<compile_context>
chip_gen: v7x
topology: tpu7x:2x2x1
jax: 0.10.0
libtpu: 0.0.40
codegen_flags: <defaults>
</compile_context>

<pallas_src>
import functools
import math

import jax
import jax.numpy as jnp
from jax import lax
from jax.experimental import pallas as pl
from jax.experimental.pallas import tpu as pltpu

# Python floats only: jnp scalar constants captured by the kernel closure
# trigger "captures constants" tracing errors.
EPS = 1e-5
NEG_INF = -1e20


# ----------------------- fused per-layer decoder kernel ----------------------
def _decoder_kernel(heads,
                    x_ref, enc_ref, tbias_ref, sbias_ref,
                    qkv_ref, fcw_ref, fcb_ref, ln_ref,
                    w1_ref, b1_ref, w2_ref, b2_ref,
                    out_ref, x_sc):
    """One decoder layer for one batch element (grid = (N, num_layers)).

    Block shapes seen by the kernel:
      x_ref    (1, Lt, E)   f32   embeddings (consumed at layer 0 only)
      enc_ref  (1, Ls, E)   bf16  encoder output
      tbias    (1, Lt, Lt)  f32   additive target-mask bias (0 / -1e20)
      sbias    (1, 1,  Ls)  f32   additive source-mask bias (0 / -1e20)
      qkv_ref  (1, 6, D, D) bf16  per-head q,k,v weights^T (self 0..2, cross 3..5)
      fcw_ref  (1, 2, E, E) bf16  attention out-proj weights^T (self, cross)
      fcb_ref  (1, 2, 1, E) f32   attention out-proj biases
      ln_ref   (1, 6, 1, E) f32   layernorm gamma/beta (norm, norm1, norm2)
      w1_ref   (1, E, Hf)   bf16  FFN weights^T / biases
      b1_ref   (1, 1, Hf)   f32
      w2_ref   (1, Hf, E)   bf16
      b2_ref   (1, 1, E)    f32
      out_ref  (1, Lt, E)   f32   decoder output (written on last layer only)
      x_sc     (Lt, E)      f32   residual stream carried across layer steps
    """
    layer = pl.program_id(1)
    E = x_ref.shape[2]
    D = E // heads
    scale = 1.0 / math.sqrt(E)     # PyTorch reference scales by sqrt(embed_size)

    @pl.when(layer == 0)
    def _():
        x_sc[...] = x_ref[0]

    x = x_sc[...]                  # (Lt, E) f32 residual stream

    def head_proj(inp, w):
        # Shared per-head (D, D) linear applied to every head's D-slice:
        # (L, E) -> (L, H, D), no heads-x-inflated block-diagonal weight.
        L = inp.shape[0]
        xh = inp.reshape(L, heads, D)
        return jnp.einsum('lhd,de->lhe', xh, w,
                          preferred_element_type=jnp.float32
                          ).astype(jnp.bfloat16)

    def attention(q_in, kv_in, bias, idx):
        # q_in (lq, E) f32; kv_in (lk, E) bf16; bias (lq|1, lk) additive f32.
        lq = q_in.shape[0]
        qh = head_proj(q_in.astype(jnp.bfloat16), qkv_ref[0, 3 * idx + 0])
        kh = head_proj(kv_in, qkv_ref[0, 3 * idx + 1])
        vh = head_proj(kv_in, qkv_ref[0, 3 * idx + 2])
        # Head-batched score / context matmuls (no per-head Python loop).
        energy = jnp.einsum('qhd,khd->hqk', qh, kh,
                            preferred_element_type=jnp.float32)     # (H, lq, lk)
        # Mask already converted to an additive bias in the wrapper: one add.
        e = (energy + bias[None]) * scale
        e = e - jnp.max(e, axis=-1, keepdims=True)
        p = jnp.exp(e)
        attn = p * pl.reciprocal(jnp.sum(p, axis=-1, keepdims=True),
                                 approx=True)                       # EUP divide
        ctx = jnp.einsum('hqk,khd->qhd', attn.astype(jnp.bfloat16), vh,
                         preferred_element_type=jnp.float32)        # (lq, H, D)
        concat = ctx.reshape(lq, E).astype(jnp.bfloat16)
        return (jnp.dot(concat, fcw_ref[0, idx],
                        preferred_element_type=jnp.float32)
                + fcb_ref[0, idx])

    def layernorm(s, g, b):        # f32 statistics
        mu = jnp.mean(s, axis=-1, keepdims=True)
        d = s - mu
        var = jnp.mean(d * d, axis=-1, keepdims=True)
        return d * lax.rsqrt(var + EPS) * g + b

    # DecoderBlock: masked self-attention + Add&Norm
    attn = attention(x, x.astype(jnp.bfloat16), tbias_ref[0], 0)
    query = layernorm(attn + x, ln_ref[0, 0], ln_ref[0, 1])
    # TransformerBlock: cross-attention (K/V = enc_out) + Add&Norm + FFN + Add&Norm
    cross = attention(query, enc_ref[0], sbias_ref[0], 1)
    h = layernorm(cross + query, ln_ref[0, 2], ln_ref[0, 3])
    hid = jnp.maximum(
        jnp.dot(h.astype(jnp.bfloat16), w1_ref[0],
                preferred_element_type=jnp.float32) + b1_ref[0], 0.0)
    ff = (jnp.dot(hid.astype(jnp.bfloat16), w2_ref[0],
                  preferred_element_type=jnp.float32) + b2_ref[0])
    x_new = layernorm(ff + h, ln_ref[0, 4], ln_ref[0, 5])
    x_sc[...] = x_new

    @pl.when(layer == pl.num_programs(1) - 1)
    def _():
        out_ref[0] = x_new.astype(out_ref.dtype)


# --------------------------- vocab projection kernel --------------------------
def _vocab_kernel(x_ref, w_ref, b_ref, out_ref):
    # x_ref (1, Lt, E) f32, w_ref (E, tV) bf16, b_ref (1, tV) f32.
    out_ref[0] = (jnp.dot(x_ref[0].astype(jnp.bfloat16), w_ref[...],
                          preferred_element_type=jnp.float32)
                  + b_ref[...]).astype(out_ref.dtype)


# ------------------------------------ wrapper ---------------------------------
def _vmem_limit(block_bytes, scratch_bytes=0):
    # Double-buffered blocks + scratch + headroom, clamped to v7x's 64 MiB.
    return int(min(64 << 20,
                   max(8 << 20, 2 * block_bytes + scratch_bytes + (4 << 20))))


def _decoder_apply(packed, tokens, enc_out, src_mask, trg_mask, *, heads):
    N, Lt = tokens.shape
    Ls = enc_out.shape[1]
    E = packed["word_emb"].shape[1]
    V = packed["fc_w_t"].shape[1]
    num_layers = packed["qkv_w"].shape[0]
    Hf = packed["ffn_w1_t"].shape[2]
    D = E // heads

    # Embedding lookups (gather) kept as plain-JAX glue.
    positions = jnp.arange(Lt)
    x = (jnp.take(packed["word_emb"], tokens, axis=0)
         + jnp.take(packed["pos_emb"], positions, axis=0)[None, :, :]
         ).astype(jnp.float32)
    enc_bf = enc_out.astype(jnp.bfloat16)
    # Masks -> additive biases ONCE (not per layer per head inside the kernel).
    tbias = jnp.where(trg_mask != 0, 0.0, NEG_INF).astype(jnp.float32)  # (N,Lt,Lt)
    sbias = jnp.where(src_mask != 0, 0.0, NEG_INF).astype(jnp.float32)
    sbias = sbias.reshape(N, 1, Ls)                                     # (N,1,Ls)

    kern = functools.partial(_decoder_kernel, heads)

    def lspec(*shape):
        # Stacked per-layer weights: streamed one layer per grid step.
        return pl.BlockSpec((1,) + shape,
                            lambda n, l, _k=len(shape): (l,) + (0,) * _k)

    def bspec(*shape):
        # Per-batch activations / masks: constant along the layer axis
        # (Pallas skips the re-DMA when the block index does not change).
        return pl.BlockSpec((1,) + shape,
                            lambda n, l, _k=len(shape): (n,) + (0,) * _k)

    main_block_bytes = (
        Lt * E * 4 + Ls * E * 2 + Lt * Lt * 4 + Ls * 4                # acts/masks
        + 6 * D * D * 2 + 2 * E * E * 2 + 2 * E * 4 + 6 * E * 4       # attn weights
        + E * Hf * 2 + Hf * 4 + Hf * E * 2 + E * 4                    # ffn weights
        + Lt * E * 4)                                                 # out block

    dec = pl.pallas_call(
        kern,
        out_shape=jax.ShapeDtypeStruct((N, Lt, E), jnp.float32),
        grid=(N, num_layers),
        in_specs=[
            bspec(Lt, E),            # embeddings (f32)
            bspec(Ls, E),            # encoder output (bf16)
            bspec(Lt, Lt),           # target mask additive bias
            bspec(1, Ls),            # source mask additive bias
            lspec(6, D, D),          # per-head q,k,v weights^T
            lspec(2, E, E),          # attention out-proj weights^T
            lspec(2, 1, E),          # attention out-proj biases
            lspec(6, 1, E),          # layernorm gamma/beta
            lspec(E, Hf),            # FFN w1^T
            lspec(1, Hf),            # FFN b1
            lspec(Hf, E),            # FFN w2^T
            lspec(1, E),             # FFN b2
        ],
        out_specs=pl.BlockSpec((1, Lt, E), lambda n, l: (n, 0, 0)),
        scratch_shapes=[pltpu.VMEM((Lt, E), jnp.float32)],
        compiler_params=pltpu.CompilerParams(
            dimension_semantics=("parallel", "arbitrary"),
            vmem_limit_bytes=_vmem_limit(main_block_bytes, Lt * E * 4)),
    )(x, enc_bf, tbias, sbias,
      packed["qkv_w"], packed["attn_fcw_t"], packed["attn_fcb"], packed["ln"],
      packed["ffn_w1_t"], packed["ffn_b1"], packed["ffn_w2_t"], packed["ffn_b2"])

    # Final vocab projection: separate call tiled over V so the (E, V) weight
    # never co-resides with layer weights; V tiles are 128-multiples when V is.
    tV = next((t for t in (512, 256, 128) if V % t == 0), V)
    vocab_block_bytes = Lt * E * 4 + E * tV * 2 + tV * 4 + Lt * tV * 4

    logits = pl.pallas_call(
        _vocab_kernel,
        out_shape=jax.ShapeDtypeStruct((N, Lt, V), jnp.float32),
        grid=(N, V // tV),
        in_specs=[
            pl.BlockSpec((1, Lt, E), lambda n, v: (n, 0, 0)),
            pl.BlockSpec((E, tV), lambda n, v: (0, v)),
            pl.BlockSpec((1, tV), lambda n, v: (0, v)),
        ],
        out_specs=pl.BlockSpec((1, Lt, tV), lambda n, v: (n, 0, v)),
        compiler_params=pltpu.CompilerParams(
            dimension_semantics=("parallel", "parallel"),
            vmem_limit_bytes=_vmem_limit(vocab_block_bytes)),
    )(dec, packed["fc_w_t"], packed["fc_b"])
    return logits


decoder_forward = jax.jit(_decoder_apply, static_argnames=("heads",))


# --------------------------- parameter construction ---------------------------
def _linear_params(key, out_f, in_f, scale=0.05):
    kw, kb = jax.random.split(key)
    return (scale * jax.random.normal(kw, (out_f, in_f), jnp.float32),
            scale * jax.random.normal(kb, (1, out_f), jnp.float32))


def _attention_params(key, embed_size, heads):
    d = embed_size // heads
    k1, k2, k3, k4 = jax.random.split(key, 4)
    wv, _ = _linear_params(k1, d, d)
    wk, _ = _linear_params(k2, d, d)
    wq, _ = _linear_params(k3, d, d)
    wfc, bfc = _linear_params(k4, embed_size, embed_size)
    return {"wv": wv, "wk": wk, "wq": wq, "wfc": wfc, "bfc": bfc}


def init_decoder_params(key, vocab, embed_size, num_layers, heads,
                        forward_expansion, max_length):
    keys = jax.random.split(key, 3 + num_layers)
    params = {
        "word_emb": 0.05 * jax.random.normal(keys[0], (vocab, embed_size),
                                             jnp.float32),
        "pos_emb": 0.05 * jax.random.normal(keys[1], (max_length, embed_size),
                                            jnp.float32),
        "layers": [],
    }
    hidden = forward_expansion * embed_size
    ones = jnp.ones((1, embed_size), jnp.float32)
    zeros = jnp.zeros((1, embed_size), jnp.float32)
    for li in range(num_layers):
        k_self, k_cross, k_ffn1, k_ffn2 = jax.random.split(keys[2 + li], 4)
        w1, b1 = _linear_params(k_ffn1, hidden, embed_size)
        w2, b2 = _linear_params(k_ffn2, embed_size, hidden)
        params["layers"].append({
            "self_attn": _attention_params(k_self, embed_size, heads),
            "norm_g": ones, "norm_b": zeros,                 # DecoderBlock.norm
            "cross_attn": _attention_params(k_cross, embed_size, heads),
            "norm1_g": ones, "norm1_b": zeros,               # TransformerBlock
            "norm2_g": ones, "norm2_b": zeros,
            "ffn": {"w1": w1, "b1": b1, "w2": w2, "b2": b2},
        })
    params["fc_w"], params["fc_b"] = _linear_params(keys[-1], vocab, embed_size)
    return params


def pack_decoder_params(params, heads):
    bf16 = jnp.bfloat16
    packed = {
        "word_emb": params["word_emb"],
        "pos_emb": params["pos_emb"],
        "fc_w_t": params["fc_w"].T.astype(bf16),
        "fc_b": params["fc_b"],
    }
    qkv, fcw, fcb, ln, w1, b1, w2, b2 = [], [], [], [], [], [], [], []
    for lp in params["layers"]:
        sa, ca = lp["self_attn"], lp["cross_attn"]
        # Shared per-head (D, D) weights, transposed once (x @ w.T == nn.Linear).
        qkv.append(jnp.stack([sa["wq"].T, sa["wk"].T, sa["wv"].T,
                              ca["wq"].T, ca["wk"].T, ca["wv"].T]))
        fcw.append(jnp.stack([sa["wfc"].T, ca["wfc"].T]))
        fcb.append(jnp.stack([sa["bfc"], ca["bfc"]]))
        ln.append(jnp.stack([lp["norm_g"], lp["norm_b"],
                             lp["norm1_g"], lp["norm1_b"],
                             lp["norm2_g"], lp["norm2_b"]]))
        w1.append(lp["ffn"]["w1"].T)
        b1.append(lp["ffn"]["b1"])
        w2.append(lp["ffn"]["w2"].T)
        b2.append(lp["ffn"]["b2"])
    packed.update(
        qkv_w=jnp.stack(qkv).astype(bf16),
        attn_fcw_t=jnp.stack(fcw).astype(bf16),
        attn_fcb=jnp.stack(fcb),
        ln=jnp.stack(ln),
        ffn_w1_t=jnp.stack(w1).astype(bf16),
        ffn_b1=jnp.stack(b1),
        ffn_w2_t=jnp.stack(w2).astype(bf16),
        ffn_b2=jnp.stack(b2))
    return packed


# -------------------------------------- main ----------------------------------
if __name__ == "__main__":
    trg_vocab_size = 32
    embed_size = 64
    num_layers = 2
    heads = 4
    forward_expansion = 4
    max_length = 16

    N, trg_len, src_len = 2, 8, 8

    key = jax.random.PRNGKey(0)
    k_par, k_tok, k_enc = jax.random.split(key, 3)
    params = init_decoder_params(k_par, trg_vocab_size, embed_size,
                                 num_layers, heads, forward_expansion,
                                 max_length)
    packed = pack_decoder_params(params, heads)

    tokens = jax.random.randint(k_tok, (N, trg_len), 0, trg_vocab_size)
    enc_out = jax.random.normal(k_enc, (N, src_len, embed_size), jnp.float32)

    # Target mask: causal lower-triangular (N, Lt, Lt).
    # Source mask: padding-style (N, 1, Ls), all positions kept.
    trg_mask = jnp.broadcast_to(
        jnp.tril(jnp.ones((trg_len, trg_len), jnp.float32)),
        (N, trg_len, trg_len))
    src_mask = jnp.ones((N, 1, src_len), jnp.float32)

    # TODO(synk): dropout layers are identity (eval mode); training-mode dropout
    # is not implemented.
    out = decoder_forward(packed, tokens, enc_out, src_mask, trg_mask,
                          heads=heads)
    out = jax.block_until_ready(out)

    assert out.shape == (N, trg_len, trg_vocab_size), out.shape
    assert bool(jnp.all(jnp.isfinite(out)))
    print("KERNEL_OK")
</pallas_src>

<mosaic_0001>
module attributes {stable_mosaic.version = 11 : i64} {
  func.func @_vocab_kernel(%arg0: i32, %arg1: i32, %arg2: memref<1x8x64xf32, #tpu.memory_space<vmem>>, %arg3: memref<64x32xbf16, #tpu.memory_space<vmem>>, %arg4: memref<1x32xf32, #tpu.memory_space<vmem>>, %arg5: memref<1x8x32xf32, #tpu.memory_space<vmem>>) attributes {dimension_semantics = [#tpu.dimension_semantics<parallel>, #tpu.dimension_semantics<parallel>], iteration_bounds = array<i64: 2, 1>, scalar_prefetch = 0 : i64, scratch_operands = 0 : i64, tpu.core_type = #tpu.core_type<tc>, window_params = [{transform_indices = @transform_0, window_bounds = array<i64: 1, 8, 64>}, {transform_indices = @transform_1, window_bounds = array<i64: 64, 32>}, {transform_indices = @transform_2, window_bounds = array<i64: 1, 32>}, {transform_indices = @transform_3, window_bounds = array<i64: 1, 8, 32>}]} {
    %c0 = arith.constant 0 : index
    %c0_0 = arith.constant 0 : index
    %c0_1 = arith.constant 0 : index
    %0 = vector.load %arg2[%c0, %c0_0, %c0_1] : memref<1x8x64xf32, #tpu.memory_space<vmem>>, vector<1x8x64xf32>
    %1 = vector.shape_cast %0 : vector<1x8x64xf32> to vector<8x64xf32>
    %2 = arith.truncf %1 : vector<8x64xf32> to vector<8x64xbf16>
    %c0_2 = arith.constant 0 : index
    %c0_3 = arith.constant 0 : index
    %3 = vector.load %arg3[%c0_2, %c0_3] : memref<64x32xbf16, #tpu.memory_space<vmem>>, vector<64x32xbf16>
    %cst = arith.constant dense<0.000000e+00> : vector<8x32xf32>
    %4 = tpu.matmul %2, %3, %cst {dimension_numbers = #tpu.dot_dimension_numbers<[1], [0], [0], [1], [0, 0, 1, 1], [], []>} : vector<8x64xbf16>, vector<64x32xbf16>, vector<8x32xf32> -> vector<8x32xf32>
    %c0_4 = arith.constant 0 : index
    %c0_5 = arith.constant 0 : index
    %5 = vector.load %arg4[%c0_4, %c0_5] : memref<1x32xf32, #tpu.memory_space<vmem>>, vector<1x32xf32>
    %6 = vector.broadcast %5 : vector<1x32xf32> to vector<8x32xf32>
    %7 = arith.addf %4, %6 : vector<8x32xf32>
    %c0_6 = arith.constant 0 : index
    %c0_7 = arith.constant 0 : index
    %c0_8 = arith.constant 0 : index
    %8 = vector.load %arg5[%c0_6, %c0_7, %c0_8] : memref<1x8x32xf32, #tpu.memory_space<vmem>>, vector<1x8x32xf32>
    %9 = vector.shape_cast %8 : vector<1x8x32xf32> to vector<8x32xf32>
    %10 = vector.shape_cast %7 : vector<8x32xf32> to vector<1x8x32xf32>
    tpu.vector_store %arg5[%c0_6, %c0_7, %c0_8], %10 {strides = array<i32>} : memref<1x8x32xf32, #tpu.memory_space<vmem>>, vector<1x8x32xf32>,
    return
  }
  func.func @transform_0(%arg0: i32, %arg1: i32) -> (i32, i32, i32) {
    %c0_i32 = arith.constant 0 : i32
    %c0_i32_0 = arith.constant 0 : i32
    %c0_i32_1 = arith.constant 0 : i32
    return %arg0, %c0_i32, %c0_i32_0 : i32, i32, i32
  }
  func.func @transform_1(%arg0: i32, %arg1: i32) -> (i32, i32) {
    %c0_i32 = arith.constant 0 : i32
    %c0_i32_0 = arith.constant 0 : i32
    return %c0_i32, %arg1 : i32, i32
  }
  func.func @transform_2(%arg0: i32, %arg1: i32) -> (i32, i32) {
    %c0_i32 = arith.constant 0 : i32
    %c0_i32_0 = arith.constant 0 : i32
    return %c0_i32, %arg1 : i32, i32
  }
  func.func @transform_3(%arg0: i32, %arg1: i32) -> (i32, i32, i32) {
    %c0_i32 = arith.constant 0 : i32
    %c0_i32_0 = arith.constant 0 : i32
    return %arg0, %c0_i32, %arg1 : i32, i32, i32
  }
}

module attributes {stable_mosaic.version = 11 : i64} {
  func.func @_decoder_kernel(%arg0: i32, %arg1: i32, %arg2: memref<1x8x64xf32, #tpu.memory_space<vmem>>, %arg3: memref<1x8x64xbf16, #tpu.memory_space<vmem>>, %arg4: memref<1x8x8xf32, #tpu.memory_space<vmem>>, %arg5: memref<1x1x8xf32, #tpu.memory_space<vmem>>, %arg6: memref<1x6x16x16xbf16, #tpu.memory_space<vmem>>, %arg7: memref<1x2x64x64xbf16, #tpu.memory_space<vmem>>, %arg8: memref<1x2x1x64xf32, #tpu.memory_space<vmem>>, %arg9: memref<1x6x1x64xf32, #tpu.memory_space<vmem>>, %arg10: memref<1x64x256xbf16, #tpu.memory_space<vmem>>, %arg11: memref<1x1x256xf32, #tpu.memory_space<vmem>>, %arg12: memref<1x256x64xbf16, #tpu.memory_space<vmem>>, %arg13: memref<1x1x64xf32, #tpu.memory_space<vmem>>, %arg14: memref<1x8x64xf32, #tpu.memory_space<vmem>>, %arg15: memref<8x64xf32, #tpu.memory_space<vmem>>) attributes {dimension_semantics = [#tpu.dimension_semantics<parallel>, #tpu.dimension_semantics<arbitrary>], iteration_bounds = array<i64: 2, 2>, scalar_prefetch = 0 : i64, scratch_operands = 1 : i64, tpu.core_type = #tpu.core_type<tc>, window_params = [{transform_indices = @transform_0, window_bounds = array<i64: 1, 8, 64>}, {transform_indices = @transform_1, window_bounds = array<i64: 1, 8, 64>}, {transform_indices = @transform_2, window_bounds = array<i64: 1, 8, 8>}, {transform_indices = @transform_3, window_bounds = array<i64: 1, 1, 8>}, {transform_indices = @transform_4, window_bounds = array<i64: 1, 6, 16, 16>}, {transform_indices = @transform_5, window_bounds = array<i64: 1, 2, 64, 64>}, {transform_indices = @transform_6, window_bounds = array<i64: 1, 2, 1, 64>}, {transform_indices = @transform_7, window_bounds = array<i64: 1, 6, 1, 64>}, {transform_indices = @transform_8, window_bounds = array<i64: 1, 64, 256>}, {transform_indices = @transform_9, window_bounds = array<i64: 1, 1, 256>}, {transform_indices = @transform_10, window_bounds = array<i64: 1, 256, 64>}, {transform_indices = @transform_11, window_bounds = array<i64: 1, 1, 64>}, {transform_indices = @transform_12, window_bounds = array<i64: 1, 8, 64>}]} {
    %c0_i32 = arith.constant 0 : i32
    %0 = arith.cmpi eq, %arg1, %c0_i32 : i32
    %1 = arith.extui %0 : i1 to i32
    %c0_i32_0 = arith.constant 0 : i32
    %2 = arith.cmpi ne, %1, %c0_i32_0 : i32
    scf.if %2 {
      %c0_120 = arith.constant 0 : index
      %c0_121 = arith.constant 0 : index
      %c0_122 = arith.constant 0 : index
      %196 = vector.load %arg2[%c0_120, %c0_121, %c0_122] : memref<1x8x64xf32, #tpu.memory_space<vmem>>, vector<1x8x64xf32>
      %197 = vector.shape_cast %196 : vector<1x8x64xf32> to vector<8x64xf32>
      %c0_123 = arith.constant 0 : index
      %c0_124 = arith.constant 0 : index
      %198 = vector.load %arg15[%c0_123, %c0_124] : memref<8x64xf32, #tpu.memory_space<vmem>>, vector<8x64xf32>
      tpu.vector_store %arg15[%c0_123, %c0_124], %197 {strides = array<i32>} : memref<8x64xf32, #tpu.memory_space<vmem>>, vector<8x64xf32>,
    } else {
    }
    %c0 = arith.constant 0 : index
    %c0_1 = arith.constant 0 : index
    %3 = vector.load %arg15[%c0, %c0_1] : memref<8x64xf32, #tpu.memory_space<vmem>>, vector<8x64xf32>
    %4 = arith.truncf %3 : vector<8x64xf32> to vector<8x64xbf16>
    %c0_2 = arith.constant 0 : index
    %c0_3 = arith.constant 0 : index
    %c0_4 = arith.constant 0 : index
    %5 = vector.load %arg4[%c0_2, %c0_3, %c0_4] : memref<1x8x8xf32, #tpu.memory_space<vmem>>, vector<1x8x8xf32>
    %6 = vector.shape_cast %5 : vector<1x8x8xf32> to vector<8x8xf32>
    %7 = arith.truncf %3 : vector<8x64xf32> to vector<8x64xbf16>
    %c0_5 = arith.constant 0 : index
    %c0_6 = arith.constant 0 : index
    %c0_7 = arith.constant 0 : index
    %c0_8 = arith.constant 0 : index
    %8 = vector.load %arg6[%c0_5, %c0_6, %c0_7, %c0_8] : memref<1x6x16x16xbf16, #tpu.memory_space<vmem>>, vector<1x1x16x16xbf16>
    %9 = vector.shape_cast %8 : vector<1x1x16x16xbf16> to vector<16x16xbf16>
    %10 = vector.shape_cast %7 : vector<8x64xbf16> to vector<8x4x16xbf16>
    "tpu.trace_start"() <{level = 10 : i32, message = "lhd,de->lhe"}> : () -> ()
    %cst = arith.constant dense<0.000000e+00> : vector<8x4x16xf32>
    %11 = tpu.matmul %10, %9, %cst {dimension_numbers = #tpu.dot_dimension_numbers<[2], [0], [0, 1], [1], [0, 0, 0, 1, 1, 1], [], []>} : vector<8x4x16xbf16>, vector<16x16xbf16>, vector<8x4x16xf32> -> vector<8x4x16xf32>
    "tpu.trace_stop"() : () -> ()
    %12 = arith.truncf %11 : vector<8x4x16xf32> to vector<8x4x16xbf16>
    %c0_9 = arith.constant 0 : index
    %c1 = arith.constant 1 : index
    %c0_10 = arith.constant 0 : index
    %c0_11 = arith.constant 0 : index
    %13 = vector.load %arg6[%c0_9, %c1, %c0_10, %c0_11] : memref<1x6x16x16xbf16, #tpu.memory_space<vmem>>, vector<1x1x16x16xbf16>
    %14 = vector.shape_cast %13 : vector<1x1x16x16xbf16> to vector<16x16xbf16>
    %15 = vector.shape_cast %4 : vector<8x64xbf16> to vector<8x4x16xbf16>
    "tpu.trace_start"() <{level = 10 : i32, message = "lhd,de->lhe"}> : () -> ()
    %cst_12 = arith.constant dense<0.000000e+00> : vector<8x4x16xf32>
    %16 = tpu.matmul %15, %14, %cst_12 {dimension_numbers = #tpu.dot_dimension_numbers<[2], [0], [0, 1], [1], [0, 0, 0, 1, 1, 1], [], []>} : vector<8x4x16xbf16>, vector<16x16xbf16>, vector<8x4x16xf32> -> vector<8x4x16xf32>
    "tpu.trace_stop"() : () -> ()
    %17 = arith.truncf %16 : vector<8x4x16xf32> to vector<8x4x16xbf16>
    %c0_13 = arith.constant 0 : index
    %c2 = arith.constant 2 : index
    %c0_14 = arith.constant 0 : index
    %c0_15 = arith.constant 0 : index
    %18 = vector.load %arg6[%c0_13, %c2, %c0_14, %c0_15] : memref<1x6x16x16xbf16, #tpu.memory_space<vmem>>, vector<1x1x16x16xbf16>
    %19 = vector.shape_cast %18 : vector<1x1x16x16xbf16> to vector<16x16xbf16>
    %20 = vector.shape_cast %4 : vector<8x64xbf16> to vector<8x4x16xbf16>
    "tpu.trace_start"() <{level = 10 : i32, message = "lhd,de->lhe"}> : () -> ()
    %cst_16 = arith.constant dense<0.000000e+00> : vector<8x4x16xf32>
    %21 = tpu.matmul %20, %19, %cst_16 {dimension_numbers = #tpu.dot_dimension_numbers<[2], [0], [0, 1], [1], [0, 0, 0, 1, 1, 1], [], []>} : vector<8x4x16xbf16>, vector<16x16xbf16>, vector<8x4x16xf32> -> vector<8x4x16xf32>
    "tpu.trace_stop"() : () -> ()
    %22 = arith.truncf %21 : vector<8x4x16xf32> to vector<8x4x16xbf16>
    "tpu.trace_start"() <{level = 10 : i32, message = "qhd,khd->hqk"}> : () -> ()
    %cst_17 = arith.constant dense<0.000000e+00> : vector<4x8x8xf32>
    %23 = tpu.matmul %12, %17, %cst_17 {dimension_numbers = #tpu.dot_dimension_numbers<[2], [2], [0], [0], [0, 1, 0, 0, 1, 0], [1], [1]>} : vector<8x4x16xbf16>, vector<8x4x16xbf16>, vector<4x8x8xf32> -> vector<4x8x8xf32>
    "tpu.trace_stop"() : () -> ()
    %24 = vector.shape_cast %6 : vector<8x8xf32> to vector<1x8x8xf32>
    %25 = vector.broadcast %24 : vector<1x8x8xf32> to vector<4x8x8xf32>
    %26 = arith.addf %23, %25 : vector<4x8x8xf32>
    %cst_18 = arith.constant 1.250000e-01 : f32
    %27 = vector.broadcast %cst_18 : f32 to vector<4x8x8xf32>
    %28 = arith.mulf %26, %27 : vector<4x8x8xf32>
    %cst_19 = arith.constant dense<0xFF800000> : vector<4x8xf32>
    %29 = vector.multi_reduction <maximumf>, %28, %cst_19 [2] : vector<4x8x8xf32> to vector<4x8xf32>
    %30 = vector.shape_cast %29 : vector<4x8xf32> to vector<4x8x1xf32>
    %31 = vector.broadcast %30 : vector<4x8x1xf32> to vector<4x8x8xf32>
    %32 = arith.subf %28, %31 : vector<4x8x8xf32>
    %33 = math.exp %32 : vector<4x8x8xf32>
    %cst_20 = arith.constant dense<0.000000e+00> : vector<4x8xf32>
    %34 = vector.multi_reduction <add>, %33, %cst_20 [2] : vector<4x8x8xf32> to vector<4x8xf32>
    %35 = vector.shape_cast %34 : vector<4x8xf32> to vector<4x8x1xf32>
    %36 = tpu.reciprocal %35 {approx = true} : vector<4x8x1xf32> -> vector<4x8x1xf32>
    %37 = vector.broadcast %36 : vector<4x8x1xf32> to vector<4x8x8xf32>
    %38 = arith.mulf %33, %37 : vector<4x8x8xf32>
    %39 = arith.truncf %38 : vector<4x8x8xf32> to vector<4x8x8xbf16>
    "tpu.trace_start"() <{level = 10 : i32, message = "hqk,khd->qhd"}> : () -> ()
    %cst_21 = arith.constant dense<0.000000e+00> : vector<4x16x8xf32>
    %40 = tpu.matmul %22, %39, %cst_21 {dimension_numbers = #tpu.dot_dimension_numbers<[0], [2], [2], [1], [0, 1, 0, 2, 1, 1], [1], [0]>} : vector<8x4x16xbf16>, vector<4x8x8xbf16>, vector<4x16x8xf32> -> vector<4x16x8xf32>
    %41 = tpu.transpose %40, [2, 0, 1] : vector<4x16x8xf32> -> vector<8x4x16xf32>
    "tpu.trace_stop"() : () -> ()
    %42 = vector.shape_cast %41 : vector<8x4x16xf32> to vector<8x64xf32>
    %43 = arith.truncf %42 : vector<8x64xf32> to vector<8x64xbf16>
    %c0_22 = arith.constant 0 : index
    %c0_23 = arith.constant 0 : index
    %c0_24 = arith.constant 0 : index
    %c0_25 = arith.constant 0 : index
    %44 = vector.load %arg7[%c0_22, %c0_23, %c0_24, %c0_25] : memref<1x2x64x64xbf16, #tpu.memory_space<vmem>>, vector<1x1x64x64xbf16>
    %45 = vector.shape_cast %44 : vector<1x1x64x64xbf16> to vector<64x64xbf16>
    %cst_26 = arith.constant dense<0.000000e+00> : vector<8x64xf32>
    %46 = tpu.matmul %43, %45, %cst_26 {dimension_numbers = #tpu.dot_dimension_numbers<[1], [0], [0], [1], [0, 0, 1, 1], [], []>} : vector<8x64xbf16>, vector<64x64xbf16>, vector<8x64xf32> -> vector<8x64xf32>
    %c0_27 = arith.constant 0 : index
    %c0_28 = arith.constant 0 : index
    %c0_29 = arith.constant 0 : index
    %c0_30 = arith.constant 0 : index
    %47 = vector.load %arg8[%c0_27, %c0_28, %c0_29, %c0_30] : memref<1x2x1x64xf32, #tpu.memory_space<vmem>>, vector<1x1x1x64xf32>
    %48 = vector.shape_cast %47 : vector<1x1x1x64xf32> to vector<1x64xf32>
    %49 = vector.broadcast %48 : vector<1x64xf32> to vector<8x64xf32>
    %50 = arith.addf %46, %49 : vector<8x64xf32>
    %51 = arith.addf %50, %3 : vector<8x64xf32>
    %c0_31 = arith.constant 0 : index
    %c0_32 = arith.constant 0 : index
    %c0_33 = arith.constant 0 : index
    %c0_34 = arith.constant 0 : index
    %52 = vector.load %arg9[%c0_31, %c0_32, %c0_33, %c0_34] : memref<1x6x1x64xf32, #tpu.memory_space<vmem>>, vector<1x1x1x64xf32>
    %53 = vector.shape_cast %52 : vector<1x1x1x64xf32> to vector<1x64xf32>
    %c0_35 = arith.constant 0 : index
    %c1_36 = arith.constant 1 : index
    %c0_37 = arith.constant 0 : index
    %c0_38 = arith.constant 0 : index
    %54 = vector.load %arg9[%c0_35, %c1_36, %c0_37, %c0_38] : memref<1x6x1x64xf32, #tpu.memory_space<vmem>>, vector<1x1x1x64xf32>
    %55 = vector.shape_cast %54 : vector<1x1x1x64xf32> to vector<1x64xf32>
    %cst_39 = arith.constant dense<0.000000e+00> : vector<8xf32>
    %56 = vector.multi_reduction <add>, %51, %cst_39 [1] : vector<8x64xf32> to vector<8xf32>
    %57 = vector.shape_cast %56 : vector<8xf32> to vector<8x1xf32>
    %cst_40 = arith.constant 6.400000e+01 : f32
    %58 = vector.broadcast %cst_40 : f32 to vector<8x1xf32>
    %59 = arith.divf %57, %58 : vector<8x1xf32>
    %60 = vector.broadcast %59 : vector<8x1xf32> to vector<8x64xf32>
    %61 = arith.subf %51, %60 : vector<8x64xf32>
    %62 = arith.mulf %61, %61 : vector<8x64xf32>
    %cst_41 = arith.constant dense<0.000000e+00> : vector<8xf32>
    %63 = vector.multi_reduction <add>, %62, %cst_41 [1] : vector<8x64xf32> to vector<8xf32>
    %64 = vector.shape_cast %63 : vector<8xf32> to vector<8x1xf32>
    %cst_42 = arith.constant 6.400000e+01 : f32
    %65 = vector.broadcast %cst_42 : f32 to vector<8x1xf32>
    %66 = arith.divf %64, %65 : vector<8x1xf32>
    %cst_43 = arith.constant 9.99999974E-6 : f32
    %67 = vector.broadcast %cst_43 : f32 to vector<8x1xf32>
    %68 = arith.addf %66, %67 : vector<8x1xf32>
    %69 = math.rsqrt %68 : vector<8x1xf32>
    %70 = vector.broadcast %69 : vector<8x1xf32> to vector<8x64xf32>
    %71 = arith.mulf %61, %70 : vector<8x64xf32>
    %72 = vector.broadcast %53 : vector<1x64xf32> to vector<8x64xf32>
    %73 = arith.mulf %71, %72 : vector<8x64xf32>
    %74 = vector.broadcast %55 : vector<1x64xf32> to vector<8x64xf32>
    %75 = arith.addf %73, %74 : vector<8x64xf32>
    %c0_44 = arith.constant 0 : index
    %c0_45 = arith.constant 0 : index
    %c0_46 = arith.constant 0 : index
    %76 = vector.load %arg3[%c0_44, %c0_45, %c0_46] : memref<1x8x64xbf16, #tpu.memory_space<vmem>>, vector<1x8x64xbf16>
    %77 = vector.shape_cast %76 : vector<1x8x64xbf16> to vector<8x64xbf16>
    %c0_47 = arith.constant 0 : index
    %c0_48 = arith.constant 0 : index
    %c0_49 = arith.constant 0 : index
    %78 = vector.load %arg5[%c0_47, %c0_48, %c0_49] : memref<1x1x8xf32, #tpu.memory_space<vmem>>, vector<1x1x8xf32>
    %79 = vector.shape_cast %78 : vector<1x1x8xf32> to vector<1x8xf32>
    %80 = arith.truncf %75 : vector<8x64xf32> to vector<8x64xbf16>
    %c0_50 = arith.constant 0 : index
    %c3 = arith.constant 3 : index
    %c0_51 = arith.constant 0 : index
    %c0_52 = arith.constant 0 : index
    %81 = vector.load %arg6[%c0_50, %c3, %c0_51, %c0_52] : memref<1x6x16x16xbf16, #tpu.memory_space<vmem>>, vector<1x1x16x16xbf16>
    %82 = vector.shape_cast %81 : vector<1x1x16x16xbf16> to vector<16x16xbf16>
    %83 = vector.shape_cast %80 : vector<8x64xbf16> to vector<8x4x16xbf16>
    "tpu.trace_start"() <{level = 10 : i32, message = "lhd,de->lhe"}> : () -> ()
    %cst_53 = arith.constant dense<0.000000e+00> : vector<8x4x16xf32>
    %84 = tpu.matmul %83, %82, %cst_53 {dimension_numbers = #tpu.dot_dimension_numbers<[2], [0], [0, 1], [1], [0, 0, 0, 1, 1, 1], [], []>} : vector<8x4x16xbf16>, vector<16x16xbf16>, vector<8x4x16xf32> -> vector<8x4x16xf32>
    "tpu.trace_stop"() : () -> ()
    %85 = arith.truncf %84 : vector<8x4x16xf32> to vector<8x4x16xbf16>
    %c0_54 = arith.constant 0 : index
    %c4 = arith.constant 4 : index
    %c0_55 = arith.constant 0 : index
    %c0_56 = arith.constant 0 : index
    %86 = vector.load %arg6[%c0_54, %c4, %c0_55, %c0_56] : memref<1x6x16x16xbf16, #tpu.memory_space<vmem>>, vector<1x1x16x16xbf16>
    %87 = vector.shape_cast %86 : vector<1x1x16x16xbf16> to vector<16x16xbf16>
    %88 = vector.shape_cast %77 : vector<8x64xbf16> to vector<8x4x16xbf16>
    "tpu.trace_start"() <{level = 10 : i32, message = "lhd,de->lhe"}> : () -> ()
    %cst_57 = arith.constant dense<0.000000e+00> : vector<8x4x16xf32>
    %89 = tpu.matmul %88, %87, %cst_57 {dimension_numbers = #tpu.dot_dimension_numbers<[2], [0], [0, 1], [1], [0, 0, 0, 1, 1, 1], [], []>} : vector<8x4x16xbf16>, vector<16x16xbf16>, vector<8x4x16xf32> -> vector<8x4x16xf32>
    "tpu.trace_stop"() : () -> ()
    %90 = arith.truncf %89 : vector<8x4x16xf32> to vector<8x4x16xbf16>
    %c0_58 = arith.constant 0 : index
    %c5 = arith.constant 5 : index
    %c0_59 = arith.constant 0 : index
    %c0_60 = arith.constant 0 : index
    %91 = vector.load %arg6[%c0_58, %c5, %c0_59, %c0_60] : memref<1x6x16x16xbf16, #tpu.memory_space<vmem>>, vector<1x1x16x16xbf16>
    %92 = vector.shape_cast %91 : vector<1x1x16x16xbf16> to vector<16x16xbf16>
    %93 = vector.shape_cast %77 : vector<8x64xbf16> to vector<8x4x16xbf16>
    "tpu.trace_start"() <{level = 10 : i32, message = "lhd,de->lhe"}> : () -> ()
    %cst_61 = arith.constant dense<0.000000e+00> : vector<8x4x16xf32>
    %94 = tpu.matmul %93, %92, %cst_61 {dimension_numbers = #tpu.dot_dimension_numbers<[2], [0], [0, 1], [1], [0, 0, 0, 1, 1, 1], [], []>} : vector<8x4x16xbf16>, vector<16x16xbf16>, vector<8x4x16xf32> -> vector<8x4x16xf32>
    "tpu.trace_stop"() : () -> ()
    %95 = arith.truncf %94 : vector<8x4x16xf32> to vector<8x4x16xbf16>
    "tpu.trace_start"() <{level = 10 : i32, message = "qhd,khd->hqk"}> : () -> ()
    %cst_62 = arith.constant dense<0.000000e+00> : vector<4x8x8xf32>
    %96 = tpu.matmul %85, %90, %cst_62 {dimension_numbers = #tpu.dot_dimension_numbers<[2], [2], [0], [0], [0, 1, 0, 0, 1, 0], [1], [1]>} : vector<8x4x16xbf16>, vector<8x4x16xbf16>, vector<4x8x8xf32> -> vector<4x8x8xf32>
    "tpu.trace_stop"() : () -> ()
    %97 = vector.shape_cast %79 : vector<1x8xf32> to vector<1x1x8xf32>
    %98 = vector.broadcast %97 : vector<1x1x8xf32> to vector<4x8x8xf32>
    %99 = arith.addf %96, %98 : vector<4x8x8xf32>
    %cst_63 = arith.constant 1.250000e-01 : f32
    %100 = vector.broadcast %cst_63 : f32 to vector<4x8x8xf32>
    %101 = arith.mulf %99, %100 : vector<4x8x8xf32>
    %cst_64 = arith.constant dense<0xFF800000> : vector<4x8xf32>
    %102 = vector.multi_reduction <maximumf>, %101, %cst_64 [2] : vector<4x8x8xf32> to vector<4x8xf32>
    %103 = vector.shape_cast %102 : vector<4x8xf32> to vector<4x8x1xf32>
    %104 = vector.broadcast %103 : vector<4x8x1xf32> to vector<4x8x8xf32>
    %105 = arith.subf %101, %104 : vector<4x8x8xf32>
    %106 = math.exp %105 : vector<4x8x8xf32>
    %cst_65 = arith.constant dense<0.000000e+00> : vector<4x8xf32>
    %107 = vector.multi_reduction <add>, %106, %cst_65 [2] : vector<4x8x8xf32> to vector<4x8xf32>
    %108 = vector.shape_cast %107 : vector<4x8xf32> to vector<4x8x1xf32>
    %109 = tpu.reciprocal %108 {approx = true} : vector<4x8x1xf32> -> vector<4x8x1xf32>
    %110 = vector.broadcast %109 : vector<4x8x1xf32> to vector<4x8x8xf32>
    %111 = arith.mulf %106, %110 : vector<4x8x8xf32>
    %112 = arith.truncf %111 : vector<4x8x8xf32> to vector<4x8x8xbf16>
    "tpu.trace_start"() <{level = 10 : i32, message = "hqk,khd->qhd"}> : () -> ()
    %cst_66 = arith.constant dense<0.000000e+00> : vector<4x16x8xf32>
    %113 = tpu.matmul %95, %112, %cst_66 {dimension_numbers = #tpu.dot_dimension_numbers<[0], [2], [2], [1], [0, 1, 0, 2, 1, 1], [1], [0]>} : vector<8x4x16xbf16>, vector<4x8x8xbf16>, vector<4x16x8xf32> -> vector<4x16x8xf32>
    %114 = tpu.transpose %113, [2, 0, 1] : vector<4x16x8xf32> -> vector<8x4x16xf32>
    "tpu.trace_stop"() : () -> ()
    %115 = vector.shape_cast %114 : vector<8x4x16xf32> to vector<8x64xf32>
    %116 = arith.truncf %115 : vector<8x64xf32> to vector<8x64xbf16>
    %c0_67 = arith.constant 0 : index
    %c1_68 = arith.constant 1 : index
    %c0_69 = arith.constant 0 : index
    %c0_70 = arith.constant 0 : index
    %117 = vector.load %arg7[%c0_67, %c1_68, %c0_69, %c0_70] : memref<1x2x64x64xbf16, #tpu.memory_space<vmem>>, vector<1x1x64x64xbf16>
    %118 = vector.shape_cast %117 : vector<1x1x64x64xbf16> to vector<64x64xbf16>
    %cst_71 = arith.constant dense<0.000000e+00> : vector<8x64xf32>
    %119 = tpu.matmul %116, %118, %cst_71 {dimension_numbers = #tpu.dot_dimension_numbers<[1], [0], [0], [1], [0, 0, 1, 1], [], []>} : vector<8x64xbf16>, vector<64x64xbf16>, vector<8x64xf32> -> vector<8x64xf32>
    %c0_72 = arith.constant 0 : index
    %c1_73 = arith.constant 1 : index
    %c0_74 = arith.constant 0 : index
    %c0_75 = arith.constant 0 : index
    %120 = vector.load %arg8[%c0_72, %c1_73, %c0_74, %c0_75] : memref<1x2x1x64xf32, #tpu.memory_space<vmem>>, vector<1x1x1x64xf32>
    %121 = vector.shape_cast %120 : vector<1x1x1x64xf32> to vector<1x64xf32>
    %122 = vector.broadcast %121 : vector<1x64xf32> to vector<8x64xf32>
    %123 = arith.addf %119, %122 : vector<8x64xf32>
    %124 = arith.addf %123, %75 : vector<8x64xf32>
    %c0_76 = arith.constant 0 : index
    %c2_77 = arith.constant 2 : index
    %c0_78 = arith.constant 0 : index
    %c0_79 = arith.constant 0 : index
    %125 = vector.load %arg9[%c0_76, %c2_77, %c0_78, %c0_79] : memref<1x6x1x64xf32, #tpu.memory_space<vmem>>, vector<1x1x1x64xf32>
    %126 = vector.shape_cast %125 : vector<1x1x1x64xf32> to vector<1x64xf32>
    %c0_80 = arith.constant 0 : index
    %c3_81 = arith.constant 3 : index
    %c0_82 = arith.constant 0 : index
    %c0_83 = arith.constant 0 : index
    %127 = vector.load %arg9[%c0_80, %c3_81, %c0_82, %c0_83] : memref<1x6x1x64xf32, #tpu.memory_space<vmem>>, vector<1x1x1x64xf32>
    %128 = vector.shape_cast %127 : vector<1x1x1x64xf32> to vector<1x64xf32>
    %cst_84 = arith.constant dense<0.000000e+00> : vector<8xf32>
    %129 = vector.multi_reduction <add>, %124, %cst_84 [1] : vector<8x64xf32> to vector<8xf32>
    %130 = vector.shape_cast %129 : vector<8xf32> to vector<8x1xf32>
    %cst_85 = arith.constant 6.400000e+01 : f32
    %131 = vector.broadcast %cst_85 : f32 to vector<8x1xf32>
    %132 = arith.divf %130, %131 : vector<8x1xf32>
    %133 = vector.broadcast %132 : vector<8x1xf32> to vector<8x64xf32>
    %134 = arith.subf %124, %133 : vector<8x64xf32>
    %135 = arith.mulf %134, %134 : vector<8x64xf32>
    %cst_86 = arith.constant dense<0.000000e+00> : vector<8xf32>
    %136 = vector.multi_reduction <add>, %135, %cst_86 [1] : vector<8x64xf32> to vector<8xf32>
    %137 = vector.shape_cast %136 : vector<8xf32> to vector<8x1xf32>
    %cst_87 = arith.constant 6.400000e+01 : f32
    %138 = vector.broadcast %cst_87 : f32 to vector<8x1xf32>
    %139 = arith.divf %137, %138 : vector<8x1xf32>
    %cst_88 = arith.constant 9.99999974E-6 : f32
    %140 = vector.broadcast %cst_88 : f32 to vector<8x1xf32>
    %141 = arith.addf %139, %140 : vector<8x1xf32>
    %142 = math.rsqrt %141 : vector<8x1xf32>
    %143 = vector.broadcast %142 : vector<8x1xf32> to vector<8x64xf32>
    %144 = arith.mulf %134, %143 : vector<8x64xf32>
    %145 = vector.broadcast %126 : vector<1x64xf32> to vector<8x64xf32>
    %146 = arith.mulf %144, %145 : vector<8x64xf32>
    %147 = vector.broadcast %128 : vector<1x64xf32> to vector<8x64xf32>
    %148 = arith.addf %146, %147 : vector<8x64xf32>
    %149 = arith.truncf %148 : vector<8x64xf32> to vector<8x64xbf16>
    %c0_89 = arith.constant 0 : index
    %c0_90 = arith.constant 0 : index
    %c0_91 = arith.constant 0 : index
    %150 = vector.load %arg10[%c0_89, %c0_90, %c0_91] : memref<1x64x256xbf16, #tpu.memory_space<vmem>>, vector<1x64x256xbf16>
    %151 = vector.shape_cast %150 : vector<1x64x256xbf16> to vector<64x256xbf16>
    %cst_92 = arith.constant dense<0.000000e+00> : vector<8x256xf32>
    %152 = tpu.matmul %149, %151, %cst_92 {dimension_numbers = #tpu.dot_dimension_numbers<[1], [0], [0], [1], [0, 0, 1, 1], [], []>} : vector<8x64xbf16>, vector<64x256xbf16>, vector<8x256xf32> -> vector<8x256xf32>
    %c0_93 = arith.constant 0 : index
    %c0_94 = arith.constant 0 : index
    %c0_95 = arith.constant 0 : index
    %153 = vector.load %arg11[%c0_93, %c0_94, %c0_95] : memref<1x1x256xf32, #tpu.memory_space<vmem>>, vector<1x1x256xf32>
    %154 = vector.shape_cast %153 : vector<1x1x256xf32> to vector<1x256xf32>
    %155 = vector.broadcast %154 : vector<1x256xf32> to vector<8x256xf32>
    %156 = arith.addf %152, %155 : vector<8x256xf32>
    %cst_96 = arith.constant 0.000000e+00 : f32
    %157 = vector.broadcast %cst_96 : f32 to vector<8x256xf32>
    %158 = arith.maximumf %156, %157 : vector<8x256xf32>
    %159 = arith.truncf %158 : vector<8x256xf32> to vector<8x256xbf16>
    %c0_97 = arith.constant 0 : index
    %c0_98 = arith.constant 0 : index
    %c0_99 = arith.constant 0 : index
    %160 = vector.load %arg12[%c0_97, %c0_98, %c0_99] : memref<1x256x64xbf16, #tpu.memory_space<vmem>>, vector<1x256x64xbf16>
    %161 = vector.shape_cast %160 : vector<1x256x64xbf16> to vector<256x64xbf16>
    %cst_100 = arith.constant dense<0.000000e+00> : vector<8x64xf32>
    %162 = tpu.matmul %159, %161, %cst_100 {dimension_numbers = #tpu.dot_dimension_numbers<[1], [0], [0], [1], [0, 0, 1, 1], [], []>} : vector<8x256xbf16>, vector<256x64xbf16>, vector<8x64xf32> -> vector<8x64xf32>
    %c0_101 = arith.constant 0 : index
    %c0_102 = arith.constant 0 : index
    %c0_103 = arith.constant 0 : index
    %163 = vector.load %arg13[%c0_101, %c0_102, %c0_103] : memref<1x1x64xf32, #tpu.memory_space<vmem>>, vector<1x1x64xf32>
    %164 = vector.shape_cast %163 : vector<1x1x64xf32> to vector<1x64xf32>
    %165 = vector.broadcast %164 : vector<1x64xf32> to vector<8x64xf32>
    %166 = arith.addf %162, %165 : vector<8x64xf32>
    %167 = arith.addf %166, %148 : vector<8x64xf32>
    %c0_104 = arith.constant 0 : index
    %c4_105 = arith.constant 4 : index
    %c0_106 = arith.constant 0 : index
    %c0_107 = arith.constant 0 : index
    %168 = vector.load %arg9[%c0_104, %c4_105, %c0_106, %c0_107] : memref<1x6x1x64xf32, #tpu.memory_space<vmem>>, vector<1x1x1x64xf32>
    %169 = vector.shape_cast %168 : vector<1x1x1x64xf32> to vector<1x64xf32>
    %c0_108 = arith.constant 0 : index
    %c5_109 = arith.constant 5 : index
    %c0_110 = arith.constant 0 : index
    %c0_111 = arith.constant 0 : index
    %170 = vector.load %arg9[%c0_108, %c5_109, %c0_110, %c0_111] : memref<1x6x1x64xf32, #tpu.memory_space<vmem>>, vector<1x1x1x64xf32>
    %171 = vector.shape_cast %170 : vector<1x1x1x64xf32> to vector<1x64xf32>
    %cst_112 = arith.constant dense<0.000000e+00> : vector<8xf32>
    %172 = vector.multi_reduction <add>, %167, %cst_112 [1] : vector<8x64xf32> to vector<8xf32>
    %173 = vector.shape_cast %172 : vector<8xf32> to vector<8x1xf32>
    %cst_113 = arith.constant 6.400000e+01 : f32
    %174 = vector.broadcast %cst_113 : f32 to vector<8x1xf32>
    %175 = arith.divf %173, %174 : vector<8x1xf32>
    %176 = vector.broadcast %175 : vector<8x1xf32> to vector<8x64xf32>
    %177 = arith.subf %167, %176 : vector<8x64xf32>
    %178 = arith.mulf %177, %177 : vector<8x64xf32>
    %cst_114 = arith.constant dense<0.000000e+00> : vector<8xf32>
    %179 = vector.multi_reduction <add>, %178, %cst_114 [1] : vector<8x64xf32> to vector<8xf32>
    %180 = vector.shape_cast %179 : vector<8xf32> to vector<8x1xf32>
    %cst_115 = arith.constant 6.400000e+01 : f32
    %181 = vector.broadcast %cst_115 : f32 to vector<8x1xf32>
    %182 = arith.divf %180, %181 : vector<8x1xf32>
    %cst_116 = arith.constant 9.99999974E-6 : f32
    %183 = vector.broadcast %cst_116 : f32 to vector<8x1xf32>
    %184 = arith.addf %182, %183 : vector<8x1xf32>
    %185 = math.rsqrt %184 : vector<8x1xf32>
    %186 = vector.broadcast %185 : vector<8x1xf32> to vector<8x64xf32>
    %187 = arith.mulf %177, %186 : vector<8x64xf32>
    %188 = vector.broadcast %169 : vector<1x64xf32> to vector<8x64xf32>
    %189 = arith.mulf %187, %188 : vector<8x64xf32>
    %190 = vector.broadcast %171 : vector<1x64xf32> to vector<8x64xf32>
    %191 = arith.addf %189, %190 : vector<8x64xf32>
    %c0_117 = arith.constant 0 : index
    %c0_118 = arith.constant 0 : index
    %192 = vector.load %arg15[%c0_117, %c0_118] : memref<8x64xf32, #tpu.memory_space<vmem>>, vector<8x64xf32>
    tpu.vector_store %arg15[%c0_117, %c0_118], %191 {strides = array<i32>} : memref<8x64xf32, #tpu.memory_space<vmem>>, vector<8x64xf32>,
    %c1_i32 = arith.constant 1 : i32
    %193 = arith.cmpi eq, %arg1, %c1_i32 : i32
    %194 = arith.extui %193 : i1 to i32
    %c0_i32_119 = arith.constant 0 : i32
    %195 = arith.cmpi ne, %194, %c0_i32_119 : i32
    scf.if %195 {
      %c0_120 = arith.constant 0 : index
      %c0_121 = arith.constant 0 : index
      %c0_122 = arith.constant 0 : index
      %196 = vector.load %arg14[%c0_120, %c0_121, %c0_122] : memref<1x8x64xf32, #tpu.memory_space<vmem>>, vector<1x8x64xf32>
      %197 = vector.shape_cast %196 : vector<1x8x64xf32> to vector<8x64xf32>
      %198 = vector.shape_cast %191 : vector<8x64xf32> to vector<1x8x64xf32>
      tpu.vector_store %arg14[%c0_120, %c0_121, %c0_122], %198 {strides = array<i32>} : memref<1x8x64xf32, #tpu.memory_space<vmem>>, vector<1x8x64xf32>,
    } else {
    }
    return
  }
  func.func @transform_0(%arg0: i32, %arg1: i32) -> (i32, i32, i32) {
    %c0_i32 = arith.constant 0 : i32
    %c0_i32_0 = arith.constant 0 : i32
    %c0_i32_1 = arith.constant 0 : i32
    return %arg0, %c0_i32, %c0_i32_0 : i32, i32, i32
  }
  func.func @transform_1(%arg0: i32, %arg1: i32) -> (i32, i32, i32) {
    %c0_i32 = arith.constant 0 : i32
    %c0_i32_0 = arith.constant 0 : i32
    %c0_i32_1 = arith.constant 0 : i32
    return %arg0, %c0_i32, %c0_i32_0 : i32, i32, i32
  }
  func.func @transform_2(%arg0: i32, %arg1: i32) -> (i32, i32, i32) {
    %c0_i32 = arith.constant 0 : i32
    %c0_i32_0 = arith.constant 0 : i32
    %c0_i32_1 = arith.constant 0 : i32
    return %arg0, %c0_i32, %c0_i32_0 : i32, i32, i32
  }
  func.func @transform_3(%arg0: i32, %arg1: i32) -> (i32, i32, i32) {
    %c0_i32 = arith.constant 0 : i32
    %c0_i32_0 = arith.constant 0 : i32
    %c0_i32_1 = arith.constant 0 : i32
    return %arg0, %c0_i32, %c0_i32_0 : i32, i32, i32
  }
  func.func @transform_4(%arg0: i32, %arg1: i32) -> (i32, i32, i32, i32) {
    %c0_i32 = arith.constant 0 : i32
    %c0_i32_0 = arith.constant 0 : i32
    %c0_i32_1 = arith.constant 0 : i32
    %c0_i32_2 = arith.constant 0 : i32
    return %arg1, %c0_i32, %c0_i32_0, %c0_i32_1 : i32, i32, i32, i32
  }
  func.func @transform_5(%arg0: i32, %arg1: i32) -> (i32, i32, i32, i32) {
    %c0_i32 = arith.constant 0 : i32
    %c0_i32_0 = arith.constant 0 : i32
    %c0_i32_1 = arith.constant 0 : i32
    %c0_i32_2 = arith.constant 0 : i32
    return %arg1, %c0_i32, %c0_i32_0, %c0_i32_1 : i32, i32, i32, i32
  }
  func.func @transform_6(%arg0: i32, %arg1: i32) -> (i32, i32, i32, i32) {
    %c0_i32 = arith.constant 0 : i32
    %c0_i32_0 = arith.constant 0 : i32
    %c0_i32_1 = arith.constant 0 : i32
    %c0_i32_2 = arith.constant 0 : i32
    return %arg1, %c0_i32, %c0_i32_0, %c0_i32_1 : i32, i32, i32, i32
  }
  func.func @transform_7(%arg0: i32, %arg1: i32) -> (i32, i32, i32, i32) {
    %c0_i32 = arith.constant 0 : i32
    %c0_i32_0 = arith.constant 0 : i32
    %c0_i32_1 = arith.constant 0 : i32
    %c0_i32_2 = arith.constant 0 : i32
    return %arg1, %c0_i32, %c0_i32_0, %c0_i32_1 : i32, i32, i32, i32
  }
  func.func @transform_8(%arg0: i32, %arg1: i32) -> (i32, i32, i32) {
    %c0_i32 = arith.constant 0 : i32
    %c0_i32_0 = arith.constant 0 : i32
    %c0_i32_1 = arith.constant 0 : i32
    return %arg1, %c0_i32, %c0_i32_0 : i32, i32, i32
  }
  func.func @transform_9(%arg0: i32, %arg1: i32) -> (i32, i32, i32) {
    %c0_i32 = arith.constant 0 : i32
    %c0_i32_0 = arith.constant 0 : i32
    %c0_i32_1 = arith.constant 0 : i32
    return %arg1, %c0_i32, %c0_i32_0 : i32, i32, i32
  }
  func.func @transform_10(%arg0: i32, %arg1: i32) -> (i32, i32, i32) {
    %c0_i32 = arith.constant 0 : i32
    %c0_i32_0 = arith.constant 0 : i32
    %c0_i32_1 = arith.constant 0 : i32
    return %arg1, %c0_i32, %c0_i32_0 : i32, i32, i32
  }
  func.func @transform_11(%arg0: i32, %arg1: i32) -> (i32, i32, i32) {
    %c0_i32 = arith.constant 0 : i32
    %c0_i32_0 = arith.constant 0 : i32
    %c0_i32_1 = arith.constant 0 : i32
    return %arg1, %c0_i32, %c0_i32_0 : i32, i32, i32
  }
  func.func @transform_12(%arg0: i32, %arg1: i32) -> (i32, i32, i32) {
    %c0_i32 = arith.constant 0 : i32
    %c0_i32_0 = arith.constant 0 : i32
    %c0_i32_1 = arith.constant 0 : i32
    return %arg0, %c0_i32, %c0_i32_0 : i32, i32, i32
  }
}

</mosaic_0001>

<llo_original>
// kernel: _decoder_apply.3
$region0: #{_decoder_apply.3}
  #allocation0 [shape = 'u32[]', space=smem, size = 0x4, offset = 0x4, fixed_abs, tag = 'smem constant byte address 0x4 - core index']
  #allocation1 [shape = 'u32[144,128]{1,0:T(1,128)}', space=vmem, size = 0x12000, scoped, tag = 'internal scratch']
  %s0 = inlined_call_operand.vmem [shape: f32[2,8,64], index: 0, kind: input, shape index: {}]
  %s1 = inlined_call_operand.vmem [shape: bf16[64,32], index: 1, kind: input, shape index: {}]
  %s2 = inlined_call_operand.vmem [shape: f32[1,32], index: 2, kind: input, shape index: {}]
  %s3 = inlined_call_operand.hbm [shape: f32[2,8,32], index: 3, kind: output, shape index: {}]
  %s4 = sld [smem:[#allocation0]]
  $region45: #{_decoder_apply.3} parent=0
    _
  %s6 = ssub.s32 1, %s4
  %s7 = scalar_select 0, %s6, %s4
  $region1: #{_decoder_apply.3} parent=0
    #allocation2 [shape = 'u8[8192]{0}', space=vmem, size = 0x2000, scoped, tag = 'output window, operand 0']
    #allocation3 [shape = 's32[2]{0}', space=sflag, size = 0x8, scoped, tag = 'scoped memory for _decoder_apply.3']
    %8 = vsyncpa [#allocation3], 0
    %s9 = scalar_lea.sflag [#allocation3], 1
    %10 = vsyncpa %s9, 0
    loop: start=0, step=1, limit=4
    $region2: #{_decoder_apply.3} parent=1 // loop_pre_header
      _
    $region3: #{_decoder_apply.3} parent=1 // loop_header
      %s12 = sphi 0, %s16
      %p13 = scmp.ge.s32.totalorder %s12, 4
      %s19 = sphi 0, %s31
      %s20 = sphi 0, %s27
      %s21 = sphi 0, %s19
      %s22 = sphi 0, %s20
      %s23 = sphi 0, %s21
      %s24 = sphi 0, %s22
      %s34 = sphi 0, %s36
      %s37 = sphi 0, %s34
      %s38 = sphi 0, %s37
      %s54 = sphi 0, %s38
      %s60 = sphi 0, %s62
      %s63 = sphi 0, %s60
      %s64 = sphi 0, %s63
      %s80 = sphi 0, %s64
      %s86 = sphi 0, %s88
      %s89 = sphi 0, %s86
      %s90 = sphi 0, %s89
      %s106 = sphi 0, %s90
      %s114 = sphi 0, %s116
      %s117 = sphi 0, %s114
      %s118 = sphi 0, %s117
      %s134 = sphi 0, %s118
    $region4: #{_decoder_apply.3} parent=1 // loop_header_branch
      %15 = sbr.rel (%p13) target = $region8
    $region5: #{_decoder_apply.3} parent=1 // loop_body
      %s17 = ssub.s32 %s12, 1
      %s18 = ssub.s32 %s12, 2
      %s25 = sadd.s32 1, %s20
      %p26 = scmp.ge.s32.totalorder %s25, 1
      %s27 = scalar_select %p26, 0, %s25
      %s28 = sadd.s32 1, %s19
      %s29 = scalar_select %p26, %s28, %s19
      %p30 = scmp.ge.s32.totalorder %s29, 2
      %s31 = scalar_select %p30, 0, %s29
      %s32 = ssub.s32 %s19, %s31
      %p33 = scmp.eq.s32.totalorder %s32, 0
      %s35 = sadd.s32 %s34, 1
      %s36 = scalar_select %p33, %s34, %s35
      %p39 = pneg %p33
      %p40 = scmp.eq.s32.totalorder %s12, 1
      %p41 = por %p39, %p40
      %p42 = scmp.ne.s32.totalorder %s34, %s37
      %p43 = scmp.eq.s32.totalorder %s12, 0
      %p44 = por %p42, %p43
      %p45 = scmp.ne.s32.totalorder %s34, %s37
      %p46 = scmp.eq.s32.totalorder %s17, 1
      %p47 = por %p45, %p46
      %p48 = scmp.ne.s32.totalorder %s37, %s38
      %p49 = scmp.eq.s32.totalorder %s17, 0
      %p50 = por %p48, %p49
      %p51 = scmp.ne.s32.totalorder %s37, %s38
      %p52 = scmp.eq.s32.totalorder %s18, 1
      %p53 = por %p51, %p52
      %p55 = scmp.ne.s32.totalorder %s38, %s54
      %p56 = scmp.eq.s32.totalorder %s18, 0
      %p57 = por %p55, %p56
      %s58 = ssub.s32 %s20, %s27
      %p59 = scmp.eq.s32.totalorder %s58, 0
      %s61 = sadd.s32 %s60, 1
      %s62 = scalar_select %p59, %s60, %s61
      %p65 = pneg %p59
      %p66 = scmp.eq.s32.totalorder %s12, 1
      %p67 = por %p65, %p66
      %p68 = scmp.ne.s32.totalorder %s60, %s63
      %p69 = scmp.eq.s32.totalorder %s12, 0
      %p70 = por %p68, %p69
      %p71 = scmp.ne.s32.totalorder %s60, %s63
      %p72 = scmp.eq.s32.totalorder %s17, 1
      %p73 = por %p71, %p72
      %p74 = scmp.ne.s32.totalorder %s63, %s64
      %p75 = scmp.eq.s32.totalorder %s17, 0
      %p76 = por %p74, %p75
      %p77 = scmp.ne.s32.totalorder %s63, %s64
      %p78 = scmp.eq.s32.totalorder %s18, 1
      %p79 = por %p77, %p78
      %p81 = scmp.ne.s32.totalorder %s64, %s80
      %p82 = scmp.eq.s32.totalorder %s18, 0
      %p83 = por %p81, %p82
      %s84 = ssub.s32 %s20, %s27
      %p85 = scmp.eq.s32.totalorder %s84, 0
      %s87 = sadd.s32 %s86, 1
      %s88 = scalar_select %p85, %s86, %s87
      %p91 = pneg %p85
      %p92 = scmp.eq.s32.totalorder %s12, 1
      %p93 = por %p91, %p92
      %p94 = scmp.ne.s32.totalorder %s86, %s89
      %p95 = scmp.eq.s32.totalorder %s12, 0
      %p96 = por %p94, %p95
      %p97 = scmp.ne.s32.totalorder %s86, %s89
      %p98 = scmp.eq.s32.totalorder %s17, 1
      %p99 = por %p97, %p98
      %p100 = scmp.ne.s32.totalorder %s89, %s90
      %p101 = scmp.eq.s32.totalorder %s17, 0
      %p102 = por %p100, %p101
      %p103 = scmp.ne.s32.totalorder %s89, %s90
      %p104 = scmp.eq.s32.totalorder %s18, 1
      %p105 = por %p103, %p104
      %p107 = scmp.ne.s32.totalorder %s90, %s106
      %p108 = scmp.eq.s32.totalorder %s18, 0
      %p109 = por %p107, %p108
      %s110 = ssub.s32 %s19, %s31
      %s111 = ssub.s32 %s20, %s27
      %s112 = sor.u32 %s110, %s111
      %p113 = scmp.eq.s32.totalorder %s112, 0
      %s115 = sadd.s32 %s114, 1
      %s116 = scalar_select %p113, %s114, %s115
      %p119 = pneg %p113
      %p120 = scmp.eq.s32.totalorder %s12, 1
      %p121 = por %p119, %p120
      %p122 = scmp.ne.s32.totalorder %s114, %s117
      %p123 = scmp.eq.s32.totalorder %s12, 0
      %p124 = por %p122, %p123
      %p125 = scmp.ne.s32.totalorder %s114, %s117
      %p126 = scmp.eq.s32.totalorder %s17, 1
      %p127 = por %p125, %p126
      %p128 = scmp.ne.s32.totalorder %s117, %s118
      %p129 = scmp.eq.s32.totalorder %s17, 0
      %p130 = por %p128, %p129
      %p131 = scmp.ne.s32.totalorder %s117, %s118
      %p132 = scmp.eq.s32.totalorder %s18, 1
      %p133 = por %p131, %p132
      %p135 = scmp.ne.s32.totalorder %s118, %s134
      %p136 = scmp.eq.s32.totalorder %s18, 0
      %p137 = por %p135, %p136
      %p138 = scmp.le.s32.totalorder 1, %s12
      %p139 = scmp.lt.s32.totalorder %s12, 3
      %p140 = pnand %p138, %p139
      %p141 = pneg %p140
      // Predicated region
      $region9: #{_decoder_apply.3} parent=5 // pred_check
        _
      $region10: #{_decoder_apply.3} parent=5 // pred_check_branch
        %143 = sbr.rel (%p140) target = $region12
      $region11: #{_decoder_apply.3} parent=5 // pred_region
        %s144 = ssub.s32 %s12, 1
        // Predicated region
        $region13: #{_decoder_apply.3} parent=11 // pred_check
          %p145 = pneg %p76
        $region14: #{_decoder_apply.3} parent=11 // pred_check_branch
          %147 = sbr.rel (%p145) target = $region16
        $region15: #{_decoder_apply.3} parent=11 // pred_region
          %p148 = scmp.lt.s32.totalorder %s22, 0
          %s149 = scalar_select %p148, %s22, 0
          %s150 = smul.addr %s149, 4
          %s151 = scalar_lea.vmem %s1, %s150
        $region16: #{_decoder_apply.3} parent=11 // pred_fallthru
          _
        // Predicated region
        $region17: #{_decoder_apply.3} parent=11 // pred_check
          %p152 = pneg %p102
        $region18: #{_decoder_apply.3} parent=11 // pred_check_branch
          %154 = sbr.rel (%p152) target = $region20
        $region19: #{_decoder_apply.3} parent=11 // pred_region
          %p155 = scmp.lt.s32.totalorder %s22, 0
          %s156 = scalar_select %p155, %s22, 0
          %s157 = scalar_lea.vmem %s2, %s156
        $region20: #{_decoder_apply.3} parent=11 // pred_fallthru
          _
      $region12: #{_decoder_apply.3} parent=5 // pred_fallthru
        _
      %p158 = scmp.lt.s32.totalorder %s12, 2
      // Predicated region
      $region21: #{_decoder_apply.3} parent=5 // pred_check
        %p159 = pneg %p158
      $region22: #{_decoder_apply.3} parent=5 // pred_check_branch
        %161 = sbr.rel (%p159) target = $region24
      $region23: #{_decoder_apply.3} parent=5 // pred_region
        // Predicated region
        $region25: #{_decoder_apply.3} parent=23 // pred_check
          %p162 = pneg %p44
        $region26: #{_decoder_apply.3} parent=23 // pred_check_branch
          %164 = sbr.rel (%p162) target = $region28
        $region27: #{_decoder_apply.3} parent=23 // pred_region
          %p165 = scmp.lt.s32.totalorder %s19, 1
          %s166 = scalar_select %p165, %s19, 1
          %s167 = smul.addr %s166, 8
          %s168 = scalar_lea.vmem %s0, %s167
        $region28: #{_decoder_apply.3} parent=23 // pred_fallthru
          _
      $region24: #{_decoder_apply.3} parent=5 // pred_fallthru
        _
      %p169 = scmp.le.s32.totalorder 1, %s12
      %p170 = scmp.lt.s32.totalorder %s12, 3
      %p171 = pnand %p169, %p170
      %p172 = pneg %p171
      // Predicated region
      $region29: #{_decoder_apply.3} parent=5 // pred_check
        _
      $region30: #{_decoder_apply.3} parent=5 // pred_check_branch
        %174 = sbr.rel (%p171) target = $region32
      $region31: #{_decoder_apply.3} parent=5 // pred_region
        %s175 = ssub.s32 %s12, 1
        %p176 = scmp.lt.s32.totalorder %s21, 1
        %s177 = scalar_select %p176, %s21, 1
        %s178 = smul.addr %s177, 8
        %s179 = scalar_lea.vmem %s0, %s178
        %p180 = pneg %p50
        %p181 = pneg %p47
        %p182 = scmp.lt.s32.totalorder %s22, 0
        %s183 = scalar_select %p182, %s22, 0
        %s184 = smul.addr %s183, 4
        %s185 = scalar_lea.vmem %s1, %s184
        %p186 = pneg %p76
        %p187 = pneg %p73
        %p188 = scmp.lt.s32.totalorder %s22, 0
        %s189 = scalar_select %p188, %s22, 0
        %s190 = scalar_lea.vmem %s2, %s189
        %p191 = pneg %p102
        %p192 = pneg %p99
        %p193 = pneg %p130
        %p194 = pneg %p127
        %s195 = sand.u32 %s117, 1
        %s196 = scalar_lea.sflag [#allocation3], %s195
        %s197 = sand.u32 %s117, 1
        %s198 = smul.addr %s197, 8
        %s199 = scalar_lea.vmem [#allocation2], %s198
        %p200 = scmp.lt.s32.totalorder %s21, 1
        %s201 = scalar_select %p200, %s21, 1
        %s202 = smul.addr %s201, 8
        %s203 = scalar_lea.vmem %s0, %s202
        %p204 = scmp.lt.s32.totalorder %s22, 0
        %s205 = scalar_select %p204, %s22, 0
        %s206 = smul.addr %s205, 4
        %s207 = scalar_lea.vmem %s1, %s206
        %p208 = scmp.lt.s32.totalorder %s22, 0
        %s209 = scalar_select %p208, %s22, 0
        %s210 = scalar_lea.vmem %s2, %s209
        %v212 = vld [vmem:[%s203] sm:$0xff]
        %v213 = vpack.c.bf16 %v212, %v212
        %v214 = vld [vmem:[%s207] sm:$0xf]
        %v215 = vld [vmem:[%s207 + $0x4] sm:$0xf]
        %v216 = vld [vmem:[%s207 + $0x8] sm:$0xf]
        %v217 = vld [vmem:[%s207 + $0xc] sm:$0xf]
        %v218 = vld [vmem:[%s207 + $0x10] sm:$0xf]
        %v219 = vld [vmem:[%s207 + $0x14] sm:$0xf]
        %v220 = vld [vmem:[%s207 + $0x18] sm:$0xf]
        %v221 = vld [vmem:[%s207 + $0x1c] sm:$0xf]
        %v222 = vld [vmem:[%s210] sm:$0x1]
        %v224 = vlaneseq
        %v225 = vshrl.u32 %v224, 7
        %v226 = vsub.s32 0, %v225
        %v227 = vrot.slane %v222, %v226
        %v237 = vunpack.c.l.b16 %v214
        %v238 = vunpack.c.l.b16 %v215
        %v239 = vunpack.c.l.b16 %v216
        %v240 = vunpack.c.l.b16 %v217
        %v241 = vunpack.c.l.b16 %v218
        %v242 = vunpack.c.l.b16 %v219
        %v243 = vunpack.c.l.b16 %v220
        %v244 = vunpack.c.l.b16 %v221
        %v245 = vpack.c.b16 %v238, %v237
        %v246 = vpack.c.b16 %v240, %v239
        %v247 = vpack.c.b16 %v242, %v241
        %v248 = vpack.c.b16 %v244, %v243
        %vm253 = vcmask 523264
        %v255 = vsel %vm253, %v213, 0
        %257 = vmatprep.subr.bf16.mxu0 0
        %258 = vmatpush1.bf16.msra.mxu0 %v245
        %259 = vmatprep.subr.bf16.mxu0 0
        %260 = vmatpush1.bf16.msra.mxu0 %v246
        %261 = vmatprep.subr.bf16.mxu0 0
        %262 = vmatpush1.bf16.msra.mxu0 %v247
        %263 = vmatprep.subr.bf16.mxu0 0
        %264 = vmatpush1.bf16.msra.mxu0 %v248
        %265 = vmatprep.subr.bf16.mxu0 0
        %266 = vmatpush1.bf16.msra.mxu0 0
        %267 = vmatprep.subr.bf16.mxu0 0
        %268 = vmatpush1.bf16.msra.mxu0 0
        %269 = vmatprep.subr.bf16.mxu0 0
        %270 = vmatpush1.bf16.msra.mxu0 0
        %271 = vmatprep.subr.bf16.mxu0 0
        %272 = vmatpush1.bf16.msra.mxu0 0
        %273 = vmatprep.subr.bf16.mxu0 0
        %274 = vmatpush1.bf16.msra.mxu0 0
        %275 = vmatprep.subr.bf16.mxu0 0
        %276 = vmatpush1.bf16.msra.mxu0 0
        %277 = vmatprep.subr.bf16.mxu0 0
        %278 = vmatpush1.bf16.msra.mxu0 0
        %279 = vmatprep.subr.bf16.mxu0 0
        %280 = vmatpush1.bf16.msra.mxu0 0
        %281 = vmatprep.subr.bf16.mxu0 0
        %282 = vmatpush1.bf16.msra.mxu0 0
        %283 = vmatprep.subr.bf16.mxu0 0
        %284 = vmatpush1.bf16.msra.mxu0 0
        %285 = vmatprep.subr.bf16.mxu0 0
        %286 = vmatpush1.bf16.msra.mxu0 0
        %287 = vmatprep.subr.bf16.mxu0 0
        %288 = vmatpush1.bf16.msra.mxu0 0
        %289 = vmatprep.mubr.bf16.mxu0 0
        %290 = vmatmul.mubr.bf16.gmra.mrb[0].mxu0 %v255
        %v291 = vpop.f32.mrb[0].mxu0
        %v292 = vadd.f32 %v227, %v291
        %v293 = vpop.f32.mrb[0].mxu0
        %v294 = vpop.f32.mrb[0].mxu0
        %v295 = vpop.f32.mrb[0].mxu0
        %296 = vdwg.mxu0
        %vm297 = vcmask 261120
        %298 = vst.msk [vmem:[%s199] sm:$0xff] %vm297, %v292
        %s299 = sand.u32 %s117, 1
        %s300 = scalar_lea.sflag [#allocation3], %s299
        %s301 = sand.u32 %s117, 1
        %s302 = smul.addr %s301, 8
        %s303 = scalar_lea.vmem [#allocation2], %s302
        // Predicated region
        $region33: #{_decoder_apply.3} parent=31 // pred_check
          %p304 = pneg %p127
        $region34: #{_decoder_apply.3} parent=31 // pred_check_branch
          %306 = sbr.rel (%p304) target = $region36
        $region35: #{_decoder_apply.3} parent=31 // pred_region
          %s308 = ssub.s32 128, 128
          %309 = vsyncadd %s300, %s308
          %s310 = sadd.s32 %s22, %s21
          %s311 = smul.addr %s310, 128
          %s312 = scalar_lea.hbm %s3, %s311
          %s314 = sshll.u32 %s303, 4
          %s315 = int_to_ptr.vmem [resolvable:$true] %s314
          %317 = dma.vmem_to_hbm [thread:$0]  %s315, 128, %s312, %s300
        $region36: #{_decoder_apply.3} parent=31 // pred_fallthru
          _
      $region32: #{_decoder_apply.3} parent=5 // pred_fallthru
        _
      %p318 = scmp.le.s32.totalorder 2, %s12
      // Predicated region
      $region37: #{_decoder_apply.3} parent=5 // pred_check
        %p319 = pneg %p318
      $region38: #{_decoder_apply.3} parent=5 // pred_check_branch
        %321 = sbr.rel (%p319) target = $region40
      $region39: #{_decoder_apply.3} parent=5 // pred_region
        %s322 = ssub.s32 %s12, 2
        // Predicated region
        $region41: #{_decoder_apply.3} parent=39 // pred_check
          %p323 = pneg %p133
        $region42: #{_decoder_apply.3} parent=39 // pred_check_branch
          %325 = sbr.rel (%p323) target = $region44
        $region43: #{_decoder_apply.3} parent=39 // pred_region
          %s326 = sand.u32 %s118, 1
          %s327 = scalar_lea.sflag [#allocation3], %s326
          %s328 = sand.u32 %s118, 1
          %s329 = smul.addr %s328, 8
          %s330 = scalar_lea.vmem [#allocation2], %s329
          %331 = dma.done %s327, 128
        $region44: #{_decoder_apply.3} parent=39 // pred_fallthru
          _
      $region40: #{_decoder_apply.3} parent=5 // pred_fallthru
        _
    $region6: #{_decoder_apply.3} parent=1 // loop_footer
      %s16 = sadd.s32 1, %s12
    $region7: #{_decoder_apply.3} parent=1 // loop_footer_branch
      %11 = sbr.rel target = $region3
    $region8: #{_decoder_apply.3} parent=1 // loop_exit
      _
    %332 = vsyncpa [#allocation3], 1
    %s333 = scalar_lea.sflag [#allocation3], 1
    %334 = vsyncpa %s333, 1

// kernel: _decoder_apply.2
$region0: #{_decoder_apply.2}
  #allocation0 [shape = 'u32[]', space=smem, size = 0x4, offset = 0x4, fixed_abs, tag = 'smem constant byte address 0x4 - core index']
  #allocation1 [shape = 'u32[144,128]{1,0:T(1,128)}', space=vmem, size = 0x12000, scoped, tag = 'internal scratch']
  #allocation2 [shape = 'f32[8,64]{1,0:T(8,128)}', space=vmem, size = 0x1000, scoped, tag = 'scratch operand']
  %s0 = inlined_call_operand.vmem [shape: f32[2,8,64], index: 0, kind: input, shape index: {}]
  %s1 = inlined_call_operand.vmem [shape: bf16[2,8,64], index: 1, kind: input, shape index: {}]
  %s2 = inlined_call_operand.vmem [shape: f32[2,8,8], index: 2, kind: input, shape index: {}]
  %s3 = inlined_call_operand.vmem [shape: f32[2,1,8], index: 3, kind: input, shape index: {}]
  %s4 = inlined_call_operand.vmem [shape: bf16[2,6,16,16], index: 4, kind: input, shape index: {}]
  %s5 = inlined_call_operand.vmem [shape: bf16[2,2,64,64], index: 5, kind: input, shape index: {}]
  %s6 = inlined_call_operand.vmem [shape: f32[2,2,1,64], index: 6, kind: input, shape index: {}]
  %s7 = inlined_call_operand.vmem [shape: f32[2,6,1,64], index: 7, kind: input, shape index: {}]
  %s8 = inlined_call_operand.vmem [shape: bf16[2,64,256], index: 8, kind: input, shape index: {}]
  %s9 = inlined_call_operand.vmem [shape: f32[2,1,256], index: 9, kind: input, shape index: {}]
  %s10 = inlined_call_operand.vmem [shape: bf16[2,256,64], index: 10, kind: input, shape index: {}]
  %s11 = inlined_call_operand.vmem [shape: f32[2,1,64], index: 11, kind: input, shape index: {}]
  %s12 = inlined_call_operand.vmem [shape: f32[2,8,64], index: 12, kind: output, shape index: {}]
  %s13 = sld [smem:[#allocation0]]
  $region89: #{_decoder_apply.2} parent=0
    _
  %s15 = ssub.s32 1, %s13
  %s16 = scalar_select 0, %s15, %s13
  loop: start=0, step=1, limit=6
  $region2: #{_decoder_apply.2} parent=0 // loop_pre_header
    _
  $region3: #{_decoder_apply.2} parent=0 // loop_header
    %s18 = sphi 0, %s22
    %p19 = scmp.ge.s32.totalorder %s18, 6
    %s25 = sphi 0, %s37
    %s26 = sphi 0, %s33
    %s27 = sphi 0, %s25
    %s28 = sphi 0, %s26
    %s29 = sphi 0, %s27
    %s30 = sphi 0, %s28
    %s40 = sphi 0, %s42
    %s43 = sphi 0, %s40
    %s44 = sphi 0, %s43
    %s60 = sphi 0, %s44
    %s66 = sphi 0, %s68
    %s69 = sphi 0, %s66
    %s70 = sphi 0, %s69
    %s86 = sphi 0, %s70
    %s92 = sphi 0, %s94
    %s95 = sphi 0, %s92
    %s96 = sphi 0, %s95
    %s112 = sphi 0, %s96
    %s118 = sphi 0, %s120
    %s121 = sphi 0, %s118
    %s122 = sphi 0, %s121
    %s138 = sphi 0, %s122
    %s144 = sphi 0, %s146
    %s147 = sphi 0, %s144
    %s148 = sphi 0, %s147
    %s164 = sphi 0, %s148
    %s170 = sphi 0, %s172
    %s173 = sphi 0, %s170
    %s174 = sphi 0, %s173
    %s190 = sphi 0, %s174
    %s196 = sphi 0, %s198
    %s199 = sphi 0, %s196
    %s200 = sphi 0, %s199
    %s216 = sphi 0, %s200
    %s222 = sphi 0, %s224
    %s225 = sphi 0, %s222
    %s226 = sphi 0, %s225
    %s242 = sphi 0, %s226
    %s248 = sphi 0, %s250
    %s251 = sphi 0, %s248
    %s252 = sphi 0, %s251
    %s268 = sphi 0, %s252
    %s274 = sphi 0, %s276
    %s277 = sphi 0, %s274
    %s278 = sphi 0, %s277
    %s294 = sphi 0, %s278
    %s300 = sphi 0, %s302
    %s303 = sphi 0, %s300
    %s304 = sphi 0, %s303
    %s320 = sphi 0, %s304
    %s326 = sphi 0, %s328
    %s329 = sphi 0, %s326
    %s330 = sphi 0, %s329
    %s346 = sphi 0, %s330
    %s352 = sphi 0, %s354
    %s355 = sphi 0, %s352
    %s356 = sphi 0, %s355
    %s372 = sphi 0, %s356
  $region4: #{_decoder_apply.2} parent=0 // loop_header_branch
    %21 = sbr.rel (%p19) target = $region8
  $region5: #{_decoder_apply.2} parent=0 // loop_body
    %s23 = ssub.s32 %s18, 1
    %s24 = ssub.s32 %s18, 2
    %s31 = sadd.s32 1, %s26
    %p32 = scmp.ge.s32.totalorder %s31, 2
    %s33 = scalar_select %p32, 0, %s31
    %s34 = sadd.s32 1, %s25
    %s35 = scalar_select %p32, %s34, %s25
    %p36 = scmp.ge.s32.totalorder %s35, 2
    %s37 = scalar_select %p36, 0, %s35
    %s38 = ssub.s32 %s25, %s37
    %p39 = scmp.eq.s32.totalorder %s38, 0
    %s41 = sadd.s32 %s40, 1
    %s42 = scalar_select %p39, %s40, %s41
    %p45 = pneg %p39
    %p46 = scmp.eq.s32.totalorder %s18, 3
    %p47 = por %p45, %p46
    %p48 = scmp.ne.s32.totalorder %s40, %s43
    %p49 = scmp.eq.s32.totalorder %s18, 0
    %p50 = por %p48, %p49
    %p51 = scmp.ne.s32.totalorder %s40, %s43
    %p52 = scmp.eq.s32.totalorder %s23, 3
    %p53 = por %p51, %p52
    %p54 = scmp.ne.s32.totalorder %s43, %s44
    %p55 = scmp.eq.s32.totalorder %s23, 0
    %p56 = por %p54, %p55
    %p57 = scmp.ne.s32.totalorder %s43, %s44
    %p58 = scmp.eq.s32.totalorder %s24, 3
    %p59 = por %p57, %p58
    %p61 = scmp.ne.s32.totalorder %s44, %s60
    %p62 = scmp.eq.s32.totalorder %s24, 0
    %p63 = por %p61, %p62
    %s64 = ssub.s32 %s25, %s37
    %p65 = scmp.eq.s32.totalorder %s64, 0
    %s67 = sadd.s32 %s66, 1
    %s68 = scalar_select %p65, %s66, %s67
    %p71 = pneg %p65
    %p72 = scmp.eq.s32.totalorder %s18, 3
    %p73 = por %p71, %p72
    %p74 = scmp.ne.s32.totalorder %s66, %s69
    %p75 = scmp.eq.s32.totalorder %s18, 0
    %p76 = por %p74, %p75
    %p77 = scmp.ne.s32.totalorder %s66, %s69
    %p78 = scmp.eq.s32.totalorder %s23, 3
    %p79 = por %p77, %p78
    %p80 = scmp.ne.s32.totalorder %s69, %s70
    %p81 = scmp.eq.s32.totalorder %s23, 0
    %p82 = por %p80, %p81
    %p83 = scmp.ne.s32.totalorder %s69, %s70
    %p84 = scmp.eq.s32.totalorder %s24, 3
    %p85 = por %p83, %p84
    %p87 = scmp.ne.s32.totalorder %s70, %s86
    %p88 = scmp.eq.s32.totalorder %s24, 0
    %p89 = por %p87, %p88
    %s90 = ssub.s32 %s25, %s37
    %p91 = scmp.eq.s32.totalorder %s90, 0
    %s93 = sadd.s32 %s92, 1
    %s94 = scalar_select %p91, %s92, %s93
    %p97 = pneg %p91
    %p98 = scmp.eq.s32.totalorder %s18, 3
    %p99 = por %p97, %p98
    %p100 = scmp.ne.s32.totalorder %s92, %s95
    %p101 = scmp.eq.s32.totalorder %s18, 0
    %p102 = por %p100, %p101
    %p103 = scmp.ne.s32.totalorder %s92, %s95
    %p104 = scmp.eq.s32.totalorder %s23, 3
    %p105 = por %p103, %p104
    %p106 = scmp.ne.s32.totalorder %s95, %s96
    %p107 = scmp.eq.s32.totalorder %s23, 0
    %p108 = por %p106, %p107
    %p109 = scmp.ne.s32.totalorder %s95, %s96
    %p110 = scmp.eq.s32.totalorder %s24, 3
    %p111 = por %p109, %p110
    %p113 = scmp.ne.s32.totalorder %s96, %s112
    %p114 = scmp.eq.s32.totalorder %s24, 0
    %p115 = por %p113, %p114
    %s116 = ssub.s32 %s25, %s37
    %p117 = scmp.eq.s32.totalorder %s116, 0
    %s119 = sadd.s32 %s118, 1
    %s120 = scalar_select %p117, %s118, %s119
    %p123 = pneg %p117
    %p124 = scmp.eq.s32.totalorder %s18, 3
    %p125 = por %p123, %p124
    %p126 = scmp.ne.s32.totalorder %s118, %s121
    %p127 = scmp.eq.s32.totalorder %s18, 0
    %p128 = por %p126, %p127
    %p129 = scmp.ne.s32.totalorder %s118, %s121
    %p130 = scmp.eq.s32.totalorder %s23, 3
    %p131 = por %p129, %p130
    %p132 = scmp.ne.s32.totalorder %s121, %s122
    %p133 = scmp.eq.s32.totalorder %s23, 0
    %p134 = por %p132, %p133
    %p135 = scmp.ne.s32.totalorder %s121, %s122
    %p136 = scmp.eq.s32.totalorder %s24, 3
    %p137 = por %p135, %p136
    %p139 = scmp.ne.s32.totalorder %s122, %s138
    %p140 = scmp.eq.s32.totalorder %s24, 0
    %p141 = por %p139, %p140
    %s142 = ssub.s32 %s26, %s33
    %p143 = scmp.eq.s32.totalorder %s142, 0
    %s145 = sadd.s32 %s144, 1
    %s146 = scalar_select %p143, %s144, %s145
    %p149 = pneg %p143
    %p150 = scmp.eq.s32.totalorder %s18, 3
    %p151 = por %p149, %p150
    %p152 = scmp.ne.s32.totalorder %s144, %s147
    %p153 = scmp.eq.s32.totalorder %s18, 0
    %p154 = por %p152, %p153
    %p155 = scmp.ne.s32.totalorder %s144, %s147
    %p156 = scmp.eq.s32.totalorder %s23, 3
    %p157 = por %p155, %p156
    %p158 = scmp.ne.s32.totalorder %s147, %s148
    %p159 = scmp.eq.s32.totalorder %s23, 0
    %p160 = por %p158, %p159
    %p161 = scmp.ne.s32.totalorder %s147, %s148
    %p162 = scmp.eq.s32.totalorder %s24, 3
    %p163 = por %p161, %p162
    %p165 = scmp.ne.s32.totalorder %s148, %s164
    %p166 = scmp.eq.s32.totalorder %s24, 0
    %p167 = por %p165, %p166
    %s168 = ssub.s32 %s26, %s33
    %p169 = scmp.eq.s32.totalorder %s168, 0
    %s171 = sadd.s32 %s170, 1
    %s172 = scalar_select %p169, %s170, %s171
    %p175 = pneg %p169
    %p176 = scmp.eq.s32.totalorder %s18, 3
    %p177 = por %p175, %p176
    %p178 = scmp.ne.s32.totalorder %s170, %s173
    %p179 = scmp.eq.s32.totalorder %s18, 0
    %p180 = por %p178, %p179
    %p181 = scmp.ne.s32.totalorder %s170, %s173
    %p182 = scmp.eq.s32.totalorder %s23, 3
    %p183 = por %p181, %p182
    %p184 = scmp.ne.s32.totalorder %s173, %s174
    %p185 = scmp.eq.s32.totalorder %s23, 0
    %p186 = por %p184, %p185
    %p187 = scmp.ne.s32.totalorder %s173, %s174
    %p188 = scmp.eq.s32.totalorder %s24, 3
    %p189 = por %p187, %p188
    %p191 = scmp.ne.s32.totalorder %s174, %s190
    %p192 = scmp.eq.s32.totalorder %s24, 0
    %p193 = por %p191, %p192
    %s194 = ssub.s32 %s26, %s33
    %p195 = scmp.eq.s32.totalorder %s194, 0
    %s197 = sadd.s32 %s196, 1
    %s198 = scalar_select %p195, %s196, %s197
    %p201 = pneg %p195
    %p202 = scmp.eq.s32.totalorder %s18, 3
    %p203 = por %p201, %p202
    %p204 = scmp.ne.s32.totalorder %s196, %s199
    %p205 = scmp.eq.s32.totalorder %s18, 0
    %p206 = por %p204, %p205
    %p207 = scmp.ne.s32.totalorder %s196, %s199
    %p208 = scmp.eq.s32.totalorder %s23, 3
    %p209 = por %p207, %p208
    %p210 = scmp.ne.s32.totalorder %s199, %s200
    %p211 = scmp.eq.s32.totalorder %s23, 0
    %p212 = por %p210, %p211
    %p213 = scmp.ne.s32.totalorder %s199, %s200
    %p214 = scmp.eq.s32.totalorder %s24, 3
    %p215 = por %p213, %p214
    %p217 = scmp.ne.s32.totalorder %s200, %s216
    %p218 = scmp.eq.s32.totalorder %s24, 0
    %p219 = por %p217, %p218
    %s220 = ssub.s32 %s26, %s33
    %p221 = scmp.eq.s32.totalorder %s220, 0
    %s223 = sadd.s32 %s222, 1
    %s224 = scalar_select %p221, %s222, %s223
    %p227 = pneg %p221
    %p228 = scmp.eq.s32.totalorder %s18, 3
    %p229 = por %p227, %p228
    %p230 = scmp.ne.s32.totalorder %s222, %s225
    %p231 = scmp.eq.s32.totalorder %s18, 0
    %p232 = por %p230, %p231
    %p233 = scmp.ne.s32.totalorder %s222, %s225
    %p234 = scmp.eq.s32.totalorder %s23, 3
    %p235 = por %p233, %p234
    %p236 = scmp.ne.s32.totalorder %s225, %s226
    %p237 = scmp.eq.s32.totalorder %s23, 0
    %p238 = por %p236, %p237
    %p239 = scmp.ne.s32.totalorder %s225, %s226
    %p240 = scmp.eq.s32.totalorder %s24, 3
    %p241 = por %p239, %p240
    %p243 = scmp.ne.s32.totalorder %s226, %s242
    %p244 = scmp.eq.s32.totalorder %s24, 0
    %p245 = por %p243, %p244
    %s246 = ssub.s32 %s26, %s33
    %p247 = scmp.eq.s32.totalorder %s246, 0
    %s249 = sadd.s32 %s248, 1
    %s250 = scalar_select %p247, %s248, %s249
    %p253 = pneg %p247
    %p254 = scmp.eq.s32.totalorder %s18, 3
    %p255 = por %p253, %p254
    %p256 = scmp.ne.s32.totalorder %s248, %s251
    %p257 = scmp.eq.s32.totalorder %s18, 0
    %p258 = por %p256, %p257
    %p259 = scmp.ne.s32.totalorder %s248, %s251
    %p260 = scmp.eq.s32.totalorder %s23, 3
    %p261 = por %p259, %p260
    %p262 = scmp.ne.s32.totalorder %s251, %s252
    %p263 = scmp.eq.s32.totalorder %s23, 0
    %p264 = por %p262, %p263
    %p265 = scmp.ne.s32.totalorder %s251, %s252
    %p266 = scmp.eq.s32.totalorder %s24, 3
    %p267 = por %p265, %p266
    %p269 = scmp.ne.s32.totalorder %s252, %s268
    %p270 = scmp.eq.s32.totalorder %s24, 0
    %p271 = por %p269, %p270
    %s272 = ssub.s32 %s26, %s33
    %p273 = scmp.eq.s32.totalorder %s272, 0
    %s275 = sadd.s32 %s274, 1
    %s276 = scalar_select %p273, %s274, %s275
    %p279 = pneg %p273
    %p280 = scmp.eq.s32.totalorder %s18, 3
    %p281 = por %p279, %p280
    %p282 = scmp.ne.s32.totalorder %s274, %s277
    %p283 = scmp.eq.s32.totalorder %s18, 0
    %p284 = por %p282, %p283
    %p285 = scmp.ne.s32.totalorder %s274, %s277
    %p286 = scmp.eq.s32.totalorder %s23, 3
    %p287 = por %p285, %p286
    %p288 = scmp.ne.s32.totalorder %s277, %s278
    %p289 = scmp.eq.s32.totalorder %s23, 0
    %p290 = por %p288, %p289
    %p291 = scmp.ne.s32.totalorder %s277, %s278
    %p292 = scmp.eq.s32.totalorder %s24, 3
    %p293 = por %p291, %p292
    %p295 = scmp.ne.s32.totalorder %s278, %s294
    %p296 = scmp.eq.s32.totalorder %s24, 0
    %p297 = por %p295, %p296
    %s298 = ssub.s32 %s26, %s33
    %p299 = scmp.eq.s32.totalorder %s298, 0
    %s301 = sadd.s32 %s300, 1
    %s302 = scalar_select %p299, %s300, %s301
    %p305 = pneg %p299
    %p306 = scmp.eq.s32.totalorder %s18, 3
    %p307 = por %p305, %p306
    %p308 = scmp.ne.s32.totalorder %s300, %s303
    %p309 = scmp.eq.s32.totalorder %s18, 0
    %p310 = por %p308, %p309
    %p311 = scmp.ne.s32.totalorder %s300, %s303
    %p312 = scmp.eq.s32.totalorder %s23, 3
    %p313 = por %p311, %p312
    %p314 = scmp.ne.s32.totalorder %s303, %s304
    %p315 = scmp.eq.s32.totalorder %s23, 0
    %p316 = por %p314, %p315
    %p317 = scmp.ne.s32.totalorder %s303, %s304
    %p318 = scmp.eq.s32.totalorder %s24, 3
    %p319 = por %p317, %p318
    %p321 = scmp.ne.s32.totalorder %s304, %s320
    %p322 = scmp.eq.s32.totalorder %s24, 0
    %p323 = por %p321, %p322
    %s324 = ssub.s32 %s26, %s33
    %p325 = scmp.eq.s32.totalorder %s324, 0
    %s327 = sadd.s32 %s326, 1
    %s328 = scalar_select %p325, %s326, %s327
    %p331 = pneg %p325
    %p332 = scmp.eq.s32.totalorder %s18, 3
    %p333 = por %p331, %p332
    %p334 = scmp.ne.s32.totalorder %s326, %s329
    %p335 = scmp.eq.s32.totalorder %s18, 0
    %p336 = por %p334, %p335
    %p337 = scmp.ne.s32.totalorder %s326, %s329
    %p338 = scmp.eq.s32.totalorder %s23, 3
    %p339 = por %p337, %p338
    %p340 = scmp.ne.s32.totalorder %s329, %s330
    %p341 = scmp.eq.s32.totalorder %s23, 0
    %p342 = por %p340, %p341
    %p343 = scmp.ne.s32.totalorder %s329, %s330
    %p344 = scmp.eq.s32.totalorder %s24, 3
    %p345 = por %p343, %p344
    %p347 = scmp.ne.s32.totalorder %s330, %s346
    %p348 = scmp.eq.s32.totalorder %s24, 0
    %p349 = por %p347, %p348
    %s350 = ssub.s32 %s25, %s37
    %p351 = scmp.eq.s32.totalorder %s350, 0
    %s353 = sadd.s32 %s352, 1
    %s354 = scalar_select %p351, %s352, %s353
    %p357 = pneg %p351
    %p358 = scmp.eq.s32.totalorder %s18, 3
    %p359 = por %p357, %p358
    %p360 = scmp.ne.s32.totalorder %s352, %s355
    %p361 = scmp.eq.s32.totalorder %s18, 0
    %p362 = por %p360, %p361
    %p363 = scmp.ne.s32.totalorder %s352, %s355
    %p364 = scmp.eq.s32.totalorder %s23, 3
    %p365 = por %p363, %p364
    %p366 = scmp.ne.s32.totalorder %s355, %s356
    %p367 = scmp.eq.s32.totalorder %s23, 0
    %p368 = por %p366, %p367
    %p369 = scmp.ne.s32.totalorder %s355, %s356
    %p370 = scmp.eq.s32.totalorder %s24, 3
    %p371 = por %p369, %p370
    %p373 = scmp.ne.s32.totalorder %s356, %s372
    %p374 = scmp.eq.s32.totalorder %s24, 0
    %p375 = por %p373, %p374
    %p376 = scmp.le.s32.totalorder 1, %s18
    %p377 = scmp.lt.s32.totalorder %s18, 5
    %p378 = pnand %p376, %p377
    %p379 = pneg %p378
    // Predicated region
    $region9: #{_decoder_apply.2} parent=5 // pred_check
      _
    $region10: #{_decoder_apply.2} parent=5 // pred_check_branch
      %381 = sbr.rel (%p378) target = $region12
    $region11: #{_decoder_apply.2} parent=5 // pred_region
      %s382 = ssub.s32 %s18, 1
    $region12: #{_decoder_apply.2} parent=5 // pred_fallthru
      _
    %p383 = scmp.lt.s32.totalorder %s18, 4
    // Predicated region
    $region13: #{_decoder_apply.2} parent=5 // pred_check
      %p384 = pneg %p383
    $region14: #{_decoder_apply.2} parent=5 // pred_check_branch
      %386 = sbr.rel (%p384) target = $region16
    $region15: #{_decoder_apply.2} parent=5 // pred_region
      // Predicated region
      $region17: #{_decoder_apply.2} parent=15 // pred_check
        %p387 = pneg %p50
      $region18: #{_decoder_apply.2} parent=15 // pred_check_branch
        %389 = sbr.rel (%p387) target = $region20
      $region19: #{_decoder_apply.2} parent=15 // pred_region
        %p390 = scmp.lt.s32.totalorder %s25, 1
        %s391 = scalar_select %p390, %s25, 1
        %s392 = smul.addr %s391, 8
        %s393 = scalar_lea.vmem %s0, %s392
      $region20: #{_decoder_apply.2} parent=15 // pred_fallthru
        _
      // Predicated region
      $region21: #{_decoder_apply.2} parent=15 // pred_check
        %p394 = pneg %p76
      $region22: #{_decoder_apply.2} parent=15 // pred_check_branch
        %396 = sbr.rel (%p394) target = $region24
      $region23: #{_decoder_apply.2} parent=15 // pred_region
        %p397 = scmp.lt.s32.totalorder %s25, 1
        %s398 = scalar_select %p397, %s25, 1
        %s399 = smul.addr %s398, 4
        %s400 = scalar_lea.vmem %s1, %s399
      $region24: #{_decoder_apply.2} parent=15 // pred_fallthru
        _
      // Predicated region
      $region25: #{_decoder_apply.2} parent=15 // pred_check
        %p401 = pneg %p102
      $region26: #{_decoder_apply.2} parent=15 // pred_check_branch
        %403 = sbr.rel (%p401) target = $region28
      $region27: #{_decoder_apply.2} parent=15 // pred_region
        %p404 = scmp.lt.s32.totalorder %s25, 1
        %s405 = scalar_select %p404, %s25, 1
        %s406 = smul.addr %s405, 8
        %s407 = scalar_lea.vmem %s2, %s406
      $region28: #{_decoder_apply.2} parent=15 // pred_fallthru
        _
      // Predicated region
      $region29: #{_decoder_apply.2} parent=15 // pred_check
        %p408 = pneg %p128
      $region30: #{_decoder_apply.2} parent=15 // pred_check_branch
        %410 = sbr.rel (%p408) target = $region32
      $region31: #{_decoder_apply.2} parent=15 // pred_region
        %p411 = scmp.lt.s32.totalorder %s25, 1
        %s412 = scalar_select %p411, %s25, 1
        %s413 = scalar_lea.vmem %s3, %s412
      $region32: #{_decoder_apply.2} parent=15 // pred_fallthru
        _
      // Predicated region
      $region33: #{_decoder_apply.2} parent=15 // pred_check
        %p414 = pneg %p154
      $region34: #{_decoder_apply.2} parent=15 // pred_check_branch
        %416 = sbr.rel (%p414) target = $region36
      $region35: #{_decoder_apply.2} parent=15 // pred_region
        %p417 = scmp.lt.s32.totalorder %s26, 1
        %s418 = scalar_select %p417, %s26, 1
        %s419 = smul.addr %s418, 12
        %s420 = smul.addr %s419, 4
        %s421 = scalar_lea.vmem %s4, %s420
      $region36: #{_decoder_apply.2} parent=15 // pred_fallthru
        _
      // Predicated region
      $region37: #{_decoder_apply.2} parent=15 // pred_check
        %p422 = pneg %p180
      $region38: #{_decoder_apply.2} parent=15 // pred_check_branch
        %424 = sbr.rel (%p422) target = $region40
      $region39: #{_decoder_apply.2} parent=15 // pred_region
        %p425 = scmp.lt.s32.totalorder %s26, 1
        %s426 = scalar_select %p425, %s26, 1
        %s427 = smul.addr %s426, 16
        %s428 = smul.addr %s427, 4
        %s429 = scalar_lea.vmem %s5, %s428
      $region40: #{_decoder_apply.2} parent=15 // pred_fallthru
        _
      // Predicated region
      $region41: #{_decoder_apply.2} parent=15 // pred_check
        %p430 = pneg %p206
      $region42: #{_decoder_apply.2} parent=15 // pred_check_branch
        %432 = sbr.rel (%p430) target = $region44
      $region43: #{_decoder_apply.2} parent=15 // pred_region
        %p433 = scmp.lt.s32.totalorder %s26, 1
        %s434 = scalar_select %p433, %s26, 1
        %s435 = smul.addr %s434, 2
        %s436 = scalar_lea.vmem %s6, %s435
      $region44: #{_decoder_apply.2} parent=15 // pred_fallthru
        _
      // Predicated region
      $region45: #{_decoder_apply.2} parent=15 // pred_check
        %p437 = pneg %p232
      $region46: #{_decoder_apply.2} parent=15 // pred_check_branch
        %439 = sbr.rel (%p437) target = $region48
      $region47: #{_decoder_apply.2} parent=15 // pred_region
        %p440 = scmp.lt.s32.totalorder %s26, 1
        %s441 = scalar_select %p440, %s26, 1
        %s442 = smul.addr %s441, 6
        %s443 = scalar_lea.vmem %s7, %s442
      $region48: #{_decoder_apply.2} parent=15 // pred_fallthru
        _
      // Predicated region
      $region49: #{_decoder_apply.2} parent=15 // pred_check
        %p444 = pneg %p258
      $region50: #{_decoder_apply.2} parent=15 // pred_check_branch
        %446 = sbr.rel (%p444) target = $region52
      $region51: #{_decoder_apply.2} parent=15 // pred_region
        %p447 = scmp.lt.s32.totalorder %s26, 1
        %s448 = scalar_select %p447, %s26, 1
        %s449 = smul.addr %s448, 16
        %s450 = smul.addr %s449, 4
        %s451 = scalar_lea.vmem %s8, %s450
      $region52: #{_decoder_apply.2} parent=15 // pred_fallthru
        _
      // Predicated region
      $region53: #{_decoder_apply.2} parent=15 // pred_check
        %p452 = pneg %p284
      $region54: #{_decoder_apply.2} parent=15 // pred_check_branch
        %454 = sbr.rel (%p452) target = $region56
      $region55: #{_decoder_apply.2} parent=15 // pred_region
        %p455 = scmp.lt.s32.totalorder %s26, 1
        %s456 = scalar_select %p455, %s26, 1
        %s457 = smul.addr %s456, 2
        %s458 = scalar_lea.vmem %s9, %s457
      $region56: #{_decoder_apply.2} parent=15 // pred_fallthru
        _
      // Predicated region
      $region57: #{_decoder_apply.2} parent=15 // pred_check
        %p459 = pneg %p310
      $region58: #{_decoder_apply.2} parent=15 // pred_check_branch
        %461 = sbr.rel (%p459) target = $region60
      $region59: #{_decoder_apply.2} parent=15 // pred_region
        %p462 = scmp.lt.s32.totalorder %s26, 1
        %s463 = scalar_select %p462, %s26, 1
        %s464 = smul.addr %s463, 32
        %s465 = smul.addr %s464, 4
        %s466 = scalar_lea.vmem %s10, %s465
      $region60: #{_decoder_apply.2} parent=15 // pred_fallthru
        _
      // Predicated region
      $region61: #{_decoder_apply.2} parent=15 // pred_check
        %p467 = pneg %p336
      $region62: #{_decoder_apply.2} parent=15 // pred_check_branch
        %469 = sbr.rel (%p467) target = $region64
      $region63: #{_decoder_apply.2} parent=15 // pred_region
        %p470 = scmp.lt.s32.totalorder %s26, 1
        %s471 = scalar_select %p470, %s26, 1
        %s472 = scalar_lea.vmem %s11, %s471
      $region64: #{_decoder_apply.2} parent=15 // pred_fallthru
        _
    $region16: #{_decoder_apply.2} parent=5 // pred_fallthru
      _
    %p473 = scmp.le.s32.totalorder 1, %s18
    %p474 = scmp.lt.s32.totalorder %s18, 5
    %p475 = pnand %p473, %p474
    %p476 = pneg %p475
    // Predicated region
    $region65: #{_decoder_apply.2} parent=5 // pred_check
      _
    $region66: #{_decoder_apply.2} parent=5 // pred_check_branch
      %478 = sbr.rel (%p475) target = $region68
    $region67: #{_decoder_apply.2} parent=5 // pred_region
      %s479 = ssub.s32 %s18, 1
      %p480 = scmp.lt.s32.totalorder %s27, 1
      %s481 = scalar_select %p480, %s27, 1
      %s482 = smul.addr %s481, 8
      %s483 = scalar_lea.vmem %s0, %s482
      %p484 = pneg %p56
      %p485 = pneg %p53
      %p486 = scmp.lt.s32.totalorder %s27, 1
      %s487 = scalar_select %p486, %s27, 1
      %s488 = smul.addr %s487, 4
      %s489 = scalar_lea.vmem %s1, %s488
      %p490 = pneg %p82
      %p491 = pneg %p79
      %p492 = scmp.lt.s32.totalorder %s27, 1
      %s493 = scalar_select %p492, %s27, 1
      %s494 = smul.addr %s493, 8
      %s495 = scalar_lea.vmem %s2, %s494
      %p496 = pneg %p108
      %p497 = pneg %p105
      %p498 = scmp.lt.s32.totalorder %s27, 1
      %s499 = scalar_select %p498, %s27, 1
      %s500 = scalar_lea.vmem %s3, %s499
      %p501 = pneg %p134
      %p502 = pneg %p131
      %p503 = scmp.lt.s32.totalorder %s28, 1
      %s504 = scalar_select %p503, %s28, 1
      %s505 = smul.addr %s504, 12
      %s506 = smul.addr %s505, 4
      %s507 = scalar_lea.vmem %s4, %s506
      %p508 = pneg %p160
      %p509 = pneg %p157
      %p510 = scmp.lt.s32.totalorder %s28, 1
      %s511 = scalar_select %p510, %s28, 1
      %s512 = smul.addr %s511, 16
      %s513 = smul.addr %s512, 4
      %s514 = scalar_lea.vmem %s5, %s513
      %p515 = pneg %p186
      %p516 = pneg %p183
      %p517 = scmp.lt.s32.totalorder %s28, 1
      %s518 = scalar_select %p517, %s28, 1
      %s519 = smul.addr %s518, 2
      %s520 = scalar_lea.vmem %s6, %s519
      %p521 = pneg %p212
      %p522 = pneg %p209
      %p523 = scmp.lt.s32.totalorder %s28, 1
      %s524 = scalar_select %p523, %s28, 1
      %s525 = smul.addr %s524, 6
      %s526 = scalar_lea.vmem %s7, %s525
      %p527 = pneg %p238
      %p528 = pneg %p235
      %p529 = scmp.lt.s32.totalorder %s28, 1
      %s530 = scalar_select %p529, %s28, 1
      %s531 = smul.addr %s530, 16
      %s532 = smul.addr %s531, 4
      %s533 = scalar_lea.vmem %s8, %s532
      %p534 = pneg %p264
      %p535 = pneg %p261
      %p536 = scmp.lt.s32.totalorder %s28, 1
      %s537 = scalar_select %p536, %s28, 1
      %s538 = smul.addr %s537, 2
      %s539 = scalar_lea.vmem %s9, %s538
      %p540 = pneg %p290
      %p541 = pneg %p287
      %p542 = scmp.lt.s32.totalorder %s28, 1
      %s543 = scalar_select %p542, %s28, 1
      %s544 = smul.addr %s543, 32
      %s545 = smul.addr %s544, 4
      %s546 = scalar_lea.vmem %s10, %s545
      %p547 = pneg %p316
      %p548 = pneg %p313
      %p549 = scmp.lt.s32.totalorder %s28, 1
      %s550 = scalar_select %p549, %s28, 1
      %s551 = scalar_lea.vmem %s11, %s550
      %p552 = pneg %p342
      %p553 = pneg %p339
      %p554 = pneg %p368
      %p555 = pneg %p365
      %p556 = scmp.lt.s32.totalorder %s27, 1
      %s557 = scalar_select %p556, %s27, 1
      %s558 = smul.addr %s557, 8
      %s559 = scalar_lea.vmem %s12, %s558
      %p560 = scmp.lt.s32.totalorder %s27, 1
      %s561 = scalar_select %p560, %s27, 1
      %s562 = smul.addr %s561, 8
      %s563 = scalar_lea.vmem %s0, %s562
      %p564 = scmp.lt.s32.totalorder %s27, 1
      %s565 = scalar_select %p564, %s27, 1
      %s566 = smul.addr %s565, 4
      %s567 = scalar_lea.vmem %s1, %s566
      %p568 = scmp.lt.s32.totalorder %s27, 1
      %s569 = scalar_select %p568, %s27, 1
      %s570 = smul.addr %s569, 8
      %s571 = scalar_lea.vmem %s2, %s570
      %p572 = scmp.lt.s32.totalorder %s27, 1
      %s573 = scalar_select %p572, %s27, 1
      %s574 = scalar_lea.vmem %s3, %s573
      %p575 = scmp.lt.s32.totalorder %s28, 1
      %s576 = scalar_select %p575, %s28, 1
      %s577 = smul.addr %s576, 12
      %s578 = smul.addr %s577, 4
      %s579 = scalar_lea.vmem %s4, %s578
      %p580 = scmp.lt.s32.totalorder %s28, 1
      %s581 = scalar_select %p580, %s28, 1
      %s582 = smul.addr %s581, 16
      %s583 = smul.addr %s582, 4
      %s584 = scalar_lea.vmem %s5, %s583
      %p585 = scmp.lt.s32.totalorder %s28, 1
      %s586 = scalar_select %p585, %s28, 1
      %s587 = smul.addr %s586, 2
      %s588 = scalar_lea.vmem %s6, %s587
      %p589 = scmp.lt.s32.totalorder %s28, 1
      %s590 = scalar_select %p589, %s28, 1
      %s591 = smul.addr %s590, 6
      %s592 = scalar_lea.vmem %s7, %s591
      %p593 = scmp.lt.s32.totalorder %s28, 1
      %s594 = scalar_select %p593, %s28, 1
      %s595 = smul.addr %s594, 16
      %s596 = smul.addr %s595, 4
      %s597 = scalar_lea.vmem %s8, %s596
      %p598 = scmp.lt.s32.totalorder %s28, 1
      %s599 = scalar_select %p598, %s28, 1
      %s600 = smul.addr %s599, 2
      %s601 = scalar_lea.vmem %s9, %s600
      %p602 = scmp.lt.s32.totalorder %s28, 1
      %s603 = scalar_select %p602, %s28, 1
      %s604 = smul.addr %s603, 32
      %s605 = smul.addr %s604, 4
      %s606 = scalar_lea.vmem %s10, %s605
      %p607 = scmp.lt.s32.totalorder %s28, 1
      %s608 = scalar_select %p607, %s28, 1
      %s609 = scalar_lea.vmem %s11, %s608
      %p610 = scmp.lt.s32.totalorder %s27, 1
      %s611 = scalar_select %p610, %s27, 1
      %s612 = smul.addr %s611, 8
      %s613 = scalar_lea.vmem %s12, %s612
      %p615 = scmp.eq.s32.totalorder %s28, 0
      // Predicated region
      $region69: #{_decoder_apply.2} parent=67 // pred_check
        %p616 = pneg %p615
      $region70: #{_decoder_apply.2} parent=67 // pred_check_branch
        %618 = sbr.rel (%p616) target = $region72
      $region71: #{_decoder_apply.2} parent=67 // pred_region
        %v619 = vld [vmem:[%s563] sm:$0xff]
        %vm620 = vcmask 523264
        %621 = vst.msk [vmem:[#allocation2] sm:$0xff] %vm620, %v619
      $region72: #{_decoder_apply.2} parent=67 // pred_fallthru
        _
      %v622 = vld [vmem:[#allocation2] sm:$0xff]
      %v623 = vpack.c.bf16 %v622, %v622
      %v624 = vld [vmem:[%s571] sm:$0xff]
      %v625 = vld [vmem:[%s579] sm:$0xf]
      %v626 = vld [vmem:[%s579 + $0x4] sm:$0xf]
      %628 = vrot.lane.b32.xlu0 %v623, 112
      %v629 = vpop.permute.xlu0 %628
      %630 = vrot.lane.b32.xlu0 %v623, 96
      %v631 = vpop.permute.xlu0 %630
      %632 = vrot.lane.b32.xlu0 %v623, 80
      %v633 = vpop.permute.xlu0 %632
      %v635 = vunpack.c.l.s4 1983009808
      %v636 = vunpack.c.0.s8 %v635
      %v637 = vlaneseq
      %v638 = vshrl.u32 %v637, 7
      %v639 = vsub.s32 %v636, %v638
      %v640 = vrot.slane %v623, %v639
      %v643 = vunpack.c.l.s4 1983009808
      %v644 = vunpack.c.0.s8 %v643
      %v645 = vlaneseq
      %v646 = vshrl.u32 %v645, 7
      %v647 = vsub.s32 %v644, %v646
      %v648 = vrot.slane %v631, %v647
      %v649 = vcombine.low %v640, %v648
      %v650 = vcombine.high %v640, %v648
      %v652 = vunpack.c.l.s4 1934713408
      %v653 = vunpack.c.0.s8 %v652
      %v654 = vlaneseq
      %v655 = vshrl.u32 %v654, 7
      %v656 = vsub.s32 %v653, %v655
      %v657 = vrot.slane %v649, %v656
      %v659 = vunpack.c.l.s4 1934713408
      %v660 = vunpack.c.0.s8 %v659
      %v661 = vlaneseq
      %v662 = vshrl.u32 %v661, 7
      %v663 = vsub.s32 %v660, %v662
      %v664 = vrot.slane %v650, %v663
      %v665 = vcombine.high %v657, 0
      %v666 = vcombine.high %v664, 0
      %v669 = vunpack.c.l.s4 1983009808
      %v670 = vunpack.c.0.s8 %v669
      %v671 = vlaneseq
      %v672 = vshrl.u32 %v671, 7
      %v673 = vsub.s32 %v670, %v672
      %v674 = vrot.slane %v629, %v673
      %v677 = vunpack.c.l.s4 1983009808
      %v678 = vunpack.c.0.s8 %v677
      %v679 = vlaneseq
      %v680 = vshrl.u32 %v679, 7
      %v681 = vsub.s32 %v678, %v680
      %v682 = vrot.slane %v633, %v681
      %v683 = vcombine.low %v674, %v682
      %v684 = vcombine.high %v674, %v682
      %v686 = vunpack.c.l.s4 1934713408
      %v687 = vunpack.c.0.s8 %v686
      %v688 = vlaneseq
      %v689 = vshrl.u32 %v688, 7
      %v690 = vsub.s32 %v687, %v689
      %v691 = vrot.slane %v683, %v690
      %v693 = vunpack.c.l.s4 1934713408
      %v694 = vunpack.c.0.s8 %v693
      %v695 = vlaneseq
      %v696 = vshrl.u32 %v695, 7
      %v697 = vsub.s32 %v694, %v696
      %v698 = vrot.slane %v684, %v697
      %v699 = vcombine.high %v691, 0
      %v700 = vcombine.high %v698, 0
      %v703 = vpack.i.b16 %v691, %v657
      %v704 = vshrl.u32 %v657, 16
      %v705 = vshrl.u32 %v691, 16
      %v706 = vpack.i.b16 %v705, %v704
      %v709 = vpack.i.b16 %v699, %v665
      %v710 = vshrl.u32 %v665, 16
      %v711 = vshrl.u32 %v699, 16
      %v712 = vpack.i.b16 %v711, %v710
      %v715 = vpack.i.b16 %v698, %v664
      %v716 = vshrl.u32 %v664, 16
      %v717 = vshrl.u32 %v698, 16
      %v718 = vpack.i.b16 %v717, %v716
      %v721 = vpack.i.b16 %v700, %v666
      %v722 = vshrl.u32 %v666, 16
      %v723 = vshrl.u32 %v700, 16
      %v724 = vpack.i.b16 %v723, %v722
      %v725 = vcombine.low %v703, %v706
      %v726 = vcombine.low %v709, %v712
      %v728 = vunpack.c.l.s4 1983009808
      %v729 = vunpack.c.0.s8 %v728
      %v730 = vlaneseq
      %v731 = vshrl.u32 %v730, 7
      %v732 = vsub.s32 %v729, %v731
      %v733 = vrot.slane %v725, %v732
      %v735 = vunpack.c.l.s4 1983009808
      %v736 = vunpack.c.0.s8 %v735
      %v737 = vlaneseq
      %v738 = vshrl.u32 %v737, 7
      %v739 = vsub.s32 %v736, %v738
      %v740 = vrot.slane %v726, %v739
      %v741 = vcombine.low %v733, %v740
      %v742 = vcombine.low %v715, %v718
      %v743 = vcombine.low %v721, %v724
      %v745 = vunpack.c.l.s4 1983009808
      %v746 = vunpack.c.0.s8 %v745
      %v747 = vlaneseq
      %v748 = vshrl.u32 %v747, 7
      %v749 = vsub.s32 %v746, %v748
      %v750 = vrot.slane %v742, %v749
      %v752 = vunpack.c.l.s4 1983009808
      %v753 = vunpack.c.0.s8 %v752
      %v754 = vlaneseq
      %v755 = vshrl.u32 %v754, 7
      %v756 = vsub.s32 %v753, %v755
      %v757 = vrot.slane %v743, %v756
      %v758 = vcombine.low %v750, %v757
      %v761 = vunpack.c.l.b16 %v625
      %v762 = vunpack.c.l.b16 %v626
      %v763 = vpack.c.b16 %v762, %v761
      %vm765 = vcmask 130048
      %v767 = vsel %vm765, %v741, 0
      %v770 = vsel %vm765, %v758, 0
      %772 = vmatprep.subr.bf16.mxu0 0
      %773 = vmatpush1.bf16.msra.mxu0 %v763
      %774 = vmatprep.subr.bf16.mxu0 0
      %775 = vmatpush1.bf16.msra.mxu0 0
      %776 = vmatprep.subr.bf16.mxu0 0
      %777 = vmatpush1.bf16.msra.mxu0 0
      %778 = vmatprep.subr.bf16.mxu0 0
      %779 = vmatpush1.bf16.msra.mxu0 0
      %780 = vmatprep.subr.bf16.mxu0 0
      %781 = vmatpush1.bf16.msra.mxu0 0
      %782 = vmatprep.subr.bf16.mxu0 0
      %783 = vmatpush1.bf16.msra.mxu0 0
      %784 = vmatprep.subr.bf16.mxu0 0
      %785 = vmatpush1.bf16.msra.mxu0 0
      %786 = vmatprep.subr.bf16.mxu0 0
      %787 = vmatpush1.bf16.msra.mxu0 0
      %788 = vmatprep.subr.bf16.mxu0 0
      %789 = vmatpush1.bf16.msra.mxu0 0
      %790 = vmatprep.subr.bf16.mxu0 0
      %791 = vmatpush1.bf16.msra.mxu0 0
      %792 = vmatprep.subr.bf16.mxu0 0
      %793 = vmatpush1.bf16.msra.mxu0 0
      %794 = vmatprep.subr.bf16.mxu0 0
      %795 = vmatpush1.bf16.msra.mxu0 0
      %796 = vmatprep.subr.bf16.mxu0 0
      %797 = vmatpush1.bf16.msra.mxu0 0
      %798 = vmatprep.subr.bf16.mxu0 0
      %799 = vmatpush1.bf16.msra.mxu0 0
      %800 = vmatprep.subr.bf16.mxu0 0
      %801 = vmatpush1.bf16.msra.mxu0 0
      %802 = vmatprep.subr.bf16.mxu0 0
      %803 = vmatpush1.bf16.msra.mxu0 0
      %804 = vmatprep.mubr.bf16.mxu0 0
      %805 = vmatmul.mubr.bf16.gmra.mrb[0].mxu0 %v767
      %v806 = vpop.f32.mrb[0].mxu0
      %v807 = vadd.f32 0.0, %v806
      %v808 = vpop.f32.mrb[0].mxu0
      %v809 = vpop.f32.mrb[0].mxu0
      %v810 = vadd.f32 0.0, %v809
      %v811 = vpop.f32.mrb[0].mxu0
      %812 = vmatprep.mubr.bf16.mxu0 0
      %813 = vmatmul.mubr.bf16.gmra.mrb[0].mxu0 %v770
      %v814 = vpop.f32.mrb[0].mxu0
      %v815 = vadd.f32 0.0, %v814
      %v816 = vpop.f32.mrb[0].mxu0
      %v817 = vpop.f32.mrb[0].mxu0
      %v818 = vadd.f32 0.0, %v817
      %v819 = vpop.f32.mrb[0].mxu0
      %820 = vdwg.mxu0
      %v825 = vcombine.high %v807, %v807
      %v826 = vcombine.high %v810, %v810
      %v827 = vcombine.high %v815, %v815
      %v828 = vcombine.high %v818, %v818
      %v833 = vpack.c.bf16 %v807, %v807
      %v834 = vpack.c.bf16 %v825, %v825
      %v835 = vpack.c.bf16 %v810, %v810
      %v836 = vpack.c.bf16 %v826, %v826
      %v837 = vpack.c.bf16 %v815, %v815
      %v838 = vpack.c.bf16 %v827, %v827
      %v839 = vpack.c.bf16 %v818, %v818
      %v840 = vpack.c.bf16 %v828, %v828
      %s841 = scalar_lea.vmem %s579, 8
      %v842 = vld [vmem:[%s841] sm:$0xf]
      %v843 = vld [vmem:[%s841 + $0x4] sm:$0xf]
      %v846 = vunpack.c.l.b16 %v842
      %v847 = vunpack.c.l.b16 %v843
      %v848 = vpack.c.b16 %v847, %v846
      %850 = vmatprep.subr.bf16.mxu0 0
      %851 = vmatpush1.bf16.msra.mxu0 %v848
      %852 = vmatprep.subr.bf16.mxu0 0
      %853 = vmatpush1.bf16.msra.mxu0 0
      %854 = vmatprep.subr.bf16.mxu0 0
      %855 = vmatpush1.bf16.msra.mxu0 0
      %856 = vmatprep.subr.bf16.mxu0 0
      %857 = vmatpush1.bf16.msra.mxu0 0
      %858 = vmatprep.subr.bf16.mxu0 0
      %859 = vmatpush1.bf16.msra.mxu0 0
      %860 = vmatprep.subr.bf16.mxu0 0
      %861 = vmatpush1.bf16.msra.mxu0 0
      %862 = vmatprep.subr.bf16.mxu0 0
      %863 = vmatpush1.bf16.msra.mxu0 0
      %864 = vmatprep.subr.bf16.mxu0 0
      %865 = vmatpush1.bf16.msra.mxu0 0
      %866 = vmatprep.subr.bf16.mxu0 0
      %867 = vmatpush1.bf16.msra.mxu0 0
      %868 = vmatprep.subr.bf16.mxu0 0
      %869 = vmatpush1.bf16.msra.mxu0 0
      %870 = vmatprep.subr.bf16.mxu0 0
      %871 = vmatpush1.bf16.msra.mxu0 0
      %872 = vmatprep.subr.bf16.mxu0 0
      %873 = vmatpush1.bf16.msra.mxu0 0
      %874 = vmatprep.subr.bf16.mxu0 0
      %875 = vmatpush1.bf16.msra.mxu0 0
      %876 = vmatprep.subr.bf16.mxu0 0
      %877 = vmatpush1.bf16.msra.mxu0 0
      %878 = vmatprep.subr.bf16.mxu0 0
      %879 = vmatpush1.bf16.msra.mxu0 0
      %880 = vmatprep.subr.bf16.mxu0 0
      %881 = vmatpush1.bf16.msra.mxu0 0
      %882 = vmatprep.mubr.bf16.mxu0 0
      %883 = vmatmul.mubr.bf16.gmra.mrb[0].mxu0 %v767
      %v884 = vpop.f32.mrb[0].mxu0
      %v885 = vadd.f32 0.0, %v884
      %v886 = vpop.f32.mrb[0].mxu0
      %v887 = vpop.f32.mrb[0].mxu0
      %v888 = vadd.f32 0.0, %v887
      %v889 = vpop.f32.mrb[0].mxu0
      %890 = vmatprep.mubr.bf16.mxu0 0
      %891 = vmatmul.mubr.bf16.gmra.mrb[0].mxu0 %v770
      %v892 = vpop.f32.mrb[0].mxu0
      %v893 = vadd.f32 0.0, %v892
      %v894 = vpop.f32.mrb[0].mxu0
      %v895 = vpop.f32.mrb[0].mxu0
      %v896 = vadd.f32 0.0, %v895
      %v897 = vpop.f32.mrb[0].mxu0
      %898 = vdwg.mxu0
      %v903 = vcombine.high %v885, %v885
      %v904 = vcombine.high %v888, %v888
      %v905 = vcombine.high %v893, %v893
      %v906 = vcombine.high %v896, %v896
      %v911 = vpack.c.bf16 %v885, %v885
      %v912 = vpack.c.bf16 %v903, %v903
      %v913 = vpack.c.bf16 %v888, %v888
      %v914 = vpack.c.bf16 %v904, %v904
      %v915 = vpack.c.bf16 %v893, %v893
      %v916 = vpack.c.bf16 %v905, %v905
      %v917 = vpack.c.bf16 %v896, %v896
      %v918 = vpack.c.bf16 %v906, %v906
      %s919 = scalar_lea.vmem %s579, 16
      %v920 = vld [vmem:[%s919] sm:$0xf]
      %v921 = vld [vmem:[%s919 + $0x4] sm:$0xf]
      %v924 = vunpack.c.l.b16 %v920
      %v925 = vunpack.c.l.b16 %v921
      %v926 = vpack.c.b16 %v925, %v924
      %928 = vmatprep.subr.bf16.mxu0 0
      %929 = vmatpush1.bf16.msra.mxu0 %v926
      %930 = vmatprep.subr.bf16.mxu0 0
      %931 = vmatpush1.bf16.msra.mxu0 0
      %932 = vmatprep.subr.bf16.mxu0 0
      %933 = vmatpush1.bf16.msra.mxu0 0
      %934 = vmatprep.subr.bf16.mxu0 0
      %935 = vmatpush1.bf16.msra.mxu0 0
      %936 = vmatprep.subr.bf16.mxu0 0
      %937 = vmatpush1.bf16.msra.mxu0 0
      %938 = vmatprep.subr.bf16.mxu0 0
      %939 = vmatpush1.bf16.msra.mxu0 0
      %940 = vmatprep.subr.bf16.mxu0 0
      %941 = vmatpush1.bf16.msra.mxu0 0
      %942 = vmatprep.subr.bf16.mxu0 0
      %943 = vmatpush1.bf16.msra.mxu0 0
      %944 = vmatprep.subr.bf16.mxu0 0
      %945 = vmatpush1.bf16.msra.mxu0 0
      %946 = vmatprep.subr.bf16.mxu0 0
      %947 = vmatpush1.bf16.msra.mxu0 0
      %948 = vmatprep.subr.bf16.mxu0 0
      %949 = vmatpush1.bf16.msra.mxu0 0
      %950 = vmatprep.subr.bf16.mxu0 0
      %951 = vmatpush1.bf16.msra.mxu0 0
      %952 = vmatprep.subr.bf16.mxu0 0
      %953 = vmatpush1.bf16.msra.mxu0 0
      %954 = vmatprep.subr.bf16.mxu0 0
      %955 = vmatpush1.bf16.msra.mxu0 0
      %956 = vmatprep.subr.bf16.mxu0 0
      %957 = vmatpush1.bf16.msra.mxu0 0
      %958 = vmatprep.subr.bf16.mxu0 0
      %959 = vmatpush1.bf16.msra.mxu0 0
      %960 = vmatprep.mubr.bf16.mxu0 0
      %961 = vmatmul.mubr.bf16.gmra.mrb[0].mxu0 %v767
      %v962 = vpop.f32.mrb[0].mxu0
      %v963 = vadd.f32 0.0, %v962
      %v964 = vpop.f32.mrb[0].mxu0
      %v965 = vpop.f32.mrb[0].mxu0
      %v966 = vadd.f32 0.0, %v965
      %v967 = vpop.f32.mrb[0].mxu0
      %968 = vmatprep.mubr.bf16.mxu0 0
      %969 = vmatmul.mubr.bf16.gmra.mrb[0].mxu0 %v770
      %v970 = vpop.f32.mrb[0].mxu0
      %v971 = vadd.f32 0.0, %v970
      %v972 = vpop.f32.mrb[0].mxu0
      %v973 = vpop.f32.mrb[0].mxu0
      %v974 = vadd.f32 0.0, %v973
      %v975 = vpop.f32.mrb[0].mxu0
      %976 = vdwg.mxu0
      %v981 = vcombine.high %v963, %v963
      %v982 = vcombine.high %v966, %v966
      %v983 = vcombine.high %v971, %v971
      %v984 = vcombine.high %v974, %v974
      %v989 = vpack.c.bf16 %v963, %v963
      %v990 = vpack.c.bf16 %v981, %v981
      %v991 = vpack.c.bf16 %v966, %v966
      %v992 = vpack.c.bf16 %v982, %v982
      %v993 = vpack.c.bf16 %v971, %v971
      %v994 = vpack.c.bf16 %v983, %v983
      %v995 = vpack.c.bf16 %v974, %v974
      %v996 = vpack.c.bf16 %v984, %v984
      %v997 = vcombine.low %v833, %v837
      %v999 = vunpack.c.l.s4 1983009808
      %v1000 = vunpack.c.0.s8 %v999
      %v1001 = vlaneseq
      %v1002 = vshrl.u32 %v1001, 7
      %v1003 = vsub.s32 %v1000, %v1002
      %v1004 = vrot.slane %v997, %v1003
      %v1005 = vcombine.low %v835, %v839
      %v1007 = vunpack.c.l.s4 1983009808
      %v1008 = vunpack.c.0.s8 %v1007
      %v1009 = vlaneseq
      %v1010 = vshrl.u32 %v1009, 7
      %v1011 = vsub.s32 %v1008, %v1010
      %v1012 = vrot.slane %v1005, %v1011
      %v1013 = vcombine.low %v1004, %v1012
      %v1015 = vunpack.c.l.s4 1934713408
      %v1016 = vunpack.c.0.s8 %v1015
      %v1017 = vlaneseq
      %v1018 = vshrl.u32 %v1017, 7
      %v1019 = vsub.s32 %v1016, %v1018
      %v1020 = vrot.slane %v1013, %v1019
      %v1021 = vcombine.high %v1020, 0
      %v1022 = vcombine.low %v834, %v838
      %v1024 = vunpack.c.l.s4 1983009808
      %v1025 = vunpack.c.0.s8 %v1024
      %v1026 = vlaneseq
      %v1027 = vshrl.u32 %v1026, 7
      %v1028 = vsub.s32 %v1025, %v1027
      %v1029 = vrot.slane %v1022, %v1028
      %v1030 = vcombine.low %v836, %v840
      %v1032 = vunpack.c.l.s4 1983009808
      %v1033 = vunpack.c.0.s8 %v1032
      %v1034 = vlaneseq
      %v1035 = vshrl.u32 %v1034, 7
      %v1036 = vsub.s32 %v1033, %v1035
      %v1037 = vrot.slane %v1030, %v1036
      %v1038 = vcombine.low %v1029, %v1037
      %v1040 = vunpack.c.l.s4 1934713408
      %v1041 = vunpack.c.0.s8 %v1040
      %v1042 = vlaneseq
      %v1043 = vshrl.u32 %v1042, 7
      %v1044 = vsub.s32 %v1041, %v1043
      %v1045 = vrot.slane %v1038, %v1044
      %v1046 = vcombine.high %v1045, 0
      %v1049 = vpack.i.b16 %v1045, %v1020
      %v1050 = vshrl.u32 %v1020, 16
      %v1051 = vshrl.u32 %v1045, 16
      %v1052 = vpack.i.b16 %v1051, %v1050
      %v1055 = vpack.i.b16 %v1046, %v1021
      %v1056 = vshrl.u32 %v1021, 16
      %v1057 = vshrl.u32 %v1046, 16
      %v1058 = vpack.i.b16 %v1057, %v1056
      %1059 = vxpose.xlu0.c.b16.start [1/8] %v911, 128
      %1060 = vxpose.xlu0.c.b16.cont [2/8] 0, 128
      %1061 = vxpose.xlu0.c.b16.cont [3/8] 0, 128
      %1062 = vxpose.xlu0.c.b16.cont [4/8] 0, 128
      %1063 = vxpose.xlu0.c.b16.cont [5/8] 0, 128
      %1064 = vxpose.xlu0.c.b16.cont [6/8] 0, 128
      %1065 = vxpose.xlu0.c.b16.cont [7/8] 0, 128
      %1066 = vxpose.xlu0.c.b16.end [8/8] 0, 128
      %v1067 = vpop.trf.xlu0
      %v1068 = vpop.trf.xlu0
      %v1069 = vpop.trf.xlu0
      %v1070 = vpop.trf.xlu0
      %v1071 = vpop.trf.xlu0
      %v1072 = vpop.trf.xlu0
      %v1073 = vpop.trf.xlu0
      %v1074 = vpop.trf.xlu0
      %1075 = vxpose.xlu0.c.b16.start [1/8] %v912, 128
      %1076 = vxpose.xlu0.c.b16.cont [2/8] 0, 128
      %1077 = vxpose.xlu0.c.b16.cont [3/8] 0, 128
      %1078 = vxpose.xlu0.c.b16.cont [4/8] 0, 128
      %1079 = vxpose.xlu0.c.b16.cont [5/8] 0, 128
      %1080 = vxpose.xlu0.c.b16.cont [6/8] 0, 128
      %1081 = vxpose.xlu0.c.b16.cont [7/8] 0, 128
      %1082 = vxpose.xlu0.c.b16.end [8/8] 0, 128
      %v1083 = vpop.trf.xlu0
      %v1084 = vpop.trf.xlu0
      %v1085 = vpop.trf.xlu0
      %v1086 = vpop.trf.xlu0
      %v1087 = vpop.trf.xlu0
      %v1088 = vpop.trf.xlu0
      %v1089 = vpop.trf.xlu0
      %v1090 = vpop.trf.xlu0
      %1091 = vxpose.xlu0.c.b16.start [1/8] %v913, 128
      %1092 = vxpose.xlu0.c.b16.cont [2/8] 0, 128
      %1093 = vxpose.xlu0.c.b16.cont [3/8] 0, 128
      %1094 = vxpose.xlu0.c.b16.cont [4/8] 0, 128
      %1095 = vxpose.xlu0.c.b16.cont [5/8] 0, 128
      %1096 = vxpose.xlu0.c.b16.cont [6/8] 0, 128
      %1097 = vxpose.xlu0.c.b16.cont [7/8] 0, 128
      %1098 = vxpose.xlu0.c.b16.end [8/8] 0, 128
      %v1099 = vpop.trf.xlu0
      %v1100 = vpop.trf.xlu0
      %v1101 = vpop.trf.xlu0
      %v1102 = vpop.trf.xlu0
      %v1103 = vpop.trf.xlu0
      %v1104 = vpop.trf.xlu0
      %v1105 = vpop.trf.xlu0
      %v1106 = vpop.trf.xlu0
      %1107 = vxpose.xlu0.c.b16.start [1/8] %v914, 128
      %1108 = vxpose.xlu0.c.b16.cont [2/8] 0, 128
      %1109 = vxpose.xlu0.c.b16.cont [3/8] 0, 128
      %1110 = vxpose.xlu0.c.b16.cont [4/8] 0, 128
      %1111 = vxpose.xlu0.c.b16.cont [5/8] 0, 128
      %1112 = vxpose.xlu0.c.b16.cont [6/8] 0, 128
      %1113 = vxpose.xlu0.c.b16.cont [7/8] 0, 128
      %1114 = vxpose.xlu0.c.b16.end [8/8] 0, 128
      %v1115 = vpop.trf.xlu0
      %v1116 = vpop.trf.xlu0
      %v1117 = vpop.trf.xlu0
      %v1118 = vpop.trf.xlu0
      %v1119 = vpop.trf.xlu0
      %v1120 = vpop.trf.xlu0
      %v1121 = vpop.trf.xlu0
      %v1122 = vpop.trf.xlu0
      %1123 = vxpose.xlu0.c.b16.start [1/8] %v915, 128
      %1124 = vxpose.xlu0.c.b16.cont [2/8] 0, 128
      %1125 = vxpose.xlu0.c.b16.cont [3/8] 0, 128
      %1126 = vxpose.xlu0.c.b16.cont [4/8] 0, 128
      %1127 = vxpose.xlu0.c.b16.cont [5/8] 0, 128
      %1128 = vxpose.xlu0.c.b16.cont [6/8] 0, 128
      %1129 = vxpose.xlu0.c.b16.cont [7/8] 0, 128
      %1130 = vxpose.xlu0.c.b16.end [8/8] 0, 128
      %v1131 = vpop.trf.xlu0
      %v1132 = vpop.trf.xlu0
      %v1133 = vpop.trf.xlu0
      %v1134 = vpop.trf.xlu0
      %v1135 = vpop.trf.xlu0
      %v1136 = vpop.trf.xlu0
      %v1137 = vpop.trf.xlu0
      %v1138 = vpop.trf.xlu0
      %1139 = vxpose.xlu0.c.b16.start [1/8] %v916, 128
      %1140 = vxpose.xlu0.c.b16.cont [2/8] 0, 128
      %1141 = vxpose.xlu0.c.b16.cont [3/8] 0, 128
      %1142 = vxpose.xlu0.c.b16.cont [4/8] 0, 128
      %1143 = vxpose.xlu0.c.b16.cont [5/8] 0, 128
      %1144 = vxpose.xlu0.c.b16.cont [6/8] 0, 128
      %1145 = vxpose.xlu0.c.b16.cont [7/8] 0, 128
      %1146 = vxpose.xlu0.c.b16.end [8/8] 0, 128
      %v1147 = vpop.trf.xlu0
      %v1148 = vpop.trf.xlu0
      %v1149 = vpop.trf.xlu0
      %v1150 = vpop.trf.xlu0
      %v1151 = vpop.trf.xlu0
      %v1152 = vpop.trf.xlu0
      %v1153 = vpop.trf.xlu0
      %v1154 = vpop.trf.xlu0
      %1155 = vxpose.xlu0.c.b16.start [1/8] %v917, 128
      %1156 = vxpose.xlu0.c.b16.cont [2/8] 0, 128
      %1157 = vxpose.xlu0.c.b16.cont [3/8] 0, 128
      %1158 = vxpose.xlu0.c.b16.cont [4/8] 0, 128
      %1159 = vxpose.xlu0.c.b16.cont [5/8] 0, 128
      %1160 = vxpose.xlu0.c.b16.cont [6/8] 0, 128
      %1161 = vxpose.xlu0.c.b16.cont [7/8] 0, 128
      %1162 = vxpose.xlu0.c.b16.end [8/8] 0, 128
      %v1163 = vpop.trf.xlu0
      %v1164 = vpop.trf.xlu0
      %v1165 = vpop.trf.xlu0
      %v1166 = vpop.trf.xlu0
      %v1167 = vpop.trf.xlu0
      %v1168 = vpop.trf.xlu0
      %v1169 = vpop.trf.xlu0
      %v1170 = vpop.trf.xlu0
      %1171 = vxpose.xlu0.c.b16.start [1/8] %v918, 128
      %1172 = vxpose.xlu0.c.b16.cont [2/8] 0, 128
      %1173 = vxpose.xlu0.c.b16.cont [3/8] 0, 128
      %1174 = vxpose.xlu0.c.b16.cont [4/8] 0, 128
      %1175 = vxpose.xlu0.c.b16.cont [5/8] 0, 128
      %1176 = vxpose.xlu0.c.b16.cont [6/8] 0, 128
      %1177 = vxpose.xlu0.c.b16.cont [7/8] 0, 128
      %1178 = vxpose.xlu0.c.b16.end [8/8] 0, 128
      %v1179 = vpop.trf.xlu0
      %v1180 = vpop.trf.xlu0
      %v1181 = vpop.trf.xlu0
      %v1182 = vpop.trf.xlu0
      %v1183 = vpop.trf.xlu0
      %v1184 = vpop.trf.xlu0
      %v1185 = vpop.trf.xlu0
      %v1186 = vpop.trf.xlu0
      %v1189 = vpack.i.b16 %v1083, %v1067
      %v1191 = vshrl.u32 %v1067, 16
      %v1192 = vshrl.u32 %v1083, 16
      %v1193 = vpack.i.b16 %v1192, %v1191
      %v1197 = vpack.i.b16 %v1115, %v1099
      %v1199 = vshrl.u32 %v1099, 16
      %v1200 = vshrl.u32 %v1115, 16
      %v1201 = vpack.i.b16 %v1200, %v1199
      %v1205 = vpack.i.b16 %v1147, %v1131
      %v1207 = vshrl.u32 %v1131, 16
      %v1208 = vshrl.u32 %v1147, 16
      %v1209 = vpack.i.b16 %v1208, %v1207
      %v1213 = vpack.i.b16 %v1179, %v1163
      %v1215 = vshrl.u32 %v1163, 16
      %v1216 = vshrl.u32 %v1179, 16
      %v1217 = vpack.i.b16 %v1216, %v1215
      %v1219 = vcombine.low %v1189, %v1205
      %v1220 = vcombine.high %v1189, %v1205
      %v1222 = vunpack.c.l.s4 1983009808
      %v1223 = vunpack.c.0.s8 %v1222
      %v1224 = vlaneseq
      %v1225 = vshrl.u32 %v1224, 7
      %v1226 = vsub.s32 %v1223, %v1225
      %v1227 = vrot.slane %v1219, %v1226
      %v1229 = vunpack.c.l.s4 1983009808
      %v1230 = vunpack.c.0.s8 %v1229
      %v1231 = vlaneseq
      %v1232 = vshrl.u32 %v1231, 7
      %v1233 = vsub.s32 %v1230, %v1232
      %v1234 = vrot.slane %v1220, %v1233
      %v1235 = vcombine.low %v1197, %v1213
      %v1236 = vcombine.high %v1197, %v1213
      %v1238 = vunpack.c.l.s4 1983009808
      %v1239 = vunpack.c.0.s8 %v1238
      %v1240 = vlaneseq
      %v1241 = vshrl.u32 %v1240, 7
      %v1242 = vsub.s32 %v1239, %v1241
      %v1243 = vrot.slane %v1235, %v1242
      %v1245 = vunpack.c.l.s4 1983009808
      %v1246 = vunpack.c.0.s8 %v1245
      %v1247 = vlaneseq
      %v1248 = vshrl.u32 %v1247, 7
      %v1249 = vsub.s32 %v1246, %v1248
      %v1250 = vrot.slane %v1236, %v1249
      %v1251 = vcombine.low %v1227, %v1243
      %v1252 = vcombine.high %v1227, %v1243
      %v1254 = vunpack.c.l.s4 1934713408
      %v1255 = vunpack.c.0.s8 %v1254
      %v1256 = vlaneseq
      %v1257 = vshrl.u32 %v1256, 7
      %v1258 = vsub.s32 %v1255, %v1257
      %v1259 = vrot.slane %v1251, %v1258
      %v1261 = vunpack.c.l.s4 1934713408
      %v1262 = vunpack.c.0.s8 %v1261
      %v1263 = vlaneseq
      %v1264 = vshrl.u32 %v1263, 7
      %v1265 = vsub.s32 %v1262, %v1264
      %v1266 = vrot.slane %v1252, %v1265
      %v1267 = vcombine.low %v1234, %v1250
      %v1268 = vcombine.high %v1234, %v1250
      %v1270 = vunpack.c.l.s4 1934713408
      %v1271 = vunpack.c.0.s8 %v1270
      %v1272 = vlaneseq
      %v1273 = vshrl.u32 %v1272, 7
      %v1274 = vsub.s32 %v1271, %v1273
      %v1275 = vrot.slane %v1267, %v1274
      %v1277 = vunpack.c.l.s4 1934713408
      %v1278 = vunpack.c.0.s8 %v1277
      %v1279 = vlaneseq
      %v1280 = vshrl.u32 %v1279, 7
      %v1281 = vsub.s32 %v1278, %v1280
      %v1282 = vrot.slane %v1268, %v1281
      %v1283 = vcombine.high %v1259, 0
      %v1284 = vcombine.high %v1266, 0
      %v1285 = vcombine.high %v1275, 0
      %v1286 = vcombine.high %v1282, 0
      %v1287 = vcombine.low %v1193, %v1209
      %v1288 = vcombine.high %v1193, %v1209
      %v1290 = vunpack.c.l.s4 1983009808
      %v1291 = vunpack.c.0.s8 %v1290
      %v1292 = vlaneseq
      %v1293 = vshrl.u32 %v1292, 7
      %v1294 = vsub.s32 %v1291, %v1293
      %v1295 = vrot.slane %v1287, %v1294
      %v1297 = vunpack.c.l.s4 1983009808
      %v1298 = vunpack.c.0.s8 %v1297
      %v1299 = vlaneseq
      %v1300 = vshrl.u32 %v1299, 7
      %v1301 = vsub.s32 %v1298, %v1300
      %v1302 = vrot.slane %v1288, %v1301
      %v1303 = vcombine.low %v1201, %v1217
      %v1304 = vcombine.high %v1201, %v1217
      %v1306 = vunpack.c.l.s4 1983009808
      %v1307 = vunpack.c.0.s8 %v1306
      %v1308 = vlaneseq
      %v1309 = vshrl.u32 %v1308, 7
      %v1310 = vsub.s32 %v1307, %v1309
      %v1311 = vrot.slane %v1303, %v1310
      %v1313 = vunpack.c.l.s4 1983009808
      %v1314 = vunpack.c.0.s8 %v1313
      %v1315 = vlaneseq
      %v1316 = vshrl.u32 %v1315, 7
      %v1317 = vsub.s32 %v1314, %v1316
      %v1318 = vrot.slane %v1304, %v1317
      %v1319 = vcombine.low %v1295, %v1311
      %v1320 = vcombine.high %v1295, %v1311
      %v1322 = vunpack.c.l.s4 1934713408
      %v1323 = vunpack.c.0.s8 %v1322
      %v1324 = vlaneseq
      %v1325 = vshrl.u32 %v1324, 7
      %v1326 = vsub.s32 %v1323, %v1325
      %v1327 = vrot.slane %v1319, %v1326
      %v1329 = vunpack.c.l.s4 1934713408
      %v1330 = vunpack.c.0.s8 %v1329
      %v1331 = vlaneseq
      %v1332 = vshrl.u32 %v1331, 7
      %v1333 = vsub.s32 %v1330, %v1332
      %v1334 = vrot.slane %v1320, %v1333
      %v1335 = vcombine.low %v1302, %v1318
      %v1336 = vcombine.high %v1302, %v1318
      %v1338 = vunpack.c.l.s4 1934713408
      %v1339 = vunpack.c.0.s8 %v1338
      %v1340 = vlaneseq
      %v1341 = vshrl.u32 %v1340, 7
      %v1342 = vsub.s32 %v1339, %v1341
      %v1343 = vrot.slane %v1335, %v1342
      %v1345 = vunpack.c.l.s4 1934713408
      %v1346 = vunpack.c.0.s8 %v1345
      %v1347 = vlaneseq
      %v1348 = vshrl.u32 %v1347, 7
      %v1349 = vsub.s32 %v1346, %v1348
      %v1350 = vrot.slane %v1336, %v1349
      %v1351 = vcombine.high %v1327, 0
      %v1352 = vcombine.high %v1334, 0
      %v1353 = vcombine.high %v1343, 0
      %v1354 = vcombine.high %v1350, 0
      %1355 = vxpose.xlu0.c.b16.start [1/8] %v1259, 128
      %1356 = vxpose.xlu0.c.b16.cont [2/8] 0, 128
      %1357 = vxpose.xlu0.c.b16.cont [3/8] 0, 128
      %1358 = vxpose.xlu0.c.b16.cont [4/8] 0, 128
      %1359 = vxpose.xlu0.c.b16.cont [5/8] 0, 128
      %1360 = vxpose.xlu0.c.b16.cont [6/8] 0, 128
      %1361 = vxpose.xlu0.c.b16.cont [7/8] 0, 128
      %1362 = vxpose.xlu0.c.b16.end [8/8] 0, 128
      %v1363 = vpop.trf.xlu0
      %v1364 = vpop.trf.xlu0
      %v1365 = vpop.trf.xlu0
      %v1366 = vpop.trf.xlu0
      %v1367 = vpop.trf.xlu0
      %v1368 = vpop.trf.xlu0
      %v1369 = vpop.trf.xlu0
      %v1370 = vpop.trf.xlu0
      %1371 = vxpose.xlu0.c.b16.start [1/8] %v1327, 128
      %1372 = vxpose.xlu0.c.b16.cont [2/8] 0, 128
      %1373 = vxpose.xlu0.c.b16.cont [3/8] 0, 128
      %1374 = vxpose.xlu0.c.b16.cont [4/8] 0, 128
      %1375 = vxpose.xlu0.c.b16.cont [5/8] 0, 128
      %1376 = vxpose.xlu0.c.b16.cont [6/8] 0, 128
      %1377 = vxpose.xlu0.c.b16.cont [7/8] 0, 128
      %1378 = vxpose.xlu0.c.b16.end [8/8] 0, 128
      %v1379 = vpop.trf.xlu0
      %v1380 = vpop.trf.xlu0
      %v1381 = vpop.trf.xlu0
      %v1382 = vpop.trf.xlu0
      %v1383 = vpop.trf.xlu0
      %v1384 = vpop.trf.xlu0
      %v1385 = vpop.trf.xlu0
      %v1386 = vpop.trf.xlu0
      %1387 = vxpose.xlu0.c.b16.start [1/8] %v1283, 128
      %1388 = vxpose.xlu0.c.b16.cont [2/8] 0, 128
      %1389 = vxpose.xlu0.c.b16.cont [3/8] 0, 128
      %1390 = vxpose.xlu0.c.b16.cont [4/8] 0, 128
      %1391 = vxpose.xlu0.c.b16.cont [5/8] 0, 128
      %1392 = vxpose.xlu0.c.b16.cont [6/8] 0, 128
      %1393 = vxpose.xlu0.c.b16.cont [7/8] 0, 128
      %1394 = vxpose.xlu0.c.b16.end [8/8] 0, 128
      %v1395 = vpop.trf.xlu0
      %v1396 = vpop.trf.xlu0
      %v1397 = vpop.trf.xlu0
      %v1398 = vpop.trf.xlu0
      %v1399 = vpop.trf.xlu0
      %v1400 = vpop.trf.xlu0
      %v1401 = vpop.trf.xlu0
      %v1402 = vpop.trf.xlu0
      %1403 = vxpose.xlu0.c.b16.start [1/8] %v1351, 128
      %1404 = vxpose.xlu0.c.b16.cont [2/8] 0, 128
      %1405 = vxpose.xlu0.c.b16.cont [3/8] 0, 128
      %1406 = vxpose.xlu0.c.b16.cont [4/8] 0, 128
      %1407 = vxpose.xlu0.c.b16.cont [5/8] 0, 128
      %1408 = vxpose.xlu0.c.b16.cont [6/8] 0, 128
      %1409 = vxpose.xlu0.c.b16.cont [7/8] 0, 128
      %1410 = vxpose.xlu0.c.b16.end [8/8] 0, 128
      %v1411 = vpop.trf.xlu0
      %v1412 = vpop.trf.xlu0
      %v1413 = vpop.trf.xlu0
      %v1414 = vpop.trf.xlu0
      %v1415 = vpop.trf.xlu0
      %v1416 = vpop.trf.xlu0
      %v1417 = vpop.trf.xlu0
      %v1418 = vpop.trf.xlu0
      %1419 = vxpose.xlu0.c.b16.start [1/8] %v1266, 128
      %1420 = vxpose.xlu0.c.b16.cont [2/8] 0, 128
      %1421 = vxpose.xlu0.c.b16.cont [3/8] 0, 128
      %1422 = vxpose.xlu0.c.b16.cont [4/8] 0, 128
      %1423 = vxpose.xlu0.c.b16.cont [5/8] 0, 128
      %1424 = vxpose.xlu0.c.b16.cont [6/8] 0, 128
      %1425 = vxpose.xlu0.c.b16.cont [7/8] 0, 128
      %1426 = vxpose.xlu0.c.b16.end [8/8] 0, 128
      %v1427 = vpop.trf.xlu0
      %v1428 = vpop.trf.xlu0
      %v1429 = vpop.trf.xlu0
      %v1430 = vpop.trf.xlu0
      %v1431 = vpop.trf.xlu0
      %v1432 = vpop.trf.xlu0
      %v1433 = vpop.trf.xlu0
      %v1434 = vpop.trf.xlu0
      %1435 = vxpose.xlu0.c.b16.start [1/8] %v1334, 128
      %1436 = vxpose.xlu0.c.b16.cont [2/8] 0, 128
      %1437 = vxpose.xlu0.c.b16.cont [3/8] 0, 128
      %1438 = vxpose.xlu0.c.b16.cont [4/8] 0, 128
      %1439 = vxpose.xlu0.c.b16.cont [5/8] 0, 128
      %1440 = vxpose.xlu0.c.b16.cont [6/8] 0, 128
      %1441 = vxpose.xlu0.c.b16.cont [7/8] 0, 128
      %1442 = vxpose.xlu0.c.b16.end [8/8] 0, 128
      %v1443 = vpop.trf.xlu0
      %v1444 = vpop.trf.xlu0
      %v1445 = vpop.trf.xlu0
      %v1446 = vpop.trf.xlu0
      %v1447 = vpop.trf.xlu0
      %v1448 = vpop.trf.xlu0
      %v1449 = vpop.trf.xlu0
      %v1450 = vpop.trf.xlu0
      %1451 = vxpose.xlu0.c.b16.start [1/8] %v1284, 128
      %1452 = vxpose.xlu0.c.b16.cont [2/8] 0, 128
      %1453 = vxpose.xlu0.c.b16.cont [3/8] 0, 128
      %1454 = vxpose.xlu0.c.b16.cont [4/8] 0, 128
      %1455 = vxpose.xlu0.c.b16.cont [5/8] 0, 128
      %1456 = vxpose.xlu0.c.b16.cont [6/8] 0, 128
      %1457 = vxpose.xlu0.c.b16.cont [7/8] 0, 128
      %1458 = vxpose.xlu0.c.b16.end [8/8] 0, 128
      %v1459 = vpop.trf.xlu0
      %v1460 = vpop.trf.xlu0
      %v1461 = vpop.trf.xlu0
      %v1462 = vpop.trf.xlu0
      %v1463 = vpop.trf.xlu0
      %v1464 = vpop.trf.xlu0
      %v1465 = vpop.trf.xlu0
      %v1466 = vpop.trf.xlu0
      %1467 = vxpose.xlu0.c.b16.start [1/8] %v1352, 128
      %1468 = vxpose.xlu0.c.b16.cont [2/8] 0, 128
      %1469 = vxpose.xlu0.c.b16.cont [3/8] 0, 128
      %1470 = vxpose.xlu0.c.b16.cont [4/8] 0, 128
      %1471 = vxpose.xlu0.c.b16.cont [5/8] 0, 128
      %1472 = vxpose.xlu0.c.b16.cont [6/8] 0, 128
      %1473 = vxpose.xlu0.c.b16.cont [7/8] 0, 128
      %1474 = vxpose.xlu0.c.b16.end [8/8] 0, 128
      %v1475 = vpop.trf.xlu0
      %v1476 = vpop.trf.xlu0
      %v1477 = vpop.trf.xlu0
      %v1478 = vpop.trf.xlu0
      %v1479 = vpop.trf.xlu0
      %v1480 = vpop.trf.xlu0
      %v1481 = vpop.trf.xlu0
      %v1482 = vpop.trf.xlu0
      %1483 = vxpose.xlu0.c.b16.start [1/8] %v1275, 128
      %1484 = vxpose.xlu0.c.b16.cont [2/8] 0, 128
      %1485 = vxpose.xlu0.c.b16.cont [3/8] 0, 128
      %1486 = vxpose.xlu0.c.b16.cont [4/8] 0, 128
      %1487 = vxpose.xlu0.c.b16.cont [5/8] 0, 128
      %1488 = vxpose.xlu0.c.b16.cont [6/8] 0, 128
      %1489 = vxpose.xlu0.c.b16.cont [7/8] 0, 128
      %1490 = vxpose.xlu0.c.b16.end [8/8] 0, 128
      %v1491 = vpop.trf.xlu0
      %v1492 = vpop.trf.xlu0
      %v1493 = vpop.trf.xlu0
      %v1494 = vpop.trf.xlu0
      %v1495 = vpop.trf.xlu0
      %v1496 = vpop.trf.xlu0
      %v1497 = vpop.trf.xlu0
      %v1498 = vpop.trf.xlu0
      %1499 = vxpose.xlu0.c.b16.start [1/8] %v1343, 128
      %1500 = vxpose.xlu0.c.b16.cont [2/8] 0, 128
      %1501 = vxpose.xlu0.c.b16.cont [3/8] 0, 128
      %1502 = vxpose.xlu0.c.b16.cont [4/8] 0, 128
      %1503 = vxpose.xlu0.c.b16.cont [5/8] 0, 128
      %1504 = vxpose.xlu0.c.b16.cont [6/8] 0, 128
      %1505 = vxpose.xlu0.c.b16.cont [7/8] 0, 128
      %1506 = vxpose.xlu0.c.b16.end [8/8] 0, 128
      %v1507 = vpop.trf.xlu0
      %v1508 = vpop.trf.xlu0
      %v1509 = vpop.trf.xlu0
      %v1510 = vpop.trf.xlu0
      %v1511 = vpop.trf.xlu0
      %v1512 = vpop.trf.xlu0
      %v1513 = vpop.trf.xlu0
      %v1514 = vpop.trf.xlu0
      %1515 = vxpose.xlu0.c.b16.start [1/8] %v1285, 128
      %1516 = vxpose.xlu0.c.b16.cont [2/8] 0, 128
      %1517 = vxpose.xlu0.c.b16.cont [3/8] 0, 128
      %1518 = vxpose.xlu0.c.b16.cont [4/8] 0, 128
      %1519 = vxpose.xlu0.c.b16.cont [5/8] 0, 128
      %1520 = vxpose.xlu0.c.b16.cont [6/8] 0, 128
      %1521 = vxpose.xlu0.c.b16.cont [7/8] 0, 128
      %1522 = vxpose.xlu0.c.b16.end [8/8] 0, 128
      %v1523 = vpop.trf.xlu0
      %v1524 = vpop.trf.xlu0
      %v1525 = vpop.trf.xlu0
      %v1526 = vpop.trf.xlu0
      %v1527 = vpop.trf.xlu0
      %v1528 = vpop.trf.xlu0
      %v1529 = vpop.trf.xlu0
      %v1530 = vpop.trf.xlu0
      %1531 = vxpose.xlu0.c.b16.start [1/8] %v1353, 128
      %1532 = vxpose.xlu0.c.b16.cont [2/8] 0, 128
      %1533 = vxpose.xlu0.c.b16.cont [3/8] 0, 128
      %1534 = vxpose.xlu0.c.b16.cont [4/8] 0, 128
      %1535 = vxpose.xlu0.c.b16.cont [5/8] 0, 128
      %1536 = vxpose.xlu0.c.b16.cont [6/8] 0, 128
      %1537 = vxpose.xlu0.c.b16.cont [7/8] 0, 128
      %1538 = vxpose.xlu0.c.b16.end [8/8] 0, 128
      %v1539 = vpop.trf.xlu0
      %v1540 = vpop.trf.xlu0
      %v1541 = vpop.trf.xlu0
      %v1542 = vpop.trf.xlu0
      %v1543 = vpop.trf.xlu0
      %v1544 = vpop.trf.xlu0
      %v1545 = vpop.trf.xlu0
      %v1546 = vpop.trf.xlu0
      %1547 = vxpose.xlu0.c.b16.start [1/8] %v1282, 128
      %1548 = vxpose.xlu0.c.b16.cont [2/8] 0, 128
      %1549 = vxpose.xlu0.c.b16.cont [3/8] 0, 128
      %1550 = vxpose.xlu0.c.b16.cont [4/8] 0, 128
      %1551 = vxpose.xlu0.c.b16.cont [5/8] 0, 128
      %1552 = vxpose.xlu0.c.b16.cont [6/8] 0, 128
      %1553 = vxpose.xlu0.c.b16.cont [7/8] 0, 128
      %1554 = vxpose.xlu0.c.b16.end [8/8] 0, 128
      %v1555 = vpop.trf.xlu0
      %v1556 = vpop.trf.xlu0
      %v1557 = vpop.trf.xlu0
      %v1558 = vpop.trf.xlu0
      %v1559 = vpop.trf.xlu0
      %v1560 = vpop.trf.xlu0
      %v1561 = vpop.trf.xlu0
      %v1562 = vpop.trf.xlu0
      %1563 = vxpose.xlu0.c.b16.start [1/8] %v1350, 128
      %1564 = vxpose.xlu0.c.b16.cont [2/8] 0, 128
      %1565 = vxpose.xlu0.c.b16.cont [3/8] 0, 128
      %1566 = vxpose.xlu0.c.b16.cont [4/8] 0, 128
      %1567 = vxpose.xlu0.c.b16.cont [5/8] 0, 128
      %1568 = vxpose.xlu0.c.b16.cont [6/8] 0, 128
      %1569 = vxpose.xlu0.c.b16.cont [7/8] 0, 128
      %1570 = vxpose.xlu0.c.b16.end [8/8] 0, 128
      %v1571 = vpop.trf.xlu0
      %v1572 = vpop.trf.xlu0
      %v1573 = vpop.trf.xlu0
      %v1574 = vpop.trf.xlu0
      %v1575 = vpop.trf.xlu0
      %v1576 = vpop.trf.xlu0
      %v1577 = vpop.trf.xlu0
      %v1578 = vpop.trf.xlu0
      %1579 = vxpose.xlu0.c.b16.start [1/8] %v1286, 128
      %1580 = vxpose.xlu0.c.b16.cont [2/8] 0, 128
      %1581 = vxpose.xlu0.c.b16.cont [3/8] 0, 128
      %1582 = vxpose.xlu0.c.b16.cont [4/8] 0, 128
      %1583 = vxpose.xlu0.c.b16.cont [5/8] 0, 128
      %1584 = vxpose.xlu0.c.b16.cont [6/8] 0, 128
      %1585 = vxpose.xlu0.c.b16.cont [7/8] 0, 128
      %1586 = vxpose.xlu0.c.b16.end [8/8] 0, 128
      %v1587 = vpop.trf.xlu0
      %v1588 = vpop.trf.xlu0
      %v1589 = vpop.trf.xlu0
      %v1590 = vpop.trf.xlu0
      %v1591 = vpop.trf.xlu0
      %v1592 = vpop.trf.xlu0
      %v1593 = vpop.trf.xlu0
      %v1594 = vpop.trf.xlu0
      %1595 = vxpose.xlu0.c.b16.start [1/8] %v1354, 128
      %1596 = vxpose.xlu0.c.b16.cont [2/8] 0, 128
      %1597 = vxpose.xlu0.c.b16.cont [3/8] 0, 128
      %1598 = vxpose.xlu0.c.b16.cont [4/8] 0, 128
      %1599 = vxpose.xlu0.c.b16.cont [5/8] 0, 128
      %1600 = vxpose.xlu0.c.b16.cont [6/8] 0, 128
      %1601 = vxpose.xlu0.c.b16.cont [7/8] 0, 128
      %1602 = vxpose.xlu0.c.b16.end [8/8] 0, 128
      %v1603 = vpop.trf.xlu0
      %v1604 = vpop.trf.xlu0
      %v1605 = vpop.trf.xlu0
      %v1606 = vpop.trf.xlu0
      %v1607 = vpop.trf.xlu0
      %v1608 = vpop.trf.xlu0
      %v1609 = vpop.trf.xlu0
      %v1610 = vpop.trf.xlu0
      %v1611 = vcombine.low %v1363, %v1427
      %v1613 = vunpack.c.l.s4 1983009808
      %v1614 = vunpack.c.0.s8 %v1613
      %v1615 = vlaneseq
      %v1616 = vshrl.u32 %v1615, 7
      %v1617 = vsub.s32 %v1614, %v1616
      %v1618 = vrot.slane %v1611, %v1617
      %v1619 = vcombine.low %v1395, %v1459
      %v1621 = vunpack.c.l.s4 1983009808
      %v1622 = vunpack.c.0.s8 %v1621
      %v1623 = vlaneseq
      %v1624 = vshrl.u32 %v1623, 7
      %v1625 = vsub.s32 %v1622, %v1624
      %v1626 = vrot.slane %v1619, %v1625
      %v1627 = vcombine.low %v1491, %v1555
      %v1629 = vunpack.c.l.s4 1983009808
      %v1630 = vunpack.c.0.s8 %v1629
      %v1631 = vlaneseq
      %v1632 = vshrl.u32 %v1631, 7
      %v1633 = vsub.s32 %v1630, %v1632
      %v1634 = vrot.slane %v1627, %v1633
      %v1635 = vcombine.low %v1523, %v1587
      %v1637 = vunpack.c.l.s4 1983009808
      %v1638 = vunpack.c.0.s8 %v1637
      %v1639 = vlaneseq
      %v1640 = vshrl.u32 %v1639, 7
      %v1641 = vsub.s32 %v1638, %v1640
      %v1642 = vrot.slane %v1635, %v1641
      %v1643 = vcombine.low %v1618, %v1626
      %v1645 = vunpack.c.l.s4 1934713408
      %v1646 = vunpack.c.0.s8 %v1645
      %v1647 = vlaneseq
      %v1648 = vshrl.u32 %v1647, 7
      %v1649 = vsub.s32 %v1646, %v1648
      %v1650 = vrot.slane %v1643, %v1649
      %v1651 = vcombine.low %v1634, %v1642
      %v1653 = vunpack.c.l.s4 1934713408
      %v1654 = vunpack.c.0.s8 %v1653
      %v1655 = vlaneseq
      %v1656 = vshrl.u32 %v1655, 7
      %v1657 = vsub.s32 %v1654, %v1656
      %v1658 = vrot.slane %v1651, %v1657
      %v1659 = vcombine.low %v1650, %v1658
      %v1660 = vcombine.high %v1650, %v1658
      %v1661 = vcombine.low %v1379, %v1443
      %v1663 = vunpack.c.l.s4 1983009808
      %v1664 = vunpack.c.0.s8 %v1663
      %v1665 = vlaneseq
      %v1666 = vshrl.u32 %v1665, 7
      %v1667 = vsub.s32 %v1664, %v1666
      %v1668 = vrot.slane %v1661, %v1667
      %v1669 = vcombine.low %v1411, %v1475
      %v1671 = vunpack.c.l.s4 1983009808
      %v1672 = vunpack.c.0.s8 %v1671
      %v1673 = vlaneseq
      %v1674 = vshrl.u32 %v1673, 7
      %v1675 = vsub.s32 %v1672, %v1674
      %v1676 = vrot.slane %v1669, %v1675
      %v1677 = vcombine.low %v1507, %v1571
      %v1679 = vunpack.c.l.s4 1983009808
      %v1680 = vunpack.c.0.s8 %v1679
      %v1681 = vlaneseq
      %v1682 = vshrl.u32 %v1681, 7
      %v1683 = vsub.s32 %v1680, %v1682
      %v1684 = vrot.slane %v1677, %v1683
      %v1685 = vcombine.low %v1539, %v1603
      %v1687 = vunpack.c.l.s4 1983009808
      %v1688 = vunpack.c.0.s8 %v1687
      %v1689 = vlaneseq
      %v1690 = vshrl.u32 %v1689, 7
      %v1691 = vsub.s32 %v1688, %v1690
      %v1692 = vrot.slane %v1685, %v1691
      %v1693 = vcombine.low %v1668, %v1676
      %v1695 = vunpack.c.l.s4 1934713408
      %v1696 = vunpack.c.0.s8 %v1695
      %v1697 = vlaneseq
      %v1698 = vshrl.u32 %v1697, 7
      %v1699 = vsub.s32 %v1696, %v1698
      %v1700 = vrot.slane %v1693, %v1699
      %v1701 = vcombine.low %v1684, %v1692
      %v1703 = vunpack.c.l.s4 1934713408
      %v1704 = vunpack.c.0.s8 %v1703
      %v1705 = vlaneseq
      %v1706 = vshrl.u32 %v1705, 7
      %v1707 = vsub.s32 %v1704, %v1706
      %v1708 = vrot.slane %v1701, %v1707
      %v1709 = vcombine.low %v1700, %v1708
      %v1710 = vcombine.high %v1700, %v1708
      %v1713 = vpack.i.b16 %v1709, %v1659
      %v1715 = vshrl.u32 %v1659, 16
      %v1716 = vshrl.u32 %v1709, 16
      %v1717 = vpack.i.b16 %v1716, %v1715
      %v1721 = vpack.i.b16 %v1710, %v1660
      %v1723 = vshrl.u32 %v1660, 16
      %v1724 = vshrl.u32 %v1710, 16
      %v1725 = vpack.i.b16 %v1724, %v1723
      %v1728 = vsel %vm765, %v1049, 0
      %1730 = vmatprep.subr.bf16.mxu0 0
      %1731 = vmatpush1.bf16.msra.mxu0 %v1713
      %1732 = vmatprep.subr.bf16.mxu0 0
      %1733 = vmatpush1.bf16.msra.mxu0 0
      %1734 = vmatprep.subr.bf16.mxu0 0
      %1735 = vmatpush1.bf16.msra.mxu0 0
      %1736 = vmatprep.subr.bf16.mxu0 0
      %1737 = vmatpush1.bf16.msra.mxu0 0
      %1738 = vmatprep.subr.bf16.mxu0 0
      %1739 = vmatpush1.bf16.msra.mxu0 0
      %1740 = vmatprep.subr.bf16.mxu0 0
      %1741 = vmatpush1.bf16.msra.mxu0 0
      %1742 = vmatprep.subr.bf16.mxu0 0
      %1743 = vmatpush1.bf16.msra.mxu0 0
      %1744 = vmatprep.subr.bf16.mxu0 0
      %1745 = vmatpush1.bf16.msra.mxu0 0
      %1746 = vmatprep.subr.bf16.mxu0 0
      %1747 = vmatpush1.bf16.msra.mxu0 0
      %1748 = vmatprep.subr.bf16.mxu0 0
      %1749 = vmatpush1.bf16.msra.mxu0 0
      %1750 = vmatprep.subr.bf16.mxu0 0
      %1751 = vmatpush1.bf16.msra.mxu0 0
      %1752 = vmatprep.subr.bf16.mxu0 0
      %1753 = vmatpush1.bf16.msra.mxu0 0
      %1754 = vmatprep.subr.bf16.mxu0 0
      %1755 = vmatpush1.bf16.msra.mxu0 0
      %1756 = vmatprep.subr.bf16.mxu0 0
      %1757 = vmatpush1.bf16.msra.mxu0 0
      %1758 = vmatprep.subr.bf16.mxu0 0
      %1759 = vmatpush1.bf16.msra.mxu0 0
      %1760 = vmatprep.subr.bf16.mxu0 0
      %1761 = vmatpush1.bf16.msra.mxu0 0
      %1762 = vmatprep.mubr.bf16.mxu0 0
      %1763 = vmatmul.mubr.bf16.gmra.mrb[0].mxu0 %v1728
      %v1764 = vpop.f32.mrb[0].mxu0
      %v1765 = vadd.f32 %v624, %v1764
      %v1766 = vpop.f32.mrb[0].mxu0
      %v1767 = vpop.f32.mrb[0].mxu0
      %v1768 = vpop.f32.mrb[0].mxu0
      %1769 = vdwg.mxu0
      %v1771 = vsel %vm765, %v1052, 0
      %1773 = vmatprep.subr.bf16.mxu0 0
      %1774 = vmatpush1.bf16.msra.mxu0 %v1717
      %1775 = vmatprep.subr.bf16.mxu0 0
      %1776 = vmatpush1.bf16.msra.mxu0 0
      %1777 = vmatprep.subr.bf16.mxu0 0
      %1778 = vmatpush1.bf16.msra.mxu0 0
      %1779 = vmatprep.subr.bf16.mxu0 0
      %1780 = vmatpush1.bf16.msra.mxu0 0
      %1781 = vmatprep.subr.bf16.mxu0 0
      %1782 = vmatpush1.bf16.msra.mxu0 0
      %1783 = vmatprep.subr.bf16.mxu0 0
      %1784 = vmatpush1.bf16.msra.mxu0 0
      %1785 = vmatprep.subr.bf16.mxu0 0
      %1786 = vmatpush1.bf16.msra.mxu0 0
      %1787 = vmatprep.subr.bf16.mxu0 0
      %1788 = vmatpush1.bf16.msra.mxu0 0
      %1789 = vmatprep.subr.bf16.mxu0 0
      %1790 = vmatpush1.bf16.msra.mxu0 0
      %1791 = vmatprep.subr.bf16.mxu0 0
      %1792 = vmatpush1.bf16.msra.mxu0 0
      %1793 = vmatprep.subr.bf16.mxu0 0
      %1794 = vmatpush1.bf16.msra.mxu0 0
      %1795 = vmatprep.subr.bf16.mxu0 0
      %1796 = vmatpush1.bf16.msra.mxu0 0
      %1797 = vmatprep.subr.bf16.mxu0 0
      %1798 = vmatpush1.bf16.msra.mxu0 0
      %1799 = vmatprep.subr.bf16.mxu0 0
      %1800 = vmatpush1.bf16.msra.mxu0 0
      %1801 = vmatprep.subr.bf16.mxu0 0
      %1802 = vmatpush1.bf16.msra.mxu0 0
      %1803 = vmatprep.subr.bf16.mxu0 0
      %1804 = vmatpush1.bf16.msra.mxu0 0
      %1805 = vmatprep.mubr.bf16.mxu0 0
      %1806 = vmatmul.mubr.bf16.gmra.mrb[0].mxu0 %v1771
      %v1807 = vpop.f32.mrb[0].mxu0
      %v1808 = vadd.f32 %v624, %v1807
      %v1809 = vpop.f32.mrb[0].mxu0
      %v1810 = vpop.f32.mrb[0].mxu0
      %v1811 = vpop.f32.mrb[0].mxu0
      %1812 = vdwg.mxu0
      %v1814 = vsel %vm765, %v1055, 0
      %1816 = vmatprep.subr.bf16.mxu0 0
      %1817 = vmatpush1.bf16.msra.mxu0 %v1721
      %1818 = vmatprep.subr.bf16.mxu0 0
      %1819 = vmatpush1.bf16.msra.mxu0 0
      %1820 = vmatprep.subr.bf16.mxu0 0
      %1821 = vmatpush1.bf16.msra.mxu0 0
      %1822 = vmatprep.subr.bf16.mxu0 0
      %1823 = vmatpush1.bf16.msra.mxu0 0
      %1824 = vmatprep.subr.bf16.mxu0 0
      %1825 = vmatpush1.bf16.msra.mxu0 0
      %1826 = vmatprep.subr.bf16.mxu0 0
      %1827 = vmatpush1.bf16.msra.mxu0 0
      %1828 = vmatprep.subr.bf16.mxu0 0
      %1829 = vmatpush1.bf16.msra.mxu0 0
      %1830 = vmatprep.subr.bf16.mxu0 0
      %1831 = vmatpush1.bf16.msra.mxu0 0
      %1832 = vmatprep.subr.bf16.mxu0 0
      %1833 = vmatpush1.bf16.msra.mxu0 0
      %1834 = vmatprep.subr.bf16.mxu0 0
      %1835 = vmatpush1.bf16.msra.mxu0 0
      %1836 = vmatprep.subr.bf16.mxu0 0
      %1837 = vmatpush1.bf16.msra.mxu0 0
      %1838 = vmatprep.subr.bf16.mxu0 0
      %1839 = vmatpush1.bf16.msra.mxu0 0
      %1840 = vmatprep.subr.bf16.mxu0 0
      %1841 = vmatpush1.bf16.msra.mxu0 0
      %1842 = vmatprep.subr.bf16.mxu0 0
      %1843 = vmatpush1.bf16.msra.mxu0 0
      %1844 = vmatprep.subr.bf16.mxu0 0
      %1845 = vmatpush1.bf16.msra.mxu0 0
      %1846 = vmatprep.subr.bf16.mxu0 0
      %1847 = vmatpush1.bf16.msra.mxu0 0
      %1848 = vmatprep.mubr.bf16.mxu0 0
      %1849 = vmatmul.mubr.bf16.gmra.mrb[0].mxu0 %v1814
      %v1850 = vpop.f32.mrb[0].mxu0
      %v1851 = vadd.f32 %v624, %v1850
      %v1852 = vpop.f32.mrb[0].mxu0
      %v1853 = vpop.f32.mrb[0].mxu0
      %v1854 = vpop.f32.mrb[0].mxu0
      %1855 = vdwg.mxu0
      %v1857 = vsel %vm765, %v1058, 0
      %1859 = vmatprep.subr.bf16.mxu0 0
      %1860 = vmatpush1.bf16.msra.mxu0 %v1725
      %1861 = vmatprep.subr.bf16.mxu0 0
      %1862 = vmatpush1.bf16.msra.mxu0 0
      %1863 = vmatprep.subr.bf16.mxu0 0
      %1864 = vmatpush1.bf16.msra.mxu0 0
      %1865 = vmatprep.subr.bf16.mxu0 0
      %1866 = vmatpush1.bf16.msra.mxu0 0
      %1867 = vmatprep.subr.bf16.mxu0 0
      %1868 = vmatpush1.bf16.msra.mxu0 0
      %1869 = vmatprep.subr.bf16.mxu0 0
      %1870 = vmatpush1.bf16.msra.mxu0 0
      %1871 = vmatprep.subr.bf16.mxu0 0
      %1872 = vmatpush1.bf16.msra.mxu0 0
      %1873 = vmatprep.subr.bf16.mxu0 0
      %1874 = vmatpush1.bf16.msra.mxu0 0
      %1875 = vmatprep.subr.bf16.mxu0 0
      %1876 = vmatpush1.bf16.msra.mxu0 0
      %1877 = vmatprep.subr.bf16.mxu0 0
      %1878 = vmatpush1.bf16.msra.mxu0 0
      %1879 = vmatprep.subr.bf16.mxu0 0
      %1880 = vmatpush1.bf16.msra.mxu0 0
      %1881 = vmatprep.subr.bf16.mxu0 0
      %1882 = vmatpush1.bf16.msra.mxu0 0
      %1883 = vmatprep.subr.bf16.mxu0 0
      %1884 = vmatpush1.bf16.msra.mxu0 0
      %1885 = vmatprep.subr.bf16.mxu0 0
      %1886 = vmatpush1.bf16.msra.mxu0 0
      %1887 = vmatprep.subr.bf16.mxu0 0
      %1888 = vmatpush1.bf16.msra.mxu0 0
      %1889 = vmatprep.subr.bf16.mxu0 0
      %1890 = vmatpush1.bf16.msra.mxu0 0
      %1891 = vmatprep.mubr.bf16.mxu0 0
      %1892 = vmatmul.mubr.bf16.gmra.mrb[0].mxu0 %v1857
      %v1893 = vpop.f32.mrb[0].mxu0
      %v1894 = vadd.f32 %v624, %v1893
      %v1895 = vpop.f32.mrb[0].mxu0
      %v1896 = vpop.f32.mrb[0].mxu0
      %v1897 = vpop.f32.mrb[0].mxu0
      %1898 = vdwg.mxu0
      %v1899 = vmul.f32 %v1765, 0.125
      %v1900 = vmul.f32 %v1808, 0.125
      %v1901 = vmul.f32 %v1851, 0.125
      %v1902 = vmul.f32 %v1894, 0.125
      %vm1903 = vcmask 64512
      %v1904 = vsel %vm1903, %v1899, -inf
      %1905 = vmax.xlane.f32.xlu0 %v1904
      %v1906 = vpop.xlane.xlu0 %1905
      %v1907 = vsel %vm1903, %v1900, -inf
      %1908 = vmax.xlane.f32.xlu0 %v1907
      %v1909 = vpop.xlane.xlu0 %1908
      %v1910 = vsel %vm1903, %v1901, -inf
      %1911 = vmax.xlane.f32.xlu0 %v1910
      %v1912 = vpop.xlane.xlu0 %1911
      %v1913 = vsel %vm1903, %v1902, -inf
      %1914 = vmax.xlane.f32.xlu0 %v1913
      %v1915 = vpop.xlane.xlu0 %1914
      %v1916 = vsub.f32 %v1899, %v1906
      %v1917 = vsub.f32 %v1900, %v1909
      %v1918 = vsub.f32 %v1901, %v1912
      %v1919 = vsub.f32 %v1902, %v1915
      %v1920 = vmul.f32 %v1916, 1.442695
      %v1921 = vpow.pop %v1920
      %v1922 = vmul.f32 %v1917, 1.442695
      %v1923 = vpow.pop %v1922
      %v1924 = vmul.f32 %v1918, 1.442695
      %v1925 = vpow.pop %v1924
      %v1926 = vmul.f32 %v1919, 1.442695
      %v1927 = vpow.pop %v1926
      %v1928 = vsel %vm1903, %v1921, 0.0
      %1929 = vadd.xlane.f32.xlu0 %v1928
      %v1930 = vpop.xlane.xlu0 %1929
      %v1931 = vsel %vm1903, %v1923, 0.0
      %1932 = vadd.xlane.f32.xlu0 %v1931
      %v1933 = vpop.xlane.xlu0 %1932
      %v1934 = vsel %vm1903, %v1925, 0.0
      %1935 = vadd.xlane.f32.xlu0 %v1934
      %v1936 = vpop.xlane.xlu0 %1935
      %v1937 = vsel %vm1903, %v1927, 0.0
      %1938 = vadd.xlane.f32.xlu0 %v1937
      %v1939 = vpop.xlane.xlu0 %1938
      %v1940 = vrcp.pop %v1930
      %v1941 = vrcp.pop %v1933
      %v1942 = vrcp.pop %v1936
      %v1943 = vrcp.pop %v1939
      %v1944 = vmul.f32 %v1921, %v1940
      %v1945 = vmul.f32 %v1923, %v1941
      %v1946 = vmul.f32 %v1925, %v1942
      %v1947 = vmul.f32 %v1927, %v1943
      %v1948 = vpack.c.bf16 %v1944, %v1944
      %v1949 = vpack.c.bf16 %v1945, %v1945
      %v1950 = vpack.c.bf16 %v1946, %v1946
      %v1951 = vpack.c.bf16 %v1947, %v1947
      %1952 = vxpose.xlu0.c.b16.start [1/8] %v989, 128
      %1953 = vxpose.xlu0.c.b16.cont [2/8] 0, 128
      %1954 = vxpose.xlu0.c.b16.cont [3/8] 0, 128
      %1955 = vxpose.xlu0.c.b16.cont [4/8] 0, 128
      %1956 = vxpose.xlu0.c.b16.cont [5/8] 0, 128
      %1957 = vxpose.xlu0.c.b16.cont [6/8] 0, 128
      %1958 = vxpose.xlu0.c.b16.cont [7/8] 0, 128
      %1959 = vxpose.xlu0.c.b16.end [8/8] 0, 128
      %v1960 = vpop.trf.xlu0
      %v1961 = vpop.trf.xlu0
      %v1962 = vpop.trf.xlu0
      %v1963 = vpop.trf.xlu0
      %v1964 = vpop.trf.xlu0
      %v1965 = vpop.trf.xlu0
      %v1966 = vpop.trf.xlu0
      %v1967 = vpop.trf.xlu0
      %1968 = vxpose.xlu0.c.b16.start [1/8] %v990, 128
      %1969 = vxpose.xlu0.c.b16.cont [2/8] 0, 128
      %1970 = vxpose.xlu0.c.b16.cont [3/8] 0, 128
      %1971 = vxpose.xlu0.c.b16.cont [4/8] 0, 128
      %1972 = vxpose.xlu0.c.b16.cont [5/8] 0, 128
      %1973 = vxpose.xlu0.c.b16.cont [6/8] 0, 128
      %1974 = vxpose.xlu0.c.b16.cont [7/8] 0, 128
      %1975 = vxpose.xlu0.c.b16.end [8/8] 0, 128
      %v1976 = vpop.trf.xlu0
      %v1977 = vpop.trf.xlu0
      %v1978 = vpop.trf.xlu0
      %v1979 = vpop.trf.xlu0
      %v1980 = vpop.trf.xlu0
      %v1981 = vpop.trf.xlu0
      %v1982 = vpop.trf.xlu0
      %v1983 = vpop.trf.xlu0
      %1984 = vxpose.xlu0.c.b16.start [1/8] %v991, 128
      %1985 = vxpose.xlu0.c.b16.cont [2/8] 0, 128
      %1986 = vxpose.xlu0.c.b16.cont [3/8] 0, 128
      %1987 = vxpose.xlu0.c.b16.cont [4/8] 0, 128
      %1988 = vxpose.xlu0.c.b16.cont [5/8] 0, 128
      %1989 = vxpose.xlu0.c.b16.cont [6/8] 0, 128
      %1990 = vxpose.xlu0.c.b16.cont [7/8] 0, 128
      %1991 = vxpose.xlu0.c.b16.end [8/8] 0, 128
      %v1992 = vpop.trf.xlu0
      %v1993 = vpop.trf.xlu0
      %v1994 = vpop.trf.xlu0
      %v1995 = vpop.trf.xlu0
      %v1996 = vpop.trf.xlu0
      %v1997 = vpop.trf.xlu0
      %v1998 = vpop.trf.xlu0
      %v1999 = vpop.trf.xlu0
      %2000 = vxpose.xlu0.c.b16.start [1/8] %v992, 128
      %2001 = vxpose.xlu0.c.b16.cont [2/8] 0, 128
      %2002 = vxpose.xlu0.c.b16.cont [3/8] 0, 128
      %2003 = vxpose.xlu0.c.b16.cont [4/8] 0, 128
      %2004 = vxpose.xlu0.c.b16.cont [5/8] 0, 128
      %2005 = vxpose.xlu0.c.b16.cont [6/8] 0, 128
      %2006 = vxpose.xlu0.c.b16.cont [7/8] 0, 128
      %2007 = vxpose.xlu0.c.b16.end [8/8] 0, 128
      %v2008 = vpop.trf.xlu0
      %v2009 = vpop.trf.xlu0
      %v2010 = vpop.trf.xlu0
      %v2011 = vpop.trf.xlu0
      %v2012 = vpop.trf.xlu0
      %v2013 = vpop.trf.xlu0
      %v2014 = vpop.trf.xlu0
      %v2015 = vpop.trf.xlu0
      %2016 = vxpose.xlu0.c.b16.start [1/8] %v993, 128
      %2017 = vxpose.xlu0.c.b16.cont [2/8] 0, 128
      %2018 = vxpose.xlu0.c.b16.cont [3/8] 0, 128
      %2019 = vxpose.xlu0.c.b16.cont [4/8] 0, 128
      %2020 = vxpose.xlu0.c.b16.cont [5/8] 0, 128
      %2021 = vxpose.xlu0.c.b16.cont [6/8] 0, 128
      %2022 = vxpose.xlu0.c.b16.cont [7/8] 0, 128
      %2023 = vxpose.xlu0.c.b16.end [8/8] 0, 128
      %v2024 = vpop.trf.xlu0
      %v2025 = vpop.trf.xlu0
      %v2026 = vpop.trf.xlu0
      %v2027 = vpop.trf.xlu0
      %v2028 = vpop.trf.xlu0
      %v2029 = vpop.trf.xlu0
      %v2030 = vpop.trf.xlu0
      %v2031 = vpop.trf.xlu0
      %2032 = vxpose.xlu0.c.b16.start [1/8] %v994, 128
      %2033 = vxpose.xlu0.c.b16.cont [2/8] 0, 128
      %2034 = vxpose.xlu0.c.b16.cont [3/8] 0, 128
      %2035 = vxpose.xlu0.c.b16.cont [4/8] 0, 128
      %2036 = vxpose.xlu0.c.b16.cont [5/8] 0, 128
      %2037 = vxpose.xlu0.c.b16.cont [6/8] 0, 128
      %2038 = vxpose.xlu0.c.b16.cont [7/8] 0, 128
      %2039 = vxpose.xlu0.c.b16.end [8/8] 0, 128
      %v2040 = vpop.trf.xlu0
      %v2041 = vpop.trf.xlu0
      %v2042 = vpop.trf.xlu0
      %v2043 = vpop.trf.xlu0
      %v2044 = vpop.trf.xlu0
      %v2045 = vpop.trf.xlu0
      %v2046 = vpop.trf.xlu0
      %v2047 = vpop.trf.xlu0
      %2048 = vxpose.xlu0.c.b16.start [1/8] %v995, 128
      %2049 = vxpose.xlu0.c.b16.cont [2/8] 0, 128
      %2050 = vxpose.xlu0.c.b16.cont [3/8] 0, 128
      %2051 = vxpose.xlu0.c.b16.cont [4/8] 0, 128
      %2052 = vxpose.xlu0.c.b16.cont [5/8] 0, 128
      %2053 = vxpose.xlu0.c.b16.cont [6/8] 0, 128
      %2054 = vxpose.xlu0.c.b16.cont [7/8] 0, 128
      %2055 = vxpose.xlu0.c.b16.end [8/8] 0, 128
      %v2056 = vpop.trf.xlu0
      %v2057 = vpop.trf.xlu0
      %v2058 = vpop.trf.xlu0
      %v2059 = vpop.trf.xlu0
      %v2060 = vpop.trf.xlu0
      %v2061 = vpop.trf.xlu0
      %v2062 = vpop.trf.xlu0
      %v2063 = vpop.trf.xlu0
      %2064 = vxpose.xlu0.c.b16.start [1/8] %v996, 128
      %2065 = vxpose.xlu0.c.b16.cont [2/8] 0, 128
      %2066 = vxpose.xlu0.c.b16.cont [3/8] 0, 128
      %2067 = vxpose.xlu0.c.b16.cont [4/8] 0, 128
      %2068 = vxpose.xlu0.c.b16.cont [5/8] 0, 128
      %2069 = vxpose.xlu0.c.b16.cont [6/8] 0, 128
      %2070 = vxpose.xlu0.c.b16.cont [7/8] 0, 128
      %2071 = vxpose.xlu0.c.b16.end [8/8] 0, 128
      %v2072 = vpop.trf.xlu0
      %v2073 = vpop.trf.xlu0
      %v2074 = vpop.trf.xlu0
      %v2075 = vpop.trf.xlu0
      %v2076 = vpop.trf.xlu0
      %v2077 = vpop.trf.xlu0
      %v2078 = vpop.trf.xlu0
      %v2079 = vpop.trf.xlu0
      %v2082 = vpack.i.b16 %v1976, %v1960
      %v2084 = vshrl.u32 %v1960, 16
      %v2085 = vshrl.u32 %v1976, 16
      %v2086 = vpack.i.b16 %v2085, %v2084
      %v2090 = vpack.i.b16 %v2008, %v1992
      %v2092 = vshrl.u32 %v1992, 16
      %v2093 = vshrl.u32 %v2008, 16
      %v2094 = vpack.i.b16 %v2093, %v2092
      %v2098 = vpack.i.b16 %v2040, %v2024
      %v2100 = vshrl.u32 %v2024, 16
      %v2101 = vshrl.u32 %v2040, 16
      %v2102 = vpack.i.b16 %v2101, %v2100
      %v2106 = vpack.i.b16 %v2072, %v2056
      %v2108 = vshrl.u32 %v2056, 16
      %v2109 = vshrl.u32 %v2072, 16
      %v2110 = vpack.i.b16 %v2109, %v2108
      %v2112 = vcombine.low %v2082, %v2098
      %v2113 = vcombine.high %v2082, %v2098
      %v2115 = vunpack.c.l.s4 1983009808
      %v2116 = vunpack.c.0.s8 %v2115
      %v2117 = vlaneseq
      %v2118 = vshrl.u32 %v2117, 7
      %v2119 = vsub.s32 %v2116, %v2118
      %v2120 = vrot.slane %v2112, %v2119
      %v2122 = vunpack.c.l.s4 1983009808
      %v2123 = vunpack.c.0.s8 %v2122
      %v2124 = vlaneseq
      %v2125 = vshrl.u32 %v2124, 7
      %v2126 = vsub.s32 %v2123, %v2125
      %v2127 = vrot.slane %v2113, %v2126
      %v2128 = vcombine.low %v2090, %v2106
      %v2129 = vcombine.high %v2090, %v2106
      %v2131 = vunpack.c.l.s4 1983009808
      %v2132 = vunpack.c.0.s8 %v2131
      %v2133 = vlaneseq
      %v2134 = vshrl.u32 %v2133, 7
      %v2135 = vsub.s32 %v2132, %v2134
      %v2136 = vrot.slane %v2128, %v2135
      %v2138 = vunpack.c.l.s4 1983009808
      %v2139 = vunpack.c.0.s8 %v2138
      %v2140 = vlaneseq
      %v2141 = vshrl.u32 %v2140, 7
      %v2142 = vsub.s32 %v2139, %v2141
      %v2143 = vrot.slane %v2129, %v2142
      %v2144 = vcombine.low %v2120, %v2136
      %v2145 = vcombine.high %v2120, %v2136
      %v2147 = vunpack.c.l.s4 1934713408
      %v2148 = vunpack.c.0.s8 %v2147
      %v2149 = vlaneseq
      %v2150 = vshrl.u32 %v2149, 7
      %v2151 = vsub.s32 %v2148, %v2150
      %v2152 = vrot.slane %v2144, %v2151
      %v2154 = vunpack.c.l.s4 1934713408
      %v2155 = vunpack.c.0.s8 %v2154
      %v2156 = vlaneseq
      %v2157 = vshrl.u32 %v2156, 7
      %v2158 = vsub.s32 %v2155, %v2157
      %v2159 = vrot.slane %v2145, %v2158
      %v2160 = vcombine.low %v2127, %v2143
      %v2161 = vcombine.high %v2127, %v2143
      %v2163 = vunpack.c.l.s4 1934713408
      %v2164 = vunpack.c.0.s8 %v2163
      %v2165 = vlaneseq
      %v2166 = vshrl.u32 %v2165, 7
      %v2167 = vsub.s32 %v2164, %v2166
      %v2168 = vrot.slane %v2160, %v2167
      %v2170 = vunpack.c.l.s4 1934713408
      %v2171 = vunpack.c.0.s8 %v2170
      %v2172 = vlaneseq
      %v2173 = vshrl.u32 %v2172, 7
      %v2174 = vsub.s32 %v2171, %v2173
      %v2175 = vrot.slane %v2161, %v2174
      %v2176 = vcombine.high %v2152, 0
      %v2177 = vcombine.high %v2159, 0
      %v2178 = vcombine.high %v2168, 0
      %v2179 = vcombine.high %v2175, 0
      %v2180 = vcombine.low %v2086, %v2102
      %v2181 = vcombine.high %v2086, %v2102
      %v2183 = vunpack.c.l.s4 1983009808
      %v2184 = vunpack.c.0.s8 %v2183
      %v2185 = vlaneseq
      %v2186 = vshrl.u32 %v2185, 7
      %v2187 = vsub.s32 %v2184, %v2186
      %v2188 = vrot.slane %v2180, %v2187
      %v2190 = vunpack.c.l.s4 1983009808
      %v2191 = vunpack.c.0.s8 %v2190
      %v2192 = vlaneseq
      %v2193 = vshrl.u32 %v2192, 7
      %v2194 = vsub.s32 %v2191, %v2193
      %v2195 = vrot.slane %v2181, %v2194
      %v2196 = vcombine.low %v2094, %v2110
      %v2197 = vcombine.high %v2094, %v2110
      %v2199 = vunpack.c.l.s4 1983009808
      %v2200 = vunpack.c.0.s8 %v2199
      %v2201 = vlaneseq
      %v2202 = vshrl.u32 %v2201, 7
      %v2203 = vsub.s32 %v2200, %v2202
      %v2204 = vrot.slane %v2196, %v2203
      %v2206 = vunpack.c.l.s4 1983009808
      %v2207 = vunpack.c.0.s8 %v2206
      %v2208 = vlaneseq
      %v2209 = vshrl.u32 %v2208, 7
      %v2210 = vsub.s32 %v2207, %v2209
      %v2211 = vrot.slane %v2197, %v2210
      %v2212 = vcombine.low %v2188, %v2204
      %v2213 = vcombine.high %v2188, %v2204
      %v2215 = vunpack.c.l.s4 1934713408
      %v2216 = vunpack.c.0.s8 %v2215
      %v2217 = vlaneseq
      %v2218 = vshrl.u32 %v2217, 7
      %v2219 = vsub.s32 %v2216, %v2218
      %v2220 = vrot.slane %v2212, %v2219
      %v2222 = vunpack.c.l.s4 1934713408
      %v2223 = vunpack.c.0.s8 %v2222
      %v2224 = vlaneseq
      %v2225 = vshrl.u32 %v2224, 7
      %v2226 = vsub.s32 %v2223, %v2225
      %v2227 = vrot.slane %v2213, %v2226
      %v2228 = vcombine.low %v2195, %v2211
      %v2229 = vcombine.high %v2195, %v2211
      %v2231 = vunpack.c.l.s4 1934713408
      %v2232 = vunpack.c.0.s8 %v2231
      %v2233 = vlaneseq
      %v2234 = vshrl.u32 %v2233, 7
      %v2235 = vsub.s32 %v2232, %v2234
      %v2236 = vrot.slane %v2228, %v2235
      %v2238 = vunpack.c.l.s4 1934713408
      %v2239 = vunpack.c.0.s8 %v2238
      %v2240 = vlaneseq
      %v2241 = vshrl.u32 %v2240, 7
      %v2242 = vsub.s32 %v2239, %v2241
      %v2243 = vrot.slane %v2229, %v2242
      %v2244 = vcombine.high %v2220, 0
      %v2245 = vcombine.high %v2227, 0
      %v2246 = vcombine.high %v2236, 0
      %v2247 = vcombine.high %v2243, 0
      %2248 = vxpose.xlu0.c.b16.start [1/8] %v2152, 128
      %2249 = vxpose.xlu0.c.b16.cont [2/8] 0, 128
      %2250 = vxpose.xlu0.c.b16.cont [3/8] 0, 128
      %2251 = vxpose.xlu0.c.b16.cont [4/8] 0, 128
      %2252 = vxpose.xlu0.c.b16.cont [5/8] 0, 128
      %2253 = vxpose.xlu0.c.b16.cont [6/8] 0, 128
      %2254 = vxpose.xlu0.c.b16.cont [7/8] 0, 128
      %2255 = vxpose.xlu0.c.b16.end [8/8] 0, 128
      %v2256 = vpop.trf.xlu0
      %v2257 = vpop.trf.xlu0
      %v2258 = vpop.trf.xlu0
      %v2259 = vpop.trf.xlu0
      %v2260 = vpop.trf.xlu0
      %v2261 = vpop.trf.xlu0
      %v2262 = vpop.trf.xlu0
      %v2263 = vpop.trf.xlu0
      %2264 = vxpose.xlu0.c.b16.start [1/8] %v2220, 128
      %2265 = vxpose.xlu0.c.b16.cont [2/8] 0, 128
      %2266 = vxpose.xlu0.c.b16.cont [3/8] 0, 128
      %2267 = vxpose.xlu0.c.b16.cont [4/8] 0, 128
      %2268 = vxpose.xlu0.c.b16.cont [5/8] 0, 128
      %2269 = vxpose.xlu0.c.b16.cont [6/8] 0, 128
      %2270 = vxpose.xlu0.c.b16.cont [7/8] 0, 128
      %2271 = vxpose.xlu0.c.b16.end [8/8] 0, 128
      %v2272 = vpop.trf.xlu0
      %v2273 = vpop.trf.xlu0
      %v2274 = vpop.trf.xlu0
      %v2275 = vpop.trf.xlu0
      %v2276 = vpop.trf.xlu0
      %v2277 = vpop.trf.xlu0
      %v2278 = vpop.trf.xlu0
      %v2279 = vpop.trf.xlu0
      %2280 = vxpose.xlu0.c.b16.start [1/8] %v2176, 128
      %2281 = vxpose.xlu0.c.b16.cont [2/8] 0, 128
      %2282 = vxpose.xlu0.c.b16.cont [3/8] 0, 128
      %2283 = vxpose.xlu0.c.b16.cont [4/8] 0, 128
      %2284 = vxpose.xlu0.c.b16.cont [5/8] 0, 128
      %2285 = vxpose.xlu0.c.b16.cont [6/8] 0, 128
      %2286 = vxpose.xlu0.c.b16.cont [7/8] 0, 128
      %2287 = vxpose.xlu0.c.b16.end [8/8] 0, 128
      %v2288 = vpop.trf.xlu0
      %v2289 = vpop.trf.xlu0
      %v2290 = vpop.trf.xlu0
      %v2291 = vpop.trf.xlu0
      %v2292 = vpop.trf.xlu0
      %v2293 = vpop.trf.xlu0
      %v2294 = vpop.trf.xlu0
      %v2295 = vpop.trf.xlu0
      %2296 = vxpose.xlu0.c.b16.start [1/8] %v2244, 128
      %2297 = vxpose.xlu0.c.b16.cont [2/8] 0, 128
      %2298 = vxpose.xlu0.c.b16.cont [3/8] 0, 128
      %2299 = vxpose.xlu0.c.b16.cont [4/8] 0, 128
      %2300 = vxpose.xlu0.c.b16.cont [5/8] 0, 128
      %2301 = vxpose.xlu0.c.b16.cont [6/8] 0, 128
      %2302 = vxpose.xlu0.c.b16.cont [7/8] 0, 128
      %2303 = vxpose.xlu0.c.b16.end [8/8] 0, 128
      %v2304 = vpop.trf.xlu0
      %v2305 = vpop.trf.xlu0
      %v2306 = vpop.trf.xlu0
      %v2307 = vpop.trf.xlu0
      %v2308 = vpop.trf.xlu0
      %v2309 = vpop.trf.xlu0
      %v2310 = vpop.trf.xlu0
      %v2311 = vpop.trf.xlu0
      %2312 = vxpose.xlu0.c.b16.start [1/8] %v2159, 128
      %2313 = vxpose.xlu0.c.b16.cont [2/8] 0, 128
      %2314 = vxpose.xlu0.c.b16.cont [3/8] 0, 128
      %2315 = vxpose.xlu0.c.b16.cont [4/8] 0, 128
      %2316 = vxpose.xlu0.c.b16.cont [5/8] 0, 128
      %2317 = vxpose.xlu0.c.b16.cont [6/8] 0, 128
      %2318 = vxpose.xlu0.c.b16.cont [7/8] 0, 128
      %2319 = vxpose.xlu0.c.b16.end [8/8] 0, 128
      %v2320 = vpop.trf.xlu0
      %v2321 = vpop.trf.xlu0
      %v2322 = vpop.trf.xlu0
      %v2323 = vpop.trf.xlu0
      %v2324 = vpop.trf.xlu0
      %v2325 = vpop.trf.xlu0
      %v2326 = vpop.trf.xlu0
      %v2327 = vpop.trf.xlu0
      %2328 = vxpose.xlu0.c.b16.start [1/8] %v2227, 128
      %2329 = vxpose.xlu0.c.b16.cont [2/8] 0, 128
      %2330 = vxpose.xlu0.c.b16.cont [3/8] 0, 128
      %2331 = vxpose.xlu0.c.b16.cont [4/8] 0, 128
      %2332 = vxpose.xlu0.c.b16.cont [5/8] 0, 128
      %2333 = vxpose.xlu0.c.b16.cont [6/8] 0, 128
      %2334 = vxpose.xlu0.c.b16.cont [7/8] 0, 128
      %2335 = vxpose.xlu0.c.b16.end [8/8] 0, 128
      %v2336 = vpop.trf.xlu0
      %v2337 = vpop.trf.xlu0
      %v2338 = vpop.trf.xlu0
      %v2339 = vpop.trf.xlu0
      %v2340 = vpop.trf.xlu0
      %v2341 = vpop.trf.xlu0
      %v2342 = vpop.trf.xlu0
      %v2343 = vpop.trf.xlu0
      %2344 = vxpose.xlu0.c.b16.start [1/8] %v2177, 128
      %2345 = vxpose.xlu0.c.b16.cont [2/8] 0, 128
      %2346 = vxpose.xlu0.c.b16.cont [3/8] 0, 128
      %2347 = vxpose.xlu0.c.b16.cont [4/8] 0, 128
      %2348 = vxpose.xlu0.c.b16.cont [5/8] 0, 128
      %2349 = vxpose.xlu0.c.b16.cont [6/8] 0, 128
      %2350 = vxpose.xlu0.c.b16.cont [7/8] 0, 128
      %2351 = vxpose.xlu0.c.b16.end [8/8] 0, 128
      %v2352 = vpop.trf.xlu0
      %v2353 = vpop.trf.xlu0
      %v2354 = vpop.trf.xlu0
      %v2355 = vpop.trf.xlu0
      %v2356 = vpop.trf.xlu0
      %v2357 = vpop.trf.xlu0
      %v2358 = vpop.trf.xlu0
      %v2359 = vpop.trf.xlu0
      %2360 = vxpose.xlu0.c.b16.start [1/8] %v2245, 128
      %2361 = vxpose.xlu0.c.b16.cont [2/8] 0, 128
      %2362 = vxpose.xlu0.c.b16.cont [3/8] 0, 128
      %2363 = vxpose.xlu0.c.b16.cont [4/8] 0, 128
      %2364 = vxpose.xlu0.c.b16.cont [5/8] 0, 128
      %2365 = vxpose.xlu0.c.b16.cont [6/8] 0, 128
      %2366 = vxpose.xlu0.c.b16.cont [7/8] 0, 128
      %2367 = vxpose.xlu0.c.b16.end [8/8] 0, 128
      %v2368 = vpop.trf.xlu0
      %v2369 = vpop.trf.xlu0
      %v2370 = vpop.trf.xlu0
      %v2371 = vpop.trf.xlu0
      %v2372 = vpop.trf.xlu0
      %v2373 = vpop.trf.xlu0
      %v2374 = vpop.trf.xlu0
      %v2375 = vpop.trf.xlu0
      %2376 = vxpose.xlu0.c.b16.start [1/8] %v2168, 128
      %2377 = vxpose.xlu0.c.b16.cont [2/8] 0, 128
      %2378 = vxpose.xlu0.c.b16.cont [3/8] 0, 128
      %2379 = vxpose.xlu0.c.b16.cont [4/8] 0, 128
      %2380 = vxpose.xlu0.c.b16.cont [5/8] 0, 128
      %2381 = vxpose.xlu0.c.b16.cont [6/8] 0, 128
      %2382 = vxpose.xlu0.c.b16.cont [7/8] 0, 128
      %2383 = vxpose.xlu0.c.b16.end [8/8] 0, 128
      %v2384 = vpop.trf.xlu0
      %v2385 = vpop.trf.xlu0
      %v2386 = vpop.trf.xlu0
      %v2387 = vpop.trf.xlu0
      %v2388 = vpop.trf.xlu0
      %v2389 = vpop.trf.xlu0
      %v2390 = vpop.trf.xlu0
      %v2391 = vpop.trf.xlu0
      %2392 = vxpose.xlu0.c.b16.start [1/8] %v2236, 128
      %2393 = vxpose.xlu0.c.b16.cont [2/8] 0, 128
      %2394 = vxpose.xlu0.c.b16.cont [3/8] 0, 128
      %2395 = vxpose.xlu0.c.b16.cont [4/8] 0, 128
      %2396 = vxpose.xlu0.c.b16.cont [5/8] 0, 128
      %2397 = vxpose.xlu0.c.b16.cont [6/8] 0, 128
      %2398 = vxpose.xlu0.c.b16.cont [7/8] 0, 128
      %2399 = vxpose.xlu0.c.b16.end [8/8] 0, 128
      %v2400 = vpop.trf.xlu0
      %v2401 = vpop.trf.xlu0
      %v2402 = vpop.trf.xlu0
      %v2403 = vpop.trf.xlu0
      %v2404 = vpop.trf.xlu0
      %v2405 = vpop.trf.xlu0
      %v2406 = vpop.trf.xlu0
      %v2407 = vpop.trf.xlu0
      %2408 = vxpose.xlu0.c.b16.start [1/8] %v2178, 128
      %2409 = vxpose.xlu0.c.b16.cont [2/8] 0, 128
      %2410 = vxpose.xlu0.c.b16.cont [3/8] 0, 128
      %2411 = vxpose.xlu0.c.b16.cont [4/8] 0, 128
      %2412 = vxpose.xlu0.c.b16.cont [5/8] 0, 128
      %2413 = vxpose.xlu0.c.b16.cont [6/8] 0, 128
      %2414 = vxpose.xlu0.c.b16.cont [7/8] 0, 128
      %2415 = vxpose.xlu0.c.b16.end [8/8] 0, 128
      %v2416 = vpop.trf.xlu0
      %v2417 = vpop.trf.xlu0
      %v2418 = vpop.trf.xlu0
      %v2419 = vpop.trf.xlu0
      %v2420 = vpop.trf.xlu0
      %v2421 = vpop.trf.xlu0
      %v2422 = vpop.trf.xlu0
      %v2423 = vpop.trf.xlu0
      %2424 = vxpose.xlu0.c.b16.start [1/8] %v2246, 128
      %2425 = vxpose.xlu0.c.b16.cont [2/8] 0, 128
      %2426 = vxpose.xlu0.c.b16.cont [3/8] 0, 128
      %2427 = vxpose.xlu0.c.b16.cont [4/8] 0, 128
      %2428 = vxpose.xlu0.c.b16.cont [5/8] 0, 128
      %2429 = vxpose.xlu0.c.b16.cont [6/8] 0, 128
      %2430 = vxpose.xlu0.c.b16.cont [7/8] 0, 128
      %2431 = vxpose.xlu0.c.b16.end [8/8] 0, 128
      %v2432 = vpop.trf.xlu0
      %v2433 = vpop.trf.xlu0
      %v2434 = vpop.trf.xlu0
      %v2435 = vpop.trf.xlu0
      %v2436 = vpop.trf.xlu0
      %v2437 = vpop.trf.xlu0
      %v2438 = vpop.trf.xlu0
      %v2439 = vpop.trf.xlu0
      %2440 = vxpose.xlu0.c.b16.start [1/8] %v2175, 128
      %2441 = vxpose.xlu0.c.b16.cont [2/8] 0, 128
      %2442 = vxpose.xlu0.c.b16.cont [3/8] 0, 128
      %2443 = vxpose.xlu0.c.b16.cont [4/8] 0, 128
      %2444 = vxpose.xlu0.c.b16.cont [5/8] 0, 128
      %2445 = vxpose.xlu0.c.b16.cont [6/8] 0, 128
      %2446 = vxpose.xlu0.c.b16.cont [7/8] 0, 128
      %2447 = vxpose.xlu0.c.b16.end [8/8] 0, 128
      %v2448 = vpop.trf.xlu0
      %v2449 = vpop.trf.xlu0
      %v2450 = vpop.trf.xlu0
      %v2451 = vpop.trf.xlu0
      %v2452 = vpop.trf.xlu0
      %v2453 = vpop.trf.xlu0
      %v2454 = vpop.trf.xlu0
      %v2455 = vpop.trf.xlu0
      %2456 = vxpose.xlu0.c.b16.start [1/8] %v2243, 128
      %2457 = vxpose.xlu0.c.b16.cont [2/8] 0, 128
      %2458 = vxpose.xlu0.c.b16.cont [3/8] 0, 128
      %2459 = vxpose.xlu0.c.b16.cont [4/8] 0, 128
      %2460 = vxpose.xlu0.c.b16.cont [5/8] 0, 128
      %2461 = vxpose.xlu0.c.b16.cont [6/8] 0, 128
      %2462 = vxpose.xlu0.c.b16.cont [7/8] 0, 128
      %2463 = vxpose.xlu0.c.b16.end [8/8] 0, 128
      %v2464 = vpop.trf.xlu0
      %v2465 = vpop.trf.xlu0
      %v2466 = vpop.trf.xlu0
      %v2467 = vpop.trf.xlu0
      %v2468 = vpop.trf.xlu0
      %v2469 = vpop.trf.xlu0
      %v2470 = vpop.trf.xlu0
      %v2471 = vpop.trf.xlu0
      %2472 = vxpose.xlu0.c.b16.start [1/8] %v2179, 128
      %2473 = vxpose.xlu0.c.b16.cont [2/8] 0, 128
      %2474 = vxpose.xlu0.c.b16.cont [3/8] 0, 128
      %2475 = vxpose.xlu0.c.b16.cont [4/8] 0, 128
      %2476 = vxpose.xlu0.c.b16.cont [5/8] 0, 128
      %2477 = vxpose.xlu0.c.b16.cont [6/8] 0, 128
      %2478 = vxpose.xlu0.c.b16.cont [7/8] 0, 128
      %2479 = vxpose.xlu0.c.b16.end [8/8] 0, 128
      %v2480 = vpop.trf.xlu0
      %v2481 = vpop.trf.xlu0
      %v2482 = vpop.trf.xlu0
      %v2483 = vpop.trf.xlu0
      %v2484 = vpop.trf.xlu0
      %v2485 = vpop.trf.xlu0
      %v2486 = vpop.trf.xlu0
      %v2487 = vpop.trf.xlu0
      %2488 = vxpose.xlu0.c.b16.start [1/8] %v2247, 128
      %2489 = vxpose.xlu0.c.b16.cont [2/8] 0, 128
      %2490 = vxpose.xlu0.c.b16.cont [3/8] 0, 128
      %2491 = vxpose.xlu0.c.b16.cont [4/8] 0, 128
      %2492 = vxpose.xlu0.c.b16.cont [5/8] 0, 128
      %2493 = vxpose.xlu0.c.b16.cont [6/8] 0, 128
      %2494 = vxpose.xlu0.c.b16.cont [7/8] 0, 128
      %2495 = vxpose.xlu0.c.b16.end [8/8] 0, 128
      %v2496 = vpop.trf.xlu0
      %v2497 = vpop.trf.xlu0
      %v2498 = vpop.trf.xlu0
      %v2499 = vpop.trf.xlu0
      %v2500 = vpop.trf.xlu0
      %v2501 = vpop.trf.xlu0
      %v2502 = vpop.trf.xlu0
      %v2503 = vpop.trf.xlu0
      %v2504 = vcombine.low %v2256, %v2320
      %v2506 = vunpack.c.l.s4 1983009808
      %v2507 = vunpack.c.0.s8 %v2506
      %v2508 = vlaneseq
      %v2509 = vshrl.u32 %v2508, 7
      %v2510 = vsub.s32 %v2507, %v2509
      %v2511 = vrot.slane %v2504, %v2510
      %v2512 = vcombine.low %v2288, %v2352
      %v2514 = vunpack.c.l.s4 1983009808
      %v2515 = vunpack.c.0.s8 %v2514
      %v2516 = vlaneseq
      %v2517 = vshrl.u32 %v2516, 7
      %v2518 = vsub.s32 %v2515, %v2517
      %v2519 = vrot.slane %v2512, %v2518
      %v2520 = vcombine.low %v2384, %v2448
      %v2522 = vunpack.c.l.s4 1983009808
      %v2523 = vunpack.c.0.s8 %v2522
      %v2524 = vlaneseq
      %v2525 = vshrl.u32 %v2524, 7
      %v2526 = vsub.s32 %v2523, %v2525
      %v2527 = vrot.slane %v2520, %v2526
      %v2528 = vcombine.low %v2416, %v2480
      %v2530 = vunpack.c.l.s4 1983009808
      %v2531 = vunpack.c.0.s8 %v2530
      %v2532 = vlaneseq
      %v2533 = vshrl.u32 %v2532, 7
      %v2534 = vsub.s32 %v2531, %v2533
      %v2535 = vrot.slane %v2528, %v2534
      %v2536 = vcombine.low %v2511, %v2519
      %v2538 = vunpack.c.l.s4 1934713408
      %v2539 = vunpack.c.0.s8 %v2538
      %v2540 = vlaneseq
      %v2541 = vshrl.u32 %v2540, 7
      %v2542 = vsub.s32 %v2539, %v2541
      %v2543 = vrot.slane %v2536, %v2542
      %v2544 = vcombine.low %v2527, %v2535
      %v2546 = vunpack.c.l.s4 1934713408
      %v2547 = vunpack.c.0.s8 %v2546
      %v2548 = vlaneseq
      %v2549 = vshrl.u32 %v2548, 7
      %v2550 = vsub.s32 %v2547, %v2549
      %v2551 = vrot.slane %v2544, %v2550
      %v2552 = vcombine.low %v2543, %v2551
      %v2553 = vcombine.high %v2543, %v2551
      %v2554 = vcombine.low %v2272, %v2336
      %v2556 = vunpack.c.l.s4 1983009808
      %v2557 = vunpack.c.0.s8 %v2556
      %v2558 = vlaneseq
      %v2559 = vshrl.u32 %v2558, 7
      %v2560 = vsub.s32 %v2557, %v2559
      %v2561 = vrot.slane %v2554, %v2560
      %v2562 = vcombine.low %v2304, %v2368
      %v2564 = vunpack.c.l.s4 1983009808
      %v2565 = vunpack.c.0.s8 %v2564
      %v2566 = vlaneseq
      %v2567 = vshrl.u32 %v2566, 7
      %v2568 = vsub.s32 %v2565, %v2567
      %v2569 = vrot.slane %v2562, %v2568
      %v2570 = vcombine.low %v2400, %v2464
      %v2572 = vunpack.c.l.s4 1983009808
      %v2573 = vunpack.c.0.s8 %v2572
      %v2574 = vlaneseq
      %v2575 = vshrl.u32 %v2574, 7
      %v2576 = vsub.s32 %v2573, %v2575
      %v2577 = vrot.slane %v2570, %v2576
      %v2578 = vcombine.low %v2432, %v2496
      %v2580 = vunpack.c.l.s4 1983009808
      %v2581 = vunpack.c.0.s8 %v2580
      %v2582 = vlaneseq
      %v2583 = vshrl.u32 %v2582, 7
      %v2584 = vsub.s32 %v2581, %v2583
      %v2585 = vrot.slane %v2578, %v2584
      %v2586 = vcombine.low %v2561, %v2569
      %v2588 = vunpack.c.l.s4 1934713408
      %v2589 = vunpack.c.0.s8 %v2588
      %v2590 = vlaneseq
      %v2591 = vshrl.u32 %v2590, 7
      %v2592 = vsub.s32 %v2589, %v2591
      %v2593 = vrot.slane %v2586, %v2592
      %v2594 = vcombine.low %v2577, %v2585
      %v2596 = vunpack.c.l.s4 1934713408
      %v2597 = vunpack.c.0.s8 %v2596
      %v2598 = vlaneseq
      %v2599 = vshrl.u32 %v2598, 7
      %v2600 = vsub.s32 %v2597, %v2599
      %v2601 = vrot.slane %v2594, %v2600
      %v2602 = vcombine.low %v2593, %v2601
      %v2603 = vcombine.high %v2593, %v2601
      %v2606 = vpack.i.b16 %v2602, %v2552
      %v2607 = vshrl.u32 %v2552, 16
      %v2608 = vshrl.u32 %v2602, 16
      %v2609 = vpack.i.b16 %v2608, %v2607
      %v2612 = vpack.i.b16 %v2603, %v2553
      %v2613 = vshrl.u32 %v2553, 16
      %v2614 = vshrl.u32 %v2603, 16
      %v2615 = vpack.i.b16 %v2614, %v2613
      %v2617 = vsel %vm1903, %v2606, 0
      %v2620 = vsel %vm1903, %v1948, 0
      %2622 = vmatprep.subr.bf16.mxu0 0
      %2623 = vmatpush1.bf16.xpose.msra.mxu0 %v2620
      %2624 = vmatprep.subr.bf16.mxu0 0
      %2625 = vmatpush1.bf16.xpose.msra.mxu0 0
      %2626 = vmatprep.subr.bf16.mxu0 0
      %2627 = vmatpush1.bf16.xpose.msra.mxu0 0
      %2628 = vmatprep.subr.bf16.mxu0 0
      %2629 = vmatpush1.bf16.xpose.msra.mxu0 0
      %2630 = vmatprep.subr.bf16.mxu0 0
      %2631 = vmatpush1.bf16.xpose.msra.mxu0 0
      %2632 = vmatprep.subr.bf16.mxu0 0
      %2633 = vmatpush1.bf16.xpose.msra.mxu0 0
      %2634 = vmatprep.subr.bf16.mxu0 0
      %2635 = vmatpush1.bf16.xpose.msra.mxu0 0
      %2636 = vmatprep.subr.bf16.mxu0 0
      %2637 = vmatpush1.bf16.xpose.msra.mxu0 0
      %2638 = vmatprep.subr.bf16.mxu0 0
      %2639 = vmatpush1.bf16.xpose.msra.mxu0 0
      %2640 = vmatprep.subr.bf16.mxu0 0
      %2641 = vmatpush1.bf16.xpose.msra.mxu0 0
      %2642 = vmatprep.subr.bf16.mxu0 0
      %2643 = vmatpush1.bf16.xpose.msra.mxu0 0
      %2644 = vmatprep.subr.bf16.mxu0 0
      %2645 = vmatpush1.bf16.xpose.msra.mxu0 0
      %2646 = vmatprep.subr.bf16.mxu0 0
      %2647 = vmatpush1.bf16.xpose.msra.mxu0 0
      %2648 = vmatprep.subr.bf16.mxu0 0
      %2649 = vmatpush1.bf16.xpose.msra.mxu0 0
      %2650 = vmatprep.subr.bf16.mxu0 0
      %2651 = vmatpush1.bf16.xpose.msra.mxu0 0
      %2652 = vmatprep.subr.bf16.mxu0 0
      %2653 = vmatpush1.bf16.xpose.msra.mxu0 0
      %2654 = vmatprep.mubr.bf16.mxu0 0
      %2655 = vmatmul.mubr.bf16.gmra.mrb[0].mxu0 %v2617
      %v2656 = vpop.f32.mrb[0].mxu0
      %v2657 = vadd.f32 0.0, %v2656
      %v2658 = vpop.f32.mrb[0].mxu0
      %v2659 = vpop.f32.mrb[0].mxu0
      %v2660 = vadd.f32 0.0, %v2659
      %v2661 = vpop.f32.mrb[0].mxu0
      %2662 = vdwg.mxu0
      %v2664 = vsel %vm1903, %v2609, 0
      %v2667 = vsel %vm1903, %v1949, 0
      %2669 = vmatprep.subr.bf16.mxu0 0
      %2670 = vmatpush1.bf16.xpose.msra.mxu0 %v2667
      %2671 = vmatprep.subr.bf16.mxu0 0
      %2672 = vmatpush1.bf16.xpose.msra.mxu0 0
      %2673 = vmatprep.subr.bf16.mxu0 0
      %2674 = vmatpush1.bf16.xpose.msra.mxu0 0
      %2675 = vmatprep.subr.bf16.mxu0 0
      %2676 = vmatpush1.bf16.xpose.msra.mxu0 0
      %2677 = vmatprep.subr.bf16.mxu0 0
      %2678 = vmatpush1.bf16.xpose.msra.mxu0 0
      %2679 = vmatprep.subr.bf16.mxu0 0
      %2680 = vmatpush1.bf16.xpose.msra.mxu0 0
      %2681 = vmatprep.subr.bf16.mxu0 0
      %2682 = vmatpush1.bf16.xpose.msra.mxu0 0
      %2683 = vmatprep.subr.bf16.mxu0 0
      %2684 = vmatpush1.bf16.xpose.msra.mxu0 0
      %2685 = vmatprep.subr.bf16.mxu0 0
      %2686 = vmatpush1.bf16.xpose.msra.mxu0 0
      %2687 = vmatprep.subr.bf16.mxu0 0
      %2688 = vmatpush1.bf16.xpose.msra.mxu0 0
      %2689 = vmatprep.subr.bf16.mxu0 0
      %2690 = vmatpush1.bf16.xpose.msra.mxu0 0
      %2691 = vmatprep.subr.bf16.mxu0 0
      %2692 = vmatpush1.bf16.xpose.msra.mxu0 0
      %2693 = vmatprep.subr.bf16.mxu0 0
      %2694 = vmatpush1.bf16.xpose.msra.mxu0 0
      %2695 = vmatprep.subr.bf16.mxu0 0
      %2696 = vmatpush1.bf16.xpose.msra.mxu0 0
      %2697 = vmatprep.subr.bf16.mxu0 0
      %2698 = vmatpush1.bf16.xpose.msra.mxu0 0
      %2699 = vmatprep.subr.bf16.mxu0 0
      %2700 = vmatpush1.bf16.xpose.msra.mxu0 0
      %2701 = vmatprep.mubr.bf16.mxu0 0
      %2702 = vmatmul.mubr.bf16.gmra.mrb[0].mxu0 %v2664
      %v2703 = vpop.f32.mrb[0].mxu0
      %v2704 = vadd.f32 0.0, %v2703
      %v2705 = vpop.f32.mrb[0].mxu0
      %v2706 = vpop.f32.mrb[0].mxu0
      %v2707 = vadd.f32 0.0, %v2706
      %v2708 = vpop.f32.mrb[0].mxu0
      %2709 = vdwg.mxu0
      %v2711 = vsel %vm1903, %v2612, 0
      %v2714 = vsel %vm1903, %v1950, 0
      %2716 = vmatprep.subr.bf16.mxu0 0
      %2717 = vmatpush1.bf16.xpose.msra.mxu0 %v2714
      %2718 = vmatprep.subr.bf16.mxu0 0
      %2719 = vmatpush1.bf16.xpose.msra.mxu0 0
      %2720 = vmatprep.subr.bf16.mxu0 0
      %2721 = vmatpush1.bf16.xpose.msra.mxu0 0
      %2722 = vmatprep.subr.bf16.mxu0 0
      %2723 = vmatpush1.bf16.xpose.msra.mxu0 0
      %2724 = vmatprep.subr.bf16.mxu0 0
      %2725 = vmatpush1.bf16.xpose.msra.mxu0 0
      %2726 = vmatprep.subr.bf16.mxu0 0
      %2727 = vmatpush1.bf16.xpose.msra.mxu0 0
      %2728 = vmatprep.subr.bf16.mxu0 0
      %2729 = vmatpush1.bf16.xpose.msra.mxu0 0
      %2730 = vmatprep.subr.bf16.mxu0 0
      %2731 = vmatpush1.bf16.xpose.msra.mxu0 0
      %2732 = vmatprep.subr.bf16.mxu0 0
      %2733 = vmatpush1.bf16.xpose.msra.mxu0 0
      %2734 = vmatprep.subr.bf16.mxu0 0
      %2735 = vmatpush1.bf16.xpose.msra.mxu0 0
      %2736 = vmatprep.subr.bf16.mxu0 0
      %2737 = vmatpush1.bf16.xpose.msra.mxu0 0
      %2738 = vmatprep.subr.bf16.mxu0 0
      %2739 = vmatpush1.bf16.xpose.msra.mxu0 0
      %2740 = vmatprep.subr.bf16.mxu0 0
      %2741 = vmatpush1.bf16.xpose.msra.mxu0 0
      %2742 = vmatprep.subr.bf16.mxu0 0
      %2743 = vmatpush1.bf16.xpose.msra.mxu0 0
      %2744 = vmatprep.subr.bf16.mxu0 0
      %2745 = vmatpush1.bf16.xpose.msra.mxu0 0
      %2746 = vmatprep.subr.bf16.mxu0 0
      %2747 = vmatpush1.bf16.xpose.msra.mxu0 0
      %2748 = vmatprep.mubr.bf16.mxu0 0
      %2749 = vmatmul.mubr.bf16.gmra.mrb[0].mxu0 %v2711
      %v2750 = vpop.f32.mrb[0].mxu0
      %v2751 = vadd.f32 0.0, %v2750
      %v2752 = vpop.f32.mrb[0].mxu0
      %v2753 = vpop.f32.mrb[0].mxu0
      %v2754 = vadd.f32 0.0, %v2753
      %v2755 = vpop.f32.mrb[0].mxu0
      %2756 = vdwg.mxu0
      %v2758 = vsel %vm1903, %v2615, 0
      %v2761 = vsel %vm1903, %v1951, 0
      %2763 = vmatprep.subr.bf16.mxu0 0
      %2764 = vmatpush1.bf16.xpose.msra.mxu0 %v2761
      %2765 = vmatprep.subr.bf16.mxu0 0
      %2766 = vmatpush1.bf16.xpose.msra.mxu0 0
      %2767 = vmatprep.subr.bf16.mxu0 0
      %2768 = vmatpush1.bf16.xpose.msra.mxu0 0
      %2769 = vmatprep.subr.bf16.mxu0 0
      %2770 = vmatpush1.bf16.xpose.msra.mxu0 0
      %2771 = vmatprep.subr.bf16.mxu0 0
      %2772 = vmatpush1.bf16.xpose.msra.mxu0 0
      %2773 = vmatprep.subr.bf16.mxu0 0
      %2774 = vmatpush1.bf16.xpose.msra.mxu0 0
      %2775 = vmatprep.subr.bf16.mxu0 0
      %2776 = vmatpush1.bf16.xpose.msra.mxu0 0
      %2777 = vmatprep.subr.bf16.mxu0 0
      %2778 = vmatpush1.bf16.xpose.msra.mxu0 0
      %2779 = vmatprep.subr.bf16.mxu0 0
      %2780 = vmatpush1.bf16.xpose.msra.mxu0 0
      %2781 = vmatprep.subr.bf16.mxu0 0
      %2782 = vmatpush1.bf16.xpose.msra.mxu0 0
      %2783 = vmatprep.subr.bf16.mxu0 0
      %2784 = vmatpush1.bf16.xpose.msra.mxu0 0
      %2785 = vmatprep.subr.bf16.mxu0 0
      %2786 = vmatpush1.bf16.xpose.msra.mxu0 0
      %2787 = vmatprep.subr.bf16.mxu0 0
      %2788 = vmatpush1.bf16.xpose.msra.mxu0 0
      %2789 = vmatprep.subr.bf16.mxu0 0
      %2790 = vmatpush1.bf16.xpose.msra.mxu0 0
      %2791 = vmatprep.subr.bf16.mxu0 0
      %2792 = vmatpush1.bf16.xpose.msra.mxu0 0
      %2793 = vmatprep.subr.bf16.mxu0 0
      %2794 = vmatpush1.bf16.xpose.msra.mxu0 0
      %2795 = vmatprep.mubr.bf16.mxu0 0
      %2796 = vmatmul.mubr.bf16.gmra.mrb[0].mxu0 %v2758
      %v2797 = vpop.f32.mrb[0].mxu0
      %v2798 = vadd.f32 0.0, %v2797
      %v2799 = vpop.f32.mrb[0].mxu0
      %v2800 = vpop.f32.mrb[0].mxu0
      %v2801 = vadd.f32 0.0, %v2800
      %v2802 = vpop.f32.mrb[0].mxu0
      %2803 = vdwg.mxu0
      %2804 = vxpose.xlu0.b32.start [1/16] %v2657, 128
      %2805 = vxpose.xlu0.b32.cont [2/16] %v2660, 128
      %2806 = vxpose.xlu0.b32.cont [3/16] 0.0, 128
      %2807 = vxpose.xlu0.b32.cont [4/16] 0.0, 128
      %2808 = vxpose.xlu0.b32.cont [5/16] 0.0, 128
      %2809 = vxpose.xlu0.b32.cont [6/16] 0.0, 128
      %2810 = vxpose.xlu0.b32.cont [7/16] 0.0, 128
      %2811 = vxpose.xlu0.b32.cont [8/16] 0.0, 128
      %2812 = vxpose.xlu0.b32.cont [9/16] 0.0, 128
      %2813 = vxpose.xlu0.b32.cont [10/16] 0.0, 128
      %2814 = vxpose.xlu0.b32.cont [11/16] 0.0, 128
      %2815 = vxpose.xlu0.b32.cont [12/16] 0.0, 128
      %2816 = vxpose.xlu0.b32.cont [13/16] 0.0, 128
      %2817 = vxpose.xlu0.b32.cont [14/16] 0.0, 128
      %2818 = vxpose.xlu0.b32.cont [15/16] 0.0, 128
      %2819 = vxpose.xlu0.b32.end [16/16] 0.0, 128
      %v2820 = vpop.trf.xlu0
      %v2821 = vpop.trf.xlu0
      %v2822 = vpop.trf.xlu0
      %v2823 = vpop.trf.xlu0
      %v2824 = vpop.trf.xlu0
      %v2825 = vpop.trf.xlu0
      %v2826 = vpop.trf.xlu0
      %v2827 = vpop.trf.xlu0
      %v2828 = vpop.trf.xlu0
      %v2829 = vpop.trf.xlu0
      %v2830 = vpop.trf.xlu0
      %v2831 = vpop.trf.xlu0
      %v2832 = vpop.trf.xlu0
      %v2833 = vpop.trf.xlu0
      %v2834 = vpop.trf.xlu0
      %v2835 = vpop.trf.xlu0
      %2836 = vxpose.xlu0.b32.start [1/16] %v2704, 128
      %2837 = vxpose.xlu0.b32.cont [2/16] %v2707, 128
      %2838 = vxpose.xlu0.b32.cont [3/16] 0.0, 128
      %2839 = vxpose.xlu0.b32.cont [4/16] 0.0, 128
      %2840 = vxpose.xlu0.b32.cont [5/16] 0.0, 128
      %2841 = vxpose.xlu0.b32.cont [6/16] 0.0, 128
      %2842 = vxpose.xlu0.b32.cont [7/16] 0.0, 128
      %2843 = vxpose.xlu0.b32.cont [8/16] 0.0, 128
      %2844 = vxpose.xlu0.b32.cont [9/16] 0.0, 128
      %2845 = vxpose.xlu0.b32.cont [10/16] 0.0, 128
      %2846 = vxpose.xlu0.b32.cont [11/16] 0.0, 128
      %2847 = vxpose.xlu0.b32.cont [12/16] 0.0, 128
      %2848 = vxpose.xlu0.b32.cont [13/16] 0.0, 128
      %2849 = vxpose.xlu0.b32.cont [14/16] 0.0, 128
      %2850 = vxpose.xlu0.b32.cont [15/16] 0.0, 128
      %2851 = vxpose.xlu0.b32.end [16/16] 0.0, 128
      %v2852 = vpop.trf.xlu0
      %v2853 = vpop.trf.xlu0
      %v2854 = vpop.trf.xlu0
      %v2855 = vpop.trf.xlu0
      %v2856 = vpop.trf.xlu0
      %v2857 = vpop.trf.xlu0
      %v2858 = vpop.trf.xlu0
      %v2859 = vpop.trf.xlu0
      %v2860 = vpop.trf.xlu0
      %v2861 = vpop.trf.xlu0
      %v2862 = vpop.trf.xlu0
      %v2863 = vpop.trf.xlu0
      %v2864 = vpop.trf.xlu0
      %v2865 = vpop.trf.xlu0
      %v2866 = vpop.trf.xlu0
      %v2867 = vpop.trf.xlu0
      %2868 = vxpose.xlu0.b32.start [1/16] %v2751, 128
      %2869 = vxpose.xlu0.b32.cont [2/16] %v2754, 128
      %2870 = vxpose.xlu0.b32.cont [3/16] 0.0, 128
      %2871 = vxpose.xlu0.b32.cont [4/16] 0.0, 128
      %2872 = vxpose.xlu0.b32.cont [5/16] 0.0, 128
      %2873 = vxpose.xlu0.b32.cont [6/16] 0.0, 128
      %2874 = vxpose.xlu0.b32.cont [7/16] 0.0, 128
      %2875 = vxpose.xlu0.b32.cont [8/16] 0.0, 128
      %2876 = vxpose.xlu0.b32.cont [9/16] 0.0, 128
      %2877 = vxpose.xlu0.b32.cont [10/16] 0.0, 128
      %2878 = vxpose.xlu0.b32.cont [11/16] 0.0, 128
      %2879 = vxpose.xlu0.b32.cont [12/16] 0.0, 128
      %2880 = vxpose.xlu0.b32.cont [13/16] 0.0, 128
      %2881 = vxpose.xlu0.b32.cont [14/16] 0.0, 128
      %2882 = vxpose.xlu0.b32.cont [15/16] 0.0, 128
      %2883 = vxpose.xlu0.b32.end [16/16] 0.0, 128
      %v2884 = vpop.trf.xlu0
      %v2885 = vpop.trf.xlu0
      %v2886 = vpop.trf.xlu0
      %v2887 = vpop.trf.xlu0
      %v2888 = vpop.trf.xlu0
      %v2889 = vpop.trf.xlu0
      %v2890 = vpop.trf.xlu0
      %v2891 = vpop.trf.xlu0
      %v2892 = vpop.trf.xlu0
      %v2893 = vpop.trf.xlu0
      %v2894 = vpop.trf.xlu0
      %v2895 = vpop.trf.xlu0
      %v2896 = vpop.trf.xlu0
      %v2897 = vpop.trf.xlu0
      %v2898 = vpop.trf.xlu0
      %v2899 = vpop.trf.xlu0
      %2900 = vxpose.xlu0.b32.start [1/16] %v2798, 128
      %2901 = vxpose.xlu0.b32.cont [2/16] %v2801, 128
      %2902 = vxpose.xlu0.b32.cont [3/16] 0.0, 128
      %2903 = vxpose.xlu0.b32.cont [4/16] 0.0, 128
      %2904 = vxpose.xlu0.b32.cont [5/16] 0.0, 128
      %2905 = vxpose.xlu0.b32.cont [6/16] 0.0, 128
      %2906 = vxpose.xlu0.b32.cont [7/16] 0.0, 128
      %2907 = vxpose.xlu0.b32.cont [8/16] 0.0, 128
      %2908 = vxpose.xlu0.b32.cont [9/16] 0.0, 128
      %2909 = vxpose.xlu0.b32.cont [10/16] 0.0, 128
      %2910 = vxpose.xlu0.b32.cont [11/16] 0.0, 128
      %2911 = vxpose.xlu0.b32.cont [12/16] 0.0, 128
      %2912 = vxpose.xlu0.b32.cont [13/16] 0.0, 128
      %2913 = vxpose.xlu0.b32.cont [14/16] 0.0, 128
      %2914 = vxpose.xlu0.b32.cont [15/16] 0.0, 128
      %2915 = vxpose.xlu0.b32.end [16/16] 0.0, 128
      %v2916 = vpop.trf.xlu0
      %v2917 = vpop.trf.xlu0
      %v2918 = vpop.trf.xlu0
      %v2919 = vpop.trf.xlu0
      %v2920 = vpop.trf.xlu0
      %v2921 = vpop.trf.xlu0
      %v2922 = vpop.trf.xlu0
      %v2923 = vpop.trf.xlu0
      %v2924 = vpop.trf.xlu0
      %v2925 = vpop.trf.xlu0
      %v2926 = vpop.trf.xlu0
      %v2927 = vpop.trf.xlu0
      %v2928 = vpop.trf.xlu0
      %v2929 = vpop.trf.xlu0
      %v2930 = vpop.trf.xlu0
      %v2931 = vpop.trf.xlu0
      %v2932 = vcombine.low %v2820, %v2884
      %v2933 = vcombine.high %v2820, %v2884
      %v2935 = vunpack.c.l.s4 1983009808
      %v2936 = vunpack.c.0.s8 %v2935
      %v2937 = vlaneseq
      %v2938 = vshrl.u32 %v2937, 7
      %v2939 = vsub.s32 %v2936, %v2938
      %v2940 = vrot.slane %v2932, %v2939
      %v2942 = vunpack.c.l.s4 1983009808
      %v2943 = vunpack.c.0.s8 %v2942
      %v2944 = vlaneseq
      %v2945 = vshrl.u32 %v2944, 7
      %v2946 = vsub.s32 %v2943, %v2945
      %v2947 = vrot.slane %v2933, %v2946
      %v2948 = vcombine.low %v2852, %v2916
      %v2949 = vcombine.high %v2852, %v2916
      %v2951 = vunpack.c.l.s4 1983009808
      %v2952 = vunpack.c.0.s8 %v2951
      %v2953 = vlaneseq
      %v2954 = vshrl.u32 %v2953, 7
      %v2955 = vsub.s32 %v2952, %v2954
      %v2956 = vrot.slane %v2948, %v2955
      %v2958 = vunpack.c.l.s4 1983009808
      %v2959 = vunpack.c.0.s8 %v2958
      %v2960 = vlaneseq
      %v2961 = vshrl.u32 %v2960, 7
      %v2962 = vsub.s32 %v2959, %v2961
      %v2963 = vrot.slane %v2949, %v2962
      %v2964 = vcombine.low %v2940, %v2956
      %v2965 = vcombine.high %v2940, %v2956
      %v2967 = vunpack.c.l.s4 1934713408
      %v2968 = vunpack.c.0.s8 %v2967
      %v2969 = vlaneseq
      %v2970 = vshrl.u32 %v2969, 7
      %v2971 = vsub.s32 %v2968, %v2970
      %v2972 = vrot.slane %v2964, %v2971
      %v2974 = vunpack.c.l.s4 1934713408
      %v2975 = vunpack.c.0.s8 %v2974
      %v2976 = vlaneseq
      %v2977 = vshrl.u32 %v2976, 7
      %v2978 = vsub.s32 %v2975, %v2977
      %v2979 = vrot.slane %v2965, %v2978
      %v2980 = vcombine.low %v2947, %v2963
      %v2981 = vcombine.high %v2947, %v2963
      %v2983 = vunpack.c.l.s4 1934713408
      %v2984 = vunpack.c.0.s8 %v2983
      %v2985 = vlaneseq
      %v2986 = vshrl.u32 %v2985, 7
      %v2987 = vsub.s32 %v2984, %v2986
      %v2988 = vrot.slane %v2980, %v2987
      %v2990 = vunpack.c.l.s4 1934713408
      %v2991 = vunpack.c.0.s8 %v2990
      %v2992 = vlaneseq
      %v2993 = vshrl.u32 %v2992, 7
      %v2994 = vsub.s32 %v2991, %v2993
      %v2995 = vrot.slane %v2981, %v2994
      %v2996 = vcombine.high %v2972, 0.0
      %v2997 = vcombine.high %v2979, 0.0
      %v2998 = vcombine.high %v2988, 0.0
      %v2999 = vcombine.high %v2995, 0.0
      %v3000 = vcombine.low %v2972, %v2979
      %v3002 = vunpack.c.l.s4 1983009808
      %v3003 = vunpack.c.0.s8 %v3002
      %v3004 = vlaneseq
      %v3005 = vshrl.u32 %v3004, 7
      %v3006 = vsub.s32 %v3003, %v3005
      %v3007 = vrot.slane %v3000, %v3006
      %v3008 = vcombine.low %v2996, %v2997
      %v3010 = vunpack.c.l.s4 1983009808
      %v3011 = vunpack.c.0.s8 %v3010
      %v3012 = vlaneseq
      %v3013 = vshrl.u32 %v3012, 7
      %v3014 = vsub.s32 %v3011, %v3013
      %v3015 = vrot.slane %v3008, %v3014
      %v3016 = vcombine.low %v2988, %v2995
      %v3018 = vunpack.c.l.s4 1983009808
      %v3019 = vunpack.c.0.s8 %v3018
      %v3020 = vlaneseq
      %v3021 = vshrl.u32 %v3020, 7
      %v3022 = vsub.s32 %v3019, %v3021
      %v3023 = vrot.slane %v3016, %v3022
      %v3024 = vcombine.low %v2998, %v2999
      %v3026 = vunpack.c.l.s4 1983009808
      %v3027 = vunpack.c.0.s8 %v3026
      %v3028 = vlaneseq
      %v3029 = vshrl.u32 %v3028, 7
      %v3030 = vsub.s32 %v3027, %v3029
      %v3031 = vrot.slane %v3024, %v3030
      %v3032 = vcombine.low %v3007, %v3015
      %v3033 = vcombine.high %v3007, %v3015
      %v3035 = vunpack.c.l.s4 1934713408
      %v3036 = vunpack.c.0.s8 %v3035
      %v3037 = vlaneseq
      %v3038 = vshrl.u32 %v3037, 7
      %v3039 = vsub.s32 %v3036, %v3038
      %v3040 = vrot.slane %v3032, %v3039
      %v3042 = vunpack.c.l.s4 1934713408
      %v3043 = vunpack.c.0.s8 %v3042
      %v3044 = vlaneseq
      %v3045 = vshrl.u32 %v3044, 7
      %v3046 = vsub.s32 %v3043, %v3045
      %v3047 = vrot.slane %v3033, %v3046
      %v3048 = vcombine.low %v3023, %v3031
      %v3049 = vcombine.high %v3023, %v3031
      %v3051 = vunpack.c.l.s4 1934713408
      %v3052 = vunpack.c.0.s8 %v3051
      %v3053 = vlaneseq
      %v3054 = vshrl.u32 %v3053, 7
      %v3055 = vsub.s32 %v3052, %v3054
      %v3056 = vrot.slane %v3048, %v3055
      %v3058 = vunpack.c.l.s4 1934713408
      %v3059 = vunpack.c.0.s8 %v3058
      %v3060 = vlaneseq
      %v3061 = vshrl.u32 %v3060, 7
      %v3062 = vsub.s32 %v3059, %v3061
      %v3063 = vrot.slane %v3049, %v3062
      %v3064 = vcombine.low %v3040, %v3056
      %v3065 = vcombine.high %v3040, %v3056
      %v3066 = vcombine.low %v3047, %v3063
      %v3067 = vcombine.high %v3047, %v3063
      %3069 = vrot.lane.b32.xlu0 %v3065, 16
      %v3070 = vpop.permute.xlu0 %3069
      %3073 = vrot.lane.b32.xlu0 %v3066, 32
      %v3074 = vpop.permute.xlu0 %3073
      %3077 = vrot.lane.b32.xlu0 %v3067, 48
      %v3078 = vpop.permute.xlu0 %3077
      %v3080 = vsel %vm765, %v3064, %v3070
      %vm3081 = vcmask 261120
      %v3082 = vsel %vm3081, %v3080, %v3074
      %vm3083 = vcmask 392192
      %v3084 = vsel %vm3083, %v3082, %v3078
      %v3085 = vpack.c.bf16 %v3084, %v3084
      %v3086 = vld [vmem:[%s584] sm:$0xf]
      %v3087 = vld [vmem:[%s584 + $0x4] sm:$0xf]
      %v3088 = vld [vmem:[%s584 + $0x8] sm:$0xf]
      %v3089 = vld [vmem:[%s584 + $0xc] sm:$0xf]
      %v3090 = vld [vmem:[%s584 + $0x10] sm:$0xf]
      %v3091 = vld [vmem:[%s584 + $0x14] sm:$0xf]
      %v3092 = vld [vmem:[%s584 + $0x18] sm:$0xf]
      %v3093 = vld [vmem:[%s584 + $0x1c] sm:$0xf]
      %v3094 = vld [vmem:[%s588] sm:$0x1]
      %v3096 = vlaneseq
      %v3097 = vshrl.u32 %v3096, 7
      %v3098 = vsub.s32 0, %v3097
      %v3099 = vrot.slane %v3094, %v3098
      %v3109 = vunpack.c.l.b16 %v3086
      %v3110 = vunpack.c.l.b16 %v3087
      %v3111 = vunpack.c.l.b16 %v3088
      %v3112 = vunpack.c.l.b16 %v3089
      %v3113 = vunpack.c.l.b16 %v3090
      %v3114 = vunpack.c.l.b16 %v3091
      %v3115 = vunpack.c.l.b16 %v3092
      %v3116 = vunpack.c.l.b16 %v3093
      %v3117 = vpack.c.b16 %v3110, %v3109
      %v3118 = vpack.c.b16 %v3112, %v3111
      %v3119 = vpack.c.b16 %v3114, %v3113
      %v3120 = vpack.c.b16 %v3116, %v3115
      %vm3125 = vcmask 523264
      %v3127 = vsel %vm3125, %v3085, 0
      %3129 = vmatprep.subr.bf16.mxu0 0
      %3130 = vmatpush1.bf16.msra.mxu0 %v3117
      %3131 = vmatprep.subr.bf16.mxu0 0
      %3132 = vmatpush1.bf16.msra.mxu0 %v3118
      %3133 = vmatprep.subr.bf16.mxu0 0
      %3134 = vmatpush1.bf16.msra.mxu0 %v3119
      %3135 = vmatprep.subr.bf16.mxu0 0
      %3136 = vmatpush1.bf16.msra.mxu0 %v3120
      %3137 = vmatprep.subr.bf16.mxu0 0
      %3138 = vmatpush1.bf16.msra.mxu0 0
      %3139 = vmatprep.subr.bf16.mxu0 0
      %3140 = vmatpush1.bf16.msra.mxu0 0
      %3141 = vmatprep.subr.bf16.mxu0 0
      %3142 = vmatpush1.bf16.msra.mxu0 0
      %3143 = vmatprep.subr.bf16.mxu0 0
      %3144 = vmatpush1.bf16.msra.mxu0 0
      %3145 = vmatprep.subr.bf16.mxu0 0
      %3146 = vmatpush1.bf16.msra.mxu0 0
      %3147 = vmatprep.subr.bf16.mxu0 0
      %3148 = vmatpush1.bf16.msra.mxu0 0
      %3149 = vmatprep.subr.bf16.mxu0 0
      %3150 = vmatpush1.bf16.msra.mxu0 0
      %3151 = vmatprep.subr.bf16.mxu0 0
      %3152 = vmatpush1.bf16.msra.mxu0 0
      %3153 = vmatprep.subr.bf16.mxu0 0
      %3154 = vmatpush1.bf16.msra.mxu0 0
      %3155 = vmatprep.subr.bf16.mxu0 0
      %3156 = vmatpush1.bf16.msra.mxu0 0
      %3157 = vmatprep.subr.bf16.mxu0 0
      %3158 = vmatpush1.bf16.msra.mxu0 0
      %3159 = vmatprep.subr.bf16.mxu0 0
      %3160 = vmatpush1.bf16.msra.mxu0 0
      %3161 = vmatprep.mubr.bf16.mxu0 0
      %3162 = vmatmul.mubr.bf16.gmra.mrb[0].mxu0 %v3127
      %v3163 = vpop.f32.mrb[0].mxu0
      %v3164 = vadd.f32 %v3099, %v3163
      %v3165 = vpop.f32.mrb[0].mxu0
      %v3166 = vpop.f32.mrb[0].mxu0
      %v3167 = vpop.f32.mrb[0].mxu0
      %3168 = vdwg.mxu0
      %v3169 = vadd.f32 %v3164, %v622
      %v3170 = vld [vmem:[%s592] sm:$0x1]
      %s3171 = scalar_lea.vmem %s592, 1
      %v3172 = vld [vmem:[%s3171] sm:$0x1]
      %v3173 = vsel %vm3125, %v3169, 0.0
      %3174 = vadd.xlane.f32.xlu0 %v3173
      %v3175 = vpop.xlane.xlu0 %3174
      %v3176 = vrcp.pop 64.0
      %v3177 = vmul.f32 %v3175, %v3176
      %v3178 = vsub.f32 %v3169, %v3177
      %v3179 = vmul.f32 %v3178, %v3178
      %v3180 = vsel %vm3125, %v3179, 0.0
      %3181 = vadd.xlane.f32.xlu0 %v3180
      %v3182 = vpop.xlane.xlu0 %3181
      %v3183 = vmul.f32 %v3182, %v3176
      %v3184 = vadd.f32 %v3183, 1e-05
      %v3185 = vrsqrt.pop %v3184
      %v3186 = vmul.f32 %v3178, %v3185
      %v3188 = vlaneseq
      %v3189 = vshrl.u32 %v3188, 7
      %v3190 = vsub.s32 0, %v3189
      %v3191 = vrot.slane %v3170, %v3190
      %v3193 = vmul.f32 %v3186, %v3191
      %v3195 = vlaneseq
      %v3196 = vshrl.u32 %v3195, 7
      %v3197 = vsub.s32 0, %v3196
      %v3198 = vrot.slane %v3172, %v3197
      %v3200 = vadd.f32 %v3193, %v3198
      %v3201 = vld [vmem:[%s567] sm:$0xf]
      %v3202 = vld [vmem:[%s574] sm:$0x1]
      %v3203 = vpack.c.bf16 %v3200, %v3200
      %s3204 = scalar_lea.vmem %s579, 24
      %v3205 = vld [vmem:[%s3204] sm:$0xf]
      %v3206 = vld [vmem:[%s3204 + $0x4] sm:$0xf]
      %3208 = vrot.lane.b32.xlu0 %v3203, 112
      %v3209 = vpop.permute.xlu0 %3208
      %3210 = vrot.lane.b32.xlu0 %v3203, 96
      %v3211 = vpop.permute.xlu0 %3210
      %3212 = vrot.lane.b32.xlu0 %v3203, 80
      %v3213 = vpop.permute.xlu0 %3212
      %v3215 = vunpack.c.l.s4 1983009808
      %v3216 = vunpack.c.0.s8 %v3215
      %v3217 = vlaneseq
      %v3218 = vshrl.u32 %v3217, 7
      %v3219 = vsub.s32 %v3216, %v3218
      %v3220 = vrot.slane %v3203, %v3219
      %v3223 = vunpack.c.l.s4 1983009808
      %v3224 = vunpack.c.0.s8 %v3223
      %v3225 = vlaneseq
      %v3226 = vshrl.u32 %v3225, 7
      %v3227 = vsub.s32 %v3224, %v3226
      %v3228 = vrot.slane %v3211, %v3227
      %v3229 = vcombine.low %v3220, %v3228
      %v3230 = vcombine.high %v3220, %v3228
      %v3232 = vunpack.c.l.s4 1934713408
      %v3233 = vunpack.c.0.s8 %v3232
      %v3234 = vlaneseq
      %v3235 = vshrl.u32 %v3234, 7
      %v3236 = vsub.s32 %v3233, %v3235
      %v3237 = vrot.slane %v3229, %v3236
      %v3239 = vunpack.c.l.s4 1934713408
      %v3240 = vunpack.c.0.s8 %v3239
      %v3241 = vlaneseq
      %v3242 = vshrl.u32 %v3241, 7
      %v3243 = vsub.s32 %v3240, %v3242
      %v3244 = vrot.slane %v3230, %v3243
      %v3245 = vcombine.high %v3237, 0
      %v3246 = vcombine.high %v3244, 0
      %v3249 = vunpack.c.l.s4 1983009808
      %v3250 = vunpack.c.0.s8 %v3249
      %v3251 = vlaneseq
      %v3252 = vshrl.u32 %v3251, 7
      %v3253 = vsub.s32 %v3250, %v3252
      %v3254 = vrot.slane %v3209, %v3253
      %v3257 = vunpack.c.l.s4 1983009808
      %v3258 = vunpack.c.0.s8 %v3257
      %v3259 = vlaneseq
      %v3260 = vshrl.u32 %v3259, 7
      %v3261 = vsub.s32 %v3258, %v3260
      %v3262 = vrot.slane %v3213, %v3261
      %v3263 = vcombine.low %v3254, %v3262
      %v3264 = vcombine.high %v3254, %v3262
      %v3266 = vunpack.c.l.s4 1934713408
      %v3267 = vunpack.c.0.s8 %v3266
      %v3268 = vlaneseq
      %v3269 = vshrl.u32 %v3268, 7
      %v3270 = vsub.s32 %v3267, %v3269
      %v3271 = vrot.slane %v3263, %v3270
      %v3273 = vunpack.c.l.s4 1934713408
      %v3274 = vunpack.c.0.s8 %v3273
      %v3275 = vlaneseq
      %v3276 = vshrl.u32 %v3275, 7
      %v3277 = vsub.s32 %v3274, %v3276
      %v3278 = vrot.slane %v3264, %v3277
      %v3279 = vcombine.high %v3271, 0
      %v3280 = vcombine.high %v3278, 0
      %v3283 = vpack.i.b16 %v3271, %v3237
      %v3284 = vshrl.u32 %v3237, 16
      %v3285 = vshrl.u32 %v3271, 16
      %v3286 = vpack.i.b16 %v3285, %v3284
      %v3289 = vpack.i.b16 %v3279, %v3245
      %v3290 = vshrl.u32 %v3245, 16
      %v3291 = vshrl.u32 %v3279, 16
      %v3292 = vpack.i.b16 %v3291, %v3290
      %v3295 = vpack.i.b16 %v3278, %v3244
      %v3296 = vshrl.u32 %v3244, 16
      %v3297 = vshrl.u32 %v3278, 16
      %v3298 = vpack.i.b16 %v3297, %v3296
      %v3301 = vpack.i.b16 %v3280, %v3246
      %v3302 = vshrl.u32 %v3246, 16
      %v3303 = vshrl.u32 %v3280, 16
      %v3304 = vpack.i.b16 %v3303, %v3302
      %v3305 = vcombine.low %v3283, %v3286
      %v3306 = vcombine.low %v3289, %v3292
      %v3308 = vunpack.c.l.s4 1983009808
      %v3309 = vunpack.c.0.s8 %v3308
      %v3310 = vlaneseq
      %v3311 = vshrl.u32 %v3310, 7
      %v3312 = vsub.s32 %v3309, %v3311
      %v3313 = vrot.slane %v3305, %v3312
      %v3315 = vunpack.c.l.s4 1983009808
      %v3316 = vunpack.c.0.s8 %v3315
      %v3317 = vlaneseq
      %v3318 = vshrl.u32 %v3317, 7
      %v3319 = vsub.s32 %v3316, %v3318
      %v3320 = vrot.slane %v3306, %v3319
      %v3321 = vcombine.low %v3313, %v3320
      %v3322 = vcombine.low %v3295, %v3298
      %v3323 = vcombine.low %v3301, %v3304
      %v3325 = vunpack.c.l.s4 1983009808
      %v3326 = vunpack.c.0.s8 %v3325
      %v3327 = vlaneseq
      %v3328 = vshrl.u32 %v3327, 7
      %v3329 = vsub.s32 %v3326, %v3328
      %v3330 = vrot.slane %v3322, %v3329
      %v3332 = vunpack.c.l.s4 1983009808
      %v3333 = vunpack.c.0.s8 %v3332
      %v3334 = vlaneseq
      %v3335 = vshrl.u32 %v3334, 7
      %v3336 = vsub.s32 %v3333, %v3335
      %v3337 = vrot.slane %v3323, %v3336
      %v3338 = vcombine.low %v3330, %v3337
      %v3341 = vunpack.c.l.b16 %v3205
      %v3342 = vunpack.c.l.b16 %v3206
      %v3343 = vpack.c.b16 %v3342, %v3341
      %v3346 = vsel %vm765, %v3321, 0
      %v3349 = vsel %vm765, %v3338, 0
      %3351 = vmatprep.subr.bf16.mxu0 0
      %3352 = vmatpush1.bf16.msra.mxu0 %v3343
      %3353 = vmatprep.subr.bf16.mxu0 0
      %3354 = vmatpush1.bf16.msra.mxu0 0
      %3355 = vmatprep.subr.bf16.mxu0 0
      %3356 = vmatpush1.bf16.msra.mxu0 0
      %3357 = vmatprep.subr.bf16.mxu0 0
      %3358 = vmatpush1.bf16.msra.mxu0 0
      %3359 = vmatprep.subr.bf16.mxu0 0
      %3360 = vmatpush1.bf16.msra.mxu0 0
      %3361 = vmatprep.subr.bf16.mxu0 0
      %3362 = vmatpush1.bf16.msra.mxu0 0
      %3363 = vmatprep.subr.bf16.mxu0 0
      %3364 = vmatpush1.bf16.msra.mxu0 0
      %3365 = vmatprep.subr.bf16.mxu0 0
      %3366 = vmatpush1.bf16.msra.mxu0 0
      %3367 = vmatprep.subr.bf16.mxu0 0
      %3368 = vmatpush1.bf16.msra.mxu0 0
      %3369 = vmatprep.subr.bf16.mxu0 0
      %3370 = vmatpush1.bf16.msra.mxu0 0
      %3371 = vmatprep.subr.bf16.mxu0 0
      %3372 = vmatpush1.bf16.msra.mxu0 0
      %3373 = vmatprep.subr.bf16.mxu0 0
      %3374 = vmatpush1.bf16.msra.mxu0 0
      %3375 = vmatprep.subr.bf16.mxu0 0
      %3376 = vmatpush1.bf16.msra.mxu0 0
      %3377 = vmatprep.subr.bf16.mxu0 0
      %3378 = vmatpush1.bf16.msra.mxu0 0
      %3379 = vmatprep.subr.bf16.mxu0 0
      %3380 = vmatpush1.bf16.msra.mxu0 0
      %3381 = vmatprep.subr.bf16.mxu0 0
      %3382 = vmatpush1.bf16.msra.mxu0 0
      %3383 = vmatprep.mubr.bf16.mxu0 0
      %3384 = vmatmul.mubr.bf16.gmra.mrb[0].mxu0 %v3346
      %v3385 = vpop.f32.mrb[0].mxu0
      %v3386 = vadd.f32 0.0, %v3385
      %v3387 = vpop.f32.mrb[0].mxu0
      %v3388 = vpop.f32.mrb[0].mxu0
      %v3389 = vadd.f32 0.0, %v3388
      %v3390 = vpop.f32.mrb[0].mxu0
      %3391 = vmatprep.mubr.bf16.mxu0 0
      %3392 = vmatmul.mubr.bf16.gmra.mrb[0].mxu0 %v3349
      %v3393 = vpop.f32.mrb[0].mxu0
      %v3394 = vadd.f32 0.0, %v3393
      %v3395 = vpop.f32.mrb[0].mxu0
      %v3396 = vpop.f32.mrb[0].mxu0
      %v3397 = vadd.f32 0.0, %v3396
      %v3398 = vpop.f32.mrb[0].mxu0
      %3399 = vdwg.mxu0
      %v3404 = vcombine.high %v3386, %v3386
      %v3405 = vcombine.high %v3389, %v3389
      %v3406 = vcombine.high %v3394, %v3394
      %v3407 = vcombine.high %v3397, %v3397
      %v3412 = vpack.c.bf16 %v3386, %v3386
      %v3413 = vpack.c.bf16 %v3404, %v3404
      %v3414 = vpack.c.bf16 %v3389, %v3389
      %v3415 = vpack.c.bf16 %v3405, %v3405
      %v3416 = vpack.c.bf16 %v3394, %v3394
      %v3417 = vpack.c.bf16 %v3406, %v3406
      %v3418 = vpack.c.bf16 %v3397, %v3397
      %v3419 = vpack.c.bf16 %v3407, %v3407
      %s3420 = scalar_lea.vmem %s579, 32
      %v3421 = vld [vmem:[%s3420] sm:$0xf]
      %v3422 = vld [vmem:[%s3420 + $0x4] sm:$0xf]
      %3424 = vrot.lane.b32.xlu0 %v3201, 112
      %v3425 = vpop.permute.xlu0 %3424
      %3426 = vrot.lane.b32.xlu0 %v3201, 96
      %v3427 = vpop.permute.xlu0 %3426
      %3428 = vrot.lane.b32.xlu0 %v3201, 80
      %v3429 = vpop.permute.xlu0 %3428
      %v3432 = vpack.i.b16 %v3425, %v3201
      %v3433 = vshrl.u32 %v3201, 16
      %v3434 = vshrl.u32 %v3425, 16
      %v3435 = vpack.i.b16 %v3434, %v3433
      %v3438 = vpack.i.b16 %v3429, %v3427
      %v3439 = vshrl.u32 %v3427, 16
      %v3440 = vshrl.u32 %v3429, 16
      %v3441 = vpack.i.b16 %v3440, %v3439
      %v3444 = vunpack.c.l.s4 1983009808
      %v3445 = vunpack.c.0.s8 %v3444
      %v3446 = vlaneseq
      %v3447 = vshrl.u32 %v3446, 7
      %v3448 = vsub.s32 %v3445, %v3447
      %v3449 = vrot.slane %v3432, %v3448
      %v3452 = vunpack.c.l.s4 1983009808
      %v3453 = vunpack.c.0.s8 %v3452
      %v3454 = vlaneseq
      %v3455 = vshrl.u32 %v3454, 7
      %v3456 = vsub.s32 %v3453, %v3455
      %v3457 = vrot.slane %v3438, %v3456
      %v3458 = vcombine.low %v3449, %v3457
      %v3459 = vcombine.high %v3449, %v3457
      %v3461 = vunpack.c.l.s4 1934713408
      %v3462 = vunpack.c.0.s8 %v3461
      %v3463 = vlaneseq
      %v3464 = vshrl.u32 %v3463, 7
      %v3465 = vsub.s32 %v3462, %v3464
      %v3466 = vrot.slane %v3458, %v3465
      %v3468 = vunpack.c.l.s4 1934713408
      %v3469 = vunpack.c.0.s8 %v3468
      %v3470 = vlaneseq
      %v3471 = vshrl.u32 %v3470, 7
      %v3472 = vsub.s32 %v3469, %v3471
      %v3473 = vrot.slane %v3459, %v3472
      %v3474 = vcombine.high %v3466, 0
      %v3475 = vcombine.high %v3473, 0
      %v3478 = vunpack.c.l.s4 1983009808
      %v3479 = vunpack.c.0.s8 %v3478
      %v3480 = vlaneseq
      %v3481 = vshrl.u32 %v3480, 7
      %v3482 = vsub.s32 %v3479, %v3481
      %v3483 = vrot.slane %v3435, %v3482
      %v3486 = vunpack.c.l.s4 1983009808
      %v3487 = vunpack.c.0.s8 %v3486
      %v3488 = vlaneseq
      %v3489 = vshrl.u32 %v3488, 7
      %v3490 = vsub.s32 %v3487, %v3489
      %v3491 = vrot.slane %v3441, %v3490
      %v3492 = vcombine.low %v3483, %v3491
      %v3493 = vcombine.high %v3483, %v3491
      %v3495 = vunpack.c.l.s4 1934713408
      %v3496 = vunpack.c.0.s8 %v3495
      %v3497 = vlaneseq
      %v3498 = vshrl.u32 %v3497, 7
      %v3499 = vsub.s32 %v3496, %v3498
      %v3500 = vrot.slane %v3492, %v3499
      %v3502 = vunpack.c.l.s4 1934713408
      %v3503 = vunpack.c.0.s8 %v3502
      %v3504 = vlaneseq
      %v3505 = vshrl.u32 %v3504, 7
      %v3506 = vsub.s32 %v3503, %v3505
      %v3507 = vrot.slane %v3493, %v3506
      %v3508 = vcombine.high %v3500, 0
      %v3509 = vcombine.high %v3507, 0
      %v3518 = vcombine.low %v3466, %v3500
      %v3519 = vcombine.low %v3474, %v3508
      %v3521 = vunpack.c.l.s4 1983009808
      %v3522 = vunpack.c.0.s8 %v3521
      %v3523 = vlaneseq
      %v3524 = vshrl.u32 %v3523, 7
      %v3525 = vsub.s32 %v3522, %v3524
      %v3526 = vrot.slane %v3518, %v3525
      %v3528 = vunpack.c.l.s4 1983009808
      %v3529 = vunpack.c.0.s8 %v3528
      %v3530 = vlaneseq
      %v3531 = vshrl.u32 %v3530, 7
      %v3532 = vsub.s32 %v3529, %v3531
      %v3533 = vrot.slane %v3519, %v3532
      %v3534 = vcombine.low %v3526, %v3533
      %v3535 = vcombine.low %v3473, %v3507
      %v3536 = vcombine.low %v3475, %v3509
      %v3538 = vunpack.c.l.s4 1983009808
      %v3539 = vunpack.c.0.s8 %v3538
      %v3540 = vlaneseq
      %v3541 = vshrl.u32 %v3540, 7
      %v3542 = vsub.s32 %v3539, %v3541
      %v3543 = vrot.slane %v3535, %v3542
      %v3545 = vunpack.c.l.s4 1983009808
      %v3546 = vunpack.c.0.s8 %v3545
      %v3547 = vlaneseq
      %v3548 = vshrl.u32 %v3547, 7
      %v3549 = vsub.s32 %v3546, %v3548
      %v3550 = vrot.slane %v3536, %v3549
      %v3551 = vcombine.low %v3543, %v3550
      %v3554 = vunpack.c.l.b16 %v3421
      %v3555 = vunpack.c.l.b16 %v3422
      %v3556 = vpack.c.b16 %v3555, %v3554
      %v3559 = vsel %vm765, %v3534, 0
      %v3562 = vsel %vm765, %v3551, 0
      %3564 = vmatprep.subr.bf16.mxu0 0
      %3565 = vmatpush1.bf16.msra.mxu0 %v3556
      %3566 = vmatprep.subr.bf16.mxu0 0
      %3567 = vmatpush1.bf16.msra.mxu0 0
      %3568 = vmatprep.subr.bf16.mxu0 0
      %3569 = vmatpush1.bf16.msra.mxu0 0
      %3570 = vmatprep.subr.bf16.mxu0 0
      %3571 = vmatpush1.bf16.msra.mxu0 0
      %3572 = vmatprep.subr.bf16.mxu0 0
      %3573 = vmatpush1.bf16.msra.mxu0 0
      %3574 = vmatprep.subr.bf16.mxu0 0
      %3575 = vmatpush1.bf16.msra.mxu0 0
      %3576 = vmatprep.subr.bf16.mxu0 0
      %3577 = vmatpush1.bf16.msra.mxu0 0
      %3578 = vmatprep.subr.bf16.mxu0 0
      %3579 = vmatpush1.bf16.msra.mxu0 0
      %3580 = vmatprep.subr.bf16.mxu0 0
      %3581 = vmatpush1.bf16.msra.mxu0 0
      %3582 = vmatprep.subr.bf16.mxu0 0
      %3583 = vmatpush1.bf16.msra.mxu0 0
      %3584 = vmatprep.subr.bf16.mxu0 0
      %3585 = vmatpush1.bf16.msra.mxu0 0
      %3586 = vmatprep.subr.bf16.mxu0 0
      %3587 = vmatpush1.bf16.msra.mxu0 0
      %3588 = vmatprep.subr.bf16.mxu0 0
      %3589 = vmatpush1.bf16.msra.mxu0 0
      %3590 = vmatprep.subr.bf16.mxu0 0
      %3591 = vmatpush1.bf16.msra.mxu0 0
      %3592 = vmatprep.subr.bf16.mxu0 0
      %3593 = vmatpush1.bf16.msra.mxu0 0
      %3594 = vmatprep.subr.bf16.mxu0 0
      %3595 = vmatpush1.bf16.msra.mxu0 0
      %3596 = vmatprep.mubr.bf16.mxu0 0
      %3597 = vmatmul.mubr.bf16.gmra.mrb[0].mxu0 %v3559
      %v3598 = vpop.f32.mrb[0].mxu0
      %v3599 = vadd.f32 0.0, %v3598
      %v3600 = vpop.f32.mrb[0].mxu0
      %v3601 = vpop.f32.mrb[0].mxu0
      %v3602 = vadd.f32 0.0, %v3601
      %v3603 = vpop.f32.mrb[0].mxu0
      %3604 = vmatprep.mubr.bf16.mxu0 0
      %3605 = vmatmul.mubr.bf16.gmra.mrb[0].mxu0 %v3562
      %v3606 = vpop.f32.mrb[0].mxu0
      %v3607 = vadd.f32 0.0, %v3606
      %v3608 = vpop.f32.mrb[0].mxu0
      %v3609 = vpop.f32.mrb[0].mxu0
      %v3610 = vadd.f32 0.0, %v3609
      %v3611 = vpop.f32.mrb[0].mxu0
      %3612 = vdwg.mxu0
      %v3617 = vcombine.high %v3599, %v3599
      %v3618 = vcombine.high %v3602, %v3602
      %v3619 = vcombine.high %v3607, %v3607
      %v3620 = vcombine.high %v3610, %v3610
      %v3625 = vpack.c.bf16 %v3599, %v3599
      %v3626 = vpack.c.bf16 %v3617, %v3617
      %v3627 = vpack.c.bf16 %v3602, %v3602
      %v3628 = vpack.c.bf16 %v3618, %v3618
      %v3629 = vpack.c.bf16 %v3607, %v3607
      %v3630 = vpack.c.bf16 %v3619, %v3619
      %v3631 = vpack.c.bf16 %v3610, %v3610
      %v3632 = vpack.c.bf16 %v3620, %v3620
      %s3633 = scalar_lea.vmem %s579, 40
      %v3634 = vld [vmem:[%s3633] sm:$0xf]
      %v3635 = vld [vmem:[%s3633 + $0x4] sm:$0xf]
      %v3638 = vunpack.c.l.b16 %v3634
      %v3639 = vunpack.c.l.b16 %v3635
      %v3640 = vpack.c.b16 %v3639, %v3638
      %3642 = vmatprep.subr.bf16.mxu0 0
      %3643 = vmatpush1.bf16.msra.mxu0 %v3640
      %3644 = vmatprep.subr.bf16.mxu0 0
      %3645 = vmatpush1.bf16.msra.mxu0 0
      %3646 = vmatprep.subr.bf16.mxu0 0
      %3647 = vmatpush1.bf16.msra.mxu0 0
      %3648 = vmatprep.subr.bf16.mxu0 0
      %3649 = vmatpush1.bf16.msra.mxu0 0
      %3650 = vmatprep.subr.bf16.mxu0 0
      %3651 = vmatpush1.bf16.msra.mxu0 0
      %3652 = vmatprep.subr.bf16.mxu0 0
      %3653 = vmatpush1.bf16.msra.mxu0 0
      %3654 = vmatprep.subr.bf16.mxu0 0
      %3655 = vmatpush1.bf16.msra.mxu0 0
      %3656 = vmatprep.subr.bf16.mxu0 0
      %3657 = vmatpush1.bf16.msra.mxu0 0
      %3658 = vmatprep.subr.bf16.mxu0 0
      %3659 = vmatpush1.bf16.msra.mxu0 0
      %3660 = vmatprep.subr.bf16.mxu0 0
      %3661 = vmatpush1.bf16.msra.mxu0 0
      %3662 = vmatprep.subr.bf16.mxu0 0
      %3663 = vmatpush1.bf16.msra.mxu0 0
      %3664 = vmatprep.subr.bf16.mxu0 0
      %3665 = vmatpush1.bf16.msra.mxu0 0
      %3666 = vmatprep.subr.bf16.mxu0 0
      %3667 = vmatpush1.bf16.msra.mxu0 0
      %3668 = vmatprep.subr.bf16.mxu0 0
      %3669 = vmatpush1.bf16.msra.mxu0 0
      %3670 = vmatprep.subr.bf16.mxu0 0
      %3671 = vmatpush1.bf16.msra.mxu0 0
      %3672 = vmatprep.subr.bf16.mxu0 0
      %3673 = vmatpush1.bf16.msra.mxu0 0
      %3674 = vmatprep.mubr.bf16.mxu0 0
      %3675 = vmatmul.mubr.bf16.gmra.mrb[0].mxu0 %v3559
      %v3676 = vpop.f32.mrb[0].mxu0
      %v3677 = vadd.f32 0.0, %v3676
      %v3678 = vpop.f32.mrb[0].mxu0
      %v3679 = vpop.f32.mrb[0].mxu0
      %v3680 = vadd.f32 0.0, %v3679
      %v3681 = vpop.f32.mrb[0].mxu0
      %3682 = vmatprep.mubr.bf16.mxu0 0
      %3683 = vmatmul.mubr.bf16.gmra.mrb[0].mxu0 %v3562
      %v3684 = vpop.f32.mrb[0].mxu0
      %v3685 = vadd.f32 0.0, %v3684
      %v3686 = vpop.f32.mrb[0].mxu0
      %v3687 = vpop.f32.mrb[0].mxu0
      %v3688 = vadd.f32 0.0, %v3687
      %v3689 = vpop.f32.mrb[0].mxu0
      %3690 = vdwg.mxu0
      %v3695 = vcombine.high %v3677, %v3677
      %v3696 = vcombine.high %v3680, %v3680
      %v3697 = vcombine.high %v3685, %v3685
      %v3698 = vcombine.high %v3688, %v3688
      %v3703 = vpack.c.bf16 %v3677, %v3677
      %v3704 = vpack.c.bf16 %v3695, %v3695
      %v3705 = vpack.c.bf16 %v3680, %v3680
      %v3706 = vpack.c.bf16 %v3696, %v3696
      %v3707 = vpack.c.bf16 %v3685, %v3685
      %v3708 = vpack.c.bf16 %v3697, %v3697
      %v3709 = vpack.c.bf16 %v3688, %v3688
      %v3710 = vpack.c.bf16 %v3698, %v3698
      %v3712 = vlaneseq
      %v3713 = vshrl.u32 %v3712, 7
      %v3714 = vsub.s32 0, %v3713
      %v3715 = vrot.slane %v3202, %v3714
      %v3717 = vcombine.low %v3412, %v3416
      %v3719 = vunpack.c.l.s4 1983009808
      %v3720 = vunpack.c.0.s8 %v3719
      %v3721 = vlaneseq
      %v3722 = vshrl.u32 %v3721, 7
      %v3723 = vsub.s32 %v3720, %v3722
      %v3724 = vrot.slane %v3717, %v3723
      %v3725 = vcombine.low %v3414, %v3418
      %v3727 = vunpack.c.l.s4 1983009808
      %v3728 = vunpack.c.0.s8 %v3727
      %v3729 = vlaneseq
      %v3730 = vshrl.u32 %v3729, 7
      %v3731 = vsub.s32 %v3728, %v3730
      %v3732 = vrot.slane %v3725, %v3731
      %v3733 = vcombine.low %v3724, %v3732
      %v3735 = vunpack.c.l.s4 1934713408
      %v3736 = vunpack.c.0.s8 %v3735
      %v3737 = vlaneseq
      %v3738 = vshrl.u32 %v3737, 7
      %v3739 = vsub.s32 %v3736, %v3738
      %v3740 = vrot.slane %v3733, %v3739
      %v3741 = vcombine.high %v3740, 0
      %v3742 = vcombine.low %v3413, %v3417
      %v3744 = vunpack.c.l.s4 1983009808
      %v3745 = vunpack.c.0.s8 %v3744
      %v3746 = vlaneseq
      %v3747 = vshrl.u32 %v3746, 7
      %v3748 = vsub.s32 %v3745, %v3747
      %v3749 = vrot.slane %v3742, %v3748
      %v3750 = vcombine.low %v3415, %v3419
      %v3752 = vunpack.c.l.s4 1983009808
      %v3753 = vunpack.c.0.s8 %v3752
      %v3754 = vlaneseq
      %v3755 = vshrl.u32 %v3754, 7
      %v3756 = vsub.s32 %v3753, %v3755
      %v3757 = vrot.slane %v3750, %v3756
      %v3758 = vcombine.low %v3749, %v3757
      %v3760 = vunpack.c.l.s4 1934713408
      %v3761 = vunpack.c.0.s8 %v3760
      %v3762 = vlaneseq
      %v3763 = vshrl.u32 %v3762, 7
      %v3764 = vsub.s32 %v3761, %v3763
      %v3765 = vrot.slane %v3758, %v3764
      %v3766 = vcombine.high %v3765, 0
      %v3769 = vpack.i.b16 %v3765, %v3740
      %v3770 = vshrl.u32 %v3740, 16
      %v3771 = vshrl.u32 %v3765, 16
      %v3772 = vpack.i.b16 %v3771, %v3770
      %v3775 = vpack.i.b16 %v3766, %v3741
      %v3776 = vshrl.u32 %v3741, 16
      %v3777 = vshrl.u32 %v3766, 16
      %v3778 = vpack.i.b16 %v3777, %v3776
      %3779 = vxpose.xlu0.c.b16.start [1/8] %v3625, 128
      %3780 = vxpose.xlu0.c.b16.cont [2/8] 0, 128
      %3781 = vxpose.xlu0.c.b16.cont [3/8] 0, 128
      %3782 = vxpose.xlu0.c.b16.cont [4/8] 0, 128
      %3783 = vxpose.xlu0.c.b16.cont [5/8] 0, 128
      %3784 = vxpose.xlu0.c.b16.cont [6/8] 0, 128
      %3785 = vxpose.xlu0.c.b16.cont [7/8] 0, 128
      %3786 = vxpose.xlu0.c.b16.end [8/8] 0, 128
      %v3787 = vpop.trf.xlu0
      %v3788 = vpop.trf.xlu0
      %v3789 = vpop.trf.xlu0
      %v3790 = vpop.trf.xlu0
      %v3791 = vpop.trf.xlu0
      %v3792 = vpop.trf.xlu0
      %v3793 = vpop.trf.xlu0
      %v3794 = vpop.trf.xlu0
      %3795 = vxpose.xlu0.c.b16.start [1/8] %v3626, 128
      %3796 = vxpose.xlu0.c.b16.cont [2/8] 0, 128
      %3797 = vxpose.xlu0.c.b16.cont [3/8] 0, 128
      %3798 = vxpose.xlu0.c.b16.cont [4/8] 0, 128
      %3799 = vxpose.xlu0.c.b16.cont [5/8] 0, 128
      %3800 = vxpose.xlu0.c.b16.cont [6/8] 0, 128
      %3801 = vxpose.xlu0.c.b16.cont [7/8] 0, 128
      %3802 = vxpose.xlu0.c.b16.end [8/8] 0, 128
      %v3803 = vpop.trf.xlu0
      %v3804 = vpop.trf.xlu0
      %v3805 = vpop.trf.xlu0
      %v3806 = vpop.trf.xlu0
      %v3807 = vpop.trf.xlu0
      %v3808 = vpop.trf.xlu0
      %v3809 = vpop.trf.xlu0
      %v3810 = vpop.trf.xlu0
      %3811 = vxpose.xlu0.c.b16.start [1/8] %v3627, 128
      %3812 = vxpose.xlu0.c.b16.cont [2/8] 0, 128
      %3813 = vxpose.xlu0.c.b16.cont [3/8] 0, 128
      %3814 = vxpose.xlu0.c.b16.cont [4/8] 0, 128
      %3815 = vxpose.xlu0.c.b16.cont [5/8] 0, 128
      %3816 = vxpose.xlu0.c.b16.cont [6/8] 0, 128
      %3817 = vxpose.xlu0.c.b16.cont [7/8] 0, 128
      %3818 = vxpose.xlu0.c.b16.end [8/8] 0, 128
      %v3819 = vpop.trf.xlu0
      %v3820 = vpop.trf.xlu0
      %v3821 = vpop.trf.xlu0
      %v3822 = vpop.trf.xlu0
      %v3823 = vpop.trf.xlu0
      %v3824 = vpop.trf.xlu0
      %v3825 = vpop.trf.xlu0
      %v3826 = vpop.trf.xlu0
      %3827 = vxpose.xlu0.c.b16.start [1/8] %v3628, 128
      %3828 = vxpose.xlu0.c.b16.cont [2/8] 0, 128
      %3829 = vxpose.xlu0.c.b16.cont [3/8] 0, 128
      %3830 = vxpose.xlu0.c.b16.cont [4/8] 0, 128
      %3831 = vxpose.xlu0.c.b16.cont [5/8] 0, 128
      %3832 = vxpose.xlu0.c.b16.cont [6/8] 0, 128
      %3833 = vxpose.xlu0.c.b16.cont [7/8] 0, 128
      %3834 = vxpose.xlu0.c.b16.end [8/8] 0, 128
      %v3835 = vpop.trf.xlu0
      %v3836 = vpop.trf.xlu0
      %v3837 = vpop.trf.xlu0
      %v3838 = vpop.trf.xlu0
      %v3839 = vpop.trf.xlu0
      %v3840 = vpop.trf.xlu0
      %v3841 = vpop.trf.xlu0
      %v3842 = vpop.trf.xlu0
      %3843 = vxpose.xlu0.c.b16.start [1/8] %v3629, 128
      %3844 = vxpose.xlu0.c.b16.cont [2/8] 0, 128
      %3845 = vxpose.xlu0.c.b16.cont [3/8] 0, 128
      %3846 = vxpose.xlu0.c.b16.cont [4/8] 0, 128
      %3847 = vxpose.xlu0.c.b16.cont [5/8] 0, 128
      %3848 = vxpose.xlu0.c.b16.cont [6/8] 0, 128
      %3849 = vxpose.xlu0.c.b16.cont [7/8] 0, 128
      %3850 = vxpose.xlu0.c.b16.end [8/8] 0, 128
      %v3851 = vpop.trf.xlu0
      %v3852 = vpop.trf.xlu0
      %v3853 = vpop.trf.xlu0
      %v3854 = vpop.trf.xlu0
      %v3855 = vpop.trf.xlu0
      %v3856 = vpop.trf.xlu0
      %v3857 = vpop.trf.xlu0
      %v3858 = vpop.trf.xlu0
      %3859 = vxpose.xlu0.c.b16.start [1/8] %v3630, 128
      %3860 = vxpose.xlu0.c.b16.cont [2/8] 0, 128
      %3861 = vxpose.xlu0.c.b16.cont [3/8] 0, 128
      %3862 = vxpose.xlu0.c.b16.cont [4/8] 0, 128
      %3863 = vxpose.xlu0.c.b16.cont [5/8] 0, 128
      %3864 = vxpose.xlu0.c.b16.cont [6/8] 0, 128
      %3865 = vxpose.xlu0.c.b16.cont [7/8] 0, 128
      %3866 = vxpose.xlu0.c.b16.end [8/8] 0, 128
      %v3867 = vpop.trf.xlu0
      %v3868 = vpop.trf.xlu0
      %v3869 = vpop.trf.xlu0
      %v3870 = vpop.trf.xlu0
      %v3871 = vpop.trf.xlu0
      %v3872 = vpop.trf.xlu0
      %v3873 = vpop.trf.xlu0
      %v3874 = vpop.trf.xlu0
      %3875 = vxpose.xlu0.c.b16.start [1/8] %v3631, 128
      %3876 = vxpose.xlu0.c.b16.cont [2/8] 0, 128
      %3877 = vxpose.xlu0.c.b16.cont [3/8] 0, 128
      %3878 = vxpose.xlu0.c.b16.cont [4/8] 0, 128
      %3879 = vxpose.xlu0.c.b16.cont [5/8] 0, 128
      %3880 = vxpose.xlu0.c.b16.cont [6/8] 0, 128
      %3881 = vxpose.xlu0.c.b16.cont [7/8] 0, 128
      %3882 = vxpose.xlu0.c.b16.end [8/8] 0, 128
      %v3883 = vpop.trf.xlu0
      %v3884 = vpop.trf.xlu0
      %v3885 = vpop.trf.xlu0
      %v3886 = vpop.trf.xlu0
      %v3887 = vpop.trf.xlu0
      %v3888 = vpop.trf.xlu0
      %v3889 = vpop.trf.xlu0
      %v3890 = vpop.trf.xlu0
      %3891 = vxpose.xlu0.c.b16.start [1/8] %v3632, 128
      %3892 = vxpose.xlu0.c.b16.cont [2/8] 0, 128
      %3893 = vxpose.xlu0.c.b16.cont [3/8] 0, 128
      %3894 = vxpose.xlu0.c.b16.cont [4/8] 0, 128
      %3895 = vxpose.xlu0.c.b16.cont [5/8] 0, 128
      %3896 = vxpose.xlu0.c.b16.cont [6/8] 0, 128
      %3897 = vxpose.xlu0.c.b16.cont [7/8] 0, 128
      %3898 = vxpose.xlu0.c.b16.end [8/8] 0, 128
      %v3899 = vpop.trf.xlu0
      %v3900 = vpop.trf.xlu0
      %v3901 = vpop.trf.xlu0
      %v3902 = vpop.trf.xlu0
      %v3903 = vpop.trf.xlu0
      %v3904 = vpop.trf.xlu0
      %v3905 = vpop.trf.xlu0
      %v3906 = vpop.trf.xlu0
      %v3909 = vpack.i.b16 %v3803, %v3787
      %v3911 = vshrl.u32 %v3787, 16
      %v3912 = vshrl.u32 %v3803, 16
      %v3913 = vpack.i.b16 %v3912, %v3911
      %v3917 = vpack.i.b16 %v3835, %v3819
      %v3919 = vshrl.u32 %v3819, 16
      %v3920 = vshrl.u32 %v3835, 16
      %v3921 = vpack.i.b16 %v3920, %v3919
      %v3925 = vpack.i.b16 %v3867, %v3851
      %v3927 = vshrl.u32 %v3851, 16
      %v3928 = vshrl.u32 %v3867, 16
      %v3929 = vpack.i.b16 %v3928, %v3927
      %v3933 = vpack.i.b16 %v3899, %v3883
      %v3935 = vshrl.u32 %v3883, 16
      %v3936 = vshrl.u32 %v3899, 16
      %v3937 = vpack.i.b16 %v3936, %v3935
      %v3939 = vcombine.low %v3909, %v3925
      %v3940 = vcombine.high %v3909, %v3925
      %v3942 = vunpack.c.l.s4 1983009808
      %v3943 = vunpack.c.0.s8 %v3942
      %v3944 = vlaneseq
      %v3945 = vshrl.u32 %v3944, 7
      %v3946 = vsub.s32 %v3943, %v3945
      %v3947 = vrot.slane %v3939, %v3946
      %v3949 = vunpack.c.l.s4 1983009808
      %v3950 = vunpack.c.0.s8 %v3949
      %v3951 = vlaneseq
      %v3952 = vshrl.u32 %v3951, 7
      %v3953 = vsub.s32 %v3950, %v3952
      %v3954 = vrot.slane %v3940, %v3953
      %v3955 = vcombine.low %v3917, %v3933
      %v3956 = vcombine.high %v3917, %v3933
      %v3958 = vunpack.c.l.s4 1983009808
      %v3959 = vunpack.c.0.s8 %v3958
      %v3960 = vlaneseq
      %v3961 = vshrl.u32 %v3960, 7
      %v3962 = vsub.s32 %v3959, %v3961
      %v3963 = vrot.slane %v3955, %v3962
      %v3965 = vunpack.c.l.s4 1983009808
      %v3966 = vunpack.c.0.s8 %v3965
      %v3967 = vlaneseq
      %v3968 = vshrl.u32 %v3967, 7
      %v3969 = vsub.s32 %v3966, %v3968
      %v3970 = vrot.slane %v3956, %v3969
      %v3971 = vcombine.low %v3947, %v3963
      %v3972 = vcombine.high %v3947, %v3963
      %v3974 = vunpack.c.l.s4 1934713408
      %v3975 = vunpack.c.0.s8 %v3974
      %v3976 = vlaneseq
      %v3977 = vshrl.u32 %v3976, 7
      %v3978 = vsub.s32 %v3975, %v3977
      %v3979 = vrot.slane %v3971, %v3978
      %v3981 = vunpack.c.l.s4 1934713408
      %v3982 = vunpack.c.0.s8 %v3981
      %v3983 = vlaneseq
      %v3984 = vshrl.u32 %v3983, 7
      %v3985 = vsub.s32 %v3982, %v3984
      %v3986 = vrot.slane %v3972, %v3985
      %v3987 = vcombine.low %v3954, %v3970
      %v3988 = vcombine.high %v3954, %v3970
      %v3990 = vunpack.c.l.s4 1934713408
      %v3991 = vunpack.c.0.s8 %v3990
      %v3992 = vlaneseq
      %v3993 = vshrl.u32 %v3992, 7
      %v3994 = vsub.s32 %v3991, %v3993
      %v3995 = vrot.slane %v3987, %v3994
      %v3997 = vunpack.c.l.s4 1934713408
      %v3998 = vunpack.c.0.s8 %v3997
      %v3999 = vlaneseq
      %v4000 = vshrl.u32 %v3999, 7
      %v4001 = vsub.s32 %v3998, %v4000
      %v4002 = vrot.slane %v3988, %v4001
      %v4003 = vcombine.high %v3979, 0
      %v4004 = vcombine.high %v3986, 0
      %v4005 = vcombine.high %v3995, 0
      %v4006 = vcombine.high %v4002, 0
      %v4007 = vcombine.low %v3913, %v3929
      %v4008 = vcombine.high %v3913, %v3929
      %v4010 = vunpack.c.l.s4 1983009808
      %v4011 = vunpack.c.0.s8 %v4010
      %v4012 = vlaneseq
      %v4013 = vshrl.u32 %v4012, 7
      %v4014 = vsub.s32 %v4011, %v4013
      %v4015 = vrot.slane %v4007, %v4014
      %v4017 = vunpack.c.l.s4 1983009808
      %v4018 = vunpack.c.0.s8 %v4017
      %v4019 = vlaneseq
      %v4020 = vshrl.u32 %v4019, 7
      %v4021 = vsub.s32 %v4018, %v4020
      %v4022 = vrot.slane %v4008, %v4021
      %v4023 = vcombine.low %v3921, %v3937
      %v4024 = vcombine.high %v3921, %v3937
      %v4026 = vunpack.c.l.s4 1983009808
      %v4027 = vunpack.c.0.s8 %v4026
      %v4028 = vlaneseq
      %v4029 = vshrl.u32 %v4028, 7
      %v4030 = vsub.s32 %v4027, %v4029
      %v4031 = vrot.slane %v4023, %v4030
      %v4033 = vunpack.c.l.s4 1983009808
      %v4034 = vunpack.c.0.s8 %v4033
      %v4035 = vlaneseq
      %v4036 = vshrl.u32 %v4035, 7
      %v4037 = vsub.s32 %v4034, %v4036
      %v4038 = vrot.slane %v4024, %v4037
      %v4039 = vcombine.low %v4015, %v4031
      %v4040 = vcombine.high %v4015, %v4031
      %v4042 = vunpack.c.l.s4 1934713408
      %v4043 = vunpack.c.0.s8 %v4042
      %v4044 = vlaneseq
      %v4045 = vshrl.u32 %v4044, 7
      %v4046 = vsub.s32 %v4043, %v4045
      %v4047 = vrot.slane %v4039, %v4046
      %v4049 = vunpack.c.l.s4 1934713408
      %v4050 = vunpack.c.0.s8 %v4049
      %v4051 = vlaneseq
      %v4052 = vshrl.u32 %v4051, 7
      %v4053 = vsub.s32 %v4050, %v4052
      %v4054 = vrot.slane %v4040, %v4053
      %v4055 = vcombine.low %v4022, %v4038
      %v4056 = vcombine.high %v4022, %v4038
      %v4058 = vunpack.c.l.s4 1934713408
      %v4059 = vunpack.c.0.s8 %v4058
      %v4060 = vlaneseq
      %v4061 = vshrl.u32 %v4060, 7
      %v4062 = vsub.s32 %v4059, %v4061
      %v4063 = vrot.slane %v4055, %v4062
      %v4065 = vunpack.c.l.s4 1934713408
      %v4066 = vunpack.c.0.s8 %v4065
      %v4067 = vlaneseq
      %v4068 = vshrl.u32 %v4067, 7
      %v4069 = vsub.s32 %v4066, %v4068
      %v4070 = vrot.slane %v4056, %v4069
      %v4071 = vcombine.high %v4047, 0
      %v4072 = vcombine.high %v4054, 0
      %v4073 = vcombine.high %v4063, 0
      %v4074 = vcombine.high %v4070, 0
      %4075 = vxpose.xlu0.c.b16.start [1/8] %v3979, 128
      %4076 = vxpose.xlu0.c.b16.cont [2/8] 0, 128
      %4077 = vxpose.xlu0.c.b16.cont [3/8] 0, 128
      %4078 = vxpose.xlu0.c.b16.cont [4/8] 0, 128
      %4079 = vxpose.xlu0.c.b16.cont [5/8] 0, 128
      %4080 = vxpose.xlu0.c.b16.cont [6/8] 0, 128
      %4081 = vxpose.xlu0.c.b16.cont [7/8] 0, 128
      %4082 = vxpose.xlu0.c.b16.end [8/8] 0, 128
      %v4083 = vpop.trf.xlu0
      %v4084 = vpop.trf.xlu0
      %v4085 = vpop.trf.xlu0
      %v4086 = vpop.trf.xlu0
      %v4087 = vpop.trf.xlu0
      %v4088 = vpop.trf.xlu0
      %v4089 = vpop.trf.xlu0
      %v4090 = vpop.trf.xlu0
      %4091 = vxpose.xlu0.c.b16.start [1/8] %v4047, 128
      %4092 = vxpose.xlu0.c.b16.cont [2/8] 0, 128
      %4093 = vxpose.xlu0.c.b16.cont [3/8] 0, 128
      %4094 = vxpose.xlu0.c.b16.cont [4/8] 0, 128
      %4095 = vxpose.xlu0.c.b16.cont [5/8] 0, 128
      %4096 = vxpose.xlu0.c.b16.cont [6/8] 0, 128
      %4097 = vxpose.xlu0.c.b16.cont [7/8] 0, 128
      %4098 = vxpose.xlu0.c.b16.end [8/8] 0, 128
      %v4099 = vpop.trf.xlu0
      %v4100 = vpop.trf.xlu0
      %v4101 = vpop.trf.xlu0
      %v4102 = vpop.trf.xlu0
      %v4103 = vpop.trf.xlu0
      %v4104 = vpop.trf.xlu0
      %v4105 = vpop.trf.xlu0
      %v4106 = vpop.trf.xlu0
      %4107 = vxpose.xlu0.c.b16.start [1/8] %v4003, 128
      %4108 = vxpose.xlu0.c.b16.cont [2/8] 0, 128
      %4109 = vxpose.xlu0.c.b16.cont [3/8] 0, 128
      %4110 = vxpose.xlu0.c.b16.cont [4/8] 0, 128
      %4111 = vxpose.xlu0.c.b16.cont [5/8] 0, 128
      %4112 = vxpose.xlu0.c.b16.cont [6/8] 0, 128
      %4113 = vxpose.xlu0.c.b16.cont [7/8] 0, 128
      %4114 = vxpose.xlu0.c.b16.end [8/8] 0, 128
      %v4115 = vpop.trf.xlu0
      %v4116 = vpop.trf.xlu0
      %v4117 = vpop.trf.xlu0
      %v4118 = vpop.trf.xlu0
      %v4119 = vpop.trf.xlu0
      %v4120 = vpop.trf.xlu0
      %v4121 = vpop.trf.xlu0
      %v4122 = vpop.trf.xlu0
      %4123 = vxpose.xlu0.c.b16.start [1/8] %v4071, 128
      %4124 = vxpose.xlu0.c.b16.cont [2/8] 0, 128
      %4125 = vxpose.xlu0.c.b16.cont [3/8] 0, 128
      %4126 = vxpose.xlu0.c.b16.cont [4/8] 0, 128
      %4127 = vxpose.xlu0.c.b16.cont [5/8] 0, 128
      %4128 = vxpose.xlu0.c.b16.cont [6/8] 0, 128
      %4129 = vxpose.xlu0.c.b16.cont [7/8] 0, 128
      %4130 = vxpose.xlu0.c.b16.end [8/8] 0, 128
      %v4131 = vpop.trf.xlu0
      %v4132 = vpop.trf.xlu0
      %v4133 = vpop.trf.xlu0
      %v4134 = vpop.trf.xlu0
      %v4135 = vpop.trf.xlu0
      %v4136 = vpop.trf.xlu0
      %v4137 = vpop.trf.xlu0
      %v4138 = vpop.trf.xlu0
      %4139 = vxpose.xlu0.c.b16.start [1/8] %v3986, 128
      %4140 = vxpose.xlu0.c.b16.cont [2/8] 0, 128
      %4141 = vxpose.xlu0.c.b16.cont [3/8] 0, 128
      %4142 = vxpose.xlu0.c.b16.cont [4/8] 0, 128
      %4143 = vxpose.xlu0.c.b16.cont [5/8] 0, 128
      %4144 = vxpose.xlu0.c.b16.cont [6/8] 0, 128
      %4145 = vxpose.xlu0.c.b16.cont [7/8] 0, 128
      %4146 = vxpose.xlu0.c.b16.end [8/8] 0, 128
      %v4147 = vpop.trf.xlu0
      %v4148 = vpop.trf.xlu0
      %v4149 = vpop.trf.xlu0
      %v4150 = vpop.trf.xlu0
      %v4151 = vpop.trf.xlu0
      %v4152 = vpop.trf.xlu0
      %v4153 = vpop.trf.xlu0
      %v4154 = vpop.trf.xlu0
      %4155 = vxpose.xlu0.c.b16.start [1/8] %v4054, 128
      %4156 = vxpose.xlu0.c.b16.cont [2/8] 0, 128
      %4157 = vxpose.xlu0.c.b16.cont [3/8] 0, 128
      %4158 = vxpose.xlu0.c.b16.cont [4/8] 0, 128
      %4159 = vxpose.xlu0.c.b16.cont [5/8] 0, 128
      %4160 = vxpose.xlu0.c.b16.cont [6/8] 0, 128
      %4161 = vxpose.xlu0.c.b16.cont [7/8] 0, 128
      %4162 = vxpose.xlu0.c.b16.end [8/8] 0, 128
      %v4163 = vpop.trf.xlu0
      %v4164 = vpop.trf.xlu0
      %v4165 = vpop.trf.xlu0
      %v4166 = vpop.trf.xlu0
      %v4167 = vpop.trf.xlu0
      %v4168 = vpop.trf.xlu0
      %v4169 = vpop.trf.xlu0
      %v4170 = vpop.trf.xlu0
      %4171 = vxpose.xlu0.c.b16.start [1/8] %v4004, 128
      %4172 = vxpose.xlu0.c.b16.cont [2/8] 0, 128
      %4173 = vxpose.xlu0.c.b16.cont [3/8] 0, 128
      %4174 = vxpose.xlu0.c.b16.cont [4/8] 0, 128
      %4175 = vxpose.xlu0.c.b16.cont [5/8] 0, 128
      %4176 = vxpose.xlu0.c.b16.cont [6/8] 0, 128
      %4177 = vxpose.xlu0.c.b16.cont [7/8] 0, 128
      %4178 = vxpose.xlu0.c.b16.end [8/8] 0, 128
      %v4179 = vpop.trf.xlu0
      %v4180 = vpop.trf.xlu0
      %v4181 = vpop.trf.xlu0
      %v4182 = vpop.trf.xlu0
      %v4183 = vpop.trf.xlu0
      %v4184 = vpop.trf.xlu0
      %v4185 = vpop.trf.xlu0
      %v4186 = vpop.trf.xlu0
      %4187 = vxpose.xlu0.c.b16.start [1/8] %v4072, 128
      %4188 = vxpose.xlu0.c.b16.cont [2/8] 0, 128
      %4189 = vxpose.xlu0.c.b16.cont [3/8] 0, 128
      %4190 = vxpose.xlu0.c.b16.cont [4/8] 0, 128
      %4191 = vxpose.xlu0.c.b16.cont [5/8] 0, 128
      %4192 = vxpose.xlu0.c.b16.cont [6/8] 0, 128
      %4193 = vxpose.xlu0.c.b16.cont [7/8] 0, 128
      %4194 = vxpose.xlu0.c.b16.end [8/8] 0, 128
      %v4195 = vpop.trf.xlu0
      %v4196 = vpop.trf.xlu0
      %v4197 = vpop.trf.xlu0
      %v4198 = vpop.trf.xlu0
      %v4199 = vpop.trf.xlu0
      %v4200 = vpop.trf.xlu0
      %v4201 = vpop.trf.xlu0
      %v4202 = vpop.trf.xlu0
      %4203 = vxpose.xlu0.c.b16.start [1/8] %v3995, 128
      %4204 = vxpose.xlu0.c.b16.cont [2/8] 0, 128
      %4205 = vxpose.xlu0.c.b16.cont [3/8] 0, 128
      %4206 = vxpose.xlu0.c.b16.cont [4/8] 0, 128
      %4207 = vxpose.xlu0.c.b16.cont [5/8] 0, 128
      %4208 = vxpose.xlu0.c.b16.cont [6/8] 0, 128
      %4209 = vxpose.xlu0.c.b16.cont [7/8] 0, 128
      %4210 = vxpose.xlu0.c.b16.end [8/8] 0, 128
      %v4211 = vpop.trf.xlu0
      %v4212 = vpop.trf.xlu0
      %v4213 = vpop.trf.xlu0
      %v4214 = vpop.trf.xlu0
      %v4215 = vpop.trf.xlu0
      %v4216 = vpop.trf.xlu0
      %v4217 = vpop.trf.xlu0
      %v4218 = vpop.trf.xlu0
      %4219 = vxpose.xlu0.c.b16.start [1/8] %v4063, 128
      %4220 = vxpose.xlu0.c.b16.cont [2/8] 0, 128
      %4221 = vxpose.xlu0.c.b16.cont [3/8] 0, 128
      %4222 = vxpose.xlu0.c.b16.cont [4/8] 0, 128
      %4223 = vxpose.xlu0.c.b16.cont [5/8] 0, 128
      %4224 = vxpose.xlu0.c.b16.cont [6/8] 0, 128
      %4225 = vxpose.xlu0.c.b16.cont [7/8] 0, 128
      %4226 = vxpose.xlu0.c.b16.end [8/8] 0, 128
      %v4227 = vpop.trf.xlu0
      %v4228 = vpop.trf.xlu0
      %v4229 = vpop.trf.xlu0
      %v4230 = vpop.trf.xlu0
      %v4231 = vpop.trf.xlu0
      %v4232 = vpop.trf.xlu0
      %v4233 = vpop.trf.xlu0
      %v4234 = vpop.trf.xlu0
      %4235 = vxpose.xlu0.c.b16.start [1/8] %v4005, 128
      %4236 = vxpose.xlu0.c.b16.cont [2/8] 0, 128
      %4237 = vxpose.xlu0.c.b16.cont [3/8] 0, 128
      %4238 = vxpose.xlu0.c.b16.cont [4/8] 0, 128
      %4239 = vxpose.xlu0.c.b16.cont [5/8] 0, 128
      %4240 = vxpose.xlu0.c.b16.cont [6/8] 0, 128
      %4241 = vxpose.xlu0.c.b16.cont [7/8] 0, 128
      %4242 = vxpose.xlu0.c.b16.end [8/8] 0, 128
      %v4243 = vpop.trf.xlu0
      %v4244 = vpop.trf.xlu0
      %v4245 = vpop.trf.xlu0
      %v4246 = vpop.trf.xlu0
      %v4247 = vpop.trf.xlu0
      %v4248 = vpop.trf.xlu0
      %v4249 = vpop.trf.xlu0
      %v4250 = vpop.trf.xlu0
      %4251 = vxpose.xlu0.c.b16.start [1/8] %v4073, 128
      %4252 = vxpose.xlu0.c.b16.cont [2/8] 0, 128
      %4253 = vxpose.xlu0.c.b16.cont [3/8] 0, 128
      %4254 = vxpose.xlu0.c.b16.cont [4/8] 0, 128
      %4255 = vxpose.xlu0.c.b16.cont [5/8] 0, 128
      %4256 = vxpose.xlu0.c.b16.cont [6/8] 0, 128
      %4257 = vxpose.xlu0.c.b16.cont [7/8] 0, 128
      %4258 = vxpose.xlu0.c.b16.end [8/8] 0, 128
      %v4259 = vpop.trf.xlu0
      %v4260 = vpop.trf.xlu0
      %v4261 = vpop.trf.xlu0
      %v4262 = vpop.trf.xlu0
      %v4263 = vpop.trf.xlu0
      %v4264 = vpop.trf.xlu0
      %v4265 = vpop.trf.xlu0
      %v4266 = vpop.trf.xlu0
      %4267 = vxpose.xlu0.c.b16.start [1/8] %v4002, 128
      %4268 = vxpose.xlu0.c.b16.cont [2/8] 0, 128
      %4269 = vxpose.xlu0.c.b16.cont [3/8] 0, 128
      %4270 = vxpose.xlu0.c.b16.cont [4/8] 0, 128
      %4271 = vxpose.xlu0.c.b16.cont [5/8] 0, 128
      %4272 = vxpose.xlu0.c.b16.cont [6/8] 0, 128
      %4273 = vxpose.xlu0.c.b16.cont [7/8] 0, 128
      %4274 = vxpose.xlu0.c.b16.end [8/8] 0, 128
      %v4275 = vpop.trf.xlu0
      %v4276 = vpop.trf.xlu0
      %v4277 = vpop.trf.xlu0
      %v4278 = vpop.trf.xlu0
      %v4279 = vpop.trf.xlu0
      %v4280 = vpop.trf.xlu0
      %v4281 = vpop.trf.xlu0
      %v4282 = vpop.trf.xlu0
      %4283 = vxpose.xlu0.c.b16.start [1/8] %v4070, 128
      %4284 = vxpose.xlu0.c.b16.cont [2/8] 0, 128
      %4285 = vxpose.xlu0.c.b16.cont [3/8] 0, 128
      %4286 = vxpose.xlu0.c.b16.cont [4/8] 0, 128
      %4287 = vxpose.xlu0.c.b16.cont [5/8] 0, 128
      %4288 = vxpose.xlu0.c.b16.cont [6/8] 0, 128
      %4289 = vxpose.xlu0.c.b16.cont [7/8] 0, 128
      %4290 = vxpose.xlu0.c.b16.end [8/8] 0, 128
      %v4291 = vpop.trf.xlu0
      %v4292 = vpop.trf.xlu0
      %v4293 = vpop.trf.xlu0
      %v4294 = vpop.trf.xlu0
      %v4295 = vpop.trf.xlu0
      %v4296 = vpop.trf.xlu0
      %v4297 = vpop.trf.xlu0
      %v4298 = vpop.trf.xlu0
      %4299 = vxpose.xlu0.c.b16.start [1/8] %v4006, 128
      %4300 = vxpose.xlu0.c.b16.cont [2/8] 0, 128
      %4301 = vxpose.xlu0.c.b16.cont [3/8] 0, 128
      %4302 = vxpose.xlu0.c.b16.cont [4/8] 0, 128
      %4303 = vxpose.xlu0.c.b16.cont [5/8] 0, 128
      %4304 = vxpose.xlu0.c.b16.cont [6/8] 0, 128
      %4305 = vxpose.xlu0.c.b16.cont [7/8] 0, 128
      %4306 = vxpose.xlu0.c.b16.end [8/8] 0, 128
      %v4307 = vpop.trf.xlu0
      %v4308 = vpop.trf.xlu0
      %v4309 = vpop.trf.xlu0
      %v4310 = vpop.trf.xlu0
      %v4311 = vpop.trf.xlu0
      %v4312 = vpop.trf.xlu0
      %v4313 = vpop.trf.xlu0
      %v4314 = vpop.trf.xlu0
      %4315 = vxpose.xlu0.c.b16.start [1/8] %v4074, 128
      %4316 = vxpose.xlu0.c.b16.cont [2/8] 0, 128
      %4317 = vxpose.xlu0.c.b16.cont [3/8] 0, 128
      %4318 = vxpose.xlu0.c.b16.cont [4/8] 0, 128
      %4319 = vxpose.xlu0.c.b16.cont [5/8] 0, 128
      %4320 = vxpose.xlu0.c.b16.cont [6/8] 0, 128
      %4321 = vxpose.xlu0.c.b16.cont [7/8] 0, 128
      %4322 = vxpose.xlu0.c.b16.end [8/8] 0, 128
      %v4323 = vpop.trf.xlu0
      %v4324 = vpop.trf.xlu0
      %v4325 = vpop.trf.xlu0
      %v4326 = vpop.trf.xlu0
      %v4327 = vpop.trf.xlu0
      %v4328 = vpop.trf.xlu0
      %v4329 = vpop.trf.xlu0
      %v4330 = vpop.trf.xlu0
      %v4331 = vcombine.low %v4083, %v4147
      %v4333 = vunpack.c.l.s4 1983009808
      %v4334 = vunpack.c.0.s8 %v4333
      %v4335 = vlaneseq
      %v4336 = vshrl.u32 %v4335, 7
      %v4337 = vsub.s32 %v4334, %v4336
      %v4338 = vrot.slane %v4331, %v4337
      %v4339 = vcombine.low %v4115, %v4179
      %v4341 = vunpack.c.l.s4 1983009808
      %v4342 = vunpack.c.0.s8 %v4341
      %v4343 = vlaneseq
      %v4344 = vshrl.u32 %v4343, 7
      %v4345 = vsub.s32 %v4342, %v4344
      %v4346 = vrot.slane %v4339, %v4345
      %v4347 = vcombine.low %v4211, %v4275
      %v4349 = vunpack.c.l.s4 1983009808
      %v4350 = vunpack.c.0.s8 %v4349
      %v4351 = vlaneseq
      %v4352 = vshrl.u32 %v4351, 7
      %v4353 = vsub.s32 %v4350, %v4352
      %v4354 = vrot.slane %v4347, %v4353
      %v4355 = vcombine.low %v4243, %v4307
      %v4357 = vunpack.c.l.s4 1983009808
      %v4358 = vunpack.c.0.s8 %v4357
      %v4359 = vlaneseq
      %v4360 = vshrl.u32 %v4359, 7
      %v4361 = vsub.s32 %v4358, %v4360
      %v4362 = vrot.slane %v4355, %v4361
      %v4363 = vcombine.low %v4338, %v4346
      %v4365 = vunpack.c.l.s4 1934713408
      %v4366 = vunpack.c.0.s8 %v4365
      %v4367 = vlaneseq
      %v4368 = vshrl.u32 %v4367, 7
      %v4369 = vsub.s32 %v4366, %v4368
      %v4370 = vrot.slane %v4363, %v4369
      %v4371 = vcombine.low %v4354, %v4362
      %v4373 = vunpack.c.l.s4 1934713408
      %v4374 = vunpack.c.0.s8 %v4373
      %v4375 = vlaneseq
      %v4376 = vshrl.u32 %v4375, 7
      %v4377 = vsub.s32 %v4374, %v4376
      %v4378 = vrot.slane %v4371, %v4377
      %v4379 = vcombine.low %v4370, %v4378
      %v4380 = vcombine.high %v4370, %v4378
      %v4381 = vcombine.low %v4099, %v4163
      %v4383 = vunpack.c.l.s4 1983009808
      %v4384 = vunpack.c.0.s8 %v4383
      %v4385 = vlaneseq
      %v4386 = vshrl.u32 %v4385, 7
      %v4387 = vsub.s32 %v4384, %v4386
      %v4388 = vrot.slane %v4381, %v4387
      %v4389 = vcombine.low %v4131, %v4195
      %v4391 = vunpack.c.l.s4 1983009808
      %v4392 = vunpack.c.0.s8 %v4391
      %v4393 = vlaneseq
      %v4394 = vshrl.u32 %v4393, 7
      %v4395 = vsub.s32 %v4392, %v4394
      %v4396 = vrot.slane %v4389, %v4395
      %v4397 = vcombine.low %v4227, %v4291
      %v4399 = vunpack.c.l.s4 1983009808
      %v4400 = vunpack.c.0.s8 %v4399
      %v4401 = vlaneseq
      %v4402 = vshrl.u32 %v4401, 7
      %v4403 = vsub.s32 %v4400, %v4402
      %v4404 = vrot.slane %v4397, %v4403
      %v4405 = vcombine.low %v4259, %v4323
      %v4407 = vunpack.c.l.s4 1983009808
      %v4408 = vunpack.c.0.s8 %v4407
      %v4409 = vlaneseq
      %v4410 = vshrl.u32 %v4409, 7
      %v4411 = vsub.s32 %v4408, %v4410
      %v4412 = vrot.slane %v4405, %v4411
      %v4413 = vcombine.low %v4388, %v4396
      %v4415 = vunpack.c.l.s4 1934713408
      %v4416 = vunpack.c.0.s8 %v4415
      %v4417 = vlaneseq
      %v4418 = vshrl.u32 %v4417, 7
      %v4419 = vsub.s32 %v4416, %v4418
      %v4420 = vrot.slane %v4413, %v4419
      %v4421 = vcombine.low %v4404, %v4412
      %v4423 = vunpack.c.l.s4 1934713408
      %v4424 = vunpack.c.0.s8 %v4423
      %v4425 = vlaneseq
      %v4426 = vshrl.u32 %v4425, 7
      %v4427 = vsub.s32 %v4424, %v4426
      %v4428 = vrot.slane %v4421, %v4427
      %v4429 = vcombine.low %v4420, %v4428
      %v4430 = vcombine.high %v4420, %v4428
      %v4433 = vpack.i.b16 %v4429, %v4379
      %v4435 = vshrl.u32 %v4379, 16
      %v4436 = vshrl.u32 %v4429, 16
      %v4437 = vpack.i.b16 %v4436, %v4435
      %v4441 = vpack.i.b16 %v4430, %v4380
      %v4443 = vshrl.u32 %v4380, 16
      %v4444 = vshrl.u32 %v4430, 16
      %v4445 = vpack.i.b16 %v4444, %v4443
      %v4448 = vsel %vm765, %v3769, 0
      %4450 = vmatprep.subr.bf16.mxu0 0
      %4451 = vmatpush1.bf16.msra.mxu0 %v4433
      %4452 = vmatprep.subr.bf16.mxu0 0
      %4453 = vmatpush1.bf16.msra.mxu0 0
      %4454 = vmatprep.subr.bf16.mxu0 0
      %4455 = vmatpush1.bf16.msra.mxu0 0
      %4456 = vmatprep.subr.bf16.mxu0 0
      %4457 = vmatpush1.bf16.msra.mxu0 0
      %4458 = vmatprep.subr.bf16.mxu0 0
      %4459 = vmatpush1.bf16.msra.mxu0 0
      %4460 = vmatprep.subr.bf16.mxu0 0
      %4461 = vmatpush1.bf16.msra.mxu0 0
      %4462 = vmatprep.subr.bf16.mxu0 0
      %4463 = vmatpush1.bf16.msra.mxu0 0
      %4464 = vmatprep.subr.bf16.mxu0 0
      %4465 = vmatpush1.bf16.msra.mxu0 0
      %4466 = vmatprep.subr.bf16.mxu0 0
      %4467 = vmatpush1.bf16.msra.mxu0 0
      %4468 = vmatprep.subr.bf16.mxu0 0
      %4469 = vmatpush1.bf16.msra.mxu0 0
      %4470 = vmatprep.subr.bf16.mxu0 0
      %4471 = vmatpush1.bf16.msra.mxu0 0
      %4472 = vmatprep.subr.bf16.mxu0 0
      %4473 = vmatpush1.bf16.msra.mxu0 0
      %4474 = vmatprep.subr.bf16.mxu0 0
      %4475 = vmatpush1.bf16.msra.mxu0 0
      %4476 = vmatprep.subr.bf16.mxu0 0
      %4477 = vmatpush1.bf16.msra.mxu0 0
      %4478 = vmatprep.subr.bf16.mxu0 0
      %4479 = vmatpush1.bf16.msra.mxu0 0
      %4480 = vmatprep.subr.bf16.mxu0 0
      %4481 = vmatpush1.bf16.msra.mxu0 0
      %4482 = vmatprep.mubr.bf16.mxu0 0
      %4483 = vmatmul.mubr.bf16.gmra.mrb[0].mxu0 %v4448
      %v4484 = vpop.f32.mrb[0].mxu0
      %v4485 = vadd.f32 %v3715, %v4484
      %v4486 = vpop.f32.mrb[0].mxu0
      %v4487 = vpop.f32.mrb[0].mxu0
      %v4488 = vpop.f32.mrb[0].mxu0
      %4489 = vdwg.mxu0
      %v4491 = vsel %vm765, %v3772, 0
      %4493 = vmatprep.subr.bf16.mxu0 0
      %4494 = vmatpush1.bf16.msra.mxu0 %v4437
      %4495 = vmatprep.subr.bf16.mxu0 0
      %4496 = vmatpush1.bf16.msra.mxu0 0
      %4497 = vmatprep.subr.bf16.mxu0 0
      %4498 = vmatpush1.bf16.msra.mxu0 0
      %4499 = vmatprep.subr.bf16.mxu0 0
      %4500 = vmatpush1.bf16.msra.mxu0 0
      %4501 = vmatprep.subr.bf16.mxu0 0
      %4502 = vmatpush1.bf16.msra.mxu0 0
      %4503 = vmatprep.subr.bf16.mxu0 0
      %4504 = vmatpush1.bf16.msra.mxu0 0
      %4505 = vmatprep.subr.bf16.mxu0 0
      %4506 = vmatpush1.bf16.msra.mxu0 0
      %4507 = vmatprep.subr.bf16.mxu0 0
      %4508 = vmatpush1.bf16.msra.mxu0 0
      %4509 = vmatprep.subr.bf16.mxu0 0
      %4510 = vmatpush1.bf16.msra.mxu0 0
      %4511 = vmatprep.subr.bf16.mxu0 0
      %4512 = vmatpush1.bf16.msra.mxu0 0
      %4513 = vmatprep.subr.bf16.mxu0 0
      %4514 = vmatpush1.bf16.msra.mxu0 0
      %4515 = vmatprep.subr.bf16.mxu0 0
      %4516 = vmatpush1.bf16.msra.mxu0 0
      %4517 = vmatprep.subr.bf16.mxu0 0
      %4518 = vmatpush1.bf16.msra.mxu0 0
      %4519 = vmatprep.subr.bf16.mxu0 0
      %4520 = vmatpush1.bf16.msra.mxu0 0
      %4521 = vmatprep.subr.bf16.mxu0 0
      %4522 = vmatpush1.bf16.msra.mxu0 0
      %4523 = vmatprep.subr.bf16.mxu0 0
      %4524 = vmatpush1.bf16.msra.mxu0 0
      %4525 = vmatprep.mubr.bf16.mxu0 0
      %4526 = vmatmul.mubr.bf16.gmra.mrb[0].mxu0 %v4491
      %v4527 = vpop.f32.mrb[0].mxu0
      %v4528 = vadd.f32 %v3715, %v4527
      %v4529 = vpop.f32.mrb[0].mxu0
      %v4530 = vpop.f32.mrb[0].mxu0
      %v4531 = vpop.f32.mrb[0].mxu0
      %4532 = vdwg.mxu0
      %v4534 = vsel %vm765, %v3775, 0
      %4536 = vmatprep.subr.bf16.mxu0 0
      %4537 = vmatpush1.bf16.msra.mxu0 %v4441
      %4538 = vmatprep.subr.bf16.mxu0 0
      %4539 = vmatpush1.bf16.msra.mxu0 0
      %4540 = vmatprep.subr.bf16.mxu0 0
      %4541 = vmatpush1.bf16.msra.mxu0 0
      %4542 = vmatprep.subr.bf16.mxu0 0
      %4543 = vmatpush1.bf16.msra.mxu0 0
      %4544 = vmatprep.subr.bf16.mxu0 0
      %4545 = vmatpush1.bf16.msra.mxu0 0
      %4546 = vmatprep.subr.bf16.mxu0 0
      %4547 = vmatpush1.bf16.msra.mxu0 0
      %4548 = vmatprep.subr.bf16.mxu0 0
      %4549 = vmatpush1.bf16.msra.mxu0 0
      %4550 = vmatprep.subr.bf16.mxu0 0
      %4551 = vmatpush1.bf16.msra.mxu0 0
      %4552 = vmatprep.subr.bf16.mxu0 0
      %4553 = vmatpush1.bf16.msra.mxu0 0
      %4554 = vmatprep.subr.bf16.mxu0 0
      %4555 = vmatpush1.bf16.msra.mxu0 0
      %4556 = vmatprep.subr.bf16.mxu0 0
      %4557 = vmatpush1.bf16.msra.mxu0 0
      %4558 = vmatprep.subr.bf16.mxu0 0
      %4559 = vmatpush1.bf16.msra.mxu0 0
      %4560 = vmatprep.subr.bf16.mxu0 0
      %4561 = vmatpush1.bf16.msra.mxu0 0
      %4562 = vmatprep.subr.bf16.mxu0 0
      %4563 = vmatpush1.bf16.msra.mxu0 0
      %4564 = vmatprep.subr.bf16.mxu0 0
      %4565 = vmatpush1.bf16.msra.mxu0 0
      %4566 = vmatprep.subr.bf16.mxu0 0
      %4567 = vmatpush1.bf16.msra.mxu0 0
      %4568 = vmatprep.mubr.bf16.mxu0 0
      %4569 = vmatmul.mubr.bf16.gmra.mrb[0].mxu0 %v4534
      %v4570 = vpop.f32.mrb[0].mxu0
      %v4571 = vadd.f32 %v3715, %v4570
      %v4572 = vpop.f32.mrb[0].mxu0
      %v4573 = vpop.f32.mrb[0].mxu0
      %v4574 = vpop.f32.mrb[0].mxu0
      %4575 = vdwg.mxu0
      %v4577 = vsel %vm765, %v3778, 0
      %4579 = vmatprep.subr.bf16.mxu0 0
      %4580 = vmatpush1.bf16.msra.mxu0 %v4445
      %4581 = vmatprep.subr.bf16.mxu0 0
      %4582 = vmatpush1.bf16.msra.mxu0 0
      %4583 = vmatprep.subr.bf16.mxu0 0
      %4584 = vmatpush1.bf16.msra.mxu0 0
      %4585 = vmatprep.subr.bf16.mxu0 0
      %4586 = vmatpush1.bf16.msra.mxu0 0
      %4587 = vmatprep.subr.bf16.mxu0 0
      %4588 = vmatpush1.bf16.msra.mxu0 0
      %4589 = vmatprep.subr.bf16.mxu0 0
      %4590 = vmatpush1.bf16.msra.mxu0 0
      %4591 = vmatprep.subr.bf16.mxu0 0
      %4592 = vmatpush1.bf16.msra.mxu0 0
      %4593 = vmatprep.subr.bf16.mxu0 0
      %4594 = vmatpush1.bf16.msra.mxu0 0
      %4595 = vmatprep.subr.bf16.mxu0 0
      %4596 = vmatpush1.bf16.msra.mxu0 0
      %4597 = vmatprep.subr.bf16.mxu0 0
      %4598 = vmatpush1.bf16.msra.mxu0 0
      %4599 = vmatprep.subr.bf16.mxu0 0
      %4600 = vmatpush1.bf16.msra.mxu0 0
      %4601 = vmatprep.subr.bf16.mxu0 0
      %4602 = vmatpush1.bf16.msra.mxu0 0
      %4603 = vmatprep.subr.bf16.mxu0 0
      %4604 = vmatpush1.bf16.msra.mxu0 0
      %4605 = vmatprep.subr.bf16.mxu0 0
      %4606 = vmatpush1.bf16.msra.mxu0 0
      %4607 = vmatprep.subr.bf16.mxu0 0
      %4608 = vmatpush1.bf16.msra.mxu0 0
      %4609 = vmatprep.subr.bf16.mxu0 0
      %4610 = vmatpush1.bf16.msra.mxu0 0
      %4611 = vmatprep.mubr.bf16.mxu0 0
      %4612 = vmatmul.mubr.bf16.gmra.mrb[0].mxu0 %v4577
      %v4613 = vpop.f32.mrb[0].mxu0
      %v4614 = vadd.f32 %v3715, %v4613
      %v4615 = vpop.f32.mrb[0].mxu0
      %v4616 = vpop.f32.mrb[0].mxu0
      %v4617 = vpop.f32.mrb[0].mxu0
      %4618 = vdwg.mxu0
      %v4619 = vmul.f32 %v4485, 0.125
      %v4620 = vmul.f32 %v4528, 0.125
      %v4621 = vmul.f32 %v4571, 0.125
      %v4622 = vmul.f32 %v4614, 0.125
      %v4623 = vsel %vm1903, %v4619, -inf
      %4624 = vmax.xlane.f32.xlu0 %v4623
      %v4625 = vpop.xlane.xlu0 %4624
      %v4626 = vsel %vm1903, %v4620, -inf
      %4627 = vmax.xlane.f32.xlu0 %v4626
      %v4628 = vpop.xlane.xlu0 %4627
      %v4629 = vsel %vm1903, %v4621, -inf
      %4630 = vmax.xlane.f32.xlu0 %v4629
      %v4631 = vpop.xlane.xlu0 %4630
      %v4632 = vsel %vm1903, %v4622, -inf
      %4633 = vmax.xlane.f32.xlu0 %v4632
      %v4634 = vpop.xlane.xlu0 %4633
      %v4635 = vsub.f32 %v4619, %v4625
      %v4636 = vsub.f32 %v4620, %v4628
      %v4637 = vsub.f32 %v4621, %v4631
      %v4638 = vsub.f32 %v4622, %v4634
      %v4639 = vmul.f32 %v4635, 1.442695
      %v4640 = vpow.pop %v4639
      %v4641 = vmul.f32 %v4636, 1.442695
      %v4642 = vpow.pop %v4641
      %v4643 = vmul.f32 %v4637, 1.442695
      %v4644 = vpow.pop %v4643
      %v4645 = vmul.f32 %v4638, 1.442695
      %v4646 = vpow.pop %v4645
      %v4647 = vsel %vm1903, %v4640, 0.0
      %4648 = vadd.xlane.f32.xlu0 %v4647
      %v4649 = vpop.xlane.xlu0 %4648
      %v4650 = vsel %vm1903, %v4642, 0.0
      %4651 = vadd.xlane.f32.xlu0 %v4650
      %v4652 = vpop.xlane.xlu0 %4651
      %v4653 = vsel %vm1903, %v4644, 0.0
      %4654 = vadd.xlane.f32.xlu0 %v4653
      %v4655 = vpop.xlane.xlu0 %4654
      %v4656 = vsel %vm1903, %v4646, 0.0
      %4657 = vadd.xlane.f32.xlu0 %v4656
      %v4658 = vpop.xlane.xlu0 %4657
      %v4659 = vrcp.pop %v4649
      %v4660 = vrcp.pop %v4652
      %v4661 = vrcp.pop %v4655
      %v4662 = vrcp.pop %v4658
      %v4663 = vmul.f32 %v4640, %v4659
      %v4664 = vmul.f32 %v4642, %v4660
      %v4665 = vmul.f32 %v4644, %v4661
      %v4666 = vmul.f32 %v4646, %v4662
      %v4667 = vpack.c.bf16 %v4663, %v4663
      %v4668 = vpack.c.bf16 %v4664, %v4664
      %v4669 = vpack.c.bf16 %v4665, %v4665
      %v4670 = vpack.c.bf16 %v4666, %v4666
      %4671 = vxpose.xlu0.c.b16.start [1/8] %v3703, 128
      %4672 = vxpose.xlu0.c.b16.cont [2/8] 0, 128
      %4673 = vxpose.xlu0.c.b16.cont [3/8] 0, 128
      %4674 = vxpose.xlu0.c.b16.cont [4/8] 0, 128
      %4675 = vxpose.xlu0.c.b16.cont [5/8] 0, 128
      %4676 = vxpose.xlu0.c.b16.cont [6/8] 0, 128
      %4677 = vxpose.xlu0.c.b16.cont [7/8] 0, 128
      %4678 = vxpose.xlu0.c.b16.end [8/8] 0, 128
      %v4679 = vpop.trf.xlu0
      %v4680 = vpop.trf.xlu0
      %v4681 = vpop.trf.xlu0
      %v4682 = vpop.trf.xlu0
      %v4683 = vpop.trf.xlu0
      %v4684 = vpop.trf.xlu0
      %v4685 = vpop.trf.xlu0
      %v4686 = vpop.trf.xlu0
      %4687 = vxpose.xlu0.c.b16.start [1/8] %v3704, 128
      %4688 = vxpose.xlu0.c.b16.cont [2/8] 0, 128
      %4689 = vxpose.xlu0.c.b16.cont [3/8] 0, 128
      %4690 = vxpose.xlu0.c.b16.cont [4/8] 0, 128
      %4691 = vxpose.xlu0.c.b16.cont [5/8] 0, 128
      %4692 = vxpose.xlu0.c.b16.cont [6/8] 0, 128
      %4693 = vxpose.xlu0.c.b16.cont [7/8] 0, 128
      %4694 = vxpose.xlu0.c.b16.end [8/8] 0, 128
      %v4695 = vpop.trf.xlu0
      %v4696 = vpop.trf.xlu0
      %v4697 = vpop.trf.xlu0
      %v4698 = vpop.trf.xlu0
      %v4699 = vpop.trf.xlu0
      %v4700 = vpop.trf.xlu0
      %v4701 = vpop.trf.xlu0
      %v4702 = vpop.trf.xlu0
      %4703 = vxpose.xlu0.c.b16.start [1/8] %v3705, 128
      %4704 = vxpose.xlu0.c.b16.cont [2/8] 0, 128
      %4705 = vxpose.xlu0.c.b16.cont [3/8] 0, 128
      %4706 = vxpose.xlu0.c.b16.cont [4/8] 0, 128
      %4707 = vxpose.xlu0.c.b16.cont [5/8] 0, 128
      %4708 = vxpose.xlu0.c.b16.cont [6/8] 0, 128
      %4709 = vxpose.xlu0.c.b16.cont [7/8] 0, 128
      %4710 = vxpose.xlu0.c.b16.end [8/8] 0, 128
      %v4711 = vpop.trf.xlu0
      %v4712 = vpop.trf.xlu0
      %v4713 = vpop.trf.xlu0
      %v4714 = vpop.trf.xlu0
      %v4715 = vpop.trf.xlu0
      %v4716 = vpop.trf.xlu0
      %v4717 = vpop.trf.xlu0
      %v4718 = vpop.trf.xlu0
      %4719 = vxpose.xlu0.c.b16.start [1/8] %v3706, 128
      %4720 = vxpose.xlu0.c.b16.cont [2/8] 0, 128
      %4721 = vxpose.xlu0.c.b16.cont [3/8] 0, 128
      %4722 = vxpose.xlu0.c.b16.cont [4/8] 0, 128
      %4723 = vxpose.xlu0.c.b16.cont [5/8] 0, 128
      %4724 = vxpose.xlu0.c.b16.cont [6/8] 0, 128
      %4725 = vxpose.xlu0.c.b16.cont [7/8] 0, 128
      %4726 = vxpose.xlu0.c.b16.end [8/8] 0, 128
      %v4727 = vpop.trf.xlu0
      %v4728 = vpop.trf.xlu0
      %v4729 = vpop.trf.xlu0
      %v4730 = vpop.trf.xlu0
      %v4731 = vpop.trf.xlu0
      %v4732 = vpop.trf.xlu0
      %v4733 = vpop.trf.xlu0
      %v4734 = vpop.trf.xlu0
      %4735 = vxpose.xlu0.c.b16.start [1/8] %v3707, 128
      %4736 = vxpose.xlu0.c.b16.cont [2/8] 0, 128
      %4737 = vxpose.xlu0.c.b16.cont [3/8] 0, 128
      %4738 = vxpose.xlu0.c.b16.cont [4/8] 0, 128
      %4739 = vxpose.xlu0.c.b16.cont [5/8] 0, 128
      %4740 = vxpose.xlu0.c.b16.cont [6/8] 0, 128
      %4741 = vxpose.xlu0.c.b16.cont [7/8] 0, 128
      %4742 = vxpose.xlu0.c.b16.end [8/8] 0, 128
      %v4743 = vpop.trf.xlu0
      %v4744 = vpop.trf.xlu0
      %v4745 = vpop.trf.xlu0
      %v4746 = vpop.trf.xlu0
      %v4747 = vpop.trf.xlu0
      %v4748 = vpop.trf.xlu0
      %v4749 = vpop.trf.xlu0
      %v4750 = vpop.trf.xlu0
      %4751 = vxpose.xlu0.c.b16.start [1/8] %v3708, 128
      %4752 = vxpose.xlu0.c.b16.cont [2/8] 0, 128
      %4753 = vxpose.xlu0.c.b16.cont [3/8] 0, 128
      %4754 = vxpose.xlu0.c.b16.cont [4/8] 0, 128
      %4755 = vxpose.xlu0.c.b16.cont [5/8] 0, 128
      %4756 = vxpose.xlu0.c.b16.cont [6/8] 0, 128
      %4757 = vxpose.xlu0.c.b16.cont [7/8] 0, 128
      %4758 = vxpose.xlu0.c.b16.end [8/8] 0, 128
      %v4759 = vpop.trf.xlu0
      %v4760 = vpop.trf.xlu0
      %v4761 = vpop.trf.xlu0
      %v4762 = vpop.trf.xlu0
      %v4763 = vpop.trf.xlu0
      %v4764 = vpop.trf.xlu0
      %v4765 = vpop.trf.xlu0
      %v4766 = vpop.trf.xlu0
      %4767 = vxpose.xlu0.c.b16.start [1/8] %v3709, 128
      %4768 = vxpose.xlu0.c.b16.cont [2/8] 0, 128
      %4769 = vxpose.xlu0.c.b16.cont [3/8] 0, 128
      %4770 = vxpose.xlu0.c.b16.cont [4/8] 0, 128
      %4771 = vxpose.xlu0.c.b16.cont [5/8] 0, 128
      %4772 = vxpose.xlu0.c.b16.cont [6/8] 0, 128
      %4773 = vxpose.xlu0.c.b16.cont [7/8] 0, 128
      %4774 = vxpose.xlu0.c.b16.end [8/8] 0, 128
      %v4775 = vpop.trf.xlu0
      %v4776 = vpop.trf.xlu0
      %v4777 = vpop.trf.xlu0
      %v4778 = vpop.trf.xlu0
      %v4779 = vpop.trf.xlu0
      %v4780 = vpop.trf.xlu0
      %v4781 = vpop.trf.xlu0
      %v4782 = vpop.trf.xlu0
      %4783 = vxpose.xlu0.c.b16.start [1/8] %v3710, 128
      %4784 = vxpose.xlu0.c.b16.cont [2/8] 0, 128
      %4785 = vxpose.xlu0.c.b16.cont [3/8] 0, 128
      %4786 = vxpose.xlu0.c.b16.cont [4/8] 0, 128
      %4787 = vxpose.xlu0.c.b16.cont [5/8] 0, 128
      %4788 = vxpose.xlu0.c.b16.cont [6/8] 0, 128
      %4789 = vxpose.xlu0.c.b16.cont [7/8] 0, 128
      %4790 = vxpose.xlu0.c.b16.end [8/8] 0, 128
      %v4791 = vpop.trf.xlu0
      %v4792 = vpop.trf.xlu0
      %v4793 = vpop.trf.xlu0
      %v4794 = vpop.trf.xlu0
      %v4795 = vpop.trf.xlu0
      %v4796 = vpop.trf.xlu0
      %v4797 = vpop.trf.xlu0
      %v4798 = vpop.trf.xlu0
      %v4801 = vpack.i.b16 %v4695, %v4679
      %v4803 = vshrl.u32 %v4679, 16
      %v4804 = vshrl.u32 %v4695, 16
      %v4805 = vpack.i.b16 %v4804, %v4803
      %v4809 = vpack.i.b16 %v4727, %v4711
      %v4811 = vshrl.u32 %v4711, 16
      %v4812 = vshrl.u32 %v4727, 16
      %v4813 = vpack.i.b16 %v4812, %v4811
      %v4817 = vpack.i.b16 %v4759, %v4743
      %v4819 = vshrl.u32 %v4743, 16
      %v4820 = vshrl.u32 %v4759, 16
      %v4821 = vpack.i.b16 %v4820, %v4819
      %v4825 = vpack.i.b16 %v4791, %v4775
      %v4827 = vshrl.u32 %v4775, 16
      %v4828 = vshrl.u32 %v4791, 16
      %v4829 = vpack.i.b16 %v4828, %v4827
      %v4831 = vcombine.low %v4801, %v4817
      %v4832 = vcombine.high %v4801, %v4817
      %v4834 = vunpack.c.l.s4 1983009808
      %v4835 = vunpack.c.0.s8 %v4834
      %v4836 = vlaneseq
      %v4837 = vshrl.u32 %v4836, 7
      %v4838 = vsub.s32 %v4835, %v4837
      %v4839 = vrot.slane %v4831, %v4838
      %v4841 = vunpack.c.l.s4 1983009808
      %v4842 = vunpack.c.0.s8 %v4841
      %v4843 = vlaneseq
      %v4844 = vshrl.u32 %v4843, 7
      %v4845 = vsub.s32 %v4842, %v4844
      %v4846 = vrot.slane %v4832, %v4845
      %v4847 = vcombine.low %v4809, %v4825
      %v4848 = vcombine.high %v4809, %v4825
      %v4850 = vunpack.c.l.s4 1983009808
      %v4851 = vunpack.c.0.s8 %v4850
      %v4852 = vlaneseq
      %v4853 = vshrl.u32 %v4852, 7
      %v4854 = vsub.s32 %v4851, %v4853
      %v4855 = vrot.slane %v4847, %v4854
      %v4857 = vunpack.c.l.s4 1983009808
      %v4858 = vunpack.c.0.s8 %v4857
      %v4859 = vlaneseq
      %v4860 = vshrl.u32 %v4859, 7
      %v4861 = vsub.s32 %v4858, %v4860
      %v4862 = vrot.slane %v4848, %v4861
      %v4863 = vcombine.low %v4839, %v4855
      %v4864 = vcombine.high %v4839, %v4855
      %v4866 = vunpack.c.l.s4 1934713408
      %v4867 = vunpack.c.0.s8 %v4866
      %v4868 = vlaneseq
      %v4869 = vshrl.u32 %v4868, 7
      %v4870 = vsub.s32 %v4867, %v4869
      %v4871 = vrot.slane %v4863, %v4870
      %v4873 = vunpack.c.l.s4 1934713408
      %v4874 = vunpack.c.0.s8 %v4873
      %v4875 = vlaneseq
      %v4876 = vshrl.u32 %v4875, 7
      %v4877 = vsub.s32 %v4874, %v4876
      %v4878 = vrot.slane %v4864, %v4877
      %v4879 = vcombine.low %v4846, %v4862
      %v4880 = vcombine.high %v4846, %v4862
      %v4882 = vunpack.c.l.s4 1934713408
      %v4883 = vunpack.c.0.s8 %v4882
      %v4884 = vlaneseq
      %v4885 = vshrl.u32 %v4884, 7
      %v4886 = vsub.s32 %v4883, %v4885
      %v4887 = vrot.slane %v4879, %v4886
      %v4889 = vunpack.c.l.s4 1934713408
      %v4890 = vunpack.c.0.s8 %v4889
      %v4891 = vlaneseq
      %v4892 = vshrl.u32 %v4891, 7
      %v4893 = vsub.s32 %v4890, %v4892
      %v4894 = vrot.slane %v4880, %v4893
      %v4895 = vcombine.high %v4871, 0
      %v4896 = vcombine.high %v4878, 0
      %v4897 = vcombine.high %v4887, 0
      %v4898 = vcombine.high %v4894, 0
      %v4899 = vcombine.low %v4805, %v4821
      %v4900 = vcombine.high %v4805, %v4821
      %v4902 = vunpack.c.l.s4 1983009808
      %v4903 = vunpack.c.0.s8 %v4902
      %v4904 = vlaneseq
      %v4905 = vshrl.u32 %v4904, 7
      %v4906 = vsub.s32 %v4903, %v4905
      %v4907 = vrot.slane %v4899, %v4906
      %v4909 = vunpack.c.l.s4 1983009808
      %v4910 = vunpack.c.0.s8 %v4909
      %v4911 = vlaneseq
      %v4912 = vshrl.u32 %v4911, 7
      %v4913 = vsub.s32 %v4910, %v4912
      %v4914 = vrot.slane %v4900, %v4913
      %v4915 = vcombine.low %v4813, %v4829
      %v4916 = vcombine.high %v4813, %v4829
      %v4918 = vunpack.c.l.s4 1983009808
      %v4919 = vunpack.c.0.s8 %v4918
      %v4920 = vlaneseq
      %v4921 = vshrl.u32 %v4920, 7
      %v4922 = vsub.s32 %v4919, %v4921
      %v4923 = vrot.slane %v4915, %v4922
      %v4925 = vunpack.c.l.s4 1983009808
      %v4926 = vunpack.c.0.s8 %v4925
      %v4927 = vlaneseq
      %v4928 = vshrl.u32 %v4927, 7
      %v4929 = vsub.s32 %v4926, %v4928
      %v4930 = vrot.slane %v4916, %v4929
      %v4931 = vcombine.low %v4907, %v4923
      %v4932 = vcombine.high %v4907, %v4923
      %v4934 = vunpack.c.l.s4 1934713408
      %v4935 = vunpack.c.0.s8 %v4934
      %v4936 = vlaneseq
      %v4937 = vshrl.u32 %v4936, 7
      %v4938 = vsub.s32 %v4935, %v4937
      %v4939 = vrot.slane %v4931, %v4938
      %v4941 = vunpack.c.l.s4 1934713408
      %v4942 = vunpack.c.0.s8 %v4941
      %v4943 = vlaneseq
      %v4944 = vshrl.u32 %v4943, 7
      %v4945 = vsub.s32 %v4942, %v4944
      %v4946 = vrot.slane %v4932, %v4945
      %v4947 = vcombine.low %v4914, %v4930
      %v4948 = vcombine.high %v4914, %v4930
      %v4950 = vunpack.c.l.s4 1934713408
      %v4951 = vunpack.c.0.s8 %v4950
      %v4952 = vlaneseq
      %v4953 = vshrl.u32 %v4952, 7
      %v4954 = vsub.s32 %v4951, %v4953
      %v4955 = vrot.slane %v4947, %v4954
      %v4957 = vunpack.c.l.s4 1934713408
      %v4958 = vunpack.c.0.s8 %v4957
      %v4959 = vlaneseq
      %v4960 = vshrl.u32 %v4959, 7
      %v4961 = vsub.s32 %v4958, %v4960
      %v4962 = vrot.slane %v4948, %v4961
      %v4963 = vcombine.high %v4939, 0
      %v4964 = vcombine.high %v4946, 0
      %v4965 = vcombine.high %v4955, 0
      %v4966 = vcombine.high %v4962, 0
      %4967 = vxpose.xlu0.c.b16.start [1/8] %v4871, 128
      %4968 = vxpose.xlu0.c.b16.cont [2/8] 0, 128
      %4969 = vxpose.xlu0.c.b16.cont [3/8] 0, 128
      %4970 = vxpose.xlu0.c.b16.cont [4/8] 0, 128
      %4971 = vxpose.xlu0.c.b16.cont [5/8] 0, 128
      %4972 = vxpose.xlu0.c.b16.cont [6/8] 0, 128
      %4973 = vxpose.xlu0.c.b16.cont [7/8] 0, 128
      %4974 = vxpose.xlu0.c.b16.end [8/8] 0, 128
      %v4975 = vpop.trf.xlu0
      %v4976 = vpop.trf.xlu0
      %v4977 = vpop.trf.xlu0
      %v4978 = vpop.trf.xlu0
      %v4979 = vpop.trf.xlu0
      %v4980 = vpop.trf.xlu0
      %v4981 = vpop.trf.xlu0
      %v4982 = vpop.trf.xlu0
      %4983 = vxpose.xlu0.c.b16.start [1/8] %v4939, 128
      %4984 = vxpose.xlu0.c.b16.cont [2/8] 0, 128
      %4985 = vxpose.xlu0.c.b16.cont [3/8] 0, 128
      %4986 = vxpose.xlu0.c.b16.cont [4/8] 0, 128
      %4987 = vxpose.xlu0.c.b16.cont [5/8] 0, 128
      %4988 = vxpose.xlu0.c.b16.cont [6/8] 0, 128
      %4989 = vxpose.xlu0.c.b16.cont [7/8] 0, 128
      %4990 = vxpose.xlu0.c.b16.end [8/8] 0, 128
      %v4991 = vpop.trf.xlu0
      %v4992 = vpop.trf.xlu0
      %v4993 = vpop.trf.xlu0
      %v4994 = vpop.trf.xlu0
      %v4995 = vpop.trf.xlu0
      %v4996 = vpop.trf.xlu0
      %v4997 = vpop.trf.xlu0
      %v4998 = vpop.trf.xlu0
      %4999 = vxpose.xlu0.c.b16.start [1/8] %v4895, 128
      %5000 = vxpose.xlu0.c.b16.cont [2/8] 0, 128
      %5001 = vxpose.xlu0.c.b16.cont [3/8] 0, 128
      %5002 = vxpose.xlu0.c.b16.cont [4/8] 0, 128
      %5003 = vxpose.xlu0.c.b16.cont [5/8] 0, 128
      %5004 = vxpose.xlu0.c.b16.cont [6/8] 0, 128
      %5005 = vxpose.xlu0.c.b16.cont [7/8] 0, 128
      %5006 = vxpose.xlu0.c.b16.end [8/8] 0, 128
      %v5007 = vpop.trf.xlu0
      %v5008 = vpop.trf.xlu0
      %v5009 = vpop.trf.xlu0
      %v5010 = vpop.trf.xlu0
      %v5011 = vpop.trf.xlu0
      %v5012 = vpop.trf.xlu0
      %v5013 = vpop.trf.xlu0
      %v5014 = vpop.trf.xlu0
      %5015 = vxpose.xlu0.c.b16.start [1/8] %v4963, 128
      %5016 = vxpose.xlu0.c.b16.cont [2/8] 0, 128
      %5017 = vxpose.xlu0.c.b16.cont [3/8] 0, 128
      %5018 = vxpose.xlu0.c.b16.cont [4/8] 0, 128
      %5019 = vxpose.xlu0.c.b16.cont [5/8] 0, 128
      %5020 = vxpose.xlu0.c.b16.cont [6/8] 0, 128
      %5021 = vxpose.xlu0.c.b16.cont [7/8] 0, 128
      %5022 = vxpose.xlu0.c.b16.end [8/8] 0, 128
      %v5023 = vpop.trf.xlu0
      %v5024 = vpop.trf.xlu0
      %v5025 = vpop.trf.xlu0
      %v5026 = vpop.trf.xlu0
      %v5027 = vpop.trf.xlu0
      %v5028 = vpop.trf.xlu0
      %v5029 = vpop.trf.xlu0
      %v5030 = vpop.trf.xlu0
      %5031 = vxpose.xlu0.c.b16.start [1/8] %v4878, 128
      %5032 = vxpose.xlu0.c.b16.cont [2/8] 0, 128
      %5033 = vxpose.xlu0.c.b16.cont [3/8] 0, 128
      %5034 = vxpose.xlu0.c.b16.cont [4/8] 0, 128
      %5035 = vxpose.xlu0.c.b16.cont [5/8] 0, 128
      %5036 = vxpose.xlu0.c.b16.cont [6/8] 0, 128
      %5037 = vxpose.xlu0.c.b16.cont [7/8] 0, 128
      %5038 = vxpose.xlu0.c.b16.end [8/8] 0, 128
      %v5039 = vpop.trf.xlu0
      %v5040 = vpop.trf.xlu0
      %v5041 = vpop.trf.xlu0
      %v5042 = vpop.trf.xlu0
      %v5043 = vpop.trf.xlu0
      %v5044 = vpop.trf.xlu0
      %v5045 = vpop.trf.xlu0
      %v5046 = vpop.trf.xlu0
      %5047 = vxpose.xlu0.c.b16.start [1/8] %v4946, 128
      %5048 = vxpose.xlu0.c.b16.cont [2/8] 0, 128
      %5049 = vxpose.xlu0.c.b16.cont [3/8] 0, 128
      %5050 = vxpose.xlu0.c.b16.cont [4/8] 0, 128
      %5051 = vxpose.xlu0.c.b16.cont [5/8] 0, 128
      %5052 = vxpose.xlu0.c.b16.cont [6/8] 0, 128
      %5053 = vxpose.xlu0.c.b16.cont [7/8] 0, 128
      %5054 = vxpose.xlu0.c.b16.end [8/8] 0, 128
      %v5055 = vpop.trf.xlu0
      %v5056 = vpop.trf.xlu0
      %v5057 = vpop.trf.xlu0
      %v5058 = vpop.trf.xlu0
      %v5059 = vpop.trf.xlu0
      %v5060 = vpop.trf.xlu0
      %v5061 = vpop.trf.xlu0
      %v5062 = vpop.trf.xlu0
      %5063 = vxpose.xlu0.c.b16.start [1/8] %v4896, 128
      %5064 = vxpose.xlu0.c.b16.cont [2/8] 0, 128
      %5065 = vxpose.xlu0.c.b16.cont [3/8] 0, 128
      %5066 = vxpose.xlu0.c.b16.cont [4/8] 0, 128
      %5067 = vxpose.xlu0.c.b16.cont [5/8] 0, 128
      %5068 = vxpose.xlu0.c.b16.cont [6/8] 0, 128
      %5069 = vxpose.xlu0.c.b16.cont [7/8] 0, 128
      %5070 = vxpose.xlu0.c.b16.end [8/8] 0, 128
      %v5071 = vpop.trf.xlu0
      %v5072 = vpop.trf.xlu0
      %v5073 = vpop.trf.xlu0
      %v5074 = vpop.trf.xlu0
      %v5075 = vpop.trf.xlu0
      %v5076 = vpop.trf.xlu0
      %v5077 = vpop.trf.xlu0
      %v5078 = vpop.trf.xlu0
      %5079 = vxpose.xlu0.c.b16.start [1/8] %v4964, 128
      %5080 = vxpose.xlu0.c.b16.cont [2/8] 0, 128
      %5081 = vxpose.xlu0.c.b16.cont [3/8] 0, 128
      %5082 = vxpose.xlu0.c.b16.cont [4/8] 0, 128
      %5083 = vxpose.xlu0.c.b16.cont [5/8] 0, 128
      %5084 = vxpose.xlu0.c.b16.cont [6/8] 0, 128
      %5085 = vxpose.xlu0.c.b16.cont [7/8] 0, 128
      %5086 = vxpose.xlu0.c.b16.end [8/8] 0, 128
      %v5087 = vpop.trf.xlu0
      %v5088 = vpop.trf.xlu0
      %v5089 = vpop.trf.xlu0
      %v5090 = vpop.trf.xlu0
      %v5091 = vpop.trf.xlu0
      %v5092 = vpop.trf.xlu0
      %v5093 = vpop.trf.xlu0
      %v5094 = vpop.trf.xlu0
      %5095 = vxpose.xlu0.c.b16.start [1/8] %v4887, 128
      %5096 = vxpose.xlu0.c.b16.cont [2/8] 0, 128
      %5097 = vxpose.xlu0.c.b16.cont [3/8] 0, 128
      %5098 = vxpose.xlu0.c.b16.cont [4/8] 0, 128
      %5099 = vxpose.xlu0.c.b16.cont [5/8] 0, 128
      %5100 = vxpose.xlu0.c.b16.cont [6/8] 0, 128
      %5101 = vxpose.xlu0.c.b16.cont [7/8] 0, 128
      %5102 = vxpose.xlu0.c.b16.end [8/8] 0, 128
      %v5103 = vpop.trf.xlu0
      %v5104 = vpop.trf.xlu0
      %v5105 = vpop.trf.xlu0
      %v5106 = vpop.trf.xlu0
      %v5107 = vpop.trf.xlu0
      %v5108 = vpop.trf.xlu0
      %v5109 = vpop.trf.xlu0
      %v5110 = vpop.trf.xlu0
      %5111 = vxpose.xlu0.c.b16.start [1/8] %v4955, 128
      %5112 = vxpose.xlu0.c.b16.cont [2/8] 0, 128
      %5113 = vxpose.xlu0.c.b16.cont [3/8] 0, 128
      %5114 = vxpose.xlu0.c.b16.cont [4/8] 0, 128
      %5115 = vxpose.xlu0.c.b16.cont [5/8] 0, 128
      %5116 = vxpose.xlu0.c.b16.cont [6/8] 0, 128
      %5117 = vxpose.xlu0.c.b16.cont [7/8] 0, 128
      %5118 = vxpose.xlu0.c.b16.end [8/8] 0, 128
      %v5119 = vpop.trf.xlu0
      %v5120 = vpop.trf.xlu0
      %v5121 = vpop.trf.xlu0
      %v5122 = vpop.trf.xlu0
      %v5123 = vpop.trf.xlu0
      %v5124 = vpop.trf.xlu0
      %v5125 = vpop.trf.xlu0
      %v5126 = vpop.trf.xlu0
      %5127 = vxpose.xlu0.c.b16.start [1/8] %v4897, 128
      %5128 = vxpose.xlu0.c.b16.cont [2/8] 0, 128
      %5129 = vxpose.xlu0.c.b16.cont [3/8] 0, 128
      %5130 = vxpose.xlu0.c.b16.cont [4/8] 0, 128
      %5131 = vxpose.xlu0.c.b16.cont [5/8] 0, 128
      %5132 = vxpose.xlu0.c.b16.cont [6/8] 0, 128
      %5133 = vxpose.xlu0.c.b16.cont [7/8] 0, 128
      %5134 = vxpose.xlu0.c.b16.end [8/8] 0, 128
      %v5135 = vpop.trf.xlu0
      %v5136 = vpop.trf.xlu0
      %v5137 = vpop.trf.xlu0
      %v5138 = vpop.trf.xlu0
      %v5139 = vpop.trf.xlu0
      %v5140 = vpop.trf.xlu0
      %v5141 = vpop.trf.xlu0
      %v5142 = vpop.trf.xlu0
      %5143 = vxpose.xlu0.c.b16.start [1/8] %v4965, 128
      %5144 = vxpose.xlu0.c.b16.cont [2/8] 0, 128
      %5145 = vxpose.xlu0.c.b16.cont [3/8] 0, 128
      %5146 = vxpose.xlu0.c.b16.cont [4/8] 0, 128
      %5147 = vxpose.xlu0.c.b16.cont [5/8] 0, 128
      %5148 = vxpose.xlu0.c.b16.cont [6/8] 0, 128
      %5149 = vxpose.xlu0.c.b16.cont [7/8] 0, 128
      %5150 = vxpose.xlu0.c.b16.end [8/8] 0, 128
      %v5151 = vpop.trf.xlu0
      %v5152 = vpop.trf.xlu0
      %v5153 = vpop.trf.xlu0
      %v5154 = vpop.trf.xlu0
      %v5155 = vpop.trf.xlu0
      %v5156 = vpop.trf.xlu0
      %v5157 = vpop.trf.xlu0
      %v5158 = vpop.trf.xlu0
      %5159 = vxpose.xlu0.c.b16.start [1/8] %v4894, 128
      %5160 = vxpose.xlu0.c.b16.cont [2/8] 0, 128
      %5161 = vxpose.xlu0.c.b16.cont [3/8] 0, 128
      %5162 = vxpose.xlu0.c.b16.cont [4/8] 0, 128
      %5163 = vxpose.xlu0.c.b16.cont [5/8] 0, 128
      %5164 = vxpose.xlu0.c.b16.cont [6/8] 0, 128
      %5165 = vxpose.xlu0.c.b16.cont [7/8] 0, 128
      %5166 = vxpose.xlu0.c.b16.end [8/8] 0, 128
      %v5167 = vpop.trf.xlu0
      %v5168 = vpop.trf.xlu0
      %v5169 = vpop.trf.xlu0
      %v5170 = vpop.trf.xlu0
      %v5171 = vpop.trf.xlu0
      %v5172 = vpop.trf.xlu0
      %v5173 = vpop.trf.xlu0
      %v5174 = vpop.trf.xlu0
      %5175 = vxpose.xlu0.c.b16.start [1/8] %v4962, 128
      %5176 = vxpose.xlu0.c.b16.cont [2/8] 0, 128
      %5177 = vxpose.xlu0.c.b16.cont [3/8] 0, 128
      %5178 = vxpose.xlu0.c.b16.cont [4/8] 0, 128
      %5179 = vxpose.xlu0.c.b16.cont [5/8] 0, 128
      %5180 = vxpose.xlu0.c.b16.cont [6/8] 0, 128
      %5181 = vxpose.xlu0.c.b16.cont [7/8] 0, 128
      %5182 = vxpose.xlu0.c.b16.end [8/8] 0, 128
      %v5183 = vpop.trf.xlu0
      %v5184 = vpop.trf.xlu0
      %v5185 = vpop.trf.xlu0
      %v5186 = vpop.trf.xlu0
      %v5187 = vpop.trf.xlu0
      %v5188 = vpop.trf.xlu0
      %v5189 = vpop.trf.xlu0
      %v5190 = vpop.trf.xlu0
      %5191 = vxpose.xlu0.c.b16.start [1/8] %v4898, 128
      %5192 = vxpose.xlu0.c.b16.cont [2/8] 0, 128
      %5193 = vxpose.xlu0.c.b16.cont [3/8] 0, 128
      %5194 = vxpose.xlu0.c.b16.cont [4/8] 0, 128
      %5195 = vxpose.xlu0.c.b16.cont [5/8] 0, 128
      %5196 = vxpose.xlu0.c.b16.cont [6/8] 0, 128
      %5197 = vxpose.xlu0.c.b16.cont [7/8] 0, 128
      %5198 = vxpose.xlu0.c.b16.end [8/8] 0, 128
      %v5199 = vpop.trf.xlu0
      %v5200 = vpop.trf.xlu0
      %v5201 = vpop.trf.xlu0
      %v5202 = vpop.trf.xlu0
      %v5203 = vpop.trf.xlu0
      %v5204 = vpop.trf.xlu0
      %v5205 = vpop.trf.xlu0
      %v5206 = vpop.trf.xlu0
      %5207 = vxpose.xlu0.c.b16.start [1/8] %v4966, 128
      %5208 = vxpose.xlu0.c.b16.cont [2/8] 0, 128
      %5209 = vxpose.xlu0.c.b16.cont [3/8] 0, 128
      %5210 = vxpose.xlu0.c.b16.cont [4/8] 0, 128
      %5211 = vxpose.xlu0.c.b16.cont [5/8] 0, 128
      %5212 = vxpose.xlu0.c.b16.cont [6/8] 0, 128
      %5213 = vxpose.xlu0.c.b16.cont [7/8] 0, 128
      %5214 = vxpose.xlu0.c.b16.end [8/8] 0, 128
      %v5215 = vpop.trf.xlu0
      %v5216 = vpop.trf.xlu0
      %v5217 = vpop.trf.xlu0
      %v5218 = vpop.trf.xlu0
      %v5219 = vpop.trf.xlu0
      %v5220 = vpop.trf.xlu0
      %v5221 = vpop.trf.xlu0
      %v5222 = vpop.trf.xlu0
      %v5223 = vcombine.low %v4975, %v5039
      %v5225 = vunpack.c.l.s4 1983009808
      %v5226 = vunpack.c.0.s8 %v5225
      %v5227 = vlaneseq
      %v5228 = vshrl.u32 %v5227, 7
      %v5229 = vsub.s32 %v5226, %v5228
      %v5230 = vrot.slane %v5223, %v5229
      %v5231 = vcombine.low %v5007, %v5071
      %v5233 = vunpack.c.l.s4 1983009808
      %v5234 = vunpack.c.0.s8 %v5233
      %v5235 = vlaneseq
      %v5236 = vshrl.u32 %v5235, 7
      %v5237 = vsub.s32 %v5234, %v5236
      %v5238 = vrot.slane %v5231, %v5237
      %v5239 = vcombine.low %v5103, %v5167
      %v5241 = vunpack.c.l.s4 1983009808
      %v5242 = vunpack.c.0.s8 %v5241
      %v5243 = vlaneseq
      %v5244 = vshrl.u32 %v5243, 7
      %v5245 = vsub.s32 %v5242, %v5244
      %v5246 = vrot.slane %v5239, %v5245
      %v5247 = vcombine.low %v5135, %v5199
      %v5249 = vunpack.c.l.s4 1983009808
      %v5250 = vunpack.c.0.s8 %v5249
      %v5251 = vlaneseq
      %v5252 = vshrl.u32 %v5251, 7
      %v5253 = vsub.s32 %v5250, %v5252
      %v5254 = vrot.slane %v5247, %v5253
      %v5255 = vcombine.low %v5230, %v5238
      %v5257 = vunpack.c.l.s4 1934713408
      %v5258 = vunpack.c.0.s8 %v5257
      %v5259 = vlaneseq
      %v5260 = vshrl.u32 %v5259, 7
      %v5261 = vsub.s32 %v5258, %v5260
      %v5262 = vrot.slane %v5255, %v5261
      %v5263 = vcombine.low %v5246, %v5254
      %v5265 = vunpack.c.l.s4 1934713408
      %v5266 = vunpack.c.0.s8 %v5265
      %v5267 = vlaneseq
      %v5268 = vshrl.u32 %v5267, 7
      %v5269 = vsub.s32 %v5266, %v5268
      %v5270 = vrot.slane %v5263, %v5269
      %v5271 = vcombine.low %v5262, %v5270
      %v5272 = vcombine.high %v5262, %v5270
      %v5273 = vcombine.low %v4991, %v5055
      %v5275 = vunpack.c.l.s4 1983009808
      %v5276 = vunpack.c.0.s8 %v5275
      %v5277 = vlaneseq
      %v5278 = vshrl.u32 %v5277, 7
      %v5279 = vsub.s32 %v5276, %v5278
      %v5280 = vrot.slane %v5273, %v5279
      %v5281 = vcombine.low %v5023, %v5087
      %v5283 = vunpack.c.l.s4 1983009808
      %v5284 = vunpack.c.0.s8 %v5283
      %v5285 = vlaneseq
      %v5286 = vshrl.u32 %v5285, 7
      %v5287 = vsub.s32 %v5284, %v5286
      %v5288 = vrot.slane %v5281, %v5287
      %v5289 = vcombine.low %v5119, %v5183
      %v5291 = vunpack.c.l.s4 1983009808
      %v5292 = vunpack.c.0.s8 %v5291
      %v5293 = vlaneseq
      %v5294 = vshrl.u32 %v5293, 7
      %v5295 = vsub.s32 %v5292, %v5294
      %v5296 = vrot.slane %v5289, %v5295
      %v5297 = vcombine.low %v5151, %v5215
      %v5299 = vunpack.c.l.s4 1983009808
      %v5300 = vunpack.c.0.s8 %v5299
      %v5301 = vlaneseq
      %v5302 = vshrl.u32 %v5301, 7
      %v5303 = vsub.s32 %v5300, %v5302
      %v5304 = vrot.slane %v5297, %v5303
      %v5305 = vcombine.low %v5280, %v5288
      %v5307 = vunpack.c.l.s4 1934713408
      %v5308 = vunpack.c.0.s8 %v5307
      %v5309 = vlaneseq
      %v5310 = vshrl.u32 %v5309, 7
      %v5311 = vsub.s32 %v5308, %v5310
      %v5312 = vrot.slane %v5305, %v5311
      %v5313 = vcombine.low %v5296, %v5304
      %v5315 = vunpack.c.l.s4 1934713408
      %v5316 = vunpack.c.0.s8 %v5315
      %v5317 = vlaneseq
      %v5318 = vshrl.u32 %v5317, 7
      %v5319 = vsub.s32 %v5316, %v5318
      %v5320 = vrot.slane %v5313, %v5319
      %v5321 = vcombine.low %v5312, %v5320
      %v5322 = vcombine.high %v5312, %v5320
      %v5325 = vpack.i.b16 %v5321, %v5271
      %v5326 = vshrl.u32 %v5271, 16
      %v5327 = vshrl.u32 %v5321, 16
      %v5328 = vpack.i.b16 %v5327, %v5326
      %v5331 = vpack.i.b16 %v5322, %v5272
      %v5332 = vshrl.u32 %v5272, 16
      %v5333 = vshrl.u32 %v5322, 16
      %v5334 = vpack.i.b16 %v5333, %v5332
      %v5336 = vsel %vm1903, %v5325, 0
      %v5339 = vsel %vm1903, %v4667, 0
      %5341 = vmatprep.subr.bf16.mxu0 0
      %5342 = vmatpush1.bf16.xpose.msra.mxu0 %v5339
      %5343 = vmatprep.subr.bf16.mxu0 0
      %5344 = vmatpush1.bf16.xpose.msra.mxu0 0
      %5345 = vmatprep.subr.bf16.mxu0 0
      %5346 = vmatpush1.bf16.xpose.msra.mxu0 0
      %5347 = vmatprep.subr.bf16.mxu0 0
      %5348 = vmatpush1.bf16.xpose.msra.mxu0 0
      %5349 = vmatprep.subr.bf16.mxu0 0
      %5350 = vmatpush1.bf16.xpose.msra.mxu0 0
      %5351 = vmatprep.subr.bf16.mxu0 0
      %5352 = vmatpush1.bf16.xpose.msra.mxu0 0
      %5353 = vmatprep.subr.bf16.mxu0 0
      %5354 = vmatpush1.bf16.xpose.msra.mxu0 0
      %5355 = vmatprep.subr.bf16.mxu0 0
      %5356 = vmatpush1.bf16.xpose.msra.mxu0 0
      %5357 = vmatprep.subr.bf16.mxu0 0
      %5358 = vmatpush1.bf16.xpose.msra.mxu0 0
      %5359 = vmatprep.subr.bf16.mxu0 0
      %5360 = vmatpush1.bf16.xpose.msra.mxu0 0
      %5361 = vmatprep.subr.bf16.mxu0 0
      %5362 = vmatpush1.bf16.xpose.msra.mxu0 0
      %5363 = vmatprep.subr.bf16.mxu0 0
      %5364 = vmatpush1.bf16.xpose.msra.mxu0 0
      %5365 = vmatprep.subr.bf16.mxu0 0
      %5366 = vmatpush1.bf16.xpose.msra.mxu0 0
      %5367 = vmatprep.subr.bf16.mxu0 0
      %5368 = vmatpush1.bf16.xpose.msra.mxu0 0
      %5369 = vmatprep.subr.bf16.mxu0 0
      %5370 = vmatpush1.bf16.xpose.msra.mxu0 0
      %5371 = vmatprep.subr.bf16.mxu0 0
      %5372 = vmatpush1.bf16.xpose.msra.mxu0 0
      %5373 = vmatprep.mubr.bf16.mxu0 0
      %5374 = vmatmul.mubr.bf16.gmra.mrb[0].mxu0 %v5336
      %v5375 = vpop.f32.mrb[0].mxu0
      %v5376 = vadd.f32 0.0, %v5375
      %v5377 = vpop.f32.mrb[0].mxu0
      %v5378 = vpop.f32.mrb[0].mxu0
      %v5379 = vadd.f32 0.0, %v5378
      %v5380 = vpop.f32.mrb[0].mxu0
      %5381 = vdwg.mxu0
      %v5383 = vsel %vm1903, %v5328, 0
      %v5386 = vsel %vm1903, %v4668, 0
      %5388 = vmatprep.subr.bf16.mxu0 0
      %5389 = vmatpush1.bf16.xpose.msra.mxu0 %v5386
      %5390 = vmatprep.subr.bf16.mxu0 0
      %5391 = vmatpush1.bf16.xpose.msra.mxu0 0
      %5392 = vmatprep.subr.bf16.mxu0 0
      %5393 = vmatpush1.bf16.xpose.msra.mxu0 0
      %5394 = vmatprep.subr.bf16.mxu0 0
      %5395 = vmatpush1.bf16.xpose.msra.mxu0 0
      %5396 = vmatprep.subr.bf16.mxu0 0
      %5397 = vmatpush1.bf16.xpose.msra.mxu0 0
      %5398 = vmatprep.subr.bf16.mxu0 0
      %5399 = vmatpush1.bf16.xpose.msra.mxu0 0
      %5400 = vmatprep.subr.bf16.mxu0 0
      %5401 = vmatpush1.bf16.xpose.msra.mxu0 0
      %5402 = vmatprep.subr.bf16.mxu0 0
      %5403 = vmatpush1.bf16.xpose.msra.mxu0 0
      %5404 = vmatprep.subr.bf16.mxu0 0
      %5405 = vmatpush1.bf16.xpose.msra.mxu0 0
      %5406 = vmatprep.subr.bf16.mxu0 0
      %5407 = vmatpush1.bf16.xpose.msra.mxu0 0
      %5408 = vmatprep.subr.bf16.mxu0 0
      %5409 = vmatpush1.bf16.xpose.msra.mxu0 0
      %5410 = vmatprep.subr.bf16.mxu0 0
      %5411 = vmatpush1.bf16.xpose.msra.mxu0 0
      %5412 = vmatprep.subr.bf16.mxu0 0
      %5413 = vmatpush1.bf16.xpose.msra.mxu0 0
      %5414 = vmatprep.subr.bf16.mxu0 0
      %5415 = vmatpush1.bf16.xpose.msra.mxu0 0
      %5416 = vmatprep.subr.bf16.mxu0 0
      %5417 = vmatpush1.bf16.xpose.msra.mxu0 0
      %5418 = vmatprep.subr.bf16.mxu0 0
      %5419 = vmatpush1.bf16.xpose.msra.mxu0 0
      %5420 = vmatprep.mubr.bf16.mxu0 0
      %5421 = vmatmul.mubr.bf16.gmra.mrb[0].mxu0 %v5383
      %v5422 = vpop.f32.mrb[0].mxu0
      %v5423 = vadd.f32 0.0, %v5422
      %v5424 = vpop.f32.mrb[0].mxu0
      %v5425 = vpop.f32.mrb[0].mxu0
      %v5426 = vadd.f32 0.0, %v5425
      %v5427 = vpop.f32.mrb[0].mxu0
      %5428 = vdwg.mxu0
      %v5430 = vsel %vm1903, %v5331, 0
      %v5433 = vsel %vm1903, %v4669, 0
      %5435 = vmatprep.subr.bf16.mxu0 0
      %5436 = vmatpush1.bf16.xpose.msra.mxu0 %v5433
      %5437 = vmatprep.subr.bf16.mxu0 0
      %5438 = vmatpush1.bf16.xpose.msra.mxu0 0
      %5439 = vmatprep.subr.bf16.mxu0 0
      %5440 = vmatpush1.bf16.xpose.msra.mxu0 0
      %5441 = vmatprep.subr.bf16.mxu0 0
      %5442 = vmatpush1.bf16.xpose.msra.mxu0 0
      %5443 = vmatprep.subr.bf16.mxu0 0
      %5444 = vmatpush1.bf16.xpose.msra.mxu0 0
      %5445 = vmatprep.subr.bf16.mxu0 0
      %5446 = vmatpush1.bf16.xpose.msra.mxu0 0
      %5447 = vmatprep.subr.bf16.mxu0 0
      %5448 = vmatpush1.bf16.xpose.msra.mxu0 0
      %5449 = vmatprep.subr.bf16.mxu0 0
      %5450 = vmatpush1.bf16.xpose.msra.mxu0 0
      %5451 = vmatprep.subr.bf16.mxu0 0
      %5452 = vmatpush1.bf16.xpose.msra.mxu0 0
      %5453 = vmatprep.subr.bf16.mxu0 0
      %5454 = vmatpush1.bf16.xpose.msra.mxu0 0
      %5455 = vmatprep.subr.bf16.mxu0 0
      %5456 = vmatpush1.bf16.xpose.msra.mxu0 0
      %5457 = vmatprep.subr.bf16.mxu0 0
      %5458 = vmatpush1.bf16.xpose.msra.mxu0 0
      %5459 = vmatprep.subr.bf16.mxu0 0
      %5460 = vmatpush1.bf16.xpose.msra.mxu0 0
      %5461 = vmatprep.subr.bf16.mxu0 0
      %5462 = vmatpush1.bf16.xpose.msra.mxu0 0
      %5463 = vmatprep.subr.bf16.mxu0 0
      %5464 = vmatpush1.bf16.xpose.msra.mxu0 0
      %5465 = vmatprep.subr.bf16.mxu0 0
      %5466 = vmatpush1.bf16.xpose.msra.mxu0 0
      %5467 = vmatprep.mubr.bf16.mxu0 0
      %5468 = vmatmul.mubr.bf16.gmra.mrb[0].mxu0 %v5430
      %v5469 = vpop.f32.mrb[0].mxu0
      %v5470 = vadd.f32 0.0, %v5469
      %v5471 = vpop.f32.mrb[0].mxu0
      %v5472 = vpop.f32.mrb[0].mxu0
      %v5473 = vadd.f32 0.0, %v5472
      %v5474 = vpop.f32.mrb[0].mxu0
      %5475 = vdwg.mxu0
      %v5477 = vsel %vm1903, %v5334, 0
      %v5480 = vsel %vm1903, %v4670, 0
      %5482 = vmatprep.subr.bf16.mxu0 0
      %5483 = vmatpush1.bf16.xpose.msra.mxu0 %v5480
      %5484 = vmatprep.subr.bf16.mxu0 0
      %5485 = vmatpush1.bf16.xpose.msra.mxu0 0
      %5486 = vmatprep.subr.bf16.mxu0 0
      %5487 = vmatpush1.bf16.xpose.msra.mxu0 0
      %5488 = vmatprep.subr.bf16.mxu0 0
      %5489 = vmatpush1.bf16.xpose.msra.mxu0 0
      %5490 = vmatprep.subr.bf16.mxu0 0
      %5491 = vmatpush1.bf16.xpose.msra.mxu0 0
      %5492 = vmatprep.subr.bf16.mxu0 0
      %5493 = vmatpush1.bf16.xpose.msra.mxu0 0
      %5494 = vmatprep.subr.bf16.mxu0 0
      %5495 = vmatpush1.bf16.xpose.msra.mxu0 0
      %5496 = vmatprep.subr.bf16.mxu0 0
      %5497 = vmatpush1.bf16.xpose.msra.mxu0 0
      %5498 = vmatprep.subr.bf16.mxu0 0
      %5499 = vmatpush1.bf16.xpose.msra.mxu0 0
      %5500 = vmatprep.subr.bf16.mxu0 0
      %5501 = vmatpush1.bf16.xpose.msra.mxu0 0
      %5502 = vmatprep.subr.bf16.mxu0 0
      %5503 = vmatpush1.bf16.xpose.msra.mxu0 0
      %5504 = vmatprep.subr.bf16.mxu0 0
      %5505 = vmatpush1.bf16.xpose.msra.mxu0 0
      %5506 = vmatprep.subr.bf16.mxu0 0
      %5507 = vmatpush1.bf16.xpose.msra.mxu0 0
      %5508 = vmatprep.subr.bf16.mxu0 0
      %5509 = vmatpush1.bf16.xpose.msra.mxu0 0
      %5510 = vmatprep.subr.bf16.mxu0 0
      %5511 = vmatpush1.bf16.xpose.msra.mxu0 0
      %5512 = vmatprep.subr.bf16.mxu0 0
      %5513 = vmatpush1.bf16.xpose.msra.mxu0 0
      %5514 = vmatprep.mubr.bf16.mxu0 0
      %5515 = vmatmul.mubr.bf16.gmra.mrb[0].mxu0 %v5477
      %v5516 = vpop.f32.mrb[0].mxu0
      %v5517 = vadd.f32 0.0, %v5516
      %v5518 = vpop.f32.mrb[0].mxu0
      %v5519 = vpop.f32.mrb[0].mxu0
      %v5520 = vadd.f32 0.0, %v5519
      %v5521 = vpop.f32.mrb[0].mxu0
      %5522 = vdwg.mxu0
      %5523 = vxpose.xlu0.b32.start [1/16] %v5376, 128
      %5524 = vxpose.xlu0.b32.cont [2/16] %v5379, 128
      %5525 = vxpose.xlu0.b32.cont [3/16] 0.0, 128
      %5526 = vxpose.xlu0.b32.cont [4/16] 0.0, 128
      %5527 = vxpose.xlu0.b32.cont [5/16] 0.0, 128
      %5528 = vxpose.xlu0.b32.cont [6/16] 0.0, 128
      %5529 = vxpose.xlu0.b32.cont [7/16] 0.0, 128
      %5530 = vxpose.xlu0.b32.cont [8/16] 0.0, 128
      %5531 = vxpose.xlu0.b32.cont [9/16] 0.0, 128
      %5532 = vxpose.xlu0.b32.cont [10/16] 0.0, 128
      %5533 = vxpose.xlu0.b32.cont [11/16] 0.0, 128
      %5534 = vxpose.xlu0.b32.cont [12/16] 0.0, 128
      %5535 = vxpose.xlu0.b32.cont [13/16] 0.0, 128
      %5536 = vxpose.xlu0.b32.cont [14/16] 0.0, 128
      %5537 = vxpose.xlu0.b32.cont [15/16] 0.0, 128
      %5538 = vxpose.xlu0.b32.end [16/16] 0.0, 128
      %v5539 = vpop.trf.xlu0
      %v5540 = vpop.trf.xlu0
      %v5541 = vpop.trf.xlu0
      %v5542 = vpop.trf.xlu0
      %v5543 = vpop.trf.xlu0
      %v5544 = vpop.trf.xlu0
      %v5545 = vpop.trf.xlu0
      %v5546 = vpop.trf.xlu0
      %v5547 = vpop.trf.xlu0
      %v5548 = vpop.trf.xlu0
      %v5549 = vpop.trf.xlu0
      %v5550 = vpop.trf.xlu0
      %v5551 = vpop.trf.xlu0
      %v5552 = vpop.trf.xlu0
      %v5553 = vpop.trf.xlu0
      %v5554 = vpop.trf.xlu0
      %5555 = vxpose.xlu0.b32.start [1/16] %v5423, 128
      %5556 = vxpose.xlu0.b32.cont [2/16] %v5426, 128
      %5557 = vxpose.xlu0.b32.cont [3/16] 0.0, 128
      %5558 = vxpose.xlu0.b32.cont [4/16] 0.0, 128
      %5559 = vxpose.xlu0.b32.cont [5/16] 0.0, 128
      %5560 = vxpose.xlu0.b32.cont [6/16] 0.0, 128
      %5561 = vxpose.xlu0.b32.cont [7/16] 0.0, 128
      %5562 = vxpose.xlu0.b32.cont [8/16] 0.0, 128
      %5563 = vxpose.xlu0.b32.cont [9/16] 0.0, 128
      %5564 = vxpose.xlu0.b32.cont [10/16] 0.0, 128
      %5565 = vxpose.xlu0.b32.cont [11/16] 0.0, 128
      %5566 = vxpose.xlu0.b32.cont [12/16] 0.0, 128
      %5567 = vxpose.xlu0.b32.cont [13/16] 0.0, 128
      %5568 = vxpose.xlu0.b32.cont [14/16] 0.0, 128
      %5569 = vxpose.xlu0.b32.cont [15/16] 0.0, 128
      %5570 = vxpose.xlu0.b32.end [16/16] 0.0, 128
      %v5571 = vpop.trf.xlu0
      %v5572 = vpop.trf.xlu0
      %v5573 = vpop.trf.xlu0
      %v5574 = vpop.trf.xlu0
      %v5575 = vpop.trf.xlu0
      %v5576 = vpop.trf.xlu0
      %v5577 = vpop.trf.xlu0
      %v5578 = vpop.trf.xlu0
      %v5579 = vpop.trf.xlu0
      %v5580 = vpop.trf.xlu0
      %v5581 = vpop.trf.xlu0
      %v5582 = vpop.trf.xlu0
      %v5583 = vpop.trf.xlu0
      %v5584 = vpop.trf.xlu0
      %v5585 = vpop.trf.xlu0
      %v5586 = vpop.trf.xlu0
      %5587 = vxpose.xlu0.b32.start [1/16] %v5470, 128
      %5588 = vxpose.xlu0.b32.cont [2/16] %v5473, 128
      %5589 = vxpose.xlu0.b32.cont [3/16] 0.0, 128
      %5590 = vxpose.xlu0.b32.cont [4/16] 0.0, 128
      %5591 = vxpose.xlu0.b32.cont [5/16] 0.0, 128
      %5592 = vxpose.xlu0.b32.cont [6/16] 0.0, 128
      %5593 = vxpose.xlu0.b32.cont [7/16] 0.0, 128
      %5594 = vxpose.xlu0.b32.cont [8/16] 0.0, 128
      %5595 = vxpose.xlu0.b32.cont [9/16] 0.0, 128
      %5596 = vxpose.xlu0.b32.cont [10/16] 0.0, 128
      %5597 = vxpose.xlu0.b32.cont [11/16] 0.0, 128
      %5598 = vxpose.xlu0.b32.cont [12/16] 0.0, 128
      %5599 = vxpose.xlu0.b32.cont [13/16] 0.0, 128
      %5600 = vxpose.xlu0.b32.cont [14/16] 0.0, 128
      %5601 = vxpose.xlu0.b32.cont [15/16] 0.0, 128
      %5602 = vxpose.xlu0.b32.end [16/16] 0.0, 128
      %v5603 = vpop.trf.xlu0
      %v5604 = vpop.trf.xlu0
      %v5605 = vpop.trf.xlu0
      %v5606 = vpop.trf.xlu0
      %v5607 = vpop.trf.xlu0
      %v5608 = vpop.trf.xlu0
      %v5609 = vpop.trf.xlu0
      %v5610 = vpop.trf.xlu0
      %v5611 = vpop.trf.xlu0
      %v5612 = vpop.trf.xlu0
      %v5613 = vpop.trf.xlu0
      %v5614 = vpop.trf.xlu0
      %v5615 = vpop.trf.xlu0
      %v5616 = vpop.trf.xlu0
      %v5617 = vpop.trf.xlu0
      %v5618 = vpop.trf.xlu0
      %5619 = vxpose.xlu0.b32.start [1/16] %v5517, 128
      %5620 = vxpose.xlu0.b32.cont [2/16] %v5520, 128
      %5621 = vxpose.xlu0.b32.cont [3/16] 0.0, 128
      %5622 = vxpose.xlu0.b32.cont [4/16] 0.0, 128
      %5623 = vxpose.xlu0.b32.cont [5/16] 0.0, 128
      %5624 = vxpose.xlu0.b32.cont [6/16] 0.0, 128
      %5625 = vxpose.xlu0.b32.cont [7/16] 0.0, 128
      %5626 = vxpose.xlu0.b32.cont [8/16] 0.0, 128
      %5627 = vxpose.xlu0.b32.cont [9/16] 0.0, 128
      %5628 = vxpose.xlu0.b32.cont [10/16] 0.0, 128
      %5629 = vxpose.xlu0.b32.cont [11/16] 0.0, 128
      %5630 = vxpose.xlu0.b32.cont [12/16] 0.0, 128
      %5631 = vxpose.xlu0.b32.cont [13/16] 0.0, 128
      %5632 = vxpose.xlu0.b32.cont [14/16] 0.0, 128
      %5633 = vxpose.xlu0.b32.cont [15/16] 0.0, 128
      %5634 = vxpose.xlu0.b32.end [16/16] 0.0, 128
      %v5635 = vpop.trf.xlu0
      %v5636 = vpop.trf.xlu0
      %v5637 = vpop.trf.xlu0
      %v5638 = vpop.trf.xlu0
      %v5639 = vpop.trf.xlu0
      %v5640 = vpop.trf.xlu0
      %v5641 = vpop.trf.xlu0
      %v5642 = vpop.trf.xlu0
      %v5643 = vpop.trf.xlu0
      %v5644 = vpop.trf.xlu0
      %v5645 = vpop.trf.xlu0
      %v5646 = vpop.trf.xlu0
      %v5647 = vpop.trf.xlu0
      %v5648 = vpop.trf.xlu0
      %v5649 = vpop.trf.xlu0
      %v5650 = vpop.trf.xlu0
      %v5651 = vcombine.low %v5539, %v5603
      %v5652 = vcombine.high %v5539, %v5603
      %v5654 = vunpack.c.l.s4 1983009808
      %v5655 = vunpack.c.0.s8 %v5654
      %v5656 = vlaneseq
      %v5657 = vshrl.u32 %v5656, 7
      %v5658 = vsub.s32 %v5655, %v5657
      %v5659 = vrot.slane %v5651, %v5658
      %v5661 = vunpack.c.l.s4 1983009808
      %v5662 = vunpack.c.0.s8 %v5661
      %v5663 = vlaneseq
      %v5664 = vshrl.u32 %v5663, 7
      %v5665 = vsub.s32 %v5662, %v5664
      %v5666 = vrot.slane %v5652, %v5665
      %v5667 = vcombine.low %v5571, %v5635
      %v5668 = vcombine.high %v5571, %v5635
      %v5670 = vunpack.c.l.s4 1983009808
      %v5671 = vunpack.c.0.s8 %v5670
      %v5672 = vlaneseq
      %v5673 = vshrl.u32 %v5672, 7
      %v5674 = vsub.s32 %v5671, %v5673
      %v5675 = vrot.slane %v5667, %v5674
      %v5677 = vunpack.c.l.s4 1983009808
      %v5678 = vunpack.c.0.s8 %v5677
      %v5679 = vlaneseq
      %v5680 = vshrl.u32 %v5679, 7
      %v5681 = vsub.s32 %v5678, %v5680
      %v5682 = vrot.slane %v5668, %v5681
      %v5683 = vcombine.low %v5659, %v5675
      %v5684 = vcombine.high %v5659, %v5675
      %v5686 = vunpack.c.l.s4 1934713408
      %v5687 = vunpack.c.0.s8 %v5686
      %v5688 = vlaneseq
      %v5689 = vshrl.u32 %v5688, 7
      %v5690 = vsub.s32 %v5687, %v5689
      %v5691 = vrot.slane %v5683, %v5690
      %v5693 = vunpack.c.l.s4 1934713408
      %v5694 = vunpack.c.0.s8 %v5693
      %v5695 = vlaneseq
      %v5696 = vshrl.u32 %v5695, 7
      %v5697 = vsub.s32 %v5694, %v5696
      %v5698 = vrot.slane %v5684, %v5697
      %v5699 = vcombine.low %v5666, %v5682
      %v5700 = vcombine.high %v5666, %v5682
      %v5702 = vunpack.c.l.s4 1934713408
      %v5703 = vunpack.c.0.s8 %v5702
      %v5704 = vlaneseq
      %v5705 = vshrl.u32 %v5704, 7
      %v5706 = vsub.s32 %v5703, %v5705
      %v5707 = vrot.slane %v5699, %v5706
      %v5709 = vunpack.c.l.s4 1934713408
      %v5710 = vunpack.c.0.s8 %v5709
      %v5711 = vlaneseq
      %v5712 = vshrl.u32 %v5711, 7
      %v5713 = vsub.s32 %v5710, %v5712
      %v5714 = vrot.slane %v5700, %v5713
      %v5715 = vcombine.high %v5691, 0.0
      %v5716 = vcombine.high %v5698, 0.0
      %v5717 = vcombine.high %v5707, 0.0
      %v5718 = vcombine.high %v5714, 0.0
      %v5719 = vcombine.low %v5691, %v5698
      %v5721 = vunpack.c.l.s4 1983009808
      %v5722 = vunpack.c.0.s8 %v5721
      %v5723 = vlaneseq
      %v5724 = vshrl.u32 %v5723, 7
      %v5725 = vsub.s32 %v5722, %v5724
      %v5726 = vrot.slane %v5719, %v5725
      %v5727 = vcombine.low %v5715, %v5716
      %v5729 = vunpack.c.l.s4 1983009808
      %v5730 = vunpack.c.0.s8 %v5729
      %v5731 = vlaneseq
      %v5732 = vshrl.u32 %v5731, 7
      %v5733 = vsub.s32 %v5730, %v5732
      %v5734 = vrot.slane %v5727, %v5733
      %v5735 = vcombine.low %v5707, %v5714
      %v5737 = vunpack.c.l.s4 1983009808
      %v5738 = vunpack.c.0.s8 %v5737
      %v5739 = vlaneseq
      %v5740 = vshrl.u32 %v5739, 7
      %v5741 = vsub.s32 %v5738, %v5740
      %v5742 = vrot.slane %v5735, %v5741
      %v5743 = vcombine.low %v5717, %v5718
      %v5745 = vunpack.c.l.s4 1983009808
      %v5746 = vunpack.c.0.s8 %v5745
      %v5747 = vlaneseq
      %v5748 = vshrl.u32 %v5747, 7
      %v5749 = vsub.s32 %v5746, %v5748
      %v5750 = vrot.slane %v5743, %v5749
      %v5751 = vcombine.low %v5726, %v5734
      %v5752 = vcombine.high %v5726, %v5734
      %v5754 = vunpack.c.l.s4 1934713408
      %v5755 = vunpack.c.0.s8 %v5754
      %v5756 = vlaneseq
      %v5757 = vshrl.u32 %v5756, 7
      %v5758 = vsub.s32 %v5755, %v5757
      %v5759 = vrot.slane %v5751, %v5758
      %v5761 = vunpack.c.l.s4 1934713408
      %v5762 = vunpack.c.0.s8 %v5761
      %v5763 = vlaneseq
      %v5764 = vshrl.u32 %v5763, 7
      %v5765 = vsub.s32 %v5762, %v5764
      %v5766 = vrot.slane %v5752, %v5765
      %v5767 = vcombine.low %v5742, %v5750
      %v5768 = vcombine.high %v5742, %v5750
      %v5770 = vunpack.c.l.s4 1934713408
      %v5771 = vunpack.c.0.s8 %v5770
      %v5772 = vlaneseq
      %v5773 = vshrl.u32 %v5772, 7
      %v5774 = vsub.s32 %v5771, %v5773
      %v5775 = vrot.slane %v5767, %v5774
      %v5777 = vunpack.c.l.s4 1934713408
      %v5778 = vunpack.c.0.s8 %v5777
      %v5779 = vlaneseq
      %v5780 = vshrl.u32 %v5779, 7
      %v5781 = vsub.s32 %v5778, %v5780
      %v5782 = vrot.slane %v5768, %v5781
      %v5783 = vcombine.low %v5759, %v5775
      %v5784 = vcombine.high %v5759, %v5775
      %v5785 = vcombine.low %v5766, %v5782
      %v5786 = vcombine.high %v5766, %v5782
      %5788 = vrot.lane.b32.xlu0 %v5784, 16
      %v5789 = vpop.permute.xlu0 %5788
      %5792 = vrot.lane.b32.xlu0 %v5785, 32
      %v5793 = vpop.permute.xlu0 %5792
      %5796 = vrot.lane.b32.xlu0 %v5786, 48
      %v5797 = vpop.permute.xlu0 %5796
      %v5799 = vsel %vm765, %v5783, %v5789
      %v5800 = vsel %vm3081, %v5799, %v5793
      %v5801 = vsel %vm3083, %v5800, %v5797
      %v5802 = vpack.c.bf16 %v5801, %v5801
      %s5803 = scalar_lea.vmem %s584, 32
      %v5804 = vld [vmem:[%s5803] sm:$0xf]
      %v5805 = vld [vmem:[%s5803 + $0x4] sm:$0xf]
      %v5806 = vld [vmem:[%s5803 + $0x8] sm:$0xf]
      %v5807 = vld [vmem:[%s5803 + $0xc] sm:$0xf]
      %v5808 = vld [vmem:[%s5803 + $0x10] sm:$0xf]
      %v5809 = vld [vmem:[%s5803 + $0x14] sm:$0xf]
      %v5810 = vld [vmem:[%s5803 + $0x18] sm:$0xf]
      %v5811 = vld [vmem:[%s5803 + $0x1c] sm:$0xf]
      %s5812 = scalar_lea.vmem %s588, 1
      %v5813 = vld [vmem:[%s5812] sm:$0x1]
      %v5815 = vlaneseq
      %v5816 = vshrl.u32 %v5815, 7
      %v5817 = vsub.s32 0, %v5816
      %v5818 = vrot.slane %v5813, %v5817
      %v5828 = vunpack.c.l.b16 %v5804
      %v5829 = vunpack.c.l.b16 %v5805
      %v5830 = vunpack.c.l.b16 %v5806
      %v5831 = vunpack.c.l.b16 %v5807
      %v5832 = vunpack.c.l.b16 %v5808
      %v5833 = vunpack.c.l.b16 %v5809
      %v5834 = vunpack.c.l.b16 %v5810
      %v5835 = vunpack.c.l.b16 %v5811
      %v5836 = vpack.c.b16 %v5829, %v5828
      %v5837 = vpack.c.b16 %v5831, %v5830
      %v5838 = vpack.c.b16 %v5833, %v5832
      %v5839 = vpack.c.b16 %v5835, %v5834
      %v5845 = vsel %vm3125, %v5802, 0
      %5847 = vmatprep.subr.bf16.mxu0 0
      %5848 = vmatpush1.bf16.msra.mxu0 %v5836
      %5849 = vmatprep.subr.bf16.mxu0 0
      %5850 = vmatpush1.bf16.msra.mxu0 %v5837
      %5851 = vmatprep.subr.bf16.mxu0 0
      %5852 = vmatpush1.bf16.msra.mxu0 %v5838
      %5853 = vmatprep.subr.bf16.mxu0 0
      %5854 = vmatpush1.bf16.msra.mxu0 %v5839
      %5855 = vmatprep.subr.bf16.mxu0 0
      %5856 = vmatpush1.bf16.msra.mxu0 0
      %5857 = vmatprep.subr.bf16.mxu0 0
      %5858 = vmatpush1.bf16.msra.mxu0 0
      %5859 = vmatprep.subr.bf16.mxu0 0
      %5860 = vmatpush1.bf16.msra.mxu0 0
      %5861 = vmatprep.subr.bf16.mxu0 0
      %5862 = vmatpush1.bf16.msra.mxu0 0
      %5863 = vmatprep.subr.bf16.mxu0 0
      %5864 = vmatpush1.bf16.msra.mxu0 0
      %5865 = vmatprep.subr.bf16.mxu0 0
      %5866 = vmatpush1.bf16.msra.mxu0 0
      %5867 = vmatprep.subr.bf16.mxu0 0
      %5868 = vmatpush1.bf16.msra.mxu0 0
      %5869 = vmatprep.subr.bf16.mxu0 0
      %5870 = vmatpush1.bf16.msra.mxu0 0
      %5871 = vmatprep.subr.bf16.mxu0 0
      %5872 = vmatpush1.bf16.msra.mxu0 0
      %5873 = vmatprep.subr.bf16.mxu0 0
      %5874 = vmatpush1.bf16.msra.mxu0 0
      %5875 = vmatprep.subr.bf16.mxu0 0
      %5876 = vmatpush1.bf16.msra.mxu0 0
      %5877 = vmatprep.subr.bf16.mxu0 0
      %5878 = vmatpush1.bf16.msra.mxu0 0
      %5879 = vmatprep.mubr.bf16.mxu0 0
      %5880 = vmatmul.mubr.bf16.gmra.mrb[0].mxu0 %v5845
      %v5881 = vpop.f32.mrb[0].mxu0
      %v5882 = vadd.f32 %v5818, %v5881
      %v5883 = vpop.f32.mrb[0].mxu0
      %v5884 = vpop.f32.mrb[0].mxu0
      %v5885 = vpop.f32.mrb[0].mxu0
      %5886 = vdwg.mxu0
      %v5887 = vadd.f32 %v5882, %v3200
      %s5888 = scalar_lea.vmem %s592, 2
      %v5889 = vld [vmem:[%s5888] sm:$0x1]
      %s5890 = scalar_lea.vmem %s592, 3
      %v5891 = vld [vmem:[%s5890] sm:$0x1]
      %v5892 = vsel %vm3125, %v5887, 0.0
      %5893 = vadd.xlane.f32.xlu0 %v5892
      %v5894 = vpop.xlane.xlu0 %5893
      %v5895 = vmul.f32 %v5894, %v3176
      %v5896 = vsub.f32 %v5887, %v5895
      %v5897 = vmul.f32 %v5896, %v5896
      %v5898 = vsel %vm3125, %v5897, 0.0
      %5899 = vadd.xlane.f32.xlu0 %v5898
      %v5900 = vpop.xlane.xlu0 %5899
      %v5901 = vmul.f32 %v5900, %v3176
      %v5902 = vadd.f32 %v5901, 1e-05
      %v5903 = vrsqrt.pop %v5902
      %v5904 = vmul.f32 %v5896, %v5903
      %v5906 = vlaneseq
      %v5907 = vshrl.u32 %v5906, 7
      %v5908 = vsub.s32 0, %v5907
      %v5909 = vrot.slane %v5889, %v5908
      %v5911 = vmul.f32 %v5904, %v5909
      %v5913 = vlaneseq
      %v5914 = vshrl.u32 %v5913, 7
      %v5915 = vsub.s32 0, %v5914
      %v5916 = vrot.slane %v5891, %v5915
      %v5918 = vadd.f32 %v5911, %v5916
      %v5919 = vpack.c.bf16 %v5918, %v5918
      %v5920 = vld [vmem:[%s597] sm:$0xff]
      %v5921 = vld [vmem:[%s597 + $0x8] sm:$0xff]
      %v5922 = vld [vmem:[%s597 + $0x10] sm:$0xff]
      %v5923 = vld [vmem:[%s597 + $0x18] sm:$0xff]
      %v5924 = vld [vmem:[%s597 + $0x20] sm:$0xff]
      %v5925 = vld [vmem:[%s597 + $0x28] sm:$0xff]
      %v5926 = vld [vmem:[%s597 + $0x30] sm:$0xff]
      %v5927 = vld [vmem:[%s597 + $0x38] sm:$0xff]
      %v5928 = vld [vmem:[%s601] sm:$0x3]
      %v5930 = vlaneseq
      %v5931 = vshrl.u32 %v5930, 7
      %v5932 = vsub.s32 0, %v5931
      %v5933 = vrot.slane %v5928, %v5932
      %v5934 = vlaneseq
      %v5935 = vshrl.u32 %v5934, 7
      %v5936 = vsub.s32 1, %v5935
      %v5937 = vrot.slane %v5928, %v5936
      %v5948 = vunpack.c.l.b16 %v5920
      %v5949 = vunpack.c.h.b16 %v5920
      %v5950 = vunpack.c.l.b16 %v5921
      %v5951 = vunpack.c.h.b16 %v5921
      %v5952 = vunpack.c.l.b16 %v5922
      %v5953 = vunpack.c.h.b16 %v5922
      %v5954 = vunpack.c.l.b16 %v5923
      %v5955 = vunpack.c.h.b16 %v5923
      %v5956 = vunpack.c.l.b16 %v5924
      %v5957 = vunpack.c.h.b16 %v5924
      %v5958 = vunpack.c.l.b16 %v5925
      %v5959 = vunpack.c.h.b16 %v5925
      %v5960 = vunpack.c.l.b16 %v5926
      %v5961 = vunpack.c.h.b16 %v5926
      %v5962 = vunpack.c.l.b16 %v5927
      %v5963 = vunpack.c.h.b16 %v5927
      %v5964 = vpack.c.b16 %v5950, %v5948
      %v5965 = vpack.c.b16 %v5951, %v5949
      %v5966 = vpack.c.b16 %v5954, %v5952
      %v5967 = vpack.c.b16 %v5955, %v5953
      %v5968 = vpack.c.b16 %v5958, %v5956
      %v5969 = vpack.c.b16 %v5959, %v5957
      %v5970 = vpack.c.b16 %v5962, %v5960
      %v5971 = vpack.c.b16 %v5963, %v5961
      %v5981 = vsel %vm3125, %v5919, 0
      %5983 = vmatprep.subr.bf16.mxu0 %v5965
      %5984 = vmatpush1.bf16.msra.mxu0 %v5964
      %5985 = vmatprep.subr.bf16.mxu0 %v5967
      %5986 = vmatpush1.bf16.msra.mxu0 %v5966
      %5987 = vmatprep.subr.bf16.mxu0 %v5969
      %5988 = vmatpush1.bf16.msra.mxu0 %v5968
      %5989 = vmatprep.subr.bf16.mxu0 %v5971
      %5990 = vmatpush1.bf16.msra.mxu0 %v5970
      %5991 = vmatprep.subr.bf16.mxu0 0
      %5992 = vmatpush1.bf16.msra.mxu0 0
      %5993 = vmatprep.subr.bf16.mxu0 0
      %5994 = vmatpush1.bf16.msra.mxu0 0
      %5995 = vmatprep.subr.bf16.mxu0 0
      %5996 = vmatpush1.bf16.msra.mxu0 0
      %5997 = vmatprep.subr.bf16.mxu0 0
      %5998 = vmatpush1.bf16.msra.mxu0 0
      %5999 = vmatprep.subr.bf16.mxu0 0
      %6000 = vmatpush1.bf16.msra.mxu0 0
      %6001 = vmatprep.subr.bf16.mxu0 0
      %6002 = vmatpush1.bf16.msra.mxu0 0
      %6003 = vmatprep.subr.bf16.mxu0 0
      %6004 = vmatpush1.bf16.msra.mxu0 0
      %6005 = vmatprep.subr.bf16.mxu0 0
      %6006 = vmatpush1.bf16.msra.mxu0 0
      %6007 = vmatprep.subr.bf16.mxu0 0
      %6008 = vmatpush1.bf16.msra.mxu0 0
      %6009 = vmatprep.subr.bf16.mxu0 0
      %6010 = vmatpush1.bf16.msra.mxu0 0
      %6011 = vmatprep.subr.bf16.mxu0 0
      %6012 = vmatpush1.bf16.msra.mxu0 0
      %6013 = vmatprep.subr.bf16.mxu0 0
      %6014 = vmatpush1.bf16.msra.mxu0 0
      %6015 = vmatprep.mubr.bf16.mxu0 0
      %6016 = vmatmul.mubr.bf16.gmra.mrb[0].mxu0 %v5981
      %v6017 = vpop.f32.mrb[0].mxu0
      %v6018 = vadd.f32 %v5933, %v6017
      %v6019 = vpop.f32.mrb[0].mxu0
      %v6020 = vadd.f32 %v5937, %v6019
      %v6021 = vpop.f32.mrb[0].mxu0
      %v6022 = vpop.f32.mrb[0].mxu0
      %6023 = vdwg.mxu0
      %v6024 = vmax.f32 %v6018, 0.0
      %v6025 = vmax.f32 %v6020, 0.0
      %v6026 = vpack.c.bf16 %v6024, %v6024
      %v6027 = vpack.c.bf16 %v6025, %v6025
      %v6028 = vld [vmem:[%s606] sm:$0xf]
      %v6029 = vld [vmem:[%s606 + $0x4] sm:$0xf]
      %v6030 = vld [vmem:[%s606 + $0x8] sm:$0xf]
      %v6031 = vld [vmem:[%s606 + $0xc] sm:$0xf]
      %v6032 = vld [vmem:[%s606 + $0x10] sm:$0xf]
      %v6033 = vld [vmem:[%s606 + $0x14] sm:$0xf]
      %v6034 = vld [vmem:[%s606 + $0x18] sm:$0xf]
      %v6035 = vld [vmem:[%s606 + $0x1c] sm:$0xf]
      %v6036 = vld [vmem:[%s606 + $0x20] sm:$0xf]
      %v6037 = vld [vmem:[%s606 + $0x24] sm:$0xf]
      %v6038 = vld [vmem:[%s606 + $0x28] sm:$0xf]
      %v6039 = vld [vmem:[%s606 + $0x2c] sm:$0xf]
      %v6040 = vld [vmem:[%s606 + $0x30] sm:$0xf]
      %v6041 = vld [vmem:[%s606 + $0x34] sm:$0xf]
      %v6042 = vld [vmem:[%s606 + $0x38] sm:$0xf]
      %v6043 = vld [vmem:[%s606 + $0x3c] sm:$0xf]
      %v6044 = vld [vmem:[%s606 + $0x40] sm:$0xf]
      %v6045 = vld [vmem:[%s606 + $0x44] sm:$0xf]
      %v6046 = vld [vmem:[%s606 + $0x48] sm:$0xf]
      %v6047 = vld [vmem:[%s606 + $0x4c] sm:$0xf]
      %v6048 = vld [vmem:[%s606 + $0x50] sm:$0xf]
      %v6049 = vld [vmem:[%s606 + $0x54] sm:$0xf]
      %v6050 = vld [vmem:[%s606 + $0x58] sm:$0xf]
      %v6051 = vld [vmem:[%s606 + $0x5c] sm:$0xf]
      %v6052 = vld [vmem:[%s606 + $0x60] sm:$0xf]
      %v6053 = vld [vmem:[%s606 + $0x64] sm:$0xf]
      %v6054 = vld [vmem:[%s606 + $0x68] sm:$0xf]
      %v6055 = vld [vmem:[%s606 + $0x6c] sm:$0xf]
      %v6056 = vld [vmem:[%s606 + $0x70] sm:$0xf]
      %v6057 = vld [vmem:[%s606 + $0x74] sm:$0xf]
      %v6058 = vld [vmem:[%s606 + $0x78] sm:$0xf]
      %v6059 = vld [vmem:[%s606 + $0x7c] sm:$0xf]
      %v6060 = vld [vmem:[%s609] sm:$0x1]
      %v6062 = vlaneseq
      %v6063 = vshrl.u32 %v6062, 7
      %v6064 = vsub.s32 0, %v6063
      %v6065 = vrot.slane %v6060, %v6064
      %v6099 = vunpack.c.l.b16 %v6028
      %v6100 = vunpack.c.l.b16 %v6029
      %v6101 = vunpack.c.l.b16 %v6030
      %v6102 = vunpack.c.l.b16 %v6031
      %v6103 = vunpack.c.l.b16 %v6032
      %v6104 = vunpack.c.l.b16 %v6033
      %v6105 = vunpack.c.l.b16 %v6034
      %v6106 = vunpack.c.l.b16 %v6035
      %v6107 = vunpack.c.l.b16 %v6036
      %v6108 = vunpack.c.l.b16 %v6037
      %v6109 = vunpack.c.l.b16 %v6038
      %v6110 = vunpack.c.l.b16 %v6039
      %v6111 = vunpack.c.l.b16 %v6040
      %v6112 = vunpack.c.l.b16 %v6041
      %v6113 = vunpack.c.l.b16 %v6042
      %v6114 = vunpack.c.l.b16 %v6043
      %v6115 = vunpack.c.l.b16 %v6044
      %v6116 = vunpack.c.l.b16 %v6045
      %v6117 = vunpack.c.l.b16 %v6046
      %v6118 = vunpack.c.l.b16 %v6047
      %v6119 = vunpack.c.l.b16 %v6048
      %v6120 = vunpack.c.l.b16 %v6049
      %v6121 = vunpack.c.l.b16 %v6050
      %v6122 = vunpack.c.l.b16 %v6051
      %v6123 = vunpack.c.l.b16 %v6052
      %v6124 = vunpack.c.l.b16 %v6053
      %v6125 = vunpack.c.l.b16 %v6054
      %v6126 = vunpack.c.l.b16 %v6055
      %v6127 = vunpack.c.l.b16 %v6056
      %v6128 = vunpack.c.l.b16 %v6057
      %v6129 = vunpack.c.l.b16 %v6058
      %v6130 = vunpack.c.l.b16 %v6059
      %v6131 = vpack.c.b16 %v6100, %v6099
      %v6132 = vpack.c.b16 %v6102, %v6101
      %v6133 = vpack.c.b16 %v6104, %v6103
      %v6134 = vpack.c.b16 %v6106, %v6105
      %v6135 = vpack.c.b16 %v6108, %v6107
      %v6136 = vpack.c.b16 %v6110, %v6109
      %v6137 = vpack.c.b16 %v6112, %v6111
      %v6138 = vpack.c.b16 %v6114, %v6113
      %v6139 = vpack.c.b16 %v6116, %v6115
      %v6140 = vpack.c.b16 %v6118, %v6117
      %v6141 = vpack.c.b16 %v6120, %v6119
      %v6142 = vpack.c.b16 %v6122, %v6121
      %v6143 = vpack.c.b16 %v6124, %v6123
      %v6144 = vpack.c.b16 %v6126, %v6125
      %v6145 = vpack.c.b16 %v6128, %v6127
      %v6146 = vpack.c.b16 %v6130, %v6129
      %6163 = vmatprep.subr.bf16.mxu0 0
      %6164 = vmatpush1.bf16.msra.mxu0 %v6131
      %6165 = vmatprep.subr.bf16.mxu0 0
      %6166 = vmatpush1.bf16.msra.mxu0 %v6132
      %6167 = vmatprep.subr.bf16.mxu0 0
      %6168 = vmatpush1.bf16.msra.mxu0 %v6133
      %6169 = vmatprep.subr.bf16.mxu0 0
      %6170 = vmatpush1.bf16.msra.mxu0 %v6134
      %6171 = vmatprep.subr.bf16.mxu0 0
      %6172 = vmatpush1.bf16.msra.mxu0 %v6135
      %6173 = vmatprep.subr.bf16.mxu0 0
      %6174 = vmatpush1.bf16.msra.mxu0 %v6136
      %6175 = vmatprep.subr.bf16.mxu0 0
      %6176 = vmatpush1.bf16.msra.mxu0 %v6137
      %6177 = vmatprep.subr.bf16.mxu0 0
      %6178 = vmatpush1.bf16.msra.mxu0 %v6138
      %6179 = vmatprep.subr.bf16.mxu0 0
      %6180 = vmatpush1.bf16.msra.mxu0 %v6139
      %6181 = vmatprep.subr.bf16.mxu0 0
      %6182 = vmatpush1.bf16.msra.mxu0 %v6140
      %6183 = vmatprep.subr.bf16.mxu0 0
      %6184 = vmatpush1.bf16.msra.mxu0 %v6141
      %6185 = vmatprep.subr.bf16.mxu0 0
      %6186 = vmatpush1.bf16.msra.mxu0 %v6142
      %6187 = vmatprep.subr.bf16.mxu0 0
      %6188 = vmatpush1.bf16.msra.mxu0 %v6143
      %6189 = vmatprep.subr.bf16.mxu0 0
      %6190 = vmatpush1.bf16.msra.mxu0 %v6144
      %6191 = vmatprep.subr.bf16.mxu0 0
      %6192 = vmatpush1.bf16.msra.mxu0 %v6145
      %6193 = vmatprep.subr.bf16.mxu0 0
      %6194 = vmatpush1.bf16.msra.mxu0 %v6146
      %6195 = vmatprep.mubr.bf16.mxu0 %v6027
      %6196 = vmatmul.mubr.bf16.gmra.mrb[0].mxu0 %v6026
      %v6197 = vpop.f32.mrb[0].mxu0
      %v6198 = vadd.f32 %v6065, %v6197
      %v6199 = vpop.f32.mrb[0].mxu0
      %v6200 = vpop.f32.mrb[0].mxu0
      %v6201 = vpop.f32.mrb[0].mxu0
      %6202 = vdwg.mxu0
      %v6203 = vadd.f32 %v6198, %v5918
      %s6204 = scalar_lea.vmem %s592, 4
      %v6205 = vld [vmem:[%s6204] sm:$0x1]
      %s6206 = scalar_lea.vmem %s592, 5
      %v6207 = vld [vmem:[%s6206] sm:$0x1]
      %v6208 = vsel %vm3125, %v6203, 0.0
      %6209 = vadd.xlane.f32.xlu0 %v6208
      %v6210 = vpop.xlane.xlu0 %6209
      %v6211 = vmul.f32 %v6210, %v3176
      %v6212 = vsub.f32 %v6203, %v6211
      %v6213 = vmul.f32 %v6212, %v6212
      %v6214 = vsel %vm3125, %v6213, 0.0
      %6215 = vadd.xlane.f32.xlu0 %v6214
      %v6216 = vpop.xlane.xlu0 %6215
      %v6217 = vmul.f32 %v6216, %v3176
      %v6218 = vadd.f32 %v6217, 1e-05
      %v6219 = vrsqrt.pop %v6218
      %v6220 = vmul.f32 %v6212, %v6219
      %v6222 = vlaneseq
      %v6223 = vshrl.u32 %v6222, 7
      %v6224 = vsub.s32 0, %v6223
      %v6225 = vrot.slane %v6205, %v6224
      %v6227 = vmul.f32 %v6220, %v6225
      %v6229 = vlaneseq
      %v6230 = vshrl.u32 %v6229, 7
      %v6231 = vsub.s32 0, %v6230
      %v6232 = vrot.slane %v6207, %v6231
      %v6234 = vadd.f32 %v6227, %v6232
      %6235 = vst.msk [vmem:[#allocation2] sm:$0xff] %vm3125, %v6234
      %p6236 = scmp.eq.s32.totalorder %s28, 1
      // Predicated region
      $region73: #{_decoder_apply.2} parent=67 // pred_check
        %p6237 = pneg %p6236
      $region74: #{_decoder_apply.2} parent=67 // pred_check_branch
        %6239 = sbr.rel (%p6237) target = $region76
      $region75: #{_decoder_apply.2} parent=67 // pred_region
        %6240 = vst.msk [vmem:[%s613] sm:$0xff] %vm3125, %v6234
      $region76: #{_decoder_apply.2} parent=67 // pred_fallthru
        _
      %p6241 = scmp.lt.s32.totalorder %s27, 1
      %s6242 = scalar_select %p6241, %s27, 1
      %s6243 = smul.addr %s6242, 8
      %s6244 = scalar_lea.vmem %s12, %s6243
      // Predicated region
      $region77: #{_decoder_apply.2} parent=67 // pred_check
        %p6245 = pneg %p365
      $region78: #{_decoder_apply.2} parent=67 // pred_check_branch
        %6247 = sbr.rel (%p6245) target = $region80
      $region79: #{_decoder_apply.2} parent=67 // pred_region
        _
      $region80: #{_decoder_apply.2} parent=67 // pred_fallthru
        _
    $region68: #{_decoder_apply.2} parent=5 // pred_fallthru
      _
    %p6248 = scmp.le.s32.totalorder 2, %s18
    // Predicated region
    $region81: #{_decoder_apply.2} parent=5 // pred_check
      %p6249 = pneg %p6248
    $region82: #{_decoder_apply.2} parent=5 // pred_check_branch
      %6251 = sbr.rel (%p6249) target = $region84
    $region83: #{_decoder_apply.2} parent=5 // pred_region
      %s6252 = ssub.s32 %s18, 2
      // Predicated region
      $region85: #{_decoder_apply.2} parent=83 // pred_check
        %p6253 = pneg %p371
      $region86: #{_decoder_apply.2} parent=83 // pred_check_branch
        %6255 = sbr.rel (%p6253) target = $region88
      $region87: #{_decoder_apply.2} parent=83 // pred_region
        %p6256 = scmp.lt.s32.totalorder %s29, 1
        %s6257 = scalar_select %p6256, %s29, 1
        %s6258 = smul.addr %s6257, 8
        %s6259 = scalar_lea.vmem %s12, %s6258
      $region88: #{_decoder_apply.2} parent=83 // pred_fallthru
        _
    $region84: #{_decoder_apply.2} parent=5 // pred_fallthru
      _
  $region6: #{_decoder_apply.2} parent=0 // loop_footer
    %s22 = sadd.s32 1, %s18
  $region7: #{_decoder_apply.2} parent=0 // loop_footer_branch
    %17 = sbr.rel target = $region3
  $region8: #{_decoder_apply.2} parent=0 // loop_exit
    _

</llo_original>
